<compile_context>
chip_gen: v7x
topology: tpu7x:2x2x1
jax: 0.10.0
libtpu: 0.0.40
codegen_flags: <defaults>
</compile_context>

<pallas_src>
import functools

import jax
import jax.numpy as jnp
from jax.experimental import pallas as pl
from jax.experimental.pallas import tpu as pltpu


_LEAK = 0.2
_BN_EPS = 1e-5
_VMEM_SPEC = pl.BlockSpec(memory_space=pltpu.MemorySpace.VMEM)


# ------------------------------ Pallas kernel -------------------------------

def _lrelu(x):
    return jnp.where(x > 0, x, _LEAK * x)


def _batchnorm(y, m, mt, inv_n):
    """Training-mode BatchNorm2d (batch stats, biased var) on y: (C*OH*OW, N).

    m  : (C, C*OH*OW) 0/1 indicator — row c selects the rows of channel c.
    mt : (C*OH*OW, C) transpose — broadcasts per-channel stats back to rows.
    Stats computed in f32 from centered values (no E[x^2]-E[x]^2 cancellation).
    """
    ch_sum = jnp.sum(jnp.dot(m, y, preferred_element_type=jnp.float32),
                     axis=1, keepdims=True)                            # (C, 1)
    mean = ch_sum * inv_n
    mean_rows = jnp.dot(mt, mean, preferred_element_type=jnp.float32)  # (R, 1)
    cy = y - mean_rows
    ch_ssq = jnp.sum(jnp.dot(m, cy * cy, preferred_element_type=jnp.float32),
                     axis=1, keepdims=True)
    var = ch_ssq * inv_n                                               # biased
    inv_std_rows = jnp.dot(mt, jax.lax.rsqrt(var + _BN_EPS),
                           preferred_element_type=jnp.float32)         # (R, 1)
    return cy * inv_std_rows


def _encoder_kernel(x_ref, t1_ref, t2_ref, t3_ref,
                    m2_ref, mt2_ref, m3_ref, mt3_ref,
                    wh_ref, bh_ref, eps_ref, out_ref,
                    *, inv_n2, inv_n3, n_z):
    """Whole encoder forward, VMEM resident.

    Activations are (rows, N) with the batch on the lane dim; each conv layer is
    a single 2-D matmul with its precomputed unrolled weight matrix.
    out_ref packs [z; mu; logvar] as (3*n_z, N).
    """
    # Layer 1: Conv(1->4, k4 s2 p1) + LeakyReLU                  -> (784, N)
    a1 = _lrelu(jnp.dot(t1_ref[...], x_ref[...],
                        preferred_element_type=jnp.float32))
    # Layer 2: Conv(4->8, k4 s2 p1) + BN + LeakyReLU             -> (392, N)
    y2 = jnp.dot(t2_ref[...], a1.astype(jnp.bfloat16),
                 preferred_element_type=jnp.float32)
    a2 = _lrelu(_batchnorm(y2, m2_ref[...], mt2_ref[...], inv_n2))
    # Layer 3: Conv(8->16, k4 s2 p2) + BN + LeakyReLU            -> (256, N)
    y3 = jnp.dot(t3_ref[...], a2.astype(jnp.bfloat16),
                 preferred_element_type=jnp.float32)
    a3 = _lrelu(_batchnorm(y3, m3_ref[...], mt3_ref[...], inv_n3))
    # Head: [fc_mu; fc_logvar] fused into one matmul             -> (2*n_z, N)
    h = jnp.dot(wh_ref[...], a3.astype(jnp.bfloat16),
                preferred_element_type=jnp.float32) + bh_ref[...]
    mu = h[:n_z, :]
    logvar = h[n_z:, :]
    z = mu + eps_ref[...] * jnp.exp(0.5 * logvar)
    # Single packed output buffer: [z; mu; logvar].
    out_ref[0:n_z, :] = z
    out_ref[n_z:2 * n_z, :] = mu
    out_ref[2 * n_z:, :] = logvar


# --------------------- One-time weight preprocessing ------------------------

def _conv_unroll_matrix(w, in_chw, stride, pad):
    """Unrolled (Toeplitz) matrix T with conv(x).flatten() == T @ x.flatten().

    w: (Cout, Cin, k, k); in_chw: (Cin, H, W).  Built by pushing the identity
    basis through lax.conv_general_dilated, so semantics exactly match
    PyTorch's Conv2d (cross-correlation, (c, h, w) flatten order).
    """
    cin, h, wd = in_chw
    d = cin * h * wd
    eye = jnp.eye(d, dtype=jnp.float32).reshape(d, cin, h, wd)
    out = jax.lax.conv_general_dilated(
        eye, w.astype(jnp.float32), window_strides=(stride, stride),
        padding=((pad, pad), (pad, pad)),
        dimension_numbers=("NCHW", "OIHW", "NCHW"))
    _, cout, oh, ow = out.shape
    t = out.reshape(d, cout * oh * ow).T          # (Cout*OH*OW, Cin*H*W)
    return t, (cout, oh, ow)


def _channel_indicator(c, hw):
    """(C, C*hw) 0/1 matrix selecting the rows belonging to each channel."""
    rows = jnp.arange(c, dtype=jnp.int32)[:, None]
    cols = jnp.arange(c * hw, dtype=jnp.int32)[None, :] // hw
    return (cols == rows).astype(jnp.float32)


def prepare_encoder(params, in_hw=28):
    """One-time weight-layout preprocessing (conv unrolling + head fusion)."""
    w1, w2, w3 = params["w1"], params["w2"], params["w3"]
    t1, (c1, h1, wd1) = _conv_unroll_matrix(w1, (w1.shape[1], in_hw, in_hw), 2, 1)
    t2, (c2, h2, wd2) = _conv_unroll_matrix(w2, (c1, h1, wd1), 2, 1)
    t3, (c3, h3, wd3) = _conv_unroll_matrix(w3, (c2, h2, wd2), 2, 2)
    m2 = _channel_indicator(c2, h2 * wd2)
    m3 = _channel_indicator(c3, h3 * wd3)
    whead = jnp.concatenate([params["wmu"], params["wlv"]], axis=0)
    bhead = jnp.concatenate([params["bmu"], params["blv"]], axis=0)[:, None]
    return dict(
        t1=t1.astype(jnp.bfloat16), t2=t2.astype(jnp.bfloat16),
        t3=t3.astype(jnp.bfloat16),
        m2=m2, mt2=m2.T, m3=m3, mt3=m3.T,
        whead=whead.astype(jnp.bfloat16), bhead=bhead.astype(jnp.float32))


def init_params(key, final=16, n_z=32):
    """Deterministic synthetic weights matching the backbone's shapes."""
    ks = jax.random.split(key, 5)
    w1 = 0.05 * jax.random.normal(ks[0], (final // 4, 1, 4, 4), jnp.float32)
    w2 = 0.05 * jax.random.normal(ks[1], (final // 2, final // 4, 4, 4), jnp.float32)
    w3 = 0.05 * jax.random.normal(ks[2], (final, final // 2, 4, 4), jnp.float32)
    wmu = 0.02 * jax.random.normal(ks[3], (n_z, final * 4 * 4), jnp.float32)
    wlv = 0.02 * jax.random.normal(ks[4], (n_z, final * 4 * 4), jnp.float32)
    bmu = jnp.zeros((n_z,), jnp.float32)
    blv = jnp.zeros((n_z,), jnp.float32)
    return dict(w1=w1, w2=w2, w3=w3, wmu=wmu, bmu=bmu, wlv=wlv, blv=blv)


# ------------------------------- Forward pass --------------------------------

def encoder_forward(prep, x, eps):
    """x: (N, 1, 28, 28) NCHW, eps: (N, n_z) standard normal noise.
    Returns (z, mu, logvar), each (N, n_z)."""
    n = x.shape[0]
    n_z = prep["whead"].shape[0] // 2
    # Elements per channel for BN batch statistics (true N, exact stats).
    hw2 = prep["m2"].shape[1] // prep["m2"].shape[0]
    hw3 = prep["m3"].shape[1] // prep["m3"].shape[0]
    inv_n2 = 1.0 / float(n * hw2)
    inv_n3 = 1.0 / float(n * hw3)

    x_flat = x.reshape(n, -1).T.astype(jnp.bfloat16)     # (Cin*H*W, N), batch on lanes
    eps_t = eps.T.astype(jnp.float32)                    # (n_z, N)

    # Whole working set (weights ~2.5 MiB + activations ~10 KiB/sample) fits the
    # scoped-VMEM default on v5e/v6e/v7x; single launch, no grid.
    out = pl.pallas_call(
        functools.partial(_encoder_kernel, inv_n2=inv_n2, inv_n3=inv_n3, n_z=n_z),
        out_shape=jax.ShapeDtypeStruct((3 * n_z, n), jnp.float32),
        in_specs=[_VMEM_SPEC] * 11,
        out_specs=_VMEM_SPEC,
        compiler_params=pltpu.CompilerParams(vmem_limit_bytes=32 * 1024 * 1024),
    )(x_flat, prep["t1"], prep["t2"], prep["t3"],
      prep["m2"], prep["mt2"], prep["m3"], prep["mt3"],
      prep["whead"], prep["bhead"], eps_t)

    out = out.T                                          # (N, 3*n_z)
    return out[:, :n_z], out[:, n_z:2 * n_z], out[:, 2 * n_z:]


if __name__ == "__main__":
    key = jax.random.PRNGKey(0)
    pkey, xkey, ekey = jax.random.split(key, 3)
    n_z = 32
    params = init_params(pkey, final=16, n_z=n_z)
    prep = prepare_encoder(params)          # one-time weight preprocessing
    x = jax.random.normal(xkey, (2, 1, 28, 28), jnp.float32)
    eps = jax.random.normal(ekey, (2, n_z), jnp.float32)

    fwd = jax.jit(encoder_forward)
    z, mu, logvar = fwd(prep, x, eps)
    jax.block_until_ready((z, mu, logvar))

    assert z.shape == (2, n_z), z.shape
    assert mu.shape == (2, n_z), mu.shape
    assert logvar.shape == (2, n_z), logvar.shape
    assert bool(jnp.all(jnp.isfinite(z)))
    assert bool(jnp.all(jnp.isfinite(mu)))
    assert bool(jnp.all(jnp.isfinite(logvar)))
    print("KERNEL_OK")
</pallas_src>

<mosaic_0001>
module attributes {stable_mosaic.version = 11 : i64} {
  func.func @_encoder_kernel(%arg0: memref<784x2xbf16, #tpu.memory_space<vmem>>, %arg1: memref<784x784xbf16, #tpu.memory_space<vmem>>, %arg2: memref<392x784xbf16, #tpu.memory_space<vmem>>, %arg3: memref<256x392xbf16, #tpu.memory_space<vmem>>, %arg4: memref<8x392xf32, #tpu.memory_space<vmem>>, %arg5: memref<392x8xf32, #tpu.memory_space<vmem>>, %arg6: memref<16x256xf32, #tpu.memory_space<vmem>>, %arg7: memref<256x16xf32, #tpu.memory_space<vmem>>, %arg8: memref<64x256xbf16, #tpu.memory_space<vmem>>, %arg9: memref<64x1xf32, #tpu.memory_space<vmem>>, %arg10: memref<32x2xf32, #tpu.memory_space<vmem>>, %arg11: memref<96x2xf32, #tpu.memory_space<vmem>>) attributes {dimension_semantics = [], scalar_prefetch = 0 : i64, scratch_operands = 0 : i64, tpu.core_type = #tpu.core_type<tc>} {
    %c0 = arith.constant 0 : index
    %c0_0 = arith.constant 0 : index
    %0 = vector.load %arg1[%c0, %c0_0] : memref<784x784xbf16, #tpu.memory_space<vmem>>, vector<784x784xbf16>
    %c0_1 = arith.constant 0 : index
    %c0_2 = arith.constant 0 : index
    %1 = vector.load %arg0[%c0_1, %c0_2] : memref<784x2xbf16, #tpu.memory_space<vmem>>, vector<784x2xbf16>
    %cst = arith.constant dense<0.000000e+00> : vector<784x2xf32>
    %2 = tpu.matmul %0, %1, %cst {dimension_numbers = #tpu.dot_dimension_numbers<[1], [0], [0], [1], [0, 0, 1, 1], [], []>} : vector<784x784xbf16>, vector<784x2xbf16>, vector<784x2xf32> -> vector<784x2xf32>
    %cst_3 = arith.constant 0.000000e+00 : f32
    %3 = vector.broadcast %cst_3 : f32 to vector<784x2xf32>
    %4 = arith.cmpf ogt, %2, %3 : vector<784x2xf32>
    %cst_4 = arith.constant 2.000000e-01 : f32
    %5 = vector.broadcast %cst_4 : f32 to vector<784x2xf32>
    %6 = arith.mulf %5, %2 : vector<784x2xf32>
    %7 = arith.select %4, %2, %6 : vector<784x2xi1>, vector<784x2xf32>
    %c0_5 = arith.constant 0 : index
    %c0_6 = arith.constant 0 : index
    %8 = vector.load %arg2[%c0_5, %c0_6] : memref<392x784xbf16, #tpu.memory_space<vmem>>, vector<392x784xbf16>
    %9 = arith.truncf %7 : vector<784x2xf32> to vector<784x2xbf16>
    %cst_7 = arith.constant dense<0.000000e+00> : vector<392x2xf32>
    %10 = tpu.matmul %8, %9, %cst_7 {dimension_numbers = #tpu.dot_dimension_numbers<[1], [0], [0], [1], [0, 0, 1, 1], [], []>} : vector<392x784xbf16>, vector<784x2xbf16>, vector<392x2xf32> -> vector<392x2xf32>
    %c0_8 = arith.constant 0 : index
    %c0_9 = arith.constant 0 : index
    %11 = vector.load %arg4[%c0_8, %c0_9] : memref<8x392xf32, #tpu.memory_space<vmem>>, vector<8x392xf32>
    %c0_10 = arith.constant 0 : index
    %c0_11 = arith.constant 0 : index
    %12 = vector.load %arg5[%c0_10, %c0_11] : memref<392x8xf32, #tpu.memory_space<vmem>>, vector<392x8xf32>
    %cst_12 = arith.constant dense<0.000000e+00> : vector<8x2xf32>
    %13 = tpu.matmul %11, %10, %cst_12 {dimension_numbers = #tpu.dot_dimension_numbers<[1], [0], [0], [1], [0, 0, 1, 1], [], []>} : vector<8x392xf32>, vector<392x2xf32>, vector<8x2xf32> -> vector<8x2xf32>
    %cst_13 = arith.constant dense<0.000000e+00> : vector<8xf32>
    %14 = vector.multi_reduction <add>, %13, %cst_13 [1] : vector<8x2xf32> to vector<8xf32>
    %15 = vector.shape_cast %14 : vector<8xf32> to vector<8x1xf32>
    %cst_14 = arith.constant 0.0102040814 : f32
    %16 = vector.broadcast %cst_14 : f32 to vector<8x1xf32>
    %17 = arith.mulf %15, %16 : vector<8x1xf32>
    %cst_15 = arith.constant dense<0.000000e+00> : vector<392x1xf32>
    %18 = tpu.matmul %12, %17, %cst_15 {dimension_numbers = #tpu.dot_dimension_numbers<[1], [0], [0], [1], [0, 0, 1, 1], [], []>} : vector<392x8xf32>, vector<8x1xf32>, vector<392x1xf32> -> vector<392x1xf32>
    %19 = vector.broadcast %18 : vector<392x1xf32> to vector<392x2xf32>
    %20 = arith.subf %10, %19 : vector<392x2xf32>
    %21 = arith.mulf %20, %20 : vector<392x2xf32>
    %cst_16 = arith.constant dense<0.000000e+00> : vector<8x2xf32>
    %22 = tpu.matmul %11, %21, %cst_16 {dimension_numbers = #tpu.dot_dimension_numbers<[1], [0], [0], [1], [0, 0, 1, 1], [], []>} : vector<8x392xf32>, vector<392x2xf32>, vector<8x2xf32> -> vector<8x2xf32>
    %cst_17 = arith.constant dense<0.000000e+00> : vector<8xf32>
    %23 = vector.multi_reduction <add>, %22, %cst_17 [1] : vector<8x2xf32> to vector<8xf32>
    %24 = vector.shape_cast %23 : vector<8xf32> to vector<8x1xf32>
    %cst_18 = arith.constant 0.0102040814 : f32
    %25 = vector.broadcast %cst_18 : f32 to vector<8x1xf32>
    %26 = arith.mulf %24, %25 : vector<8x1xf32>
    %cst_19 = arith.constant 9.99999974E-6 : f32
    %27 = vector.broadcast %cst_19 : f32 to vector<8x1xf32>
    %28 = arith.addf %26, %27 : vector<8x1xf32>
    %29 = math.rsqrt %28 : vector<8x1xf32>
    %cst_20 = arith.constant dense<0.000000e+00> : vector<392x1xf32>
    %30 = tpu.matmul %12, %29, %cst_20 {dimension_numbers = #tpu.dot_dimension_numbers<[1], [0], [0], [1], [0, 0, 1, 1], [], []>} : vector<392x8xf32>, vector<8x1xf32>, vector<392x1xf32> -> vector<392x1xf32>
    %31 = vector.broadcast %30 : vector<392x1xf32> to vector<392x2xf32>
    %32 = arith.mulf %20, %31 : vector<392x2xf32>
    %cst_21 = arith.constant 0.000000e+00 : f32
    %33 = vector.broadcast %cst_21 : f32 to vector<392x2xf32>
    %34 = arith.cmpf ogt, %32, %33 : vector<392x2xf32>
    %cst_22 = arith.constant 2.000000e-01 : f32
    %35 = vector.broadcast %cst_22 : f32 to vector<392x2xf32>
    %36 = arith.mulf %35, %32 : vector<392x2xf32>
    %37 = arith.select %34, %32, %36 : vector<392x2xi1>, vector<392x2xf32>
    %c0_23 = arith.constant 0 : index
    %c0_24 = arith.constant 0 : index
    %38 = vector.load %arg3[%c0_23, %c0_24] : memref<256x392xbf16, #tpu.memory_space<vmem>>, vector<256x392xbf16>
    %39 = arith.truncf %37 : vector<392x2xf32> to vector<392x2xbf16>
    %cst_25 = arith.constant dense<0.000000e+00> : vector<256x2xf32>
    %40 = tpu.matmul %38, %39, %cst_25 {dimension_numbers = #tpu.dot_dimension_numbers<[1], [0], [0], [1], [0, 0, 1, 1], [], []>} : vector<256x392xbf16>, vector<392x2xbf16>, vector<256x2xf32> -> vector<256x2xf32>
    %c0_26 = arith.constant 0 : index
    %c0_27 = arith.constant 0 : index
    %41 = vector.load %arg6[%c0_26, %c0_27] : memref<16x256xf32, #tpu.memory_space<vmem>>, vector<16x256xf32>
    %c0_28 = arith.constant 0 : index
    %c0_29 = arith.constant 0 : index
    %42 = vector.load %arg7[%c0_28, %c0_29] : memref<256x16xf32, #tpu.memory_space<vmem>>, vector<256x16xf32>
    %cst_30 = arith.constant dense<0.000000e+00> : vector<16x2xf32>
    %43 = tpu.matmul %41, %40, %cst_30 {dimension_numbers = #tpu.dot_dimension_numbers<[1], [0], [0], [1], [0, 0, 1, 1], [], []>} : vector<16x256xf32>, vector<256x2xf32>, vector<16x2xf32> -> vector<16x2xf32>
    %cst_31 = arith.constant dense<0.000000e+00> : vector<16xf32>
    %44 = vector.multi_reduction <add>, %43, %cst_31 [1] : vector<16x2xf32> to vector<16xf32>
    %45 = vector.shape_cast %44 : vector<16xf32> to vector<16x1xf32>
    %cst_32 = arith.constant 3.125000e-02 : f32
    %46 = vector.broadcast %cst_32 : f32 to vector<16x1xf32>
    %47 = arith.mulf %45, %46 : vector<16x1xf32>
    %cst_33 = arith.constant dense<0.000000e+00> : vector<256x1xf32>
    %48 = tpu.matmul %42, %47, %cst_33 {dimension_numbers = #tpu.dot_dimension_numbers<[1], [0], [0], [1], [0, 0, 1, 1], [], []>} : vector<256x16xf32>, vector<16x1xf32>, vector<256x1xf32> -> vector<256x1xf32>
    %49 = vector.broadcast %48 : vector<256x1xf32> to vector<256x2xf32>
    %50 = arith.subf %40, %49 : vector<256x2xf32>
    %51 = arith.mulf %50, %50 : vector<256x2xf32>
    %cst_34 = arith.constant dense<0.000000e+00> : vector<16x2xf32>
    %52 = tpu.matmul %41, %51, %cst_34 {dimension_numbers = #tpu.dot_dimension_numbers<[1], [0], [0], [1], [0, 0, 1, 1], [], []>} : vector<16x256xf32>, vector<256x2xf32>, vector<16x2xf32> -> vector<16x2xf32>
    %cst_35 = arith.constant dense<0.000000e+00> : vector<16xf32>
    %53 = vector.multi_reduction <add>, %52, %cst_35 [1] : vector<16x2xf32> to vector<16xf32>
    %54 = vector.shape_cast %53 : vector<16xf32> to vector<16x1xf32>
    %cst_36 = arith.constant 3.125000e-02 : f32
    %55 = vector.broadcast %cst_36 : f32 to vector<16x1xf32>
    %56 = arith.mulf %54, %55 : vector<16x1xf32>
    %cst_37 = arith.constant 9.99999974E-6 : f32
    %57 = vector.broadcast %cst_37 : f32 to vector<16x1xf32>
    %58 = arith.addf %56, %57 : vector<16x1xf32>
    %59 = math.rsqrt %58 : vector<16x1xf32>
    %cst_38 = arith.constant dense<0.000000e+00> : vector<256x1xf32>
    %60 = tpu.matmul %42, %59, %cst_38 {dimension_numbers = #tpu.dot_dimension_numbers<[1], [0], [0], [1], [0, 0, 1, 1], [], []>} : vector<256x16xf32>, vector<16x1xf32>, vector<256x1xf32> -> vector<256x1xf32>
    %61 = vector.broadcast %60 : vector<256x1xf32> to vector<256x2xf32>
    %62 = arith.mulf %50, %61 : vector<256x2xf32>
    %cst_39 = arith.constant 0.000000e+00 : f32
    %63 = vector.broadcast %cst_39 : f32 to vector<256x2xf32>
    %64 = arith.cmpf ogt, %62, %63 : vector<256x2xf32>
    %cst_40 = arith.constant 2.000000e-01 : f32
    %65 = vector.broadcast %cst_40 : f32 to vector<256x2xf32>
    %66 = arith.mulf %65, %62 : vector<256x2xf32>
    %67 = arith.select %64, %62, %66 : vector<256x2xi1>, vector<256x2xf32>
    %c0_41 = arith.constant 0 : index
    %c0_42 = arith.constant 0 : index
    %68 = vector.load %arg8[%c0_41, %c0_42] : memref<64x256xbf16, #tpu.memory_space<vmem>>, vector<64x256xbf16>
    %69 = arith.truncf %67 : vector<256x2xf32> to vector<256x2xbf16>
    %cst_43 = arith.constant dense<0.000000e+00> : vector<64x2xf32>
    %70 = tpu.matmul %68, %69, %cst_43 {dimension_numbers = #tpu.dot_dimension_numbers<[1], [0], [0], [1], [0, 0, 1, 1], [], []>} : vector<64x256xbf16>, vector<256x2xbf16>, vector<64x2xf32> -> vector<64x2xf32>
    %c0_44 = arith.constant 0 : index
    %c0_45 = arith.constant 0 : index
    %71 = vector.load %arg9[%c0_44, %c0_45] : memref<64x1xf32, #tpu.memory_space<vmem>>, vector<64x1xf32>
    %72 = vector.broadcast %71 : vector<64x1xf32> to vector<64x2xf32>
    %73 = arith.addf %70, %72 : vector<64x2xf32>
    %74 = vector.extract_strided_slice %73 {offsets = [0, 0], sizes = [32, 2], strides = [1, 1]} : vector<64x2xf32> to vector<32x2xf32>
    %75 = vector.extract_strided_slice %73 {offsets = [32, 0], sizes = [32, 2], strides = [1, 1]} : vector<64x2xf32> to vector<32x2xf32>
    %c0_46 = arith.constant 0 : index
    %c0_47 = arith.constant 0 : index
    %76 = vector.load %arg10[%c0_46, %c0_47] : memref<32x2xf32, #tpu.memory_space<vmem>>, vector<32x2xf32>
    %cst_48 = arith.constant 5.000000e-01 : f32
    %77 = vector.broadcast %cst_48 : f32 to vector<32x2xf32>
    %78 = arith.mulf %77, %75 : vector<32x2xf32>
    %79 = math.exp %78 : vector<32x2xf32>
    %80 = arith.mulf %76, %79 : vector<32x2xf32>
    %81 = arith.addf %74, %80 : vector<32x2xf32>
    %c0_49 = arith.constant 0 : index
    %c0_50 = arith.constant 0 : index
    %82 = vector.load %arg11[%c0_49, %c0_50] : memref<96x2xf32, #tpu.memory_space<vmem>>, vector<32x2xf32>
    tpu.vector_store %arg11[%c0_49, %c0_50], %81 {strides = array<i32>} : memref<96x2xf32, #tpu.memory_space<vmem>>, vector<32x2xf32>,
    %c32 = arith.constant 32 : index
    %c0_51 = arith.constant 0 : index
    %83 = vector.load %arg11[%c32, %c0_51] : memref<96x2xf32, #tpu.memory_space<vmem>>, vector<32x2xf32>
    tpu.vector_store %arg11[%c32, %c0_51], %74 {strides = array<i32>} : memref<96x2xf32, #tpu.memory_space<vmem>>, vector<32x2xf32>,
    %c64 = arith.constant 64 : index
    %c0_52 = arith.constant 0 : index
    %84 = vector.load %arg11[%c64, %c0_52] : memref<96x2xf32, #tpu.memory_space<vmem>>, vector<32x2xf32>
    tpu.vector_store %arg11[%c64, %c0_52], %75 {strides = array<i32>} : memref<96x2xf32, #tpu.memory_space<vmem>>, vector<32x2xf32>,
    return
  }
}

</mosaic_0001>

<llo_original>
// kernel: encoder_forward.1
$region0: #{encoder_forward.1}
  #allocation0 [shape = 'u32[]', space=smem, size = 0x4, offset = 0x4, fixed_abs, tag = 'smem constant byte address 0x4 - core index']
  #allocation1 [shape = 'u32[144,128]{1,0:T(1,128)}', space=vmem, size = 0x12000, scoped, tag = 'internal scratch']
  %s0 = inlined_call_operand.vmem [shape: bf16[784,2], index: 0, kind: input, shape index: {}]
  %s1 = inlined_call_operand.hbm [shape: bf16[784,784], index: 1, kind: input, shape index: {}]
  %s2 = inlined_call_operand.vmem [shape: bf16[392,784], index: 2, kind: input, shape index: {}]
  %s3 = inlined_call_operand.vmem [shape: bf16[256,392], index: 3, kind: input, shape index: {}]
  %s4 = inlined_call_operand.hbm [shape: f32[8,392], index: 4, kind: input, shape index: {}]
  %s5 = inlined_call_operand.vmem [shape: f32[392,8], index: 5, kind: input, shape index: {}]
  %s6 = inlined_call_operand.hbm [shape: f32[16,256], index: 6, kind: input, shape index: {}]
  %s7 = inlined_call_operand.vmem [shape: f32[256,16], index: 7, kind: input, shape index: {}]
  %s8 = inlined_call_operand.hbm [shape: bf16[64,256], index: 8, kind: input, shape index: {}]
  %s9 = inlined_call_operand.vmem [shape: f32[64,1], index: 9, kind: input, shape index: {}]
  %s10 = inlined_call_operand.vmem [shape: f32[32,2], index: 10, kind: input, shape index: {}]
  %s11 = inlined_call_operand.vmem [shape: f32[96,2], index: 11, kind: output, shape index: {}]
  %s12 = sld [smem:[#allocation0]]
  $region70: #{encoder_forward.1} parent=0
    _
  %s14 = ssub.s32 1, %s12
  %s15 = scalar_select 0, %s14, %s12
  $region1: #{encoder_forward.1} parent=0
    #allocation2 [shape = 'u8[1404928]{0}', space=vmem, size = 0x157000, scoped, tag = 'input window, operand 1, single buffered']
    #allocation3 [shape = 's32[1]{0}', space=sflag, size = 0x4, scoped, tag = 'scoped memory for encoder_forward.1']
    #allocation4 [shape = 'u8[16384]{0}', space=vmem, size = 0x4000, scoped, tag = 'input window, operand 4, single buffered']
    #allocation5 [shape = 's32[1]{0}', space=sflag, size = 0x4, scoped, tag = 'scoped memory for encoder_forward.1']
    #allocation6 [shape = 'u8[16384]{0}', space=vmem, size = 0x4000, scoped, tag = 'input window, operand 6, single buffered']
    #allocation7 [shape = 'u8[32768]{0}', space=vmem, size = 0x8000, scoped, tag = 'input window, operand 8, single buffered']
    #allocation8 [shape = 's32[1]{0}', space=sflag, size = 0x4, scoped, tag = 'scoped memory for encoder_forward.1']
    %16 = vsyncpa [#allocation3], 0
    %17 = vsyncpa [#allocation5], 0
    %18 = vsyncpa [#allocation8], 0
    // Predicated region
    $region2: #{encoder_forward.1} parent=1 // pred_check
      _
    $region3: #{encoder_forward.1} parent=1 // pred_check_branch
      %20 = sbr.rel (0) target = $region5
    $region4: #{encoder_forward.1} parent=1 // pred_region
      _
    $region5: #{encoder_forward.1} parent=1 // pred_fallthru
      _
    // Predicated region
    $region6: #{encoder_forward.1} parent=1 // pred_check
      _
    $region7: #{encoder_forward.1} parent=1 // pred_check_branch
      %22 = sbr.rel (0) target = $region9
    $region8: #{encoder_forward.1} parent=1 // pred_region
      %s24 = ssub.s32 43904, 43904
      %25 = vsyncadd [#allocation3], %s24
      %s26 = sshll.u32 [#allocation2], 4
      %s27 = int_to_ptr.vmem [resolvable:$true] %s26
      %32 = dma.hbm_to_vmem [thread:$0]  %s1, 43904, %s27, [#allocation3], 448, 448, 28
    $region9: #{encoder_forward.1} parent=1 // pred_fallthru
      _
    // Predicated region
    $region10: #{encoder_forward.1} parent=1 // pred_check
      _
    $region11: #{encoder_forward.1} parent=1 // pred_check_branch
      %34 = sbr.rel (0) target = $region13
    $region12: #{encoder_forward.1} parent=1 // pred_region
      _
    $region13: #{encoder_forward.1} parent=1 // pred_fallthru
      _
    // Predicated region
    $region14: #{encoder_forward.1} parent=1 // pred_check
      _
    $region15: #{encoder_forward.1} parent=1 // pred_check_branch
      %36 = sbr.rel (0) target = $region17
    $region16: #{encoder_forward.1} parent=1 // pred_region
      _
    $region17: #{encoder_forward.1} parent=1 // pred_fallthru
      _
    // Predicated region
    $region18: #{encoder_forward.1} parent=1 // pred_check
      _
    $region19: #{encoder_forward.1} parent=1 // pred_check_branch
      %38 = sbr.rel (0) target = $region21
    $region20: #{encoder_forward.1} parent=1 // pred_region
      %s40 = ssub.s32 512, 512
      %41 = vsyncadd [#allocation5], %s40
      %s43 = sshll.u32 [#allocation4], 4
      %s44 = int_to_ptr.vmem [resolvable:$true] %s43
      %46 = dma.hbm_to_vmem [thread:$0]  %s4, 512, %s44, [#allocation5]
    $region21: #{encoder_forward.1} parent=1 // pred_fallthru
      _
    // Predicated region
    $region22: #{encoder_forward.1} parent=1 // pred_check
      _
    $region23: #{encoder_forward.1} parent=1 // pred_check_branch
      %48 = sbr.rel (0) target = $region25
    $region24: #{encoder_forward.1} parent=1 // pred_region
      _
    $region25: #{encoder_forward.1} parent=1 // pred_fallthru
      _
    // Predicated region
    $region26: #{encoder_forward.1} parent=1 // pred_check
      _
    $region27: #{encoder_forward.1} parent=1 // pred_check_branch
      %50 = sbr.rel (0) target = $region29
    $region28: #{encoder_forward.1} parent=1 // pred_region
      %s52 = ssub.s32 512, 512
      %53 = vsyncadd [#allocation5], %s52
      %s54 = sshll.u32 [#allocation6], 4
      %s55 = int_to_ptr.vmem [resolvable:$true] %s54
      %60 = dma.hbm_to_vmem [thread:$0]  %s6, 512, %s55, [#allocation5], 256, 256, 16
    $region29: #{encoder_forward.1} parent=1 // pred_fallthru
      _
    // Predicated region
    $region30: #{encoder_forward.1} parent=1 // pred_check
      _
    $region31: #{encoder_forward.1} parent=1 // pred_check_branch
      %62 = sbr.rel (0) target = $region33
    $region32: #{encoder_forward.1} parent=1 // pred_region
      _
    $region33: #{encoder_forward.1} parent=1 // pred_fallthru
      _
    // Predicated region
    $region34: #{encoder_forward.1} parent=1 // pred_check
      _
    $region35: #{encoder_forward.1} parent=1 // pred_check_branch
      %64 = sbr.rel (0) target = $region37
    $region36: #{encoder_forward.1} parent=1 // pred_region
      %s66 = ssub.s32 1024, 1024
      %67 = vsyncadd [#allocation8], %s66
      %s68 = sshll.u32 [#allocation7], 4
      %s69 = int_to_ptr.vmem [resolvable:$true] %s68
      %74 = dma.hbm_to_vmem [thread:$0]  %s8, 1024, %s69, [#allocation8], 128, 128, 8
    $region37: #{encoder_forward.1} parent=1 // pred_fallthru
      _
    // Predicated region
    $region38: #{encoder_forward.1} parent=1 // pred_check
      _
    $region39: #{encoder_forward.1} parent=1 // pred_check_branch
      %76 = sbr.rel (0) target = $region41
    $region40: #{encoder_forward.1} parent=1 // pred_region
      _
    $region41: #{encoder_forward.1} parent=1 // pred_fallthru
      _
    // Predicated region
    $region42: #{encoder_forward.1} parent=1 // pred_check
      _
    $region43: #{encoder_forward.1} parent=1 // pred_check_branch
      %78 = sbr.rel (0) target = $region45
    $region44: #{encoder_forward.1} parent=1 // pred_region
      _
    $region45: #{encoder_forward.1} parent=1 // pred_fallthru
      _
    // Predicated region
    $region46: #{encoder_forward.1} parent=1 // pred_check
      _
    $region47: #{encoder_forward.1} parent=1 // pred_check_branch
      %80 = sbr.rel (0) target = $region49
    $region48: #{encoder_forward.1} parent=1 // pred_region
      %81 = dma.done [#allocation3], 43904
    $region49: #{encoder_forward.1} parent=1 // pred_fallthru
      _
    // Predicated region
    $region50: #{encoder_forward.1} parent=1 // pred_check
      _
    $region51: #{encoder_forward.1} parent=1 // pred_check_branch
      %83 = sbr.rel (0) target = $region53
    $region52: #{encoder_forward.1} parent=1 // pred_region
      %84 = dma.done [#allocation5], 512
    $region53: #{encoder_forward.1} parent=1 // pred_fallthru
      _
    // Predicated region
    $region54: #{encoder_forward.1} parent=1 // pred_check
      _
    $region55: #{encoder_forward.1} parent=1 // pred_check_branch
      %86 = sbr.rel (0) target = $region57
    $region56: #{encoder_forward.1} parent=1 // pred_region
      %87 = dma.done [#allocation5], 512
    $region57: #{encoder_forward.1} parent=1 // pred_fallthru
      _
    // Predicated region
    $region58: #{encoder_forward.1} parent=1 // pred_check
      _
    $region59: #{encoder_forward.1} parent=1 // pred_check_branch
      %89 = sbr.rel (0) target = $region61
    $region60: #{encoder_forward.1} parent=1 // pred_region
      %90 = dma.done [#allocation8], 1024
    $region61: #{encoder_forward.1} parent=1 // pred_fallthru
      _
    %v92 = vld [vmem:[#allocation2] sm:$0xff]
    %v93 = vld [vmem:[#allocation2 + $0x8] sm:$0xff]
    %v94 = vld [vmem:[#allocation2 + $0x10] sm:$0xff]
    %v95 = vld [vmem:[#allocation2 + $0x18] sm:$0xf]
    %v96 = vld [vmem:[#allocation2 + $0x1c] sm:$0xff]
    %v97 = vld [vmem:[#allocation2 + $0x24] sm:$0xff]
    %v98 = vld [vmem:[#allocation2 + $0x2c] sm:$0xff]
    %v99 = vld [vmem:[#allocation2 + $0x34] sm:$0xf]
    %v100 = vld [vmem:[#allocation2 + $0x38] sm:$0xff]
    %v101 = vld [vmem:[#allocation2 + $0x40] sm:$0xff]
    %v102 = vld [vmem:[#allocation2 + $0x48] sm:$0xff]
    %v103 = vld [vmem:[#allocation2 + $0x50] sm:$0xf]
    %v104 = vld [vmem:[#allocation2 + $0x54] sm:$0xff]
    %v105 = vld [vmem:[#allocation2 + $0x5c] sm:$0xff]
    %v106 = vld [vmem:[#allocation2 + $0x64] sm:$0xff]
    %v107 = vld [vmem:[#allocation2 + $0x6c] sm:$0xf]
    %v108 = vld [vmem:[#allocation2 + $0x70] sm:$0xff]
    %v109 = vld [vmem:[#allocation2 + $0x78] sm:$0xff]
    %v110 = vld [vmem:[#allocation2 + $0x80] sm:$0xff]
    %v111 = vld [vmem:[#allocation2 + $0x88] sm:$0xf]
    %v112 = vld [vmem:[#allocation2 + $0x8c] sm:$0xff]
    %v113 = vld [vmem:[#allocation2 + $0x94] sm:$0xff]
    %v114 = vld [vmem:[#allocation2 + $0x9c] sm:$0xff]
    %v115 = vld [vmem:[#allocation2 + $0xa4] sm:$0xf]
    %v116 = vld [vmem:[#allocation2 + $0xa8] sm:$0xff]
    %v117 = vld [vmem:[#allocation2 + $0xb0] sm:$0xff]
    %v118 = vld [vmem:[#allocation2 + $0xb8] sm:$0xff]
    %v119 = vld [vmem:[#allocation2 + $0xc0] sm:$0xf]
    %v120 = vld [vmem:[#allocation2 + $0xc4] sm:$0xff]
    %v121 = vld [vmem:[#allocation2 + $0xcc] sm:$0xff]
    %v122 = vld [vmem:[#allocation2 + $0xd4] sm:$0xff]
    %v123 = vld [vmem:[#allocation2 + $0xdc] sm:$0xf]
    %v124 = vld [vmem:[#allocation2 + $0xe0] sm:$0xff]
    %v125 = vld [vmem:[#allocation2 + $0xe8] sm:$0xff]
    %v126 = vld [vmem:[#allocation2 + $0xf0] sm:$0xff]
    %v127 = vld [vmem:[#allocation2 + $0xf8] sm:$0xf]
    %v128 = vld [vmem:[#allocation2 + $0xfc] sm:$0xff]
    %v129 = vld [vmem:[#allocation2 + $0x104] sm:$0xff]
    %v130 = vld [vmem:[#allocation2 + $0x10c] sm:$0xff]
    %v131 = vld [vmem:[#allocation2 + $0x114] sm:$0xf]
    %v132 = vld [vmem:[#allocation2 + $0x118] sm:$0xff]
    %v133 = vld [vmem:[#allocation2 + $0x120] sm:$0xff]
    %v134 = vld [vmem:[#allocation2 + $0x128] sm:$0xff]
    %v135 = vld [vmem:[#allocation2 + $0x130] sm:$0xf]
    %v136 = vld [vmem:[#allocation2 + $0x134] sm:$0xff]
    %v137 = vld [vmem:[#allocation2 + $0x13c] sm:$0xff]
    %v138 = vld [vmem:[#allocation2 + $0x144] sm:$0xff]
    %v139 = vld [vmem:[#allocation2 + $0x14c] sm:$0xf]
    %v140 = vld [vmem:[#allocation2 + $0x150] sm:$0xff]
    %v141 = vld [vmem:[#allocation2 + $0x158] sm:$0xff]
    %v142 = vld [vmem:[#allocation2 + $0x160] sm:$0xff]
    %v143 = vld [vmem:[#allocation2 + $0x168] sm:$0xf]
    %v144 = vld [vmem:[#allocation2 + $0x16c] sm:$0xff]
    %v145 = vld [vmem:[#allocation2 + $0x174] sm:$0xff]
    %v146 = vld [vmem:[#allocation2 + $0x17c] sm:$0xff]
    %v147 = vld [vmem:[#allocation2 + $0x184] sm:$0xf]
    %v148 = vld [vmem:[#allocation2 + $0x188] sm:$0xff]
    %v149 = vld [vmem:[#allocation2 + $0x190] sm:$0xff]
    %v150 = vld [vmem:[#allocation2 + $0x198] sm:$0xff]
    %v151 = vld [vmem:[#allocation2 + $0x1a0] sm:$0xf]
    %v152 = vld [vmem:[#allocation2 + $0x1a4] sm:$0xff]
    %v153 = vld [vmem:[#allocation2 + $0x1ac] sm:$0xff]
    %v154 = vld [vmem:[#allocation2 + $0x1b4] sm:$0xff]
    %v155 = vld [vmem:[#allocation2 + $0x1bc] sm:$0xf]
    %v156 = vld [vmem:[#allocation2 + $0x1c0] sm:$0xff]
    %v157 = vld [vmem:[#allocation2 + $0x1c8] sm:$0xff]
    %v158 = vld [vmem:[#allocation2 + $0x1d0] sm:$0xff]
    %v159 = vld [vmem:[#allocation2 + $0x1d8] sm:$0xf]
    %v160 = vld [vmem:[#allocation2 + $0x1dc] sm:$0xff]
    %v161 = vld [vmem:[#allocation2 + $0x1e4] sm:$0xff]
    %v162 = vld [vmem:[#allocation2 + $0x1ec] sm:$0xff]
    %v163 = vld [vmem:[#allocation2 + $0x1f4] sm:$0xf]
    %v164 = vld [vmem:[#allocation2 + $0x1f8] sm:$0xff]
    %v165 = vld [vmem:[#allocation2 + $0x200] sm:$0xff]
    %v166 = vld [vmem:[#allocation2 + $0x208] sm:$0xff]
    %v167 = vld [vmem:[#allocation2 + $0x210] sm:$0xf]
    %v168 = vld [vmem:[#allocation2 + $0x214] sm:$0xff]
    %v169 = vld [vmem:[#allocation2 + $0x21c] sm:$0xff]
    %v170 = vld [vmem:[#allocation2 + $0x224] sm:$0xff]
    %v171 = vld [vmem:[#allocation2 + $0x22c] sm:$0xf]
    %v172 = vld [vmem:[#allocation2 + $0x230] sm:$0xff]
    %v173 = vld [vmem:[#allocation2 + $0x238] sm:$0xff]
    %v174 = vld [vmem:[#allocation2 + $0x240] sm:$0xff]
    %v175 = vld [vmem:[#allocation2 + $0x248] sm:$0xf]
    %v176 = vld [vmem:[#allocation2 + $0x24c] sm:$0xff]
    %v177 = vld [vmem:[#allocation2 + $0x254] sm:$0xff]
    %v178 = vld [vmem:[#allocation2 + $0x25c] sm:$0xff]
    %v179 = vld [vmem:[#allocation2 + $0x264] sm:$0xf]
    %v180 = vld [vmem:[#allocation2 + $0x268] sm:$0xff]
    %v181 = vld [vmem:[#allocation2 + $0x270] sm:$0xff]
    %v182 = vld [vmem:[#allocation2 + $0x278] sm:$0xff]
    %v183 = vld [vmem:[#allocation2 + $0x280] sm:$0xf]
    %v184 = vld [vmem:[#allocation2 + $0x284] sm:$0xff]
    %v185 = vld [vmem:[#allocation2 + $0x28c] sm:$0xff]
    %v186 = vld [vmem:[#allocation2 + $0x294] sm:$0xff]
    %v187 = vld [vmem:[#allocation2 + $0x29c] sm:$0xf]
    %v188 = vld [vmem:[#allocation2 + $0x2a0] sm:$0xff]
    %v189 = vld [vmem:[#allocation2 + $0x2a8] sm:$0xff]
    %v190 = vld [vmem:[#allocation2 + $0x2b0] sm:$0xff]
    %v191 = vld [vmem:[#allocation2 + $0x2b8] sm:$0xf]
    %v192 = vld [vmem:[#allocation2 + $0x2bc] sm:$0xff]
    %v193 = vld [vmem:[#allocation2 + $0x2c4] sm:$0xff]
    %v194 = vld [vmem:[#allocation2 + $0x2cc] sm:$0xff]
    %v195 = vld [vmem:[#allocation2 + $0x2d4] sm:$0xf]
    %v196 = vld [vmem:[#allocation2 + $0x2d8] sm:$0xff]
    %v197 = vld [vmem:[#allocation2 + $0x2e0] sm:$0xff]
    %v198 = vld [vmem:[#allocation2 + $0x2e8] sm:$0xff]
    %v199 = vld [vmem:[#allocation2 + $0x2f0] sm:$0xf]
    %v200 = vld [vmem:[#allocation2 + $0x2f4] sm:$0xff]
    %v201 = vld [vmem:[#allocation2 + $0x2fc] sm:$0xff]
    %v202 = vld [vmem:[#allocation2 + $0x304] sm:$0xff]
    %v203 = vld [vmem:[#allocation2 + $0x30c] sm:$0xf]
    %v204 = vld [vmem:[#allocation2 + $0x310] sm:$0xff]
    %v205 = vld [vmem:[#allocation2 + $0x318] sm:$0xff]
    %v206 = vld [vmem:[#allocation2 + $0x320] sm:$0xff]
    %v207 = vld [vmem:[#allocation2 + $0x328] sm:$0xf]
    %v208 = vld [vmem:[#allocation2 + $0x32c] sm:$0xff]
    %v209 = vld [vmem:[#allocation2 + $0x334] sm:$0xff]
    %v210 = vld [vmem:[#allocation2 + $0x33c] sm:$0xff]
    %v211 = vld [vmem:[#allocation2 + $0x344] sm:$0xf]
    %v212 = vld [vmem:[#allocation2 + $0x348] sm:$0xff]
    %v213 = vld [vmem:[#allocation2 + $0x350] sm:$0xff]
    %v214 = vld [vmem:[#allocation2 + $0x358] sm:$0xff]
    %v215 = vld [vmem:[#allocation2 + $0x360] sm:$0xf]
    %v216 = vld [vmem:[#allocation2 + $0x364] sm:$0xff]
    %v217 = vld [vmem:[#allocation2 + $0x36c] sm:$0xff]
    %v218 = vld [vmem:[#allocation2 + $0x374] sm:$0xff]
    %v219 = vld [vmem:[#allocation2 + $0x37c] sm:$0xf]
    %v220 = vld [vmem:[#allocation2 + $0x380] sm:$0xff]
    %v221 = vld [vmem:[#allocation2 + $0x388] sm:$0xff]
    %v222 = vld [vmem:[#allocation2 + $0x390] sm:$0xff]
    %v223 = vld [vmem:[#allocation2 + $0x398] sm:$0xf]
    %v224 = vld [vmem:[#allocation2 + $0x39c] sm:$0xff]
    %v225 = vld [vmem:[#allocation2 + $0x3a4] sm:$0xff]
    %v226 = vld [vmem:[#allocation2 + $0x3ac] sm:$0xff]
    %v227 = vld [vmem:[#allocation2 + $0x3b4] sm:$0xf]
    %v228 = vld [vmem:[#allocation2 + $0x3b8] sm:$0xff]
    %v229 = vld [vmem:[#allocation2 + $0x3c0] sm:$0xff]
    %v230 = vld [vmem:[#allocation2 + $0x3c8] sm:$0xff]
    %v231 = vld [vmem:[#allocation2 + $0x3d0] sm:$0xf]
    %v232 = vld [vmem:[#allocation2 + $0x3d4] sm:$0xff]
    %v233 = vld [vmem:[#allocation2 + $0x3dc] sm:$0xff]
    %v234 = vld [vmem:[#allocation2 + $0x3e4] sm:$0xff]
    %v235 = vld [vmem:[#allocation2 + $0x3ec] sm:$0xf]
    %v236 = vld [vmem:[#allocation2 + $0x3f0] sm:$0xff]
    %v237 = vld [vmem:[#allocation2 + $0x3f8] sm:$0xff]
    %v238 = vld [vmem:[#allocation2 + $0x400] sm:$0xff]
    %v239 = vld [vmem:[#allocation2 + $0x408] sm:$0xf]
    %v240 = vld [vmem:[#allocation2 + $0x40c] sm:$0xff]
    %v241 = vld [vmem:[#allocation2 + $0x414] sm:$0xff]
    %v242 = vld [vmem:[#allocation2 + $0x41c] sm:$0xff]
    %v243 = vld [vmem:[#allocation2 + $0x424] sm:$0xf]
    %v244 = vld [vmem:[#allocation2 + $0x428] sm:$0xff]
    %v245 = vld [vmem:[#allocation2 + $0x430] sm:$0xff]
    %v246 = vld [vmem:[#allocation2 + $0x438] sm:$0xff]
    %v247 = vld [vmem:[#allocation2 + $0x440] sm:$0xf]
    %v248 = vld [vmem:[#allocation2 + $0x444] sm:$0xff]
    %v249 = vld [vmem:[#allocation2 + $0x44c] sm:$0xff]
    %v250 = vld [vmem:[#allocation2 + $0x454] sm:$0xff]
    %v251 = vld [vmem:[#allocation2 + $0x45c] sm:$0xf]
    %v252 = vld [vmem:[#allocation2 + $0x460] sm:$0xff]
    %v253 = vld [vmem:[#allocation2 + $0x468] sm:$0xff]
    %v254 = vld [vmem:[#allocation2 + $0x470] sm:$0xff]
    %v255 = vld [vmem:[#allocation2 + $0x478] sm:$0xf]
    %v256 = vld [vmem:[#allocation2 + $0x47c] sm:$0xff]
    %v257 = vld [vmem:[#allocation2 + $0x484] sm:$0xff]
    %v258 = vld [vmem:[#allocation2 + $0x48c] sm:$0xff]
    %v259 = vld [vmem:[#allocation2 + $0x494] sm:$0xf]
    %v260 = vld [vmem:[#allocation2 + $0x498] sm:$0xff]
    %v261 = vld [vmem:[#allocation2 + $0x4a0] sm:$0xff]
    %v262 = vld [vmem:[#allocation2 + $0x4a8] sm:$0xff]
    %v263 = vld [vmem:[#allocation2 + $0x4b0] sm:$0xf]
    %v264 = vld [vmem:[#allocation2 + $0x4b4] sm:$0xff]
    %v265 = vld [vmem:[#allocation2 + $0x4bc] sm:$0xff]
    %v266 = vld [vmem:[#allocation2 + $0x4c4] sm:$0xff]
    %v267 = vld [vmem:[#allocation2 + $0x4cc] sm:$0xf]
    %v268 = vld [vmem:[#allocation2 + $0x4d0] sm:$0xff]
    %v269 = vld [vmem:[#allocation2 + $0x4d8] sm:$0xff]
    %v270 = vld [vmem:[#allocation2 + $0x4e0] sm:$0xff]
    %v271 = vld [vmem:[#allocation2 + $0x4e8] sm:$0xf]
    %v272 = vld [vmem:[#allocation2 + $0x4ec] sm:$0xff]
    %v273 = vld [vmem:[#allocation2 + $0x4f4] sm:$0xff]
    %v274 = vld [vmem:[#allocation2 + $0x4fc] sm:$0xff]
    %v275 = vld [vmem:[#allocation2 + $0x504] sm:$0xf]
    %v276 = vld [vmem:[#allocation2 + $0x508] sm:$0xff]
    %v277 = vld [vmem:[#allocation2 + $0x510] sm:$0xff]
    %v278 = vld [vmem:[#allocation2 + $0x518] sm:$0xff]
    %v279 = vld [vmem:[#allocation2 + $0x520] sm:$0xf]
    %v280 = vld [vmem:[#allocation2 + $0x524] sm:$0xff]
    %v281 = vld [vmem:[#allocation2 + $0x52c] sm:$0xff]
    %v282 = vld [vmem:[#allocation2 + $0x534] sm:$0xff]
    %v283 = vld [vmem:[#allocation2 + $0x53c] sm:$0xf]
    %v284 = vld [vmem:[#allocation2 + $0x540] sm:$0xff]
    %v285 = vld [vmem:[#allocation2 + $0x548] sm:$0xff]
    %v286 = vld [vmem:[#allocation2 + $0x550] sm:$0xff]
    %v287 = vld [vmem:[#allocation2 + $0x558] sm:$0xf]
    %v288 = vld [vmem:[#allocation2 + $0x55c] sm:$0xff]
    %v289 = vld [vmem:[#allocation2 + $0x564] sm:$0xff]
    %v290 = vld [vmem:[#allocation2 + $0x56c] sm:$0xff]
    %v291 = vld [vmem:[#allocation2 + $0x574] sm:$0xf]
    %v292 = vld [vmem:[#allocation2 + $0x578] sm:$0xff]
    %v293 = vld [vmem:[#allocation2 + $0x580] sm:$0xff]
    %v294 = vld [vmem:[#allocation2 + $0x588] sm:$0xff]
    %v295 = vld [vmem:[#allocation2 + $0x590] sm:$0xf]
    %v296 = vld [vmem:[#allocation2 + $0x594] sm:$0xff]
    %v297 = vld [vmem:[#allocation2 + $0x59c] sm:$0xff]
    %v298 = vld [vmem:[#allocation2 + $0x5a4] sm:$0xff]
    %v299 = vld [vmem:[#allocation2 + $0x5ac] sm:$0xf]
    %v300 = vld [vmem:[#allocation2 + $0x5b0] sm:$0xff]
    %v301 = vld [vmem:[#allocation2 + $0x5b8] sm:$0xff]
    %v302 = vld [vmem:[#allocation2 + $0x5c0] sm:$0xff]
    %v303 = vld [vmem:[#allocation2 + $0x5c8] sm:$0xf]
    %v304 = vld [vmem:[#allocation2 + $0x5cc] sm:$0xff]
    %v305 = vld [vmem:[#allocation2 + $0x5d4] sm:$0xff]
    %v306 = vld [vmem:[#allocation2 + $0x5dc] sm:$0xff]
    %v307 = vld [vmem:[#allocation2 + $0x5e4] sm:$0xf]
    %v308 = vld [vmem:[#allocation2 + $0x5e8] sm:$0xff]
    %v309 = vld [vmem:[#allocation2 + $0x5f0] sm:$0xff]
    %v310 = vld [vmem:[#allocation2 + $0x5f8] sm:$0xff]
    %v311 = vld [vmem:[#allocation2 + $0x600] sm:$0xf]
    %v312 = vld [vmem:[#allocation2 + $0x604] sm:$0xff]
    %v313 = vld [vmem:[#allocation2 + $0x60c] sm:$0xff]
    %v314 = vld [vmem:[#allocation2 + $0x614] sm:$0xff]
    %v315 = vld [vmem:[#allocation2 + $0x61c] sm:$0xf]
    %v316 = vld [vmem:[#allocation2 + $0x620] sm:$0xff]
    %v317 = vld [vmem:[#allocation2 + $0x628] sm:$0xff]
    %v318 = vld [vmem:[#allocation2 + $0x630] sm:$0xff]
    %v319 = vld [vmem:[#allocation2 + $0x638] sm:$0xf]
    %v320 = vld [vmem:[#allocation2 + $0x63c] sm:$0xff]
    %v321 = vld [vmem:[#allocation2 + $0x644] sm:$0xff]
    %v322 = vld [vmem:[#allocation2 + $0x64c] sm:$0xff]
    %v323 = vld [vmem:[#allocation2 + $0x654] sm:$0xf]
    %v324 = vld [vmem:[#allocation2 + $0x658] sm:$0xff]
    %v325 = vld [vmem:[#allocation2 + $0x660] sm:$0xff]
    %v326 = vld [vmem:[#allocation2 + $0x668] sm:$0xff]
    %v327 = vld [vmem:[#allocation2 + $0x670] sm:$0xf]
    %v328 = vld [vmem:[#allocation2 + $0x674] sm:$0xff]
    %v329 = vld [vmem:[#allocation2 + $0x67c] sm:$0xff]
    %v330 = vld [vmem:[#allocation2 + $0x684] sm:$0xff]
    %v331 = vld [vmem:[#allocation2 + $0x68c] sm:$0xf]
    %v332 = vld [vmem:[#allocation2 + $0x690] sm:$0xff]
    %v333 = vld [vmem:[#allocation2 + $0x698] sm:$0xff]
    %v334 = vld [vmem:[#allocation2 + $0x6a0] sm:$0xff]
    %v335 = vld [vmem:[#allocation2 + $0x6a8] sm:$0xf]
    %v336 = vld [vmem:[#allocation2 + $0x6ac] sm:$0xff]
    %v337 = vld [vmem:[#allocation2 + $0x6b4] sm:$0xff]
    %v338 = vld [vmem:[#allocation2 + $0x6bc] sm:$0xff]
    %v339 = vld [vmem:[#allocation2 + $0x6c4] sm:$0xf]
    %v340 = vld [vmem:[#allocation2 + $0x6c8] sm:$0xff]
    %v341 = vld [vmem:[#allocation2 + $0x6d0] sm:$0xff]
    %v342 = vld [vmem:[#allocation2 + $0x6d8] sm:$0xff]
    %v343 = vld [vmem:[#allocation2 + $0x6e0] sm:$0xf]
    %v344 = vld [vmem:[#allocation2 + $0x6e4] sm:$0xff]
    %v345 = vld [vmem:[#allocation2 + $0x6ec] sm:$0xff]
    %v346 = vld [vmem:[#allocation2 + $0x6f4] sm:$0xff]
    %v347 = vld [vmem:[#allocation2 + $0x6fc] sm:$0xf]
    %v348 = vld [vmem:[#allocation2 + $0x700] sm:$0xff]
    %v349 = vld [vmem:[#allocation2 + $0x708] sm:$0xff]
    %v350 = vld [vmem:[#allocation2 + $0x710] sm:$0xff]
    %v351 = vld [vmem:[#allocation2 + $0x718] sm:$0xf]
    %v352 = vld [vmem:[#allocation2 + $0x71c] sm:$0xff]
    %v353 = vld [vmem:[#allocation2 + $0x724] sm:$0xff]
    %v354 = vld [vmem:[#allocation2 + $0x72c] sm:$0xff]
    %v355 = vld [vmem:[#allocation2 + $0x734] sm:$0xf]
    %v356 = vld [vmem:[#allocation2 + $0x738] sm:$0xff]
    %v357 = vld [vmem:[#allocation2 + $0x740] sm:$0xff]
    %v358 = vld [vmem:[#allocation2 + $0x748] sm:$0xff]
    %v359 = vld [vmem:[#allocation2 + $0x750] sm:$0xf]
    %v360 = vld [vmem:[#allocation2 + $0x754] sm:$0xff]
    %v361 = vld [vmem:[#allocation2 + $0x75c] sm:$0xff]
    %v362 = vld [vmem:[#allocation2 + $0x764] sm:$0xff]
    %v363 = vld [vmem:[#allocation2 + $0x76c] sm:$0xf]
    %v364 = vld [vmem:[#allocation2 + $0x770] sm:$0xff]
    %v365 = vld [vmem:[#allocation2 + $0x778] sm:$0xff]
    %v366 = vld [vmem:[#allocation2 + $0x780] sm:$0xff]
    %v367 = vld [vmem:[#allocation2 + $0x788] sm:$0xf]
    %v368 = vld [vmem:[#allocation2 + $0x78c] sm:$0xff]
    %v369 = vld [vmem:[#allocation2 + $0x794] sm:$0xff]
    %v370 = vld [vmem:[#allocation2 + $0x79c] sm:$0xff]
    %v371 = vld [vmem:[#allocation2 + $0x7a4] sm:$0xf]
    %v372 = vld [vmem:[#allocation2 + $0x7a8] sm:$0xff]
    %v373 = vld [vmem:[#allocation2 + $0x7b0] sm:$0xff]
    %v374 = vld [vmem:[#allocation2 + $0x7b8] sm:$0xff]
    %v375 = vld [vmem:[#allocation2 + $0x7c0] sm:$0xf]
    %v376 = vld [vmem:[#allocation2 + $0x7c4] sm:$0xff]
    %v377 = vld [vmem:[#allocation2 + $0x7cc] sm:$0xff]
    %v378 = vld [vmem:[#allocation2 + $0x7d4] sm:$0xff]
    %v379 = vld [vmem:[#allocation2 + $0x7dc] sm:$0xf]
    %v380 = vld [vmem:[#allocation2 + $0x7e0] sm:$0xff]
    %v381 = vld [vmem:[#allocation2 + $0x7e8] sm:$0xff]
    %v382 = vld [vmem:[#allocation2 + $0x7f0] sm:$0xff]
    %v383 = vld [vmem:[#allocation2 + $0x7f8] sm:$0xf]
    %v384 = vld [vmem:[#allocation2 + $0x7fc] sm:$0xff]
    %v385 = vld [vmem:[#allocation2 + $0x804] sm:$0xff]
    %v386 = vld [vmem:[#allocation2 + $0x80c] sm:$0xff]
    %v387 = vld [vmem:[#allocation2 + $0x814] sm:$0xf]
    %v388 = vld [vmem:[#allocation2 + $0x818] sm:$0xff]
    %v389 = vld [vmem:[#allocation2 + $0x820] sm:$0xff]
    %v390 = vld [vmem:[#allocation2 + $0x828] sm:$0xff]
    %v391 = vld [vmem:[#allocation2 + $0x830] sm:$0xf]
    %v392 = vld [vmem:[#allocation2 + $0x834] sm:$0xff]
    %v393 = vld [vmem:[#allocation2 + $0x83c] sm:$0xff]
    %v394 = vld [vmem:[#allocation2 + $0x844] sm:$0xff]
    %v395 = vld [vmem:[#allocation2 + $0x84c] sm:$0xf]
    %v396 = vld [vmem:[#allocation2 + $0x850] sm:$0xff]
    %v397 = vld [vmem:[#allocation2 + $0x858] sm:$0xff]
    %v398 = vld [vmem:[#allocation2 + $0x860] sm:$0xff]
    %v399 = vld [vmem:[#allocation2 + $0x868] sm:$0xf]
    %v400 = vld [vmem:[#allocation2 + $0x86c] sm:$0xff]
    %v401 = vld [vmem:[#allocation2 + $0x874] sm:$0xff]
    %v402 = vld [vmem:[#allocation2 + $0x87c] sm:$0xff]
    %v403 = vld [vmem:[#allocation2 + $0x884] sm:$0xf]
    %v404 = vld [vmem:[#allocation2 + $0x888] sm:$0xff]
    %v405 = vld [vmem:[#allocation2 + $0x890] sm:$0xff]
    %v406 = vld [vmem:[#allocation2 + $0x898] sm:$0xff]
    %v407 = vld [vmem:[#allocation2 + $0x8a0] sm:$0xf]
    %v408 = vld [vmem:[#allocation2 + $0x8a4] sm:$0xff]
    %v409 = vld [vmem:[#allocation2 + $0x8ac] sm:$0xff]
    %v410 = vld [vmem:[#allocation2 + $0x8b4] sm:$0xff]
    %v411 = vld [vmem:[#allocation2 + $0x8bc] sm:$0xf]
    %v412 = vld [vmem:[#allocation2 + $0x8c0] sm:$0xff]
    %v413 = vld [vmem:[#allocation2 + $0x8c8] sm:$0xff]
    %v414 = vld [vmem:[#allocation2 + $0x8d0] sm:$0xff]
    %v415 = vld [vmem:[#allocation2 + $0x8d8] sm:$0xf]
    %v416 = vld [vmem:[#allocation2 + $0x8dc] sm:$0xff]
    %v417 = vld [vmem:[#allocation2 + $0x8e4] sm:$0xff]
    %v418 = vld [vmem:[#allocation2 + $0x8ec] sm:$0xff]
    %v419 = vld [vmem:[#allocation2 + $0x8f4] sm:$0xf]
    %v420 = vld [vmem:[#allocation2 + $0x8f8] sm:$0xff]
    %v421 = vld [vmem:[#allocation2 + $0x900] sm:$0xff]
    %v422 = vld [vmem:[#allocation2 + $0x908] sm:$0xff]
    %v423 = vld [vmem:[#allocation2 + $0x910] sm:$0xf]
    %v424 = vld [vmem:[#allocation2 + $0x914] sm:$0xff]
    %v425 = vld [vmem:[#allocation2 + $0x91c] sm:$0xff]
    %v426 = vld [vmem:[#allocation2 + $0x924] sm:$0xff]
    %v427 = vld [vmem:[#allocation2 + $0x92c] sm:$0xf]
    %v428 = vld [vmem:[#allocation2 + $0x930] sm:$0xff]
    %v429 = vld [vmem:[#allocation2 + $0x938] sm:$0xff]
    %v430 = vld [vmem:[#allocation2 + $0x940] sm:$0xff]
    %v431 = vld [vmem:[#allocation2 + $0x948] sm:$0xf]
    %v432 = vld [vmem:[#allocation2 + $0x94c] sm:$0xff]
    %v433 = vld [vmem:[#allocation2 + $0x954] sm:$0xff]
    %v434 = vld [vmem:[#allocation2 + $0x95c] sm:$0xff]
    %v435 = vld [vmem:[#allocation2 + $0x964] sm:$0xf]
    %v436 = vld [vmem:[#allocation2 + $0x968] sm:$0xff]
    %v437 = vld [vmem:[#allocation2 + $0x970] sm:$0xff]
    %v438 = vld [vmem:[#allocation2 + $0x978] sm:$0xff]
    %v439 = vld [vmem:[#allocation2 + $0x980] sm:$0xf]
    %v440 = vld [vmem:[#allocation2 + $0x984] sm:$0xff]
    %v441 = vld [vmem:[#allocation2 + $0x98c] sm:$0xff]
    %v442 = vld [vmem:[#allocation2 + $0x994] sm:$0xff]
    %v443 = vld [vmem:[#allocation2 + $0x99c] sm:$0xf]
    %v444 = vld [vmem:[#allocation2 + $0x9a0] sm:$0xff]
    %v445 = vld [vmem:[#allocation2 + $0x9a8] sm:$0xff]
    %v446 = vld [vmem:[#allocation2 + $0x9b0] sm:$0xff]
    %v447 = vld [vmem:[#allocation2 + $0x9b8] sm:$0xf]
    %v448 = vld [vmem:[#allocation2 + $0x9bc] sm:$0xff]
    %v449 = vld [vmem:[#allocation2 + $0x9c4] sm:$0xff]
    %v450 = vld [vmem:[#allocation2 + $0x9cc] sm:$0xff]
    %v451 = vld [vmem:[#allocation2 + $0x9d4] sm:$0xf]
    %v452 = vld [vmem:[#allocation2 + $0x9d8] sm:$0xff]
    %v453 = vld [vmem:[#allocation2 + $0x9e0] sm:$0xff]
    %v454 = vld [vmem:[#allocation2 + $0x9e8] sm:$0xff]
    %v455 = vld [vmem:[#allocation2 + $0x9f0] sm:$0xf]
    %v456 = vld [vmem:[#allocation2 + $0x9f4] sm:$0xff]
    %v457 = vld [vmem:[#allocation2 + $0x9fc] sm:$0xff]
    %v458 = vld [vmem:[#allocation2 + $0xa04] sm:$0xff]
    %v459 = vld [vmem:[#allocation2 + $0xa0c] sm:$0xf]
    %v460 = vld [vmem:[#allocation2 + $0xa10] sm:$0xff]
    %v461 = vld [vmem:[#allocation2 + $0xa18] sm:$0xff]
    %v462 = vld [vmem:[#allocation2 + $0xa20] sm:$0xff]
    %v463 = vld [vmem:[#allocation2 + $0xa28] sm:$0xf]
    %v464 = vld [vmem:[#allocation2 + $0xa2c] sm:$0xff]
    %v465 = vld [vmem:[#allocation2 + $0xa34] sm:$0xff]
    %v466 = vld [vmem:[#allocation2 + $0xa3c] sm:$0xff]
    %v467 = vld [vmem:[#allocation2 + $0xa44] sm:$0xf]
    %v468 = vld [vmem:[#allocation2 + $0xa48] sm:$0xff]
    %v469 = vld [vmem:[#allocation2 + $0xa50] sm:$0xff]
    %v470 = vld [vmem:[#allocation2 + $0xa58] sm:$0xff]
    %v471 = vld [vmem:[#allocation2 + $0xa60] sm:$0xf]
    %v472 = vld [vmem:[#allocation2 + $0xa64] sm:$0xff]
    %v473 = vld [vmem:[#allocation2 + $0xa6c] sm:$0xff]
    %v474 = vld [vmem:[#allocation2 + $0xa74] sm:$0xff]
    %v475 = vld [vmem:[#allocation2 + $0xa7c] sm:$0xf]
    %v476 = vld [vmem:[#allocation2 + $0xa80] sm:$0xff]
    %v477 = vld [vmem:[#allocation2 + $0xa88] sm:$0xff]
    %v478 = vld [vmem:[#allocation2 + $0xa90] sm:$0xff]
    %v479 = vld [vmem:[#allocation2 + $0xa98] sm:$0xf]
    %v480 = vld [vmem:[#allocation2 + $0xa9c] sm:$0xff]
    %v481 = vld [vmem:[#allocation2 + $0xaa4] sm:$0xff]
    %v482 = vld [vmem:[#allocation2 + $0xaac] sm:$0xff]
    %v483 = vld [vmem:[#allocation2 + $0xab4] sm:$0xf]
    %v484 = vld [vmem:[%s0] sm:$0xf]
    %v485 = vld [vmem:[%s0 + $0x4] sm:$0xf]
    %v486 = vld [vmem:[%s0 + $0x8] sm:$0xf]
    %v487 = vld [vmem:[%s0 + $0xc] sm:$0xf]
    %v488 = vld [vmem:[%s0 + $0x10] sm:$0xf]
    %v489 = vld [vmem:[%s0 + $0x14] sm:$0xf]
    %v490 = vld [vmem:[%s0 + $0x18] sm:$0xf]
    %v491 = vld [vmem:[%s0 + $0x1c] sm:$0xf]
    %v492 = vld [vmem:[%s0 + $0x20] sm:$0xf]
    %v493 = vld [vmem:[%s0 + $0x24] sm:$0xf]
    %v494 = vld [vmem:[%s0 + $0x28] sm:$0xf]
    %v495 = vld [vmem:[%s0 + $0x2c] sm:$0xf]
    %v496 = vld [vmem:[%s0 + $0x30] sm:$0xf]
    %v497 = vld [vmem:[%s0 + $0x34] sm:$0xf]
    %v498 = vld [vmem:[%s0 + $0x38] sm:$0xf]
    %v499 = vld [vmem:[%s0 + $0x3c] sm:$0xf]
    %v500 = vld [vmem:[%s0 + $0x40] sm:$0xf]
    %v501 = vld [vmem:[%s0 + $0x44] sm:$0xf]
    %v502 = vld [vmem:[%s0 + $0x48] sm:$0xf]
    %v503 = vld [vmem:[%s0 + $0x4c] sm:$0xf]
    %v504 = vld [vmem:[%s0 + $0x50] sm:$0xf]
    %v505 = vld [vmem:[%s0 + $0x54] sm:$0xf]
    %v506 = vld [vmem:[%s0 + $0x58] sm:$0xf]
    %v507 = vld [vmem:[%s0 + $0x5c] sm:$0xf]
    %v508 = vld [vmem:[%s0 + $0x60] sm:$0xf]
    %v509 = vld [vmem:[%s0 + $0x64] sm:$0xf]
    %v510 = vld [vmem:[%s0 + $0x68] sm:$0xf]
    %v511 = vld [vmem:[%s0 + $0x6c] sm:$0xf]
    %v512 = vld [vmem:[%s0 + $0x70] sm:$0xf]
    %v513 = vld [vmem:[%s0 + $0x74] sm:$0xf]
    %v514 = vld [vmem:[%s0 + $0x78] sm:$0xf]
    %v515 = vld [vmem:[%s0 + $0x7c] sm:$0xf]
    %v516 = vld [vmem:[%s0 + $0x80] sm:$0xf]
    %v517 = vld [vmem:[%s0 + $0x84] sm:$0xf]
    %v518 = vld [vmem:[%s0 + $0x88] sm:$0xf]
    %v519 = vld [vmem:[%s0 + $0x8c] sm:$0xf]
    %v520 = vld [vmem:[%s0 + $0x90] sm:$0xf]
    %v521 = vld [vmem:[%s0 + $0x94] sm:$0xf]
    %v522 = vld [vmem:[%s0 + $0x98] sm:$0xf]
    %v523 = vld [vmem:[%s0 + $0x9c] sm:$0xf]
    %v524 = vld [vmem:[%s0 + $0xa0] sm:$0xf]
    %v525 = vld [vmem:[%s0 + $0xa4] sm:$0xf]
    %v526 = vld [vmem:[%s0 + $0xa8] sm:$0xf]
    %v527 = vld [vmem:[%s0 + $0xac] sm:$0xf]
    %v528 = vld [vmem:[%s0 + $0xb0] sm:$0xf]
    %v529 = vld [vmem:[%s0 + $0xb4] sm:$0xf]
    %v530 = vld [vmem:[%s0 + $0xb8] sm:$0xf]
    %v531 = vld [vmem:[%s0 + $0xbc] sm:$0xf]
    %v532 = vld [vmem:[%s0 + $0xc0] sm:$0xf]
    %v533 = vld [vmem:[%s0 + $0xc4] sm:$0xf]
    %v534 = vld [vmem:[%s0 + $0xc8] sm:$0xf]
    %v535 = vld [vmem:[%s0 + $0xcc] sm:$0xf]
    %v536 = vld [vmem:[%s0 + $0xd0] sm:$0xf]
    %v537 = vld [vmem:[%s0 + $0xd4] sm:$0xf]
    %v538 = vld [vmem:[%s0 + $0xd8] sm:$0xf]
    %v539 = vld [vmem:[%s0 + $0xdc] sm:$0xf]
    %v540 = vld [vmem:[%s0 + $0xe0] sm:$0xf]
    %v541 = vld [vmem:[%s0 + $0xe4] sm:$0xf]
    %v542 = vld [vmem:[%s0 + $0xe8] sm:$0xf]
    %v543 = vld [vmem:[%s0 + $0xec] sm:$0xf]
    %v544 = vld [vmem:[%s0 + $0xf0] sm:$0xf]
    %v545 = vld [vmem:[%s0 + $0xf4] sm:$0xf]
    %v546 = vld [vmem:[%s0 + $0xf8] sm:$0xf]
    %v547 = vld [vmem:[%s0 + $0xfc] sm:$0xf]
    %v548 = vld [vmem:[%s0 + $0x100] sm:$0xf]
    %v549 = vld [vmem:[%s0 + $0x104] sm:$0xf]
    %v550 = vld [vmem:[%s0 + $0x108] sm:$0xf]
    %v551 = vld [vmem:[%s0 + $0x10c] sm:$0xf]
    %v552 = vld [vmem:[%s0 + $0x110] sm:$0xf]
    %v553 = vld [vmem:[%s0 + $0x114] sm:$0xf]
    %v554 = vld [vmem:[%s0 + $0x118] sm:$0xf]
    %v555 = vld [vmem:[%s0 + $0x11c] sm:$0xf]
    %v556 = vld [vmem:[%s0 + $0x120] sm:$0xf]
    %v557 = vld [vmem:[%s0 + $0x124] sm:$0xf]
    %v558 = vld [vmem:[%s0 + $0x128] sm:$0xf]
    %v559 = vld [vmem:[%s0 + $0x12c] sm:$0xf]
    %v560 = vld [vmem:[%s0 + $0x130] sm:$0xf]
    %v561 = vld [vmem:[%s0 + $0x134] sm:$0xf]
    %v562 = vld [vmem:[%s0 + $0x138] sm:$0xf]
    %v563 = vld [vmem:[%s0 + $0x13c] sm:$0xf]
    %v564 = vld [vmem:[%s0 + $0x140] sm:$0xf]
    %v565 = vld [vmem:[%s0 + $0x144] sm:$0xf]
    %v566 = vld [vmem:[%s0 + $0x148] sm:$0xf]
    %v567 = vld [vmem:[%s0 + $0x14c] sm:$0xf]
    %v568 = vld [vmem:[%s0 + $0x150] sm:$0xf]
    %v569 = vld [vmem:[%s0 + $0x154] sm:$0xf]
    %v570 = vld [vmem:[%s0 + $0x158] sm:$0xf]
    %v571 = vld [vmem:[%s0 + $0x15c] sm:$0xf]
    %v572 = vld [vmem:[%s0 + $0x160] sm:$0xf]
    %v573 = vld [vmem:[%s0 + $0x164] sm:$0xf]
    %v574 = vld [vmem:[%s0 + $0x168] sm:$0xf]
    %v575 = vld [vmem:[%s0 + $0x16c] sm:$0xf]
    %v576 = vld [vmem:[%s0 + $0x170] sm:$0xf]
    %v577 = vld [vmem:[%s0 + $0x174] sm:$0xf]
    %v578 = vld [vmem:[%s0 + $0x178] sm:$0xf]
    %v579 = vld [vmem:[%s0 + $0x17c] sm:$0xf]
    %v580 = vld [vmem:[%s0 + $0x180] sm:$0xf]
    %v581 = vld [vmem:[%s0 + $0x184] sm:$0xf]
    %v974 = vunpack.c.l.b16 %v92
    %v975 = vunpack.c.h.b16 %v92
    %v976 = vunpack.c.l.b16 %v93
    %v977 = vunpack.c.h.b16 %v93
    %v978 = vunpack.c.l.b16 %v94
    %v979 = vunpack.c.h.b16 %v94
    %v980 = vunpack.c.l.b16 %v95
    %v981 = vunpack.c.l.b16 %v96
    %v982 = vunpack.c.h.b16 %v96
    %v983 = vunpack.c.l.b16 %v97
    %v984 = vunpack.c.h.b16 %v97
    %v985 = vunpack.c.l.b16 %v98
    %v986 = vunpack.c.h.b16 %v98
    %v987 = vunpack.c.l.b16 %v99
    %v988 = vunpack.c.l.b16 %v100
    %v989 = vunpack.c.h.b16 %v100
    %v990 = vunpack.c.l.b16 %v101
    %v991 = vunpack.c.h.b16 %v101
    %v992 = vunpack.c.l.b16 %v102
    %v993 = vunpack.c.h.b16 %v102
    %v994 = vunpack.c.l.b16 %v103
    %v995 = vunpack.c.l.b16 %v104
    %v996 = vunpack.c.h.b16 %v104
    %v997 = vunpack.c.l.b16 %v105
    %v998 = vunpack.c.h.b16 %v105
    %v999 = vunpack.c.l.b16 %v106
    %v1000 = vunpack.c.h.b16 %v106
    %v1001 = vunpack.c.l.b16 %v107
    %v1002 = vunpack.c.l.b16 %v108
    %v1003 = vunpack.c.h.b16 %v108
    %v1004 = vunpack.c.l.b16 %v109
    %v1005 = vunpack.c.h.b16 %v109
    %v1006 = vunpack.c.l.b16 %v110
    %v1007 = vunpack.c.h.b16 %v110
    %v1008 = vunpack.c.l.b16 %v111
    %v1009 = vunpack.c.l.b16 %v112
    %v1010 = vunpack.c.h.b16 %v112
    %v1011 = vunpack.c.l.b16 %v113
    %v1012 = vunpack.c.h.b16 %v113
    %v1013 = vunpack.c.l.b16 %v114
    %v1014 = vunpack.c.h.b16 %v114
    %v1015 = vunpack.c.l.b16 %v115
    %v1016 = vunpack.c.l.b16 %v116
    %v1017 = vunpack.c.h.b16 %v116
    %v1018 = vunpack.c.l.b16 %v117
    %v1019 = vunpack.c.h.b16 %v117
    %v1020 = vunpack.c.l.b16 %v118
    %v1021 = vunpack.c.h.b16 %v118
    %v1022 = vunpack.c.l.b16 %v119
    %v1023 = vunpack.c.l.b16 %v120
    %v1024 = vunpack.c.h.b16 %v120
    %v1025 = vunpack.c.l.b16 %v121
    %v1026 = vunpack.c.h.b16 %v121
    %v1027 = vunpack.c.l.b16 %v122
    %v1028 = vunpack.c.h.b16 %v122
    %v1029 = vunpack.c.l.b16 %v123
    %v1030 = vunpack.c.l.b16 %v124
    %v1031 = vunpack.c.h.b16 %v124
    %v1032 = vunpack.c.l.b16 %v125
    %v1033 = vunpack.c.h.b16 %v125
    %v1034 = vunpack.c.l.b16 %v126
    %v1035 = vunpack.c.h.b16 %v126
    %v1036 = vunpack.c.l.b16 %v127
    %v1037 = vunpack.c.l.b16 %v128
    %v1038 = vunpack.c.h.b16 %v128
    %v1039 = vunpack.c.l.b16 %v129
    %v1040 = vunpack.c.h.b16 %v129
    %v1041 = vunpack.c.l.b16 %v130
    %v1042 = vunpack.c.h.b16 %v130
    %v1043 = vunpack.c.l.b16 %v131
    %v1044 = vunpack.c.l.b16 %v132
    %v1045 = vunpack.c.h.b16 %v132
    %v1046 = vunpack.c.l.b16 %v133
    %v1047 = vunpack.c.h.b16 %v133
    %v1048 = vunpack.c.l.b16 %v134
    %v1049 = vunpack.c.h.b16 %v134
    %v1050 = vunpack.c.l.b16 %v135
    %v1051 = vunpack.c.l.b16 %v136
    %v1052 = vunpack.c.h.b16 %v136
    %v1053 = vunpack.c.l.b16 %v137
    %v1054 = vunpack.c.h.b16 %v137
    %v1055 = vunpack.c.l.b16 %v138
    %v1056 = vunpack.c.h.b16 %v138
    %v1057 = vunpack.c.l.b16 %v139
    %v1058 = vunpack.c.l.b16 %v140
    %v1059 = vunpack.c.h.b16 %v140
    %v1060 = vunpack.c.l.b16 %v141
    %v1061 = vunpack.c.h.b16 %v141
    %v1062 = vunpack.c.l.b16 %v142
    %v1063 = vunpack.c.h.b16 %v142
    %v1064 = vunpack.c.l.b16 %v143
    %v1065 = vunpack.c.l.b16 %v144
    %v1066 = vunpack.c.h.b16 %v144
    %v1067 = vunpack.c.l.b16 %v145
    %v1068 = vunpack.c.h.b16 %v145
    %v1069 = vunpack.c.l.b16 %v146
    %v1070 = vunpack.c.h.b16 %v146
    %v1071 = vunpack.c.l.b16 %v147
    %v1072 = vunpack.c.l.b16 %v148
    %v1073 = vunpack.c.h.b16 %v148
    %v1074 = vunpack.c.l.b16 %v149
    %v1075 = vunpack.c.h.b16 %v149
    %v1076 = vunpack.c.l.b16 %v150
    %v1077 = vunpack.c.h.b16 %v150
    %v1078 = vunpack.c.l.b16 %v151
    %v1079 = vunpack.c.l.b16 %v152
    %v1080 = vunpack.c.h.b16 %v152
    %v1081 = vunpack.c.l.b16 %v153
    %v1082 = vunpack.c.h.b16 %v153
    %v1083 = vunpack.c.l.b16 %v154
    %v1084 = vunpack.c.h.b16 %v154
    %v1085 = vunpack.c.l.b16 %v155
    %v1086 = vunpack.c.l.b16 %v156
    %v1087 = vunpack.c.h.b16 %v156
    %v1088 = vunpack.c.l.b16 %v157
    %v1089 = vunpack.c.h.b16 %v157
    %v1090 = vunpack.c.l.b16 %v158
    %v1091 = vunpack.c.h.b16 %v158
    %v1092 = vunpack.c.l.b16 %v159
    %v1093 = vunpack.c.l.b16 %v160
    %v1094 = vunpack.c.h.b16 %v160
    %v1095 = vunpack.c.l.b16 %v161
    %v1096 = vunpack.c.h.b16 %v161
    %v1097 = vunpack.c.l.b16 %v162
    %v1098 = vunpack.c.h.b16 %v162
    %v1099 = vunpack.c.l.b16 %v163
    %v1100 = vunpack.c.l.b16 %v164
    %v1101 = vunpack.c.h.b16 %v164
    %v1102 = vunpack.c.l.b16 %v165
    %v1103 = vunpack.c.h.b16 %v165
    %v1104 = vunpack.c.l.b16 %v166
    %v1105 = vunpack.c.h.b16 %v166
    %v1106 = vunpack.c.l.b16 %v167
    %v1107 = vunpack.c.l.b16 %v168
    %v1108 = vunpack.c.h.b16 %v168
    %v1109 = vunpack.c.l.b16 %v169
    %v1110 = vunpack.c.h.b16 %v169
    %v1111 = vunpack.c.l.b16 %v170
    %v1112 = vunpack.c.h.b16 %v170
    %v1113 = vunpack.c.l.b16 %v171
    %v1114 = vunpack.c.l.b16 %v172
    %v1115 = vunpack.c.h.b16 %v172
    %v1116 = vunpack.c.l.b16 %v173
    %v1117 = vunpack.c.h.b16 %v173
    %v1118 = vunpack.c.l.b16 %v174
    %v1119 = vunpack.c.h.b16 %v174
    %v1120 = vunpack.c.l.b16 %v175
    %v1121 = vunpack.c.l.b16 %v176
    %v1122 = vunpack.c.h.b16 %v176
    %v1123 = vunpack.c.l.b16 %v177
    %v1124 = vunpack.c.h.b16 %v177
    %v1125 = vunpack.c.l.b16 %v178
    %v1126 = vunpack.c.h.b16 %v178
    %v1127 = vunpack.c.l.b16 %v179
    %v1128 = vunpack.c.l.b16 %v180
    %v1129 = vunpack.c.h.b16 %v180
    %v1130 = vunpack.c.l.b16 %v181
    %v1131 = vunpack.c.h.b16 %v181
    %v1132 = vunpack.c.l.b16 %v182
    %v1133 = vunpack.c.h.b16 %v182
    %v1134 = vunpack.c.l.b16 %v183
    %v1135 = vunpack.c.l.b16 %v184
    %v1136 = vunpack.c.h.b16 %v184
    %v1137 = vunpack.c.l.b16 %v185
    %v1138 = vunpack.c.h.b16 %v185
    %v1139 = vunpack.c.l.b16 %v186
    %v1140 = vunpack.c.h.b16 %v186
    %v1141 = vunpack.c.l.b16 %v187
    %v1142 = vunpack.c.l.b16 %v188
    %v1143 = vunpack.c.h.b16 %v188
    %v1144 = vunpack.c.l.b16 %v189
    %v1145 = vunpack.c.h.b16 %v189
    %v1146 = vunpack.c.l.b16 %v190
    %v1147 = vunpack.c.h.b16 %v190
    %v1148 = vunpack.c.l.b16 %v191
    %v1149 = vunpack.c.l.b16 %v192
    %v1150 = vunpack.c.h.b16 %v192
    %v1151 = vunpack.c.l.b16 %v193
    %v1152 = vunpack.c.h.b16 %v193
    %v1153 = vunpack.c.l.b16 %v194
    %v1154 = vunpack.c.h.b16 %v194
    %v1155 = vunpack.c.l.b16 %v195
    %v1156 = vunpack.c.l.b16 %v196
    %v1157 = vunpack.c.h.b16 %v196
    %v1158 = vunpack.c.l.b16 %v197
    %v1159 = vunpack.c.h.b16 %v197
    %v1160 = vunpack.c.l.b16 %v198
    %v1161 = vunpack.c.h.b16 %v198
    %v1162 = vunpack.c.l.b16 %v199
    %v1163 = vunpack.c.l.b16 %v200
    %v1164 = vunpack.c.h.b16 %v200
    %v1165 = vunpack.c.l.b16 %v201
    %v1166 = vunpack.c.h.b16 %v201
    %v1167 = vunpack.c.l.b16 %v202
    %v1168 = vunpack.c.h.b16 %v202
    %v1169 = vunpack.c.l.b16 %v203
    %v1170 = vunpack.c.l.b16 %v204
    %v1171 = vunpack.c.h.b16 %v204
    %v1172 = vunpack.c.l.b16 %v205
    %v1173 = vunpack.c.h.b16 %v205
    %v1174 = vunpack.c.l.b16 %v206
    %v1175 = vunpack.c.h.b16 %v206
    %v1176 = vunpack.c.l.b16 %v207
    %v1177 = vunpack.c.l.b16 %v208
    %v1178 = vunpack.c.h.b16 %v208
    %v1179 = vunpack.c.l.b16 %v209
    %v1180 = vunpack.c.h.b16 %v209
    %v1181 = vunpack.c.l.b16 %v210
    %v1182 = vunpack.c.h.b16 %v210
    %v1183 = vunpack.c.l.b16 %v211
    %v1184 = vunpack.c.l.b16 %v212
    %v1185 = vunpack.c.h.b16 %v212
    %v1186 = vunpack.c.l.b16 %v213
    %v1187 = vunpack.c.h.b16 %v213
    %v1188 = vunpack.c.l.b16 %v214
    %v1189 = vunpack.c.h.b16 %v214
    %v1190 = vunpack.c.l.b16 %v215
    %v1191 = vunpack.c.l.b16 %v216
    %v1192 = vunpack.c.h.b16 %v216
    %v1193 = vunpack.c.l.b16 %v217
    %v1194 = vunpack.c.h.b16 %v217
    %v1195 = vunpack.c.l.b16 %v218
    %v1196 = vunpack.c.h.b16 %v218
    %v1197 = vunpack.c.l.b16 %v219
    %v1198 = vunpack.c.l.b16 %v220
    %v1199 = vunpack.c.h.b16 %v220
    %v1200 = vunpack.c.l.b16 %v221
    %v1201 = vunpack.c.h.b16 %v221
    %v1202 = vunpack.c.l.b16 %v222
    %v1203 = vunpack.c.h.b16 %v222
    %v1204 = vunpack.c.l.b16 %v223
    %v1205 = vunpack.c.l.b16 %v224
    %v1206 = vunpack.c.h.b16 %v224
    %v1207 = vunpack.c.l.b16 %v225
    %v1208 = vunpack.c.h.b16 %v225
    %v1209 = vunpack.c.l.b16 %v226
    %v1210 = vunpack.c.h.b16 %v226
    %v1211 = vunpack.c.l.b16 %v227
    %v1212 = vunpack.c.l.b16 %v228
    %v1213 = vunpack.c.h.b16 %v228
    %v1214 = vunpack.c.l.b16 %v229
    %v1215 = vunpack.c.h.b16 %v229
    %v1216 = vunpack.c.l.b16 %v230
    %v1217 = vunpack.c.h.b16 %v230
    %v1218 = vunpack.c.l.b16 %v231
    %v1219 = vunpack.c.l.b16 %v232
    %v1220 = vunpack.c.h.b16 %v232
    %v1221 = vunpack.c.l.b16 %v233
    %v1222 = vunpack.c.h.b16 %v233
    %v1223 = vunpack.c.l.b16 %v234
    %v1224 = vunpack.c.h.b16 %v234
    %v1225 = vunpack.c.l.b16 %v235
    %v1226 = vunpack.c.l.b16 %v236
    %v1227 = vunpack.c.h.b16 %v236
    %v1228 = vunpack.c.l.b16 %v237
    %v1229 = vunpack.c.h.b16 %v237
    %v1230 = vunpack.c.l.b16 %v238
    %v1231 = vunpack.c.h.b16 %v238
    %v1232 = vunpack.c.l.b16 %v239
    %v1233 = vunpack.c.l.b16 %v240
    %v1234 = vunpack.c.h.b16 %v240
    %v1235 = vunpack.c.l.b16 %v241
    %v1236 = vunpack.c.h.b16 %v241
    %v1237 = vunpack.c.l.b16 %v242
    %v1238 = vunpack.c.h.b16 %v242
    %v1239 = vunpack.c.l.b16 %v243
    %v1240 = vunpack.c.l.b16 %v244
    %v1241 = vunpack.c.h.b16 %v244
    %v1242 = vunpack.c.l.b16 %v245
    %v1243 = vunpack.c.h.b16 %v245
    %v1244 = vunpack.c.l.b16 %v246
    %v1245 = vunpack.c.h.b16 %v246
    %v1246 = vunpack.c.l.b16 %v247
    %v1247 = vunpack.c.l.b16 %v248
    %v1248 = vunpack.c.h.b16 %v248
    %v1249 = vunpack.c.l.b16 %v249
    %v1250 = vunpack.c.h.b16 %v249
    %v1251 = vunpack.c.l.b16 %v250
    %v1252 = vunpack.c.h.b16 %v250
    %v1253 = vunpack.c.l.b16 %v251
    %v1254 = vunpack.c.l.b16 %v252
    %v1255 = vunpack.c.h.b16 %v252
    %v1256 = vunpack.c.l.b16 %v253
    %v1257 = vunpack.c.h.b16 %v253
    %v1258 = vunpack.c.l.b16 %v254
    %v1259 = vunpack.c.h.b16 %v254
    %v1260 = vunpack.c.l.b16 %v255
    %v1261 = vunpack.c.l.b16 %v256
    %v1262 = vunpack.c.h.b16 %v256
    %v1263 = vunpack.c.l.b16 %v257
    %v1264 = vunpack.c.h.b16 %v257
    %v1265 = vunpack.c.l.b16 %v258
    %v1266 = vunpack.c.h.b16 %v258
    %v1267 = vunpack.c.l.b16 %v259
    %v1268 = vunpack.c.l.b16 %v260
    %v1269 = vunpack.c.h.b16 %v260
    %v1270 = vunpack.c.l.b16 %v261
    %v1271 = vunpack.c.h.b16 %v261
    %v1272 = vunpack.c.l.b16 %v262
    %v1273 = vunpack.c.h.b16 %v262
    %v1274 = vunpack.c.l.b16 %v263
    %v1275 = vunpack.c.l.b16 %v264
    %v1276 = vunpack.c.h.b16 %v264
    %v1277 = vunpack.c.l.b16 %v265
    %v1278 = vunpack.c.h.b16 %v265
    %v1279 = vunpack.c.l.b16 %v266
    %v1280 = vunpack.c.h.b16 %v266
    %v1281 = vunpack.c.l.b16 %v267
    %v1282 = vunpack.c.l.b16 %v268
    %v1283 = vunpack.c.h.b16 %v268
    %v1284 = vunpack.c.l.b16 %v269
    %v1285 = vunpack.c.h.b16 %v269
    %v1286 = vunpack.c.l.b16 %v270
    %v1287 = vunpack.c.h.b16 %v270
    %v1288 = vunpack.c.l.b16 %v271
    %v1289 = vunpack.c.l.b16 %v272
    %v1290 = vunpack.c.h.b16 %v272
    %v1291 = vunpack.c.l.b16 %v273
    %v1292 = vunpack.c.h.b16 %v273
    %v1293 = vunpack.c.l.b16 %v274
    %v1294 = vunpack.c.h.b16 %v274
    %v1295 = vunpack.c.l.b16 %v275
    %v1296 = vunpack.c.l.b16 %v276
    %v1297 = vunpack.c.h.b16 %v276
    %v1298 = vunpack.c.l.b16 %v277
    %v1299 = vunpack.c.h.b16 %v277
    %v1300 = vunpack.c.l.b16 %v278
    %v1301 = vunpack.c.h.b16 %v278
    %v1302 = vunpack.c.l.b16 %v279
    %v1303 = vunpack.c.l.b16 %v280
    %v1304 = vunpack.c.h.b16 %v280
    %v1305 = vunpack.c.l.b16 %v281
    %v1306 = vunpack.c.h.b16 %v281
    %v1307 = vunpack.c.l.b16 %v282
    %v1308 = vunpack.c.h.b16 %v282
    %v1309 = vunpack.c.l.b16 %v283
    %v1310 = vunpack.c.l.b16 %v284
    %v1311 = vunpack.c.h.b16 %v284
    %v1312 = vunpack.c.l.b16 %v285
    %v1313 = vunpack.c.h.b16 %v285
    %v1314 = vunpack.c.l.b16 %v286
    %v1315 = vunpack.c.h.b16 %v286
    %v1316 = vunpack.c.l.b16 %v287
    %v1317 = vunpack.c.l.b16 %v288
    %v1318 = vunpack.c.h.b16 %v288
    %v1319 = vunpack.c.l.b16 %v289
    %v1320 = vunpack.c.h.b16 %v289
    %v1321 = vunpack.c.l.b16 %v290
    %v1322 = vunpack.c.h.b16 %v290
    %v1323 = vunpack.c.l.b16 %v291
    %v1324 = vunpack.c.l.b16 %v292
    %v1325 = vunpack.c.h.b16 %v292
    %v1326 = vunpack.c.l.b16 %v293
    %v1327 = vunpack.c.h.b16 %v293
    %v1328 = vunpack.c.l.b16 %v294
    %v1329 = vunpack.c.h.b16 %v294
    %v1330 = vunpack.c.l.b16 %v295
    %v1331 = vunpack.c.l.b16 %v296
    %v1332 = vunpack.c.h.b16 %v296
    %v1333 = vunpack.c.l.b16 %v297
    %v1334 = vunpack.c.h.b16 %v297
    %v1335 = vunpack.c.l.b16 %v298
    %v1336 = vunpack.c.h.b16 %v298
    %v1337 = vunpack.c.l.b16 %v299
    %v1338 = vunpack.c.l.b16 %v300
    %v1339 = vunpack.c.h.b16 %v300
    %v1340 = vunpack.c.l.b16 %v301
    %v1341 = vunpack.c.h.b16 %v301
    %v1342 = vunpack.c.l.b16 %v302
    %v1343 = vunpack.c.h.b16 %v302
    %v1344 = vunpack.c.l.b16 %v303
    %v1345 = vunpack.c.l.b16 %v304
    %v1346 = vunpack.c.h.b16 %v304
    %v1347 = vunpack.c.l.b16 %v305
    %v1348 = vunpack.c.h.b16 %v305
    %v1349 = vunpack.c.l.b16 %v306
    %v1350 = vunpack.c.h.b16 %v306
    %v1351 = vunpack.c.l.b16 %v307
    %v1352 = vunpack.c.l.b16 %v308
    %v1353 = vunpack.c.h.b16 %v308
    %v1354 = vunpack.c.l.b16 %v309
    %v1355 = vunpack.c.h.b16 %v309
    %v1356 = vunpack.c.l.b16 %v310
    %v1357 = vunpack.c.h.b16 %v310
    %v1358 = vunpack.c.l.b16 %v311
    %v1359 = vunpack.c.l.b16 %v312
    %v1360 = vunpack.c.h.b16 %v312
    %v1361 = vunpack.c.l.b16 %v313
    %v1362 = vunpack.c.h.b16 %v313
    %v1363 = vunpack.c.l.b16 %v314
    %v1364 = vunpack.c.h.b16 %v314
    %v1365 = vunpack.c.l.b16 %v315
    %v1366 = vunpack.c.l.b16 %v316
    %v1367 = vunpack.c.h.b16 %v316
    %v1368 = vunpack.c.l.b16 %v317
    %v1369 = vunpack.c.h.b16 %v317
    %v1370 = vunpack.c.l.b16 %v318
    %v1371 = vunpack.c.h.b16 %v318
    %v1372 = vunpack.c.l.b16 %v319
    %v1373 = vunpack.c.l.b16 %v320
    %v1374 = vunpack.c.h.b16 %v320
    %v1375 = vunpack.c.l.b16 %v321
    %v1376 = vunpack.c.h.b16 %v321
    %v1377 = vunpack.c.l.b16 %v322
    %v1378 = vunpack.c.h.b16 %v322
    %v1379 = vunpack.c.l.b16 %v323
    %v1380 = vunpack.c.l.b16 %v324
    %v1381 = vunpack.c.h.b16 %v324
    %v1382 = vunpack.c.l.b16 %v325
    %v1383 = vunpack.c.h.b16 %v325
    %v1384 = vunpack.c.l.b16 %v326
    %v1385 = vunpack.c.h.b16 %v326
    %v1386 = vunpack.c.l.b16 %v327
    %v1387 = vunpack.c.l.b16 %v328
    %v1388 = vunpack.c.h.b16 %v328
    %v1389 = vunpack.c.l.b16 %v329
    %v1390 = vunpack.c.h.b16 %v329
    %v1391 = vunpack.c.l.b16 %v330
    %v1392 = vunpack.c.h.b16 %v330
    %v1393 = vunpack.c.l.b16 %v331
    %v1394 = vunpack.c.l.b16 %v332
    %v1395 = vunpack.c.h.b16 %v332
    %v1396 = vunpack.c.l.b16 %v333
    %v1397 = vunpack.c.h.b16 %v333
    %v1398 = vunpack.c.l.b16 %v334
    %v1399 = vunpack.c.h.b16 %v334
    %v1400 = vunpack.c.l.b16 %v335
    %v1401 = vunpack.c.l.b16 %v336
    %v1402 = vunpack.c.h.b16 %v336
    %v1403 = vunpack.c.l.b16 %v337
    %v1404 = vunpack.c.h.b16 %v337
    %v1405 = vunpack.c.l.b16 %v338
    %v1406 = vunpack.c.h.b16 %v338
    %v1407 = vunpack.c.l.b16 %v339
    %v1408 = vunpack.c.l.b16 %v340
    %v1409 = vunpack.c.h.b16 %v340
    %v1410 = vunpack.c.l.b16 %v341
    %v1411 = vunpack.c.h.b16 %v341
    %v1412 = vunpack.c.l.b16 %v342
    %v1413 = vunpack.c.h.b16 %v342
    %v1414 = vunpack.c.l.b16 %v343
    %v1415 = vunpack.c.l.b16 %v344
    %v1416 = vunpack.c.h.b16 %v344
    %v1417 = vunpack.c.l.b16 %v345
    %v1418 = vunpack.c.h.b16 %v345
    %v1419 = vunpack.c.l.b16 %v346
    %v1420 = vunpack.c.h.b16 %v346
    %v1421 = vunpack.c.l.b16 %v347
    %v1422 = vunpack.c.l.b16 %v348
    %v1423 = vunpack.c.h.b16 %v348
    %v1424 = vunpack.c.l.b16 %v349
    %v1425 = vunpack.c.h.b16 %v349
    %v1426 = vunpack.c.l.b16 %v350
    %v1427 = vunpack.c.h.b16 %v350
    %v1428 = vunpack.c.l.b16 %v351
    %v1429 = vunpack.c.l.b16 %v352
    %v1430 = vunpack.c.h.b16 %v352
    %v1431 = vunpack.c.l.b16 %v353
    %v1432 = vunpack.c.h.b16 %v353
    %v1433 = vunpack.c.l.b16 %v354
    %v1434 = vunpack.c.h.b16 %v354
    %v1435 = vunpack.c.l.b16 %v355
    %v1436 = vunpack.c.l.b16 %v356
    %v1437 = vunpack.c.h.b16 %v356
    %v1438 = vunpack.c.l.b16 %v357
    %v1439 = vunpack.c.h.b16 %v357
    %v1440 = vunpack.c.l.b16 %v358
    %v1441 = vunpack.c.h.b16 %v358
    %v1442 = vunpack.c.l.b16 %v359
    %v1443 = vunpack.c.l.b16 %v360
    %v1444 = vunpack.c.h.b16 %v360
    %v1445 = vunpack.c.l.b16 %v361
    %v1446 = vunpack.c.h.b16 %v361
    %v1447 = vunpack.c.l.b16 %v362
    %v1448 = vunpack.c.h.b16 %v362
    %v1449 = vunpack.c.l.b16 %v363
    %v1450 = vunpack.c.l.b16 %v364
    %v1451 = vunpack.c.h.b16 %v364
    %v1452 = vunpack.c.l.b16 %v365
    %v1453 = vunpack.c.h.b16 %v365
    %v1454 = vunpack.c.l.b16 %v366
    %v1455 = vunpack.c.h.b16 %v366
    %v1456 = vunpack.c.l.b16 %v367
    %v1457 = vunpack.c.l.b16 %v368
    %v1458 = vunpack.c.h.b16 %v368
    %v1459 = vunpack.c.l.b16 %v369
    %v1460 = vunpack.c.h.b16 %v369
    %v1461 = vunpack.c.l.b16 %v370
    %v1462 = vunpack.c.h.b16 %v370
    %v1463 = vunpack.c.l.b16 %v371
    %v1464 = vunpack.c.l.b16 %v372
    %v1465 = vunpack.c.h.b16 %v372
    %v1466 = vunpack.c.l.b16 %v373
    %v1467 = vunpack.c.h.b16 %v373
    %v1468 = vunpack.c.l.b16 %v374
    %v1469 = vunpack.c.h.b16 %v374
    %v1470 = vunpack.c.l.b16 %v375
    %v1471 = vunpack.c.l.b16 %v376
    %v1472 = vunpack.c.h.b16 %v376
    %v1473 = vunpack.c.l.b16 %v377
    %v1474 = vunpack.c.h.b16 %v377
    %v1475 = vunpack.c.l.b16 %v378
    %v1476 = vunpack.c.h.b16 %v378
    %v1477 = vunpack.c.l.b16 %v379
    %v1478 = vunpack.c.l.b16 %v380
    %v1479 = vunpack.c.h.b16 %v380
    %v1480 = vunpack.c.l.b16 %v381
    %v1481 = vunpack.c.h.b16 %v381
    %v1482 = vunpack.c.l.b16 %v382
    %v1483 = vunpack.c.h.b16 %v382
    %v1484 = vunpack.c.l.b16 %v383
    %v1485 = vunpack.c.l.b16 %v384
    %v1486 = vunpack.c.h.b16 %v384
    %v1487 = vunpack.c.l.b16 %v385
    %v1488 = vunpack.c.h.b16 %v385
    %v1489 = vunpack.c.l.b16 %v386
    %v1490 = vunpack.c.h.b16 %v386
    %v1491 = vunpack.c.l.b16 %v387
    %v1492 = vunpack.c.l.b16 %v388
    %v1493 = vunpack.c.h.b16 %v388
    %v1494 = vunpack.c.l.b16 %v389
    %v1495 = vunpack.c.h.b16 %v389
    %v1496 = vunpack.c.l.b16 %v390
    %v1497 = vunpack.c.h.b16 %v390
    %v1498 = vunpack.c.l.b16 %v391
    %v1499 = vunpack.c.l.b16 %v392
    %v1500 = vunpack.c.h.b16 %v392
    %v1501 = vunpack.c.l.b16 %v393
    %v1502 = vunpack.c.h.b16 %v393
    %v1503 = vunpack.c.l.b16 %v394
    %v1504 = vunpack.c.h.b16 %v394
    %v1505 = vunpack.c.l.b16 %v395
    %v1506 = vunpack.c.l.b16 %v396
    %v1507 = vunpack.c.h.b16 %v396
    %v1508 = vunpack.c.l.b16 %v397
    %v1509 = vunpack.c.h.b16 %v397
    %v1510 = vunpack.c.l.b16 %v398
    %v1511 = vunpack.c.h.b16 %v398
    %v1512 = vunpack.c.l.b16 %v399
    %v1513 = vunpack.c.l.b16 %v400
    %v1514 = vunpack.c.h.b16 %v400
    %v1515 = vunpack.c.l.b16 %v401
    %v1516 = vunpack.c.h.b16 %v401
    %v1517 = vunpack.c.l.b16 %v402
    %v1518 = vunpack.c.h.b16 %v402
    %v1519 = vunpack.c.l.b16 %v403
    %v1520 = vunpack.c.l.b16 %v404
    %v1521 = vunpack.c.h.b16 %v404
    %v1522 = vunpack.c.l.b16 %v405
    %v1523 = vunpack.c.h.b16 %v405
    %v1524 = vunpack.c.l.b16 %v406
    %v1525 = vunpack.c.h.b16 %v406
    %v1526 = vunpack.c.l.b16 %v407
    %v1527 = vunpack.c.l.b16 %v408
    %v1528 = vunpack.c.h.b16 %v408
    %v1529 = vunpack.c.l.b16 %v409
    %v1530 = vunpack.c.h.b16 %v409
    %v1531 = vunpack.c.l.b16 %v410
    %v1532 = vunpack.c.h.b16 %v410
    %v1533 = vunpack.c.l.b16 %v411
    %v1534 = vunpack.c.l.b16 %v412
    %v1535 = vunpack.c.h.b16 %v412
    %v1536 = vunpack.c.l.b16 %v413
    %v1537 = vunpack.c.h.b16 %v413
    %v1538 = vunpack.c.l.b16 %v414
    %v1539 = vunpack.c.h.b16 %v414
    %v1540 = vunpack.c.l.b16 %v415
    %v1541 = vunpack.c.l.b16 %v416
    %v1542 = vunpack.c.h.b16 %v416
    %v1543 = vunpack.c.l.b16 %v417
    %v1544 = vunpack.c.h.b16 %v417
    %v1545 = vunpack.c.l.b16 %v418
    %v1546 = vunpack.c.h.b16 %v418
    %v1547 = vunpack.c.l.b16 %v419
    %v1548 = vunpack.c.l.b16 %v420
    %v1549 = vunpack.c.h.b16 %v420
    %v1550 = vunpack.c.l.b16 %v421
    %v1551 = vunpack.c.h.b16 %v421
    %v1552 = vunpack.c.l.b16 %v422
    %v1553 = vunpack.c.h.b16 %v422
    %v1554 = vunpack.c.l.b16 %v423
    %v1555 = vunpack.c.l.b16 %v424
    %v1556 = vunpack.c.h.b16 %v424
    %v1557 = vunpack.c.l.b16 %v425
    %v1558 = vunpack.c.h.b16 %v425
    %v1559 = vunpack.c.l.b16 %v426
    %v1560 = vunpack.c.h.b16 %v426
    %v1561 = vunpack.c.l.b16 %v427
    %v1562 = vunpack.c.l.b16 %v428
    %v1563 = vunpack.c.h.b16 %v428
    %v1564 = vunpack.c.l.b16 %v429
    %v1565 = vunpack.c.h.b16 %v429
    %v1566 = vunpack.c.l.b16 %v430
    %v1567 = vunpack.c.h.b16 %v430
    %v1568 = vunpack.c.l.b16 %v431
    %v1569 = vunpack.c.l.b16 %v432
    %v1570 = vunpack.c.h.b16 %v432
    %v1571 = vunpack.c.l.b16 %v433
    %v1572 = vunpack.c.h.b16 %v433
    %v1573 = vunpack.c.l.b16 %v434
    %v1574 = vunpack.c.h.b16 %v434
    %v1575 = vunpack.c.l.b16 %v435
    %v1576 = vunpack.c.l.b16 %v436
    %v1577 = vunpack.c.h.b16 %v436
    %v1578 = vunpack.c.l.b16 %v437
    %v1579 = vunpack.c.h.b16 %v437
    %v1580 = vunpack.c.l.b16 %v438
    %v1581 = vunpack.c.h.b16 %v438
    %v1582 = vunpack.c.l.b16 %v439
    %v1583 = vunpack.c.l.b16 %v440
    %v1584 = vunpack.c.h.b16 %v440
    %v1585 = vunpack.c.l.b16 %v441
    %v1586 = vunpack.c.h.b16 %v441
    %v1587 = vunpack.c.l.b16 %v442
    %v1588 = vunpack.c.h.b16 %v442
    %v1589 = vunpack.c.l.b16 %v443
    %v1590 = vunpack.c.l.b16 %v444
    %v1591 = vunpack.c.h.b16 %v444
    %v1592 = vunpack.c.l.b16 %v445
    %v1593 = vunpack.c.h.b16 %v445
    %v1594 = vunpack.c.l.b16 %v446
    %v1595 = vunpack.c.h.b16 %v446
    %v1596 = vunpack.c.l.b16 %v447
    %v1597 = vunpack.c.l.b16 %v448
    %v1598 = vunpack.c.h.b16 %v448
    %v1599 = vunpack.c.l.b16 %v449
    %v1600 = vunpack.c.h.b16 %v449
    %v1601 = vunpack.c.l.b16 %v450
    %v1602 = vunpack.c.h.b16 %v450
    %v1603 = vunpack.c.l.b16 %v451
    %v1604 = vunpack.c.l.b16 %v452
    %v1605 = vunpack.c.h.b16 %v452
    %v1606 = vunpack.c.l.b16 %v453
    %v1607 = vunpack.c.h.b16 %v453
    %v1608 = vunpack.c.l.b16 %v454
    %v1609 = vunpack.c.h.b16 %v454
    %v1610 = vunpack.c.l.b16 %v455
    %v1611 = vunpack.c.l.b16 %v456
    %v1612 = vunpack.c.h.b16 %v456
    %v1613 = vunpack.c.l.b16 %v457
    %v1614 = vunpack.c.h.b16 %v457
    %v1615 = vunpack.c.l.b16 %v458
    %v1616 = vunpack.c.h.b16 %v458
    %v1617 = vunpack.c.l.b16 %v459
    %v1618 = vunpack.c.l.b16 %v460
    %v1619 = vunpack.c.h.b16 %v460
    %v1620 = vunpack.c.l.b16 %v461
    %v1621 = vunpack.c.h.b16 %v461
    %v1622 = vunpack.c.l.b16 %v462
    %v1623 = vunpack.c.h.b16 %v462
    %v1624 = vunpack.c.l.b16 %v463
    %v1625 = vunpack.c.l.b16 %v464
    %v1626 = vunpack.c.h.b16 %v464
    %v1627 = vunpack.c.l.b16 %v465
    %v1628 = vunpack.c.h.b16 %v465
    %v1629 = vunpack.c.l.b16 %v466
    %v1630 = vunpack.c.h.b16 %v466
    %v1631 = vunpack.c.l.b16 %v467
    %v1632 = vunpack.c.l.b16 %v468
    %v1633 = vunpack.c.h.b16 %v468
    %v1634 = vunpack.c.l.b16 %v469
    %v1635 = vunpack.c.h.b16 %v469
    %v1636 = vunpack.c.l.b16 %v470
    %v1637 = vunpack.c.h.b16 %v470
    %v1638 = vunpack.c.l.b16 %v471
    %v1639 = vunpack.c.l.b16 %v472
    %v1640 = vunpack.c.h.b16 %v472
    %v1641 = vunpack.c.l.b16 %v473
    %v1642 = vunpack.c.h.b16 %v473
    %v1643 = vunpack.c.l.b16 %v474
    %v1644 = vunpack.c.h.b16 %v474
    %v1645 = vunpack.c.l.b16 %v475
    %v1646 = vunpack.c.l.b16 %v476
    %v1647 = vunpack.c.h.b16 %v476
    %v1648 = vunpack.c.l.b16 %v477
    %v1649 = vunpack.c.h.b16 %v477
    %v1650 = vunpack.c.l.b16 %v478
    %v1651 = vunpack.c.h.b16 %v478
    %v1652 = vunpack.c.l.b16 %v479
    %v1653 = vunpack.c.l.b16 %v480
    %v1654 = vunpack.c.h.b16 %v480
    %v1655 = vunpack.c.l.b16 %v481
    %v1656 = vunpack.c.h.b16 %v481
    %v1657 = vunpack.c.l.b16 %v482
    %v1658 = vunpack.c.h.b16 %v482
    %v1659 = vunpack.c.l.b16 %v483
    %v1660 = vpack.c.b16 %v981, %v974
    %v1661 = vpack.c.b16 %v982, %v975
    %v1662 = vpack.c.b16 %v983, %v976
    %v1663 = vpack.c.b16 %v984, %v977
    %v1664 = vpack.c.b16 %v985, %v978
    %v1665 = vpack.c.b16 %v986, %v979
    %v1666 = vpack.c.b16 %v987, %v980
    %v1667 = vpack.c.b16 %v995, %v988
    %v1668 = vpack.c.b16 %v996, %v989
    %v1669 = vpack.c.b16 %v997, %v990
    %v1670 = vpack.c.b16 %v998, %v991
    %v1671 = vpack.c.b16 %v999, %v992
    %v1672 = vpack.c.b16 %v1000, %v993
    %v1673 = vpack.c.b16 %v1001, %v994
    %v1674 = vpack.c.b16 %v1009, %v1002
    %v1675 = vpack.c.b16 %v1010, %v1003
    %v1676 = vpack.c.b16 %v1011, %v1004
    %v1677 = vpack.c.b16 %v1012, %v1005
    %v1678 = vpack.c.b16 %v1013, %v1006
    %v1679 = vpack.c.b16 %v1014, %v1007
    %v1680 = vpack.c.b16 %v1015, %v1008
    %v1681 = vpack.c.b16 %v1023, %v1016
    %v1682 = vpack.c.b16 %v1024, %v1017
    %v1683 = vpack.c.b16 %v1025, %v1018
    %v1684 = vpack.c.b16 %v1026, %v1019
    %v1685 = vpack.c.b16 %v1027, %v1020
    %v1686 = vpack.c.b16 %v1028, %v1021
    %v1687 = vpack.c.b16 %v1029, %v1022
    %v1688 = vpack.c.b16 %v1037, %v1030
    %v1689 = vpack.c.b16 %v1038, %v1031
    %v1690 = vpack.c.b16 %v1039, %v1032
    %v1691 = vpack.c.b16 %v1040, %v1033
    %v1692 = vpack.c.b16 %v1041, %v1034
    %v1693 = vpack.c.b16 %v1042, %v1035
    %v1694 = vpack.c.b16 %v1043, %v1036
    %v1695 = vpack.c.b16 %v1051, %v1044
    %v1696 = vpack.c.b16 %v1052, %v1045
    %v1697 = vpack.c.b16 %v1053, %v1046
    %v1698 = vpack.c.b16 %v1054, %v1047
    %v1699 = vpack.c.b16 %v1055, %v1048
    %v1700 = vpack.c.b16 %v1056, %v1049
    %v1701 = vpack.c.b16 %v1057, %v1050
    %v1702 = vpack.c.b16 %v1065, %v1058
    %v1703 = vpack.c.b16 %v1066, %v1059
    %v1704 = vpack.c.b16 %v1067, %v1060
    %v1705 = vpack.c.b16 %v1068, %v1061
    %v1706 = vpack.c.b16 %v1069, %v1062
    %v1707 = vpack.c.b16 %v1070, %v1063
    %v1708 = vpack.c.b16 %v1071, %v1064
    %v1709 = vpack.c.b16 %v1079, %v1072
    %v1710 = vpack.c.b16 %v1080, %v1073
    %v1711 = vpack.c.b16 %v1081, %v1074
    %v1712 = vpack.c.b16 %v1082, %v1075
    %v1713 = vpack.c.b16 %v1083, %v1076
    %v1714 = vpack.c.b16 %v1084, %v1077
    %v1715 = vpack.c.b16 %v1085, %v1078
    %v1716 = vpack.c.b16 %v1093, %v1086
    %v1717 = vpack.c.b16 %v1094, %v1087
    %v1718 = vpack.c.b16 %v1095, %v1088
    %v1719 = vpack.c.b16 %v1096, %v1089
    %v1720 = vpack.c.b16 %v1097, %v1090
    %v1721 = vpack.c.b16 %v1098, %v1091
    %v1722 = vpack.c.b16 %v1099, %v1092
    %v1723 = vpack.c.b16 %v1107, %v1100
    %v1724 = vpack.c.b16 %v1108, %v1101
    %v1725 = vpack.c.b16 %v1109, %v1102
    %v1726 = vpack.c.b16 %v1110, %v1103
    %v1727 = vpack.c.b16 %v1111, %v1104
    %v1728 = vpack.c.b16 %v1112, %v1105
    %v1729 = vpack.c.b16 %v1113, %v1106
    %v1730 = vpack.c.b16 %v1121, %v1114
    %v1731 = vpack.c.b16 %v1122, %v1115
    %v1732 = vpack.c.b16 %v1123, %v1116
    %v1733 = vpack.c.b16 %v1124, %v1117
    %v1734 = vpack.c.b16 %v1125, %v1118
    %v1735 = vpack.c.b16 %v1126, %v1119
    %v1736 = vpack.c.b16 %v1127, %v1120
    %v1737 = vpack.c.b16 %v1135, %v1128
    %v1738 = vpack.c.b16 %v1136, %v1129
    %v1739 = vpack.c.b16 %v1137, %v1130
    %v1740 = vpack.c.b16 %v1138, %v1131
    %v1741 = vpack.c.b16 %v1139, %v1132
    %v1742 = vpack.c.b16 %v1140, %v1133
    %v1743 = vpack.c.b16 %v1141, %v1134
    %v1744 = vpack.c.b16 %v1149, %v1142
    %v1745 = vpack.c.b16 %v1150, %v1143
    %v1746 = vpack.c.b16 %v1151, %v1144
    %v1747 = vpack.c.b16 %v1152, %v1145
    %v1748 = vpack.c.b16 %v1153, %v1146
    %v1749 = vpack.c.b16 %v1154, %v1147
    %v1750 = vpack.c.b16 %v1155, %v1148
    %v1751 = vpack.c.b16 %v1163, %v1156
    %v1752 = vpack.c.b16 %v1164, %v1157
    %v1753 = vpack.c.b16 %v1165, %v1158
    %v1754 = vpack.c.b16 %v1166, %v1159
    %v1755 = vpack.c.b16 %v1167, %v1160
    %v1756 = vpack.c.b16 %v1168, %v1161
    %v1757 = vpack.c.b16 %v1169, %v1162
    %v1758 = vpack.c.b16 %v1177, %v1170
    %v1759 = vpack.c.b16 %v1178, %v1171
    %v1760 = vpack.c.b16 %v1179, %v1172
    %v1761 = vpack.c.b16 %v1180, %v1173
    %v1762 = vpack.c.b16 %v1181, %v1174
    %v1763 = vpack.c.b16 %v1182, %v1175
    %v1764 = vpack.c.b16 %v1183, %v1176
    %v1765 = vpack.c.b16 %v1191, %v1184
    %v1766 = vpack.c.b16 %v1192, %v1185
    %v1767 = vpack.c.b16 %v1193, %v1186
    %v1768 = vpack.c.b16 %v1194, %v1187
    %v1769 = vpack.c.b16 %v1195, %v1188
    %v1770 = vpack.c.b16 %v1196, %v1189
    %v1771 = vpack.c.b16 %v1197, %v1190
    %v1772 = vpack.c.b16 %v1205, %v1198
    %v1773 = vpack.c.b16 %v1206, %v1199
    %v1774 = vpack.c.b16 %v1207, %v1200
    %v1775 = vpack.c.b16 %v1208, %v1201
    %v1776 = vpack.c.b16 %v1209, %v1202
    %v1777 = vpack.c.b16 %v1210, %v1203
    %v1778 = vpack.c.b16 %v1211, %v1204
    %v1779 = vpack.c.b16 %v1219, %v1212
    %v1780 = vpack.c.b16 %v1220, %v1213
    %v1781 = vpack.c.b16 %v1221, %v1214
    %v1782 = vpack.c.b16 %v1222, %v1215
    %v1783 = vpack.c.b16 %v1223, %v1216
    %v1784 = vpack.c.b16 %v1224, %v1217
    %v1785 = vpack.c.b16 %v1225, %v1218
    %v1786 = vpack.c.b16 %v1233, %v1226
    %v1787 = vpack.c.b16 %v1234, %v1227
    %v1788 = vpack.c.b16 %v1235, %v1228
    %v1789 = vpack.c.b16 %v1236, %v1229
    %v1790 = vpack.c.b16 %v1237, %v1230
    %v1791 = vpack.c.b16 %v1238, %v1231
    %v1792 = vpack.c.b16 %v1239, %v1232
    %v1793 = vpack.c.b16 %v1247, %v1240
    %v1794 = vpack.c.b16 %v1248, %v1241
    %v1795 = vpack.c.b16 %v1249, %v1242
    %v1796 = vpack.c.b16 %v1250, %v1243
    %v1797 = vpack.c.b16 %v1251, %v1244
    %v1798 = vpack.c.b16 %v1252, %v1245
    %v1799 = vpack.c.b16 %v1253, %v1246
    %v1800 = vpack.c.b16 %v1261, %v1254
    %v1801 = vpack.c.b16 %v1262, %v1255
    %v1802 = vpack.c.b16 %v1263, %v1256
    %v1803 = vpack.c.b16 %v1264, %v1257
    %v1804 = vpack.c.b16 %v1265, %v1258
    %v1805 = vpack.c.b16 %v1266, %v1259
    %v1806 = vpack.c.b16 %v1267, %v1260
    %v1807 = vpack.c.b16 %v1275, %v1268
    %v1808 = vpack.c.b16 %v1276, %v1269
    %v1809 = vpack.c.b16 %v1277, %v1270
    %v1810 = vpack.c.b16 %v1278, %v1271
    %v1811 = vpack.c.b16 %v1279, %v1272
    %v1812 = vpack.c.b16 %v1280, %v1273
    %v1813 = vpack.c.b16 %v1281, %v1274
    %v1814 = vpack.c.b16 %v1289, %v1282
    %v1815 = vpack.c.b16 %v1290, %v1283
    %v1816 = vpack.c.b16 %v1291, %v1284
    %v1817 = vpack.c.b16 %v1292, %v1285
    %v1818 = vpack.c.b16 %v1293, %v1286
    %v1819 = vpack.c.b16 %v1294, %v1287
    %v1820 = vpack.c.b16 %v1295, %v1288
    %v1821 = vpack.c.b16 %v1303, %v1296
    %v1822 = vpack.c.b16 %v1304, %v1297
    %v1823 = vpack.c.b16 %v1305, %v1298
    %v1824 = vpack.c.b16 %v1306, %v1299
    %v1825 = vpack.c.b16 %v1307, %v1300
    %v1826 = vpack.c.b16 %v1308, %v1301
    %v1827 = vpack.c.b16 %v1309, %v1302
    %v1828 = vpack.c.b16 %v1317, %v1310
    %v1829 = vpack.c.b16 %v1318, %v1311
    %v1830 = vpack.c.b16 %v1319, %v1312
    %v1831 = vpack.c.b16 %v1320, %v1313
    %v1832 = vpack.c.b16 %v1321, %v1314
    %v1833 = vpack.c.b16 %v1322, %v1315
    %v1834 = vpack.c.b16 %v1323, %v1316
    %v1835 = vpack.c.b16 %v1331, %v1324
    %v1836 = vpack.c.b16 %v1332, %v1325
    %v1837 = vpack.c.b16 %v1333, %v1326
    %v1838 = vpack.c.b16 %v1334, %v1327
    %v1839 = vpack.c.b16 %v1335, %v1328
    %v1840 = vpack.c.b16 %v1336, %v1329
    %v1841 = vpack.c.b16 %v1337, %v1330
    %v1842 = vpack.c.b16 %v1345, %v1338
    %v1843 = vpack.c.b16 %v1346, %v1339
    %v1844 = vpack.c.b16 %v1347, %v1340
    %v1845 = vpack.c.b16 %v1348, %v1341
    %v1846 = vpack.c.b16 %v1349, %v1342
    %v1847 = vpack.c.b16 %v1350, %v1343
    %v1848 = vpack.c.b16 %v1351, %v1344
    %v1849 = vpack.c.b16 %v1359, %v1352
    %v1850 = vpack.c.b16 %v1360, %v1353
    %v1851 = vpack.c.b16 %v1361, %v1354
    %v1852 = vpack.c.b16 %v1362, %v1355
    %v1853 = vpack.c.b16 %v1363, %v1356
    %v1854 = vpack.c.b16 %v1364, %v1357
    %v1855 = vpack.c.b16 %v1365, %v1358
    %v1856 = vpack.c.b16 %v1373, %v1366
    %v1857 = vpack.c.b16 %v1374, %v1367
    %v1858 = vpack.c.b16 %v1375, %v1368
    %v1859 = vpack.c.b16 %v1376, %v1369
    %v1860 = vpack.c.b16 %v1377, %v1370
    %v1861 = vpack.c.b16 %v1378, %v1371
    %v1862 = vpack.c.b16 %v1379, %v1372
    %v1863 = vpack.c.b16 %v1387, %v1380
    %v1864 = vpack.c.b16 %v1388, %v1381
    %v1865 = vpack.c.b16 %v1389, %v1382
    %v1866 = vpack.c.b16 %v1390, %v1383
    %v1867 = vpack.c.b16 %v1391, %v1384
    %v1868 = vpack.c.b16 %v1392, %v1385
    %v1869 = vpack.c.b16 %v1393, %v1386
    %v1870 = vpack.c.b16 %v1401, %v1394
    %v1871 = vpack.c.b16 %v1402, %v1395
    %v1872 = vpack.c.b16 %v1403, %v1396
    %v1873 = vpack.c.b16 %v1404, %v1397
    %v1874 = vpack.c.b16 %v1405, %v1398
    %v1875 = vpack.c.b16 %v1406, %v1399
    %v1876 = vpack.c.b16 %v1407, %v1400
    %v1877 = vpack.c.b16 %v1415, %v1408
    %v1878 = vpack.c.b16 %v1416, %v1409
    %v1879 = vpack.c.b16 %v1417, %v1410
    %v1880 = vpack.c.b16 %v1418, %v1411
    %v1881 = vpack.c.b16 %v1419, %v1412
    %v1882 = vpack.c.b16 %v1420, %v1413
    %v1883 = vpack.c.b16 %v1421, %v1414
    %v1884 = vpack.c.b16 %v1429, %v1422
    %v1885 = vpack.c.b16 %v1430, %v1423
    %v1886 = vpack.c.b16 %v1431, %v1424
    %v1887 = vpack.c.b16 %v1432, %v1425
    %v1888 = vpack.c.b16 %v1433, %v1426
    %v1889 = vpack.c.b16 %v1434, %v1427
    %v1890 = vpack.c.b16 %v1435, %v1428
    %v1891 = vpack.c.b16 %v1443, %v1436
    %v1892 = vpack.c.b16 %v1444, %v1437
    %v1893 = vpack.c.b16 %v1445, %v1438
    %v1894 = vpack.c.b16 %v1446, %v1439
    %v1895 = vpack.c.b16 %v1447, %v1440
    %v1896 = vpack.c.b16 %v1448, %v1441
    %v1897 = vpack.c.b16 %v1449, %v1442
    %v1898 = vpack.c.b16 %v1457, %v1450
    %v1899 = vpack.c.b16 %v1458, %v1451
    %v1900 = vpack.c.b16 %v1459, %v1452
    %v1901 = vpack.c.b16 %v1460, %v1453
    %v1902 = vpack.c.b16 %v1461, %v1454
    %v1903 = vpack.c.b16 %v1462, %v1455
    %v1904 = vpack.c.b16 %v1463, %v1456
    %v1905 = vpack.c.b16 %v1471, %v1464
    %v1906 = vpack.c.b16 %v1472, %v1465
    %v1907 = vpack.c.b16 %v1473, %v1466
    %v1908 = vpack.c.b16 %v1474, %v1467
    %v1909 = vpack.c.b16 %v1475, %v1468
    %v1910 = vpack.c.b16 %v1476, %v1469
    %v1911 = vpack.c.b16 %v1477, %v1470
    %v1912 = vpack.c.b16 %v1485, %v1478
    %v1913 = vpack.c.b16 %v1486, %v1479
    %v1914 = vpack.c.b16 %v1487, %v1480
    %v1915 = vpack.c.b16 %v1488, %v1481
    %v1916 = vpack.c.b16 %v1489, %v1482
    %v1917 = vpack.c.b16 %v1490, %v1483
    %v1918 = vpack.c.b16 %v1491, %v1484
    %v1919 = vpack.c.b16 %v1499, %v1492
    %v1920 = vpack.c.b16 %v1500, %v1493
    %v1921 = vpack.c.b16 %v1501, %v1494
    %v1922 = vpack.c.b16 %v1502, %v1495
    %v1923 = vpack.c.b16 %v1503, %v1496
    %v1924 = vpack.c.b16 %v1504, %v1497
    %v1925 = vpack.c.b16 %v1505, %v1498
    %v1926 = vpack.c.b16 %v1513, %v1506
    %v1927 = vpack.c.b16 %v1514, %v1507
    %v1928 = vpack.c.b16 %v1515, %v1508
    %v1929 = vpack.c.b16 %v1516, %v1509
    %v1930 = vpack.c.b16 %v1517, %v1510
    %v1931 = vpack.c.b16 %v1518, %v1511
    %v1932 = vpack.c.b16 %v1519, %v1512
    %v1933 = vpack.c.b16 %v1527, %v1520
    %v1934 = vpack.c.b16 %v1528, %v1521
    %v1935 = vpack.c.b16 %v1529, %v1522
    %v1936 = vpack.c.b16 %v1530, %v1523
    %v1937 = vpack.c.b16 %v1531, %v1524
    %v1938 = vpack.c.b16 %v1532, %v1525
    %v1939 = vpack.c.b16 %v1533, %v1526
    %v1940 = vpack.c.b16 %v1541, %v1534
    %v1941 = vpack.c.b16 %v1542, %v1535
    %v1942 = vpack.c.b16 %v1543, %v1536
    %v1943 = vpack.c.b16 %v1544, %v1537
    %v1944 = vpack.c.b16 %v1545, %v1538
    %v1945 = vpack.c.b16 %v1546, %v1539
    %v1946 = vpack.c.b16 %v1547, %v1540
    %v1947 = vpack.c.b16 %v1555, %v1548
    %v1948 = vpack.c.b16 %v1556, %v1549
    %v1949 = vpack.c.b16 %v1557, %v1550
    %v1950 = vpack.c.b16 %v1558, %v1551
    %v1951 = vpack.c.b16 %v1559, %v1552
    %v1952 = vpack.c.b16 %v1560, %v1553
    %v1953 = vpack.c.b16 %v1561, %v1554
    %v1954 = vpack.c.b16 %v1569, %v1562
    %v1955 = vpack.c.b16 %v1570, %v1563
    %v1956 = vpack.c.b16 %v1571, %v1564
    %v1957 = vpack.c.b16 %v1572, %v1565
    %v1958 = vpack.c.b16 %v1573, %v1566
    %v1959 = vpack.c.b16 %v1574, %v1567
    %v1960 = vpack.c.b16 %v1575, %v1568
    %v1961 = vpack.c.b16 %v1583, %v1576
    %v1962 = vpack.c.b16 %v1584, %v1577
    %v1963 = vpack.c.b16 %v1585, %v1578
    %v1964 = vpack.c.b16 %v1586, %v1579
    %v1965 = vpack.c.b16 %v1587, %v1580
    %v1966 = vpack.c.b16 %v1588, %v1581
    %v1967 = vpack.c.b16 %v1589, %v1582
    %v1968 = vpack.c.b16 %v1597, %v1590
    %v1969 = vpack.c.b16 %v1598, %v1591
    %v1970 = vpack.c.b16 %v1599, %v1592
    %v1971 = vpack.c.b16 %v1600, %v1593
    %v1972 = vpack.c.b16 %v1601, %v1594
    %v1973 = vpack.c.b16 %v1602, %v1595
    %v1974 = vpack.c.b16 %v1603, %v1596
    %v1975 = vpack.c.b16 %v1611, %v1604
    %v1976 = vpack.c.b16 %v1612, %v1605
    %v1977 = vpack.c.b16 %v1613, %v1606
    %v1978 = vpack.c.b16 %v1614, %v1607
    %v1979 = vpack.c.b16 %v1615, %v1608
    %v1980 = vpack.c.b16 %v1616, %v1609
    %v1981 = vpack.c.b16 %v1617, %v1610
    %v1982 = vpack.c.b16 %v1625, %v1618
    %v1983 = vpack.c.b16 %v1626, %v1619
    %v1984 = vpack.c.b16 %v1627, %v1620
    %v1985 = vpack.c.b16 %v1628, %v1621
    %v1986 = vpack.c.b16 %v1629, %v1622
    %v1987 = vpack.c.b16 %v1630, %v1623
    %v1988 = vpack.c.b16 %v1631, %v1624
    %v1989 = vpack.c.b16 %v1639, %v1632
    %v1990 = vpack.c.b16 %v1640, %v1633
    %v1991 = vpack.c.b16 %v1641, %v1634
    %v1992 = vpack.c.b16 %v1642, %v1635
    %v1993 = vpack.c.b16 %v1643, %v1636
    %v1994 = vpack.c.b16 %v1644, %v1637
    %v1995 = vpack.c.b16 %v1645, %v1638
    %v1996 = vpack.c.b16 %v1653, %v1646
    %v1997 = vpack.c.b16 %v1654, %v1647
    %v1998 = vpack.c.b16 %v1655, %v1648
    %v1999 = vpack.c.b16 %v1656, %v1649
    %v2000 = vpack.c.b16 %v1657, %v1650
    %v2001 = vpack.c.b16 %v1658, %v1651
    %v2002 = vpack.c.b16 %v1659, %v1652
    %v2395 = vunpack.c.l.b16 %v484
    %v2396 = vunpack.c.l.b16 %v485
    %v2397 = vunpack.c.l.b16 %v486
    %v2398 = vunpack.c.l.b16 %v487
    %v2399 = vunpack.c.l.b16 %v488
    %v2400 = vunpack.c.l.b16 %v489
    %v2401 = vunpack.c.l.b16 %v490
    %v2402 = vunpack.c.l.b16 %v491
    %v2403 = vunpack.c.l.b16 %v492
    %v2404 = vunpack.c.l.b16 %v493
    %v2405 = vunpack.c.l.b16 %v494
    %v2406 = vunpack.c.l.b16 %v495
    %v2407 = vunpack.c.l.b16 %v496
    %v2408 = vunpack.c.l.b16 %v497
    %v2409 = vunpack.c.l.b16 %v498
    %v2410 = vunpack.c.l.b16 %v499
    %v2411 = vunpack.c.l.b16 %v500
    %v2412 = vunpack.c.l.b16 %v501
    %v2413 = vunpack.c.l.b16 %v502
    %v2414 = vunpack.c.l.b16 %v503
    %v2415 = vunpack.c.l.b16 %v504
    %v2416 = vunpack.c.l.b16 %v505
    %v2417 = vunpack.c.l.b16 %v506
    %v2418 = vunpack.c.l.b16 %v507
    %v2419 = vunpack.c.l.b16 %v508
    %v2420 = vunpack.c.l.b16 %v509
    %v2421 = vunpack.c.l.b16 %v510
    %v2422 = vunpack.c.l.b16 %v511
    %v2423 = vunpack.c.l.b16 %v512
    %v2424 = vunpack.c.l.b16 %v513
    %v2425 = vunpack.c.l.b16 %v514
    %v2426 = vunpack.c.l.b16 %v515
    %v2427 = vunpack.c.l.b16 %v516
    %v2428 = vunpack.c.l.b16 %v517
    %v2429 = vunpack.c.l.b16 %v518
    %v2430 = vunpack.c.l.b16 %v519
    %v2431 = vunpack.c.l.b16 %v520
    %v2432 = vunpack.c.l.b16 %v521
    %v2433 = vunpack.c.l.b16 %v522
    %v2434 = vunpack.c.l.b16 %v523
    %v2435 = vunpack.c.l.b16 %v524
    %v2436 = vunpack.c.l.b16 %v525
    %v2437 = vunpack.c.l.b16 %v526
    %v2438 = vunpack.c.l.b16 %v527
    %v2439 = vunpack.c.l.b16 %v528
    %v2440 = vunpack.c.l.b16 %v529
    %v2441 = vunpack.c.l.b16 %v530
    %v2442 = vunpack.c.l.b16 %v531
    %v2443 = vunpack.c.l.b16 %v532
    %v2444 = vunpack.c.l.b16 %v533
    %v2445 = vunpack.c.l.b16 %v534
    %v2446 = vunpack.c.l.b16 %v535
    %v2447 = vunpack.c.l.b16 %v536
    %v2448 = vunpack.c.l.b16 %v537
    %v2449 = vunpack.c.l.b16 %v538
    %v2450 = vunpack.c.l.b16 %v539
    %v2451 = vunpack.c.l.b16 %v540
    %v2452 = vunpack.c.l.b16 %v541
    %v2453 = vunpack.c.l.b16 %v542
    %v2454 = vunpack.c.l.b16 %v543
    %v2455 = vunpack.c.l.b16 %v544
    %v2456 = vunpack.c.l.b16 %v545
    %v2457 = vunpack.c.l.b16 %v546
    %v2458 = vunpack.c.l.b16 %v547
    %v2459 = vunpack.c.l.b16 %v548
    %v2460 = vunpack.c.l.b16 %v549
    %v2461 = vunpack.c.l.b16 %v550
    %v2462 = vunpack.c.l.b16 %v551
    %v2463 = vunpack.c.l.b16 %v552
    %v2464 = vunpack.c.l.b16 %v553
    %v2465 = vunpack.c.l.b16 %v554
    %v2466 = vunpack.c.l.b16 %v555
    %v2467 = vunpack.c.l.b16 %v556
    %v2468 = vunpack.c.l.b16 %v557
    %v2469 = vunpack.c.l.b16 %v558
    %v2470 = vunpack.c.l.b16 %v559
    %v2471 = vunpack.c.l.b16 %v560
    %v2472 = vunpack.c.l.b16 %v561
    %v2473 = vunpack.c.l.b16 %v562
    %v2474 = vunpack.c.l.b16 %v563
    %v2475 = vunpack.c.l.b16 %v564
    %v2476 = vunpack.c.l.b16 %v565
    %v2477 = vunpack.c.l.b16 %v566
    %v2478 = vunpack.c.l.b16 %v567
    %v2479 = vunpack.c.l.b16 %v568
    %v2480 = vunpack.c.l.b16 %v569
    %v2481 = vunpack.c.l.b16 %v570
    %v2482 = vunpack.c.l.b16 %v571
    %v2483 = vunpack.c.l.b16 %v572
    %v2484 = vunpack.c.l.b16 %v573
    %v2485 = vunpack.c.l.b16 %v574
    %v2486 = vunpack.c.l.b16 %v575
    %v2487 = vunpack.c.l.b16 %v576
    %v2488 = vunpack.c.l.b16 %v577
    %v2489 = vunpack.c.l.b16 %v578
    %v2490 = vunpack.c.l.b16 %v579
    %v2491 = vunpack.c.l.b16 %v580
    %v2492 = vunpack.c.l.b16 %v581
    %v2493 = vpack.c.b16 %v2396, %v2395
    %v2494 = vpack.c.b16 %v2398, %v2397
    %v2495 = vpack.c.b16 %v2400, %v2399
    %v2496 = vpack.c.b16 %v2402, %v2401
    %v2497 = vpack.c.b16 %v2404, %v2403
    %v2498 = vpack.c.b16 %v2406, %v2405
    %v2499 = vpack.c.b16 %v2408, %v2407
    %v2500 = vpack.c.b16 %v2410, %v2409
    %v2501 = vpack.c.b16 %v2412, %v2411
    %v2502 = vpack.c.b16 %v2414, %v2413
    %v2503 = vpack.c.b16 %v2416, %v2415
    %v2504 = vpack.c.b16 %v2418, %v2417
    %v2505 = vpack.c.b16 %v2420, %v2419
    %v2506 = vpack.c.b16 %v2422, %v2421
    %v2507 = vpack.c.b16 %v2424, %v2423
    %v2508 = vpack.c.b16 %v2426, %v2425
    %v2509 = vpack.c.b16 %v2428, %v2427
    %v2510 = vpack.c.b16 %v2430, %v2429
    %v2511 = vpack.c.b16 %v2432, %v2431
    %v2512 = vpack.c.b16 %v2434, %v2433
    %v2513 = vpack.c.b16 %v2436, %v2435
    %v2514 = vpack.c.b16 %v2438, %v2437
    %v2515 = vpack.c.b16 %v2440, %v2439
    %v2516 = vpack.c.b16 %v2442, %v2441
    %v2517 = vpack.c.b16 %v2444, %v2443
    %v2518 = vpack.c.b16 %v2446, %v2445
    %v2519 = vpack.c.b16 %v2448, %v2447
    %v2520 = vpack.c.b16 %v2450, %v2449
    %v2521 = vpack.c.b16 %v2452, %v2451
    %v2522 = vpack.c.b16 %v2454, %v2453
    %v2523 = vpack.c.b16 %v2456, %v2455
    %v2524 = vpack.c.b16 %v2458, %v2457
    %v2525 = vpack.c.b16 %v2460, %v2459
    %v2526 = vpack.c.b16 %v2462, %v2461
    %v2527 = vpack.c.b16 %v2464, %v2463
    %v2528 = vpack.c.b16 %v2466, %v2465
    %v2529 = vpack.c.b16 %v2468, %v2467
    %v2530 = vpack.c.b16 %v2470, %v2469
    %v2531 = vpack.c.b16 %v2472, %v2471
    %v2532 = vpack.c.b16 %v2474, %v2473
    %v2533 = vpack.c.b16 %v2476, %v2475
    %v2534 = vpack.c.b16 %v2478, %v2477
    %v2535 = vpack.c.b16 %v2480, %v2479
    %v2536 = vpack.c.b16 %v2482, %v2481
    %v2537 = vpack.c.b16 %v2484, %v2483
    %v2538 = vpack.c.b16 %v2486, %v2485
    %v2539 = vpack.c.b16 %v2488, %v2487
    %v2540 = vpack.c.b16 %v2490, %v2489
    %v2541 = vpack.c.b16 %v2492, %v2491
    %vm2591 = vcmask 130048
    %v2593 = vsel %vm2591, %v1666, 0
    %v2596 = vsel %vm2591, %v1673, 0
    %v2599 = vsel %vm2591, %v1680, 0
    %v2602 = vsel %vm2591, %v1687, 0
    %v2605 = vsel %vm2591, %v1694, 0
    %v2608 = vsel %vm2591, %v1701, 0
    %v2611 = vsel %vm2591, %v1708, 0
    %v2614 = vsel %vm2591, %v1715, 0
    %v2617 = vsel %vm2591, %v1722, 0
    %v2620 = vsel %vm2591, %v1729, 0
    %v2623 = vsel %vm2591, %v1736, 0
    %v2626 = vsel %vm2591, %v1743, 0
    %v2629 = vsel %vm2591, %v1750, 0
    %v2632 = vsel %vm2591, %v1757, 0
    %v2635 = vsel %vm2591, %v1764, 0
    %v2638 = vsel %vm2591, %v1771, 0
    %v2641 = vsel %vm2591, %v1778, 0
    %v2644 = vsel %vm2591, %v1785, 0
    %v2647 = vsel %vm2591, %v1792, 0
    %v2650 = vsel %vm2591, %v1799, 0
    %v2653 = vsel %vm2591, %v1806, 0
    %v2656 = vsel %vm2591, %v1813, 0
    %v2659 = vsel %vm2591, %v1820, 0
    %v2662 = vsel %vm2591, %v1827, 0
    %v2665 = vsel %vm2591, %v1834, 0
    %v2668 = vsel %vm2591, %v1841, 0
    %v2671 = vsel %vm2591, %v1848, 0
    %v2674 = vsel %vm2591, %v1855, 0
    %v2677 = vsel %vm2591, %v1862, 0
    %v2680 = vsel %vm2591, %v1869, 0
    %v2683 = vsel %vm2591, %v1876, 0
    %v2686 = vsel %vm2591, %v1883, 0
    %v2689 = vsel %vm2591, %v1890, 0
    %v2692 = vsel %vm2591, %v1897, 0
    %v2695 = vsel %vm2591, %v1904, 0
    %v2698 = vsel %vm2591, %v1911, 0
    %v2701 = vsel %vm2591, %v1918, 0
    %v2704 = vsel %vm2591, %v1925, 0
    %v2707 = vsel %vm2591, %v1932, 0
    %v2710 = vsel %vm2591, %v1939, 0
    %v2713 = vsel %vm2591, %v1946, 0
    %v2716 = vsel %vm2591, %v1953, 0
    %v2719 = vsel %vm2591, %v1960, 0
    %v2722 = vsel %vm2591, %v1967, 0
    %v2725 = vsel %vm2591, %v1974, 0
    %v2728 = vsel %vm2591, %v1981, 0
    %v2731 = vsel %vm2591, %v1988, 0
    %v2734 = vsel %vm2591, %v1995, 0
    %v2737 = vsel %vm2591, %v2002, 0
    %2739 = vmatprep.subr.bf16.mxu0 0
    %2740 = vmatpush1.bf16.msra.mxu0 %v2493
    %2741 = vmatprep.subr.bf16.mxu0 0
    %2742 = vmatpush1.bf16.msra.mxu0 %v2494
    %2743 = vmatprep.subr.bf16.mxu0 0
    %2744 = vmatpush1.bf16.msra.mxu0 %v2495
    %2745 = vmatprep.subr.bf16.mxu0 0
    %2746 = vmatpush1.bf16.msra.mxu0 %v2496
    %2747 = vmatprep.subr.bf16.mxu0 0
    %2748 = vmatpush1.bf16.msra.mxu0 %v2497
    %2749 = vmatprep.subr.bf16.mxu0 0
    %2750 = vmatpush1.bf16.msra.mxu0 %v2498
    %2751 = vmatprep.subr.bf16.mxu0 0
    %2752 = vmatpush1.bf16.msra.mxu0 %v2499
    %2753 = vmatprep.subr.bf16.mxu0 0
    %2754 = vmatpush1.bf16.msra.mxu0 %v2500
    %2755 = vmatprep.subr.bf16.mxu0 0
    %2756 = vmatpush1.bf16.msra.mxu0 %v2501
    %2757 = vmatprep.subr.bf16.mxu0 0
    %2758 = vmatpush1.bf16.msra.mxu0 %v2502
    %2759 = vmatprep.subr.bf16.mxu0 0
    %2760 = vmatpush1.bf16.msra.mxu0 %v2503
    %2761 = vmatprep.subr.bf16.mxu0 0
    %2762 = vmatpush1.bf16.msra.mxu0 %v2504
    %2763 = vmatprep.subr.bf16.mxu0 0
    %2764 = vmatpush1.bf16.msra.mxu0 %v2505
    %2765 = vmatprep.subr.bf16.mxu0 0
    %2766 = vmatpush1.bf16.msra.mxu0 %v2506
    %2767 = vmatprep.subr.bf16.mxu0 0
    %2768 = vmatpush1.bf16.msra.mxu0 %v2507
    %2769 = vmatprep.subr.bf16.mxu0 0
    %2770 = vmatpush1.bf16.msra.mxu0 %v2508
    %2771 = vmatprep.mubr.bf16.mxu0 %v1661
    %2772 = vmatmul.mubr.bf16.gmra.mrb[0].mxu0 %v1660
    %v2773 = vpop.f32.mrb[0].mxu0
    %v2774 = vadd.f32 0.0, %v2773
    %v2775 = vpop.f32.mrb[0].mxu0
    %v2776 = vpop.f32.mrb[0].mxu0
    %v2777 = vadd.f32 0.0, %v2776
    %v2778 = vpop.f32.mrb[0].mxu0
    %2779 = vmatprep.mubr.bf16.mxu0 %v1668
    %2780 = vmatmul.mubr.bf16.gmra.mrb[0].mxu0 %v1667
    %v2781 = vpop.f32.mrb[0].mxu0
    %v2782 = vadd.f32 0.0, %v2781
    %v2783 = vpop.f32.mrb[0].mxu0
    %v2784 = vpop.f32.mrb[0].mxu0
    %v2785 = vadd.f32 0.0, %v2784
    %v2786 = vpop.f32.mrb[0].mxu0
    %2787 = vmatprep.mubr.bf16.mxu0 %v1675
    %2788 = vmatmul.mubr.bf16.gmra.mrb[0].mxu0 %v1674
    %v2789 = vpop.f32.mrb[0].mxu0
    %v2790 = vadd.f32 0.0, %v2789
    %v2791 = vpop.f32.mrb[0].mxu0
    %v2792 = vpop.f32.mrb[0].mxu0
    %v2793 = vadd.f32 0.0, %v2792
    %v2794 = vpop.f32.mrb[0].mxu0
    %2795 = vmatprep.mubr.bf16.mxu0 %v1682
    %2796 = vmatmul.mubr.bf16.gmra.mrb[0].mxu0 %v1681
    %v2797 = vpop.f32.mrb[0].mxu0
    %v2798 = vadd.f32 0.0, %v2797
    %v2799 = vpop.f32.mrb[0].mxu0
    %v2800 = vpop.f32.mrb[0].mxu0
    %v2801 = vadd.f32 0.0, %v2800
    %v2802 = vpop.f32.mrb[0].mxu0
    %2803 = vmatprep.mubr.bf16.mxu0 %v1689
    %2804 = vmatmul.mubr.bf16.gmra.mrb[0].mxu0 %v1688
    %v2805 = vpop.f32.mrb[0].mxu0
    %v2806 = vadd.f32 0.0, %v2805
    %v2807 = vpop.f32.mrb[0].mxu0
    %v2808 = vpop.f32.mrb[0].mxu0
    %v2809 = vadd.f32 0.0, %v2808
    %v2810 = vpop.f32.mrb[0].mxu0
    %2811 = vmatprep.mubr.bf16.mxu0 %v1696
    %2812 = vmatmul.mubr.bf16.gmra.mrb[0].mxu0 %v1695
    %v2813 = vpop.f32.mrb[0].mxu0
    %v2814 = vadd.f32 0.0, %v2813
    %v2815 = vpop.f32.mrb[0].mxu0
    %v2816 = vpop.f32.mrb[0].mxu0
    %v2817 = vadd.f32 0.0, %v2816
    %v2818 = vpop.f32.mrb[0].mxu0
    %2819 = vmatprep.mubr.bf16.mxu0 %v1703
    %2820 = vmatmul.mubr.bf16.gmra.mrb[0].mxu0 %v1702
    %v2821 = vpop.f32.mrb[0].mxu0
    %v2822 = vadd.f32 0.0, %v2821
    %v2823 = vpop.f32.mrb[0].mxu0
    %v2824 = vpop.f32.mrb[0].mxu0
    %v2825 = vadd.f32 0.0, %v2824
    %v2826 = vpop.f32.mrb[0].mxu0
    %2827 = vmatprep.mubr.bf16.mxu0 %v1710
    %2828 = vmatmul.mubr.bf16.gmra.mrb[0].mxu0 %v1709
    %v2829 = vpop.f32.mrb[0].mxu0
    %v2830 = vadd.f32 0.0, %v2829
    %v2831 = vpop.f32.mrb[0].mxu0
    %v2832 = vpop.f32.mrb[0].mxu0
    %v2833 = vadd.f32 0.0, %v2832
    %v2834 = vpop.f32.mrb[0].mxu0
    %2835 = vmatprep.mubr.bf16.mxu0 %v1717
    %2836 = vmatmul.mubr.bf16.gmra.mrb[0].mxu0 %v1716
    %v2837 = vpop.f32.mrb[0].mxu0
    %v2838 = vadd.f32 0.0, %v2837
    %v2839 = vpop.f32.mrb[0].mxu0
    %v2840 = vpop.f32.mrb[0].mxu0
    %v2841 = vadd.f32 0.0, %v2840
    %v2842 = vpop.f32.mrb[0].mxu0
    %2843 = vmatprep.mubr.bf16.mxu0 %v1724
    %2844 = vmatmul.mubr.bf16.gmra.mrb[0].mxu0 %v1723
    %v2845 = vpop.f32.mrb[0].mxu0
    %v2846 = vadd.f32 0.0, %v2845
    %v2847 = vpop.f32.mrb[0].mxu0
    %v2848 = vpop.f32.mrb[0].mxu0
    %v2849 = vadd.f32 0.0, %v2848
    %v2850 = vpop.f32.mrb[0].mxu0
    %2851 = vmatprep.mubr.bf16.mxu0 %v1731
    %2852 = vmatmul.mubr.bf16.gmra.mrb[0].mxu0 %v1730
    %v2853 = vpop.f32.mrb[0].mxu0
    %v2854 = vadd.f32 0.0, %v2853
    %v2855 = vpop.f32.mrb[0].mxu0
    %v2856 = vpop.f32.mrb[0].mxu0
    %v2857 = vadd.f32 0.0, %v2856
    %v2858 = vpop.f32.mrb[0].mxu0
    %2859 = vmatprep.mubr.bf16.mxu0 %v1738
    %2860 = vmatmul.mubr.bf16.gmra.mrb[0].mxu0 %v1737
    %v2861 = vpop.f32.mrb[0].mxu0
    %v2862 = vadd.f32 0.0, %v2861
    %v2863 = vpop.f32.mrb[0].mxu0
    %v2864 = vpop.f32.mrb[0].mxu0
    %v2865 = vadd.f32 0.0, %v2864
    %v2866 = vpop.f32.mrb[0].mxu0
    %2867 = vmatprep.mubr.bf16.mxu0 %v1745
    %2868 = vmatmul.mubr.bf16.gmra.mrb[0].mxu0 %v1744
    %v2869 = vpop.f32.mrb[0].mxu0
    %v2870 = vadd.f32 0.0, %v2869
    %v2871 = vpop.f32.mrb[0].mxu0
    %v2872 = vpop.f32.mrb[0].mxu0
    %v2873 = vadd.f32 0.0, %v2872
    %v2874 = vpop.f32.mrb[0].mxu0
    %2875 = vmatprep.mubr.bf16.mxu0 %v1752
    %2876 = vmatmul.mubr.bf16.gmra.mrb[0].mxu0 %v1751
    %v2877 = vpop.f32.mrb[0].mxu0
    %v2878 = vadd.f32 0.0, %v2877
    %v2879 = vpop.f32.mrb[0].mxu0
    %v2880 = vpop.f32.mrb[0].mxu0
    %v2881 = vadd.f32 0.0, %v2880
    %v2882 = vpop.f32.mrb[0].mxu0
    %2883 = vmatprep.mubr.bf16.mxu0 %v1759
    %2884 = vmatmul.mubr.bf16.gmra.mrb[0].mxu0 %v1758
    %v2885 = vpop.f32.mrb[0].mxu0
    %v2886 = vadd.f32 0.0, %v2885
    %v2887 = vpop.f32.mrb[0].mxu0
    %v2888 = vpop.f32.mrb[0].mxu0
    %v2889 = vadd.f32 0.0, %v2888
    %v2890 = vpop.f32.mrb[0].mxu0
    %2891 = vmatprep.mubr.bf16.mxu0 %v1766
    %2892 = vmatmul.mubr.bf16.gmra.mrb[0].mxu0 %v1765
    %v2893 = vpop.f32.mrb[0].mxu0
    %v2894 = vadd.f32 0.0, %v2893
    %v2895 = vpop.f32.mrb[0].mxu0
    %v2896 = vpop.f32.mrb[0].mxu0
    %v2897 = vadd.f32 0.0, %v2896
    %v2898 = vpop.f32.mrb[0].mxu0
    %2899 = vmatprep.mubr.bf16.mxu0 %v1773
    %2900 = vmatmul.mubr.bf16.gmra.mrb[0].mxu0 %v1772
    %v2901 = vpop.f32.mrb[0].mxu0
    %v2902 = vadd.f32 0.0, %v2901
    %v2903 = vpop.f32.mrb[0].mxu0
    %v2904 = vpop.f32.mrb[0].mxu0
    %v2905 = vadd.f32 0.0, %v2904
    %v2906 = vpop.f32.mrb[0].mxu0
    %2907 = vmatprep.mubr.bf16.mxu0 %v1780
    %2908 = vmatmul.mubr.bf16.gmra.mrb[0].mxu0 %v1779
    %v2909 = vpop.f32.mrb[0].mxu0
    %v2910 = vadd.f32 0.0, %v2909
    %v2911 = vpop.f32.mrb[0].mxu0
    %v2912 = vpop.f32.mrb[0].mxu0
    %v2913 = vadd.f32 0.0, %v2912
    %v2914 = vpop.f32.mrb[0].mxu0
    %2915 = vmatprep.mubr.bf16.mxu0 %v1787
    %2916 = vmatmul.mubr.bf16.gmra.mrb[0].mxu0 %v1786
    %v2917 = vpop.f32.mrb[0].mxu0
    %v2918 = vadd.f32 0.0, %v2917
    %v2919 = vpop.f32.mrb[0].mxu0
    %v2920 = vpop.f32.mrb[0].mxu0
    %v2921 = vadd.f32 0.0, %v2920
    %v2922 = vpop.f32.mrb[0].mxu0
    %2923 = vmatprep.mubr.bf16.mxu0 %v1794
    %2924 = vmatmul.mubr.bf16.gmra.mrb[0].mxu0 %v1793
    %v2925 = vpop.f32.mrb[0].mxu0
    %v2926 = vadd.f32 0.0, %v2925
    %v2927 = vpop.f32.mrb[0].mxu0
    %v2928 = vpop.f32.mrb[0].mxu0
    %v2929 = vadd.f32 0.0, %v2928
    %v2930 = vpop.f32.mrb[0].mxu0
    %2931 = vmatprep.mubr.bf16.mxu0 %v1801
    %2932 = vmatmul.mubr.bf16.gmra.mrb[0].mxu0 %v1800
    %v2933 = vpop.f32.mrb[0].mxu0
    %v2934 = vadd.f32 0.0, %v2933
    %v2935 = vpop.f32.mrb[0].mxu0
    %v2936 = vpop.f32.mrb[0].mxu0
    %v2937 = vadd.f32 0.0, %v2936
    %v2938 = vpop.f32.mrb[0].mxu0
    %2939 = vmatprep.mubr.bf16.mxu0 %v1808
    %2940 = vmatmul.mubr.bf16.gmra.mrb[0].mxu0 %v1807
    %v2941 = vpop.f32.mrb[0].mxu0
    %v2942 = vadd.f32 0.0, %v2941
    %v2943 = vpop.f32.mrb[0].mxu0
    %v2944 = vpop.f32.mrb[0].mxu0
    %v2945 = vadd.f32 0.0, %v2944
    %v2946 = vpop.f32.mrb[0].mxu0
    %2947 = vmatprep.mubr.bf16.mxu0 %v1815
    %2948 = vmatmul.mubr.bf16.gmra.mrb[0].mxu0 %v1814
    %v2949 = vpop.f32.mrb[0].mxu0
    %v2950 = vadd.f32 0.0, %v2949
    %v2951 = vpop.f32.mrb[0].mxu0
    %v2952 = vpop.f32.mrb[0].mxu0
    %v2953 = vadd.f32 0.0, %v2952
    %v2954 = vpop.f32.mrb[0].mxu0
    %2955 = vmatprep.mubr.bf16.mxu0 %v1822
    %2956 = vmatmul.mubr.bf16.gmra.mrb[0].mxu0 %v1821
    %v2957 = vpop.f32.mrb[0].mxu0
    %v2958 = vadd.f32 0.0, %v2957
    %v2959 = vpop.f32.mrb[0].mxu0
    %v2960 = vpop.f32.mrb[0].mxu0
    %v2961 = vadd.f32 0.0, %v2960
    %v2962 = vpop.f32.mrb[0].mxu0
    %2963 = vmatprep.mubr.bf16.mxu0 %v1829
    %2964 = vmatmul.mubr.bf16.gmra.mrb[0].mxu0 %v1828
    %v2965 = vpop.f32.mrb[0].mxu0
    %v2966 = vadd.f32 0.0, %v2965
    %v2967 = vpop.f32.mrb[0].mxu0
    %v2968 = vpop.f32.mrb[0].mxu0
    %v2969 = vadd.f32 0.0, %v2968
    %v2970 = vpop.f32.mrb[0].mxu0
    %2971 = vmatprep.mubr.bf16.mxu0 %v1836
    %2972 = vmatmul.mubr.bf16.gmra.mrb[0].mxu0 %v1835
    %v2973 = vpop.f32.mrb[0].mxu0
    %v2974 = vadd.f32 0.0, %v2973
    %v2975 = vpop.f32.mrb[0].mxu0
    %v2976 = vpop.f32.mrb[0].mxu0
    %v2977 = vadd.f32 0.0, %v2976
    %v2978 = vpop.f32.mrb[0].mxu0
    %2979 = vmatprep.mubr.bf16.mxu0 %v1843
    %2980 = vmatmul.mubr.bf16.gmra.mrb[0].mxu0 %v1842
    %v2981 = vpop.f32.mrb[0].mxu0
    %v2982 = vadd.f32 0.0, %v2981
    %v2983 = vpop.f32.mrb[0].mxu0
    %v2984 = vpop.f32.mrb[0].mxu0
    %v2985 = vadd.f32 0.0, %v2984
    %v2986 = vpop.f32.mrb[0].mxu0
    %2987 = vmatprep.mubr.bf16.mxu0 %v1850
    %2988 = vmatmul.mubr.bf16.gmra.mrb[0].mxu0 %v1849
    %v2989 = vpop.f32.mrb[0].mxu0
    %v2990 = vadd.f32 0.0, %v2989
    %v2991 = vpop.f32.mrb[0].mxu0
    %v2992 = vpop.f32.mrb[0].mxu0
    %v2993 = vadd.f32 0.0, %v2992
    %v2994 = vpop.f32.mrb[0].mxu0
    %2995 = vmatprep.mubr.bf16.mxu0 %v1857
    %2996 = vmatmul.mubr.bf16.gmra.mrb[0].mxu0 %v1856
    %v2997 = vpop.f32.mrb[0].mxu0
    %v2998 = vadd.f32 0.0, %v2997
    %v2999 = vpop.f32.mrb[0].mxu0
    %v3000 = vpop.f32.mrb[0].mxu0
    %v3001 = vadd.f32 0.0, %v3000
    %v3002 = vpop.f32.mrb[0].mxu0
    %3003 = vmatprep.mubr.bf16.mxu0 %v1864
    %3004 = vmatmul.mubr.bf16.gmra.mrb[0].mxu0 %v1863
    %v3005 = vpop.f32.mrb[0].mxu0
    %v3006 = vadd.f32 0.0, %v3005
    %v3007 = vpop.f32.mrb[0].mxu0
    %v3008 = vpop.f32.mrb[0].mxu0
    %v3009 = vadd.f32 0.0, %v3008
    %v3010 = vpop.f32.mrb[0].mxu0
    %3011 = vmatprep.mubr.bf16.mxu0 %v1871
    %3012 = vmatmul.mubr.bf16.gmra.mrb[0].mxu0 %v1870
    %v3013 = vpop.f32.mrb[0].mxu0
    %v3014 = vadd.f32 0.0, %v3013
    %v3015 = vpop.f32.mrb[0].mxu0
    %v3016 = vpop.f32.mrb[0].mxu0
    %v3017 = vadd.f32 0.0, %v3016
    %v3018 = vpop.f32.mrb[0].mxu0
    %3019 = vmatprep.mubr.bf16.mxu0 %v1878
    %3020 = vmatmul.mubr.bf16.gmra.mrb[0].mxu0 %v1877
    %v3021 = vpop.f32.mrb[0].mxu0
    %v3022 = vadd.f32 0.0, %v3021
    %v3023 = vpop.f32.mrb[0].mxu0
    %v3024 = vpop.f32.mrb[0].mxu0
    %v3025 = vadd.f32 0.0, %v3024
    %v3026 = vpop.f32.mrb[0].mxu0
    %3027 = vmatprep.mubr.bf16.mxu0 %v1885
    %3028 = vmatmul.mubr.bf16.gmra.mrb[0].mxu0 %v1884
    %v3029 = vpop.f32.mrb[0].mxu0
    %v3030 = vadd.f32 0.0, %v3029
    %v3031 = vpop.f32.mrb[0].mxu0
    %v3032 = vpop.f32.mrb[0].mxu0
    %v3033 = vadd.f32 0.0, %v3032
    %v3034 = vpop.f32.mrb[0].mxu0
    %3035 = vmatprep.mubr.bf16.mxu0 %v1892
    %3036 = vmatmul.mubr.bf16.gmra.mrb[0].mxu0 %v1891
    %v3037 = vpop.f32.mrb[0].mxu0
    %v3038 = vadd.f32 0.0, %v3037
    %v3039 = vpop.f32.mrb[0].mxu0
    %v3040 = vpop.f32.mrb[0].mxu0
    %v3041 = vadd.f32 0.0, %v3040
    %v3042 = vpop.f32.mrb[0].mxu0
    %3043 = vmatprep.mubr.bf16.mxu0 %v1899
    %3044 = vmatmul.mubr.bf16.gmra.mrb[0].mxu0 %v1898
    %v3045 = vpop.f32.mrb[0].mxu0
    %v3046 = vadd.f32 0.0, %v3045
    %v3047 = vpop.f32.mrb[0].mxu0
    %v3048 = vpop.f32.mrb[0].mxu0
    %v3049 = vadd.f32 0.0, %v3048
    %v3050 = vpop.f32.mrb[0].mxu0
    %3051 = vmatprep.mubr.bf16.mxu0 %v1906
    %3052 = vmatmul.mubr.bf16.gmra.mrb[0].mxu0 %v1905
    %v3053 = vpop.f32.mrb[0].mxu0
    %v3054 = vadd.f32 0.0, %v3053
    %v3055 = vpop.f32.mrb[0].mxu0
    %v3056 = vpop.f32.mrb[0].mxu0
    %v3057 = vadd.f32 0.0, %v3056
    %v3058 = vpop.f32.mrb[0].mxu0
    %3059 = vmatprep.mubr.bf16.mxu0 %v1913
    %3060 = vmatmul.mubr.bf16.gmra.mrb[0].mxu0 %v1912
    %v3061 = vpop.f32.mrb[0].mxu0
    %v3062 = vadd.f32 0.0, %v3061
    %v3063 = vpop.f32.mrb[0].mxu0
    %v3064 = vpop.f32.mrb[0].mxu0
    %v3065 = vadd.f32 0.0, %v3064
    %v3066 = vpop.f32.mrb[0].mxu0
    %3067 = vmatprep.mubr.bf16.mxu0 %v1920
    %3068 = vmatmul.mubr.bf16.gmra.mrb[0].mxu0 %v1919
    %v3069 = vpop.f32.mrb[0].mxu0
    %v3070 = vadd.f32 0.0, %v3069
    %v3071 = vpop.f32.mrb[0].mxu0
    %v3072 = vpop.f32.mrb[0].mxu0
    %v3073 = vadd.f32 0.0, %v3072
    %v3074 = vpop.f32.mrb[0].mxu0
    %3075 = vmatprep.mubr.bf16.mxu0 %v1927
    %3076 = vmatmul.mubr.bf16.gmra.mrb[0].mxu0 %v1926
    %v3077 = vpop.f32.mrb[0].mxu0
    %v3078 = vadd.f32 0.0, %v3077
    %v3079 = vpop.f32.mrb[0].mxu0
    %v3080 = vpop.f32.mrb[0].mxu0
    %v3081 = vadd.f32 0.0, %v3080
    %v3082 = vpop.f32.mrb[0].mxu0
    %3083 = vmatprep.mubr.bf16.mxu0 %v1934
    %3084 = vmatmul.mubr.bf16.gmra.mrb[0].mxu0 %v1933
    %v3085 = vpop.f32.mrb[0].mxu0
    %v3086 = vadd.f32 0.0, %v3085
    %v3087 = vpop.f32.mrb[0].mxu0
    %v3088 = vpop.f32.mrb[0].mxu0
    %v3089 = vadd.f32 0.0, %v3088
    %v3090 = vpop.f32.mrb[0].mxu0
    %3091 = vmatprep.mubr.bf16.mxu0 %v1941
    %3092 = vmatmul.mubr.bf16.gmra.mrb[0].mxu0 %v1940
    %v3093 = vpop.f32.mrb[0].mxu0
    %v3094 = vadd.f32 0.0, %v3093
    %v3095 = vpop.f32.mrb[0].mxu0
    %v3096 = vpop.f32.mrb[0].mxu0
    %v3097 = vadd.f32 0.0, %v3096
    %v3098 = vpop.f32.mrb[0].mxu0
    %3099 = vmatprep.mubr.bf16.mxu0 %v1948
    %3100 = vmatmul.mubr.bf16.gmra.mrb[0].mxu0 %v1947
    %v3101 = vpop.f32.mrb[0].mxu0
    %v3102 = vadd.f32 0.0, %v3101
    %v3103 = vpop.f32.mrb[0].mxu0
    %v3104 = vpop.f32.mrb[0].mxu0
    %v3105 = vadd.f32 0.0, %v3104
    %v3106 = vpop.f32.mrb[0].mxu0
    %3107 = vmatprep.mubr.bf16.mxu0 %v1955
    %3108 = vmatmul.mubr.bf16.gmra.mrb[0].mxu0 %v1954
    %v3109 = vpop.f32.mrb[0].mxu0
    %v3110 = vadd.f32 0.0, %v3109
    %v3111 = vpop.f32.mrb[0].mxu0
    %v3112 = vpop.f32.mrb[0].mxu0
    %v3113 = vadd.f32 0.0, %v3112
    %v3114 = vpop.f32.mrb[0].mxu0
    %3115 = vmatprep.mubr.bf16.mxu0 %v1962
    %3116 = vmatmul.mubr.bf16.gmra.mrb[0].mxu0 %v1961
    %v3117 = vpop.f32.mrb[0].mxu0
    %v3118 = vadd.f32 0.0, %v3117
    %v3119 = vpop.f32.mrb[0].mxu0
    %v3120 = vpop.f32.mrb[0].mxu0
    %v3121 = vadd.f32 0.0, %v3120
    %v3122 = vpop.f32.mrb[0].mxu0
    %3123 = vmatprep.mubr.bf16.mxu0 %v1969
    %3124 = vmatmul.mubr.bf16.gmra.mrb[0].mxu0 %v1968
    %v3125 = vpop.f32.mrb[0].mxu0
    %v3126 = vadd.f32 0.0, %v3125
    %v3127 = vpop.f32.mrb[0].mxu0
    %v3128 = vpop.f32.mrb[0].mxu0
    %v3129 = vadd.f32 0.0, %v3128
    %v3130 = vpop.f32.mrb[0].mxu0
    %3131 = vmatprep.mubr.bf16.mxu0 %v1976
    %3132 = vmatmul.mubr.bf16.gmra.mrb[0].mxu0 %v1975
    %v3133 = vpop.f32.mrb[0].mxu0
    %v3134 = vadd.f32 0.0, %v3133
    %v3135 = vpop.f32.mrb[0].mxu0
    %v3136 = vpop.f32.mrb[0].mxu0
    %v3137 = vadd.f32 0.0, %v3136
    %v3138 = vpop.f32.mrb[0].mxu0
    %3139 = vmatprep.mubr.bf16.mxu0 %v1983
    %3140 = vmatmul.mubr.bf16.gmra.mrb[0].mxu0 %v1982
    %v3141 = vpop.f32.mrb[0].mxu0
    %v3142 = vadd.f32 0.0, %v3141
    %v3143 = vpop.f32.mrb[0].mxu0
    %v3144 = vpop.f32.mrb[0].mxu0
    %v3145 = vadd.f32 0.0, %v3144
    %v3146 = vpop.f32.mrb[0].mxu0
    %3147 = vmatprep.mubr.bf16.mxu0 %v1990
    %3148 = vmatmul.mubr.bf16.gmra.mrb[0].mxu0 %v1989
    %v3149 = vpop.f32.mrb[0].mxu0
    %v3150 = vadd.f32 0.0, %v3149
    %v3151 = vpop.f32.mrb[0].mxu0
    %v3152 = vpop.f32.mrb[0].mxu0
    %v3153 = vadd.f32 0.0, %v3152
    %v3154 = vpop.f32.mrb[0].mxu0
    %3155 = vmatprep.mubr.bf16.mxu0 %v1997
    %3156 = vmatmul.mubr.bf16.gmra.mrb[0].mxu0 %v1996
    %v3157 = vpop.f32.mrb[0].mxu0
    %v3158 = vadd.f32 0.0, %v3157
    %v3159 = vpop.f32.mrb[0].mxu0
    %v3160 = vpop.f32.mrb[0].mxu0
    %v3161 = vadd.f32 0.0, %v3160
    %v3162 = vpop.f32.mrb[0].mxu0
    %3163 = vdwg.mxu0
    %3164 = vmatprep.subr.bf16.mxu0 0
    %3165 = vmatpush1.bf16.msra.mxu0 %v2509
    %3166 = vmatprep.subr.bf16.mxu0 0
    %3167 = vmatpush1.bf16.msra.mxu0 %v2510
    %3168 = vmatprep.subr.bf16.mxu0 0
    %3169 = vmatpush1.bf16.msra.mxu0 %v2511
    %3170 = vmatprep.subr.bf16.mxu0 0
    %3171 = vmatpush1.bf16.msra.mxu0 %v2512
    %3172 = vmatprep.subr.bf16.mxu0 0
    %3173 = vmatpush1.bf16.msra.mxu0 %v2513
    %3174 = vmatprep.subr.bf16.mxu0 0
    %3175 = vmatpush1.bf16.msra.mxu0 %v2514
    %3176 = vmatprep.subr.bf16.mxu0 0
    %3177 = vmatpush1.bf16.msra.mxu0 %v2515
    %3178 = vmatprep.subr.bf16.mxu0 0
    %3179 = vmatpush1.bf16.msra.mxu0 %v2516
    %3180 = vmatprep.subr.bf16.mxu0 0
    %3181 = vmatpush1.bf16.msra.mxu0 %v2517
    %3182 = vmatprep.subr.bf16.mxu0 0
    %3183 = vmatpush1.bf16.msra.mxu0 %v2518
    %3184 = vmatprep.subr.bf16.mxu0 0
    %3185 = vmatpush1.bf16.msra.mxu0 %v2519
    %3186 = vmatprep.subr.bf16.mxu0 0
    %3187 = vmatpush1.bf16.msra.mxu0 %v2520
    %3188 = vmatprep.subr.bf16.mxu0 0
    %3189 = vmatpush1.bf16.msra.mxu0 %v2521
    %3190 = vmatprep.subr.bf16.mxu0 0
    %3191 = vmatpush1.bf16.msra.mxu0 %v2522
    %3192 = vmatprep.subr.bf16.mxu0 0
    %3193 = vmatpush1.bf16.msra.mxu0 %v2523
    %3194 = vmatprep.subr.bf16.mxu0 0
    %3195 = vmatpush1.bf16.msra.mxu0 %v2524
    %3196 = vmatprep.mubr.bf16.mxu0 %v1663
    %3197 = vmatmul.mubr.bf16.gmra.mrb[0].mxu0 %v1662
    %v3198 = vpop.f32.mrb[0].mxu0
    %v3199 = vadd.f32 %v2774, %v3198
    %v3200 = vpop.f32.mrb[0].mxu0
    %v3201 = vpop.f32.mrb[0].mxu0
    %v3202 = vadd.f32 %v2777, %v3201
    %v3203 = vpop.f32.mrb[0].mxu0
    %3204 = vmatprep.mubr.bf16.mxu0 %v1670
    %3205 = vmatmul.mubr.bf16.gmra.mrb[0].mxu0 %v1669
    %v3206 = vpop.f32.mrb[0].mxu0
    %v3207 = vadd.f32 %v2782, %v3206
    %v3208 = vpop.f32.mrb[0].mxu0
    %v3209 = vpop.f32.mrb[0].mxu0
    %v3210 = vadd.f32 %v2785, %v3209
    %v3211 = vpop.f32.mrb[0].mxu0
    %3212 = vmatprep.mubr.bf16.mxu0 %v1677
    %3213 = vmatmul.mubr.bf16.gmra.mrb[0].mxu0 %v1676
    %v3214 = vpop.f32.mrb[0].mxu0
    %v3215 = vadd.f32 %v2790, %v3214
    %v3216 = vpop.f32.mrb[0].mxu0
    %v3217 = vpop.f32.mrb[0].mxu0
    %v3218 = vadd.f32 %v2793, %v3217
    %v3219 = vpop.f32.mrb[0].mxu0
    %3220 = vmatprep.mubr.bf16.mxu0 %v1684
    %3221 = vmatmul.mubr.bf16.gmra.mrb[0].mxu0 %v1683
    %v3222 = vpop.f32.mrb[0].mxu0
    %v3223 = vadd.f32 %v2798, %v3222
    %v3224 = vpop.f32.mrb[0].mxu0
    %v3225 = vpop.f32.mrb[0].mxu0
    %v3226 = vadd.f32 %v2801, %v3225
    %v3227 = vpop.f32.mrb[0].mxu0
    %3228 = vmatprep.mubr.bf16.mxu0 %v1691
    %3229 = vmatmul.mubr.bf16.gmra.mrb[0].mxu0 %v1690
    %v3230 = vpop.f32.mrb[0].mxu0
    %v3231 = vadd.f32 %v2806, %v3230
    %v3232 = vpop.f32.mrb[0].mxu0
    %v3233 = vpop.f32.mrb[0].mxu0
    %v3234 = vadd.f32 %v2809, %v3233
    %v3235 = vpop.f32.mrb[0].mxu0
    %3236 = vmatprep.mubr.bf16.mxu0 %v1698
    %3237 = vmatmul.mubr.bf16.gmra.mrb[0].mxu0 %v1697
    %v3238 = vpop.f32.mrb[0].mxu0
    %v3239 = vadd.f32 %v2814, %v3238
    %v3240 = vpop.f32.mrb[0].mxu0
    %v3241 = vpop.f32.mrb[0].mxu0
    %v3242 = vadd.f32 %v2817, %v3241
    %v3243 = vpop.f32.mrb[0].mxu0
    %3244 = vmatprep.mubr.bf16.mxu0 %v1705
    %3245 = vmatmul.mubr.bf16.gmra.mrb[0].mxu0 %v1704
    %v3246 = vpop.f32.mrb[0].mxu0
    %v3247 = vadd.f32 %v2822, %v3246
    %v3248 = vpop.f32.mrb[0].mxu0
    %v3249 = vpop.f32.mrb[0].mxu0
    %v3250 = vadd.f32 %v2825, %v3249
    %v3251 = vpop.f32.mrb[0].mxu0
    %3252 = vmatprep.mubr.bf16.mxu0 %v1712
    %3253 = vmatmul.mubr.bf16.gmra.mrb[0].mxu0 %v1711
    %v3254 = vpop.f32.mrb[0].mxu0
    %v3255 = vadd.f32 %v2830, %v3254
    %v3256 = vpop.f32.mrb[0].mxu0
    %v3257 = vpop.f32.mrb[0].mxu0
    %v3258 = vadd.f32 %v2833, %v3257
    %v3259 = vpop.f32.mrb[0].mxu0
    %3260 = vmatprep.mubr.bf16.mxu0 %v1719
    %3261 = vmatmul.mubr.bf16.gmra.mrb[0].mxu0 %v1718
    %v3262 = vpop.f32.mrb[0].mxu0
    %v3263 = vadd.f32 %v2838, %v3262
    %v3264 = vpop.f32.mrb[0].mxu0
    %v3265 = vpop.f32.mrb[0].mxu0
    %v3266 = vadd.f32 %v2841, %v3265
    %v3267 = vpop.f32.mrb[0].mxu0
    %3268 = vmatprep.mubr.bf16.mxu0 %v1726
    %3269 = vmatmul.mubr.bf16.gmra.mrb[0].mxu0 %v1725
    %v3270 = vpop.f32.mrb[0].mxu0
    %v3271 = vadd.f32 %v2846, %v3270
    %v3272 = vpop.f32.mrb[0].mxu0
    %v3273 = vpop.f32.mrb[0].mxu0
    %v3274 = vadd.f32 %v2849, %v3273
    %v3275 = vpop.f32.mrb[0].mxu0
    %3276 = vmatprep.mubr.bf16.mxu0 %v1733
    %3277 = vmatmul.mubr.bf16.gmra.mrb[0].mxu0 %v1732
    %v3278 = vpop.f32.mrb[0].mxu0
    %v3279 = vadd.f32 %v2854, %v3278
    %v3280 = vpop.f32.mrb[0].mxu0
    %v3281 = vpop.f32.mrb[0].mxu0
    %v3282 = vadd.f32 %v2857, %v3281
    %v3283 = vpop.f32.mrb[0].mxu0
    %3284 = vmatprep.mubr.bf16.mxu0 %v1740
    %3285 = vmatmul.mubr.bf16.gmra.mrb[0].mxu0 %v1739
    %v3286 = vpop.f32.mrb[0].mxu0
    %v3287 = vadd.f32 %v2862, %v3286
    %v3288 = vpop.f32.mrb[0].mxu0
    %v3289 = vpop.f32.mrb[0].mxu0
    %v3290 = vadd.f32 %v2865, %v3289
    %v3291 = vpop.f32.mrb[0].mxu0
    %3292 = vmatprep.mubr.bf16.mxu0 %v1747
    %3293 = vmatmul.mubr.bf16.gmra.mrb[0].mxu0 %v1746
    %v3294 = vpop.f32.mrb[0].mxu0
    %v3295 = vadd.f32 %v2870, %v3294
    %v3296 = vpop.f32.mrb[0].mxu0
    %v3297 = vpop.f32.mrb[0].mxu0
    %v3298 = vadd.f32 %v2873, %v3297
    %v3299 = vpop.f32.mrb[0].mxu0
    %3300 = vmatprep.mubr.bf16.mxu0 %v1754
    %3301 = vmatmul.mubr.bf16.gmra.mrb[0].mxu0 %v1753
    %v3302 = vpop.f32.mrb[0].mxu0
    %v3303 = vadd.f32 %v2878, %v3302
    %v3304 = vpop.f32.mrb[0].mxu0
    %v3305 = vpop.f32.mrb[0].mxu0
    %v3306 = vadd.f32 %v2881, %v3305
    %v3307 = vpop.f32.mrb[0].mxu0
    %3308 = vmatprep.mubr.bf16.mxu0 %v1761
    %3309 = vmatmul.mubr.bf16.gmra.mrb[0].mxu0 %v1760
    %v3310 = vpop.f32.mrb[0].mxu0
    %v3311 = vadd.f32 %v2886, %v3310
    %v3312 = vpop.f32.mrb[0].mxu0
    %v3313 = vpop.f32.mrb[0].mxu0
    %v3314 = vadd.f32 %v2889, %v3313
    %v3315 = vpop.f32.mrb[0].mxu0
    %3316 = vmatprep.mubr.bf16.mxu0 %v1768
    %3317 = vmatmul.mubr.bf16.gmra.mrb[0].mxu0 %v1767
    %v3318 = vpop.f32.mrb[0].mxu0
    %v3319 = vadd.f32 %v2894, %v3318
    %v3320 = vpop.f32.mrb[0].mxu0
    %v3321 = vpop.f32.mrb[0].mxu0
    %v3322 = vadd.f32 %v2897, %v3321
    %v3323 = vpop.f32.mrb[0].mxu0
    %3324 = vmatprep.mubr.bf16.mxu0 %v1775
    %3325 = vmatmul.mubr.bf16.gmra.mrb[0].mxu0 %v1774
    %v3326 = vpop.f32.mrb[0].mxu0
    %v3327 = vadd.f32 %v2902, %v3326
    %v3328 = vpop.f32.mrb[0].mxu0
    %v3329 = vpop.f32.mrb[0].mxu0
    %v3330 = vadd.f32 %v2905, %v3329
    %v3331 = vpop.f32.mrb[0].mxu0
    %3332 = vmatprep.mubr.bf16.mxu0 %v1782
    %3333 = vmatmul.mubr.bf16.gmra.mrb[0].mxu0 %v1781
    %v3334 = vpop.f32.mrb[0].mxu0
    %v3335 = vadd.f32 %v2910, %v3334
    %v3336 = vpop.f32.mrb[0].mxu0
    %v3337 = vpop.f32.mrb[0].mxu0
    %v3338 = vadd.f32 %v2913, %v3337
    %v3339 = vpop.f32.mrb[0].mxu0
    %3340 = vmatprep.mubr.bf16.mxu0 %v1789
    %3341 = vmatmul.mubr.bf16.gmra.mrb[0].mxu0 %v1788
    %v3342 = vpop.f32.mrb[0].mxu0
    %v3343 = vadd.f32 %v2918, %v3342
    %v3344 = vpop.f32.mrb[0].mxu0
    %v3345 = vpop.f32.mrb[0].mxu0
    %v3346 = vadd.f32 %v2921, %v3345
    %v3347 = vpop.f32.mrb[0].mxu0
    %3348 = vmatprep.mubr.bf16.mxu0 %v1796
    %3349 = vmatmul.mubr.bf16.gmra.mrb[0].mxu0 %v1795
    %v3350 = vpop.f32.mrb[0].mxu0
    %v3351 = vadd.f32 %v2926, %v3350
    %v3352 = vpop.f32.mrb[0].mxu0
    %v3353 = vpop.f32.mrb[0].mxu0
    %v3354 = vadd.f32 %v2929, %v3353
    %v3355 = vpop.f32.mrb[0].mxu0
    %3356 = vmatprep.mubr.bf16.mxu0 %v1803
    %3357 = vmatmul.mubr.bf16.gmra.mrb[0].mxu0 %v1802
    %v3358 = vpop.f32.mrb[0].mxu0
    %v3359 = vadd.f32 %v2934, %v3358
    %v3360 = vpop.f32.mrb[0].mxu0
    %v3361 = vpop.f32.mrb[0].mxu0
    %v3362 = vadd.f32 %v2937, %v3361
    %v3363 = vpop.f32.mrb[0].mxu0
    %3364 = vmatprep.mubr.bf16.mxu0 %v1810
    %3365 = vmatmul.mubr.bf16.gmra.mrb[0].mxu0 %v1809
    %v3366 = vpop.f32.mrb[0].mxu0
    %v3367 = vadd.f32 %v2942, %v3366
    %v3368 = vpop.f32.mrb[0].mxu0
    %v3369 = vpop.f32.mrb[0].mxu0
    %v3370 = vadd.f32 %v2945, %v3369
    %v3371 = vpop.f32.mrb[0].mxu0
    %3372 = vmatprep.mubr.bf16.mxu0 %v1817
    %3373 = vmatmul.mubr.bf16.gmra.mrb[0].mxu0 %v1816
    %v3374 = vpop.f32.mrb[0].mxu0
    %v3375 = vadd.f32 %v2950, %v3374
    %v3376 = vpop.f32.mrb[0].mxu0
    %v3377 = vpop.f32.mrb[0].mxu0
    %v3378 = vadd.f32 %v2953, %v3377
    %v3379 = vpop.f32.mrb[0].mxu0
    %3380 = vmatprep.mubr.bf16.mxu0 %v1824
    %3381 = vmatmul.mubr.bf16.gmra.mrb[0].mxu0 %v1823
    %v3382 = vpop.f32.mrb[0].mxu0
    %v3383 = vadd.f32 %v2958, %v3382
    %v3384 = vpop.f32.mrb[0].mxu0
    %v3385 = vpop.f32.mrb[0].mxu0
    %v3386 = vadd.f32 %v2961, %v3385
    %v3387 = vpop.f32.mrb[0].mxu0
    %3388 = vmatprep.mubr.bf16.mxu0 %v1831
    %3389 = vmatmul.mubr.bf16.gmra.mrb[0].mxu0 %v1830
    %v3390 = vpop.f32.mrb[0].mxu0
    %v3391 = vadd.f32 %v2966, %v3390
    %v3392 = vpop.f32.mrb[0].mxu0
    %v3393 = vpop.f32.mrb[0].mxu0
    %v3394 = vadd.f32 %v2969, %v3393
    %v3395 = vpop.f32.mrb[0].mxu0
    %3396 = vmatprep.mubr.bf16.mxu0 %v1838
    %3397 = vmatmul.mubr.bf16.gmra.mrb[0].mxu0 %v1837
    %v3398 = vpop.f32.mrb[0].mxu0
    %v3399 = vadd.f32 %v2974, %v3398
    %v3400 = vpop.f32.mrb[0].mxu0
    %v3401 = vpop.f32.mrb[0].mxu0
    %v3402 = vadd.f32 %v2977, %v3401
    %v3403 = vpop.f32.mrb[0].mxu0
    %3404 = vmatprep.mubr.bf16.mxu0 %v1845
    %3405 = vmatmul.mubr.bf16.gmra.mrb[0].mxu0 %v1844
    %v3406 = vpop.f32.mrb[0].mxu0
    %v3407 = vadd.f32 %v2982, %v3406
    %v3408 = vpop.f32.mrb[0].mxu0
    %v3409 = vpop.f32.mrb[0].mxu0
    %v3410 = vadd.f32 %v2985, %v3409
    %v3411 = vpop.f32.mrb[0].mxu0
    %3412 = vmatprep.mubr.bf16.mxu0 %v1852
    %3413 = vmatmul.mubr.bf16.gmra.mrb[0].mxu0 %v1851
    %v3414 = vpop.f32.mrb[0].mxu0
    %v3415 = vadd.f32 %v2990, %v3414
    %v3416 = vpop.f32.mrb[0].mxu0
    %v3417 = vpop.f32.mrb[0].mxu0
    %v3418 = vadd.f32 %v2993, %v3417
    %v3419 = vpop.f32.mrb[0].mxu0
    %3420 = vmatprep.mubr.bf16.mxu0 %v1859
    %3421 = vmatmul.mubr.bf16.gmra.mrb[0].mxu0 %v1858
    %v3422 = vpop.f32.mrb[0].mxu0
    %v3423 = vadd.f32 %v2998, %v3422
    %v3424 = vpop.f32.mrb[0].mxu0
    %v3425 = vpop.f32.mrb[0].mxu0
    %v3426 = vadd.f32 %v3001, %v3425
    %v3427 = vpop.f32.mrb[0].mxu0
    %3428 = vmatprep.mubr.bf16.mxu0 %v1866
    %3429 = vmatmul.mubr.bf16.gmra.mrb[0].mxu0 %v1865
    %v3430 = vpop.f32.mrb[0].mxu0
    %v3431 = vadd.f32 %v3006, %v3430
    %v3432 = vpop.f32.mrb[0].mxu0
    %v3433 = vpop.f32.mrb[0].mxu0
    %v3434 = vadd.f32 %v3009, %v3433
    %v3435 = vpop.f32.mrb[0].mxu0
    %3436 = vmatprep.mubr.bf16.mxu0 %v1873
    %3437 = vmatmul.mubr.bf16.gmra.mrb[0].mxu0 %v1872
    %v3438 = vpop.f32.mrb[0].mxu0
    %v3439 = vadd.f32 %v3014, %v3438
    %v3440 = vpop.f32.mrb[0].mxu0
    %v3441 = vpop.f32.mrb[0].mxu0
    %v3442 = vadd.f32 %v3017, %v3441
    %v3443 = vpop.f32.mrb[0].mxu0
    %3444 = vmatprep.mubr.bf16.mxu0 %v1880
    %3445 = vmatmul.mubr.bf16.gmra.mrb[0].mxu0 %v1879
    %v3446 = vpop.f32.mrb[0].mxu0
    %v3447 = vadd.f32 %v3022, %v3446
    %v3448 = vpop.f32.mrb[0].mxu0
    %v3449 = vpop.f32.mrb[0].mxu0
    %v3450 = vadd.f32 %v3025, %v3449
    %v3451 = vpop.f32.mrb[0].mxu0
    %3452 = vmatprep.mubr.bf16.mxu0 %v1887
    %3453 = vmatmul.mubr.bf16.gmra.mrb[0].mxu0 %v1886
    %v3454 = vpop.f32.mrb[0].mxu0
    %v3455 = vadd.f32 %v3030, %v3454
    %v3456 = vpop.f32.mrb[0].mxu0
    %v3457 = vpop.f32.mrb[0].mxu0
    %v3458 = vadd.f32 %v3033, %v3457
    %v3459 = vpop.f32.mrb[0].mxu0
    %3460 = vmatprep.mubr.bf16.mxu0 %v1894
    %3461 = vmatmul.mubr.bf16.gmra.mrb[0].mxu0 %v1893
    %v3462 = vpop.f32.mrb[0].mxu0
    %v3463 = vadd.f32 %v3038, %v3462
    %v3464 = vpop.f32.mrb[0].mxu0
    %v3465 = vpop.f32.mrb[0].mxu0
    %v3466 = vadd.f32 %v3041, %v3465
    %v3467 = vpop.f32.mrb[0].mxu0
    %3468 = vmatprep.mubr.bf16.mxu0 %v1901
    %3469 = vmatmul.mubr.bf16.gmra.mrb[0].mxu0 %v1900
    %v3470 = vpop.f32.mrb[0].mxu0
    %v3471 = vadd.f32 %v3046, %v3470
    %v3472 = vpop.f32.mrb[0].mxu0
    %v3473 = vpop.f32.mrb[0].mxu0
    %v3474 = vadd.f32 %v3049, %v3473
    %v3475 = vpop.f32.mrb[0].mxu0
    %3476 = vmatprep.mubr.bf16.mxu0 %v1908
    %3477 = vmatmul.mubr.bf16.gmra.mrb[0].mxu0 %v1907
    %v3478 = vpop.f32.mrb[0].mxu0
    %v3479 = vadd.f32 %v3054, %v3478
    %v3480 = vpop.f32.mrb[0].mxu0
    %v3481 = vpop.f32.mrb[0].mxu0
    %v3482 = vadd.f32 %v3057, %v3481
    %v3483 = vpop.f32.mrb[0].mxu0
    %3484 = vmatprep.mubr.bf16.mxu0 %v1915
    %3485 = vmatmul.mubr.bf16.gmra.mrb[0].mxu0 %v1914
    %v3486 = vpop.f32.mrb[0].mxu0
    %v3487 = vadd.f32 %v3062, %v3486
    %v3488 = vpop.f32.mrb[0].mxu0
    %v3489 = vpop.f32.mrb[0].mxu0
    %v3490 = vadd.f32 %v3065, %v3489
    %v3491 = vpop.f32.mrb[0].mxu0
    %3492 = vmatprep.mubr.bf16.mxu0 %v1922
    %3493 = vmatmul.mubr.bf16.gmra.mrb[0].mxu0 %v1921
    %v3494 = vpop.f32.mrb[0].mxu0
    %v3495 = vadd.f32 %v3070, %v3494
    %v3496 = vpop.f32.mrb[0].mxu0
    %v3497 = vpop.f32.mrb[0].mxu0
    %v3498 = vadd.f32 %v3073, %v3497
    %v3499 = vpop.f32.mrb[0].mxu0
    %3500 = vmatprep.mubr.bf16.mxu0 %v1929
    %3501 = vmatmul.mubr.bf16.gmra.mrb[0].mxu0 %v1928
    %v3502 = vpop.f32.mrb[0].mxu0
    %v3503 = vadd.f32 %v3078, %v3502
    %v3504 = vpop.f32.mrb[0].mxu0
    %v3505 = vpop.f32.mrb[0].mxu0
    %v3506 = vadd.f32 %v3081, %v3505
    %v3507 = vpop.f32.mrb[0].mxu0
    %3508 = vmatprep.mubr.bf16.mxu0 %v1936
    %3509 = vmatmul.mubr.bf16.gmra.mrb[0].mxu0 %v1935
    %v3510 = vpop.f32.mrb[0].mxu0
    %v3511 = vadd.f32 %v3086, %v3510
    %v3512 = vpop.f32.mrb[0].mxu0
    %v3513 = vpop.f32.mrb[0].mxu0
    %v3514 = vadd.f32 %v3089, %v3513
    %v3515 = vpop.f32.mrb[0].mxu0
    %3516 = vmatprep.mubr.bf16.mxu0 %v1943
    %3517 = vmatmul.mubr.bf16.gmra.mrb[0].mxu0 %v1942
    %v3518 = vpop.f32.mrb[0].mxu0
    %v3519 = vadd.f32 %v3094, %v3518
    %v3520 = vpop.f32.mrb[0].mxu0
    %v3521 = vpop.f32.mrb[0].mxu0
    %v3522 = vadd.f32 %v3097, %v3521
    %v3523 = vpop.f32.mrb[0].mxu0
    %3524 = vmatprep.mubr.bf16.mxu0 %v1950
    %3525 = vmatmul.mubr.bf16.gmra.mrb[0].mxu0 %v1949
    %v3526 = vpop.f32.mrb[0].mxu0
    %v3527 = vadd.f32 %v3102, %v3526
    %v3528 = vpop.f32.mrb[0].mxu0
    %v3529 = vpop.f32.mrb[0].mxu0
    %v3530 = vadd.f32 %v3105, %v3529
    %v3531 = vpop.f32.mrb[0].mxu0
    %3532 = vmatprep.mubr.bf16.mxu0 %v1957
    %3533 = vmatmul.mubr.bf16.gmra.mrb[0].mxu0 %v1956
    %v3534 = vpop.f32.mrb[0].mxu0
    %v3535 = vadd.f32 %v3110, %v3534
    %v3536 = vpop.f32.mrb[0].mxu0
    %v3537 = vpop.f32.mrb[0].mxu0
    %v3538 = vadd.f32 %v3113, %v3537
    %v3539 = vpop.f32.mrb[0].mxu0
    %3540 = vmatprep.mubr.bf16.mxu0 %v1964
    %3541 = vmatmul.mubr.bf16.gmra.mrb[0].mxu0 %v1963
    %v3542 = vpop.f32.mrb[0].mxu0
    %v3543 = vadd.f32 %v3118, %v3542
    %v3544 = vpop.f32.mrb[0].mxu0
    %v3545 = vpop.f32.mrb[0].mxu0
    %v3546 = vadd.f32 %v3121, %v3545
    %v3547 = vpop.f32.mrb[0].mxu0
    %3548 = vmatprep.mubr.bf16.mxu0 %v1971
    %3549 = vmatmul.mubr.bf16.gmra.mrb[0].mxu0 %v1970
    %v3550 = vpop.f32.mrb[0].mxu0
    %v3551 = vadd.f32 %v3126, %v3550
    %v3552 = vpop.f32.mrb[0].mxu0
    %v3553 = vpop.f32.mrb[0].mxu0
    %v3554 = vadd.f32 %v3129, %v3553
    %v3555 = vpop.f32.mrb[0].mxu0
    %3556 = vmatprep.mubr.bf16.mxu0 %v1978
    %3557 = vmatmul.mubr.bf16.gmra.mrb[0].mxu0 %v1977
    %v3558 = vpop.f32.mrb[0].mxu0
    %v3559 = vadd.f32 %v3134, %v3558
    %v3560 = vpop.f32.mrb[0].mxu0
    %v3561 = vpop.f32.mrb[0].mxu0
    %v3562 = vadd.f32 %v3137, %v3561
    %v3563 = vpop.f32.mrb[0].mxu0
    %3564 = vmatprep.mubr.bf16.mxu0 %v1985
    %3565 = vmatmul.mubr.bf16.gmra.mrb[0].mxu0 %v1984
    %v3566 = vpop.f32.mrb[0].mxu0
    %v3567 = vadd.f32 %v3142, %v3566
    %v3568 = vpop.f32.mrb[0].mxu0
    %v3569 = vpop.f32.mrb[0].mxu0
    %v3570 = vadd.f32 %v3145, %v3569
    %v3571 = vpop.f32.mrb[0].mxu0
    %3572 = vmatprep.mubr.bf16.mxu0 %v1992
    %3573 = vmatmul.mubr.bf16.gmra.mrb[0].mxu0 %v1991
    %v3574 = vpop.f32.mrb[0].mxu0
    %v3575 = vadd.f32 %v3150, %v3574
    %v3576 = vpop.f32.mrb[0].mxu0
    %v3577 = vpop.f32.mrb[0].mxu0
    %v3578 = vadd.f32 %v3153, %v3577
    %v3579 = vpop.f32.mrb[0].mxu0
    %3580 = vmatprep.mubr.bf16.mxu0 %v1999
    %3581 = vmatmul.mubr.bf16.gmra.mrb[0].mxu0 %v1998
    %v3582 = vpop.f32.mrb[0].mxu0
    %v3583 = vadd.f32 %v3158, %v3582
    %v3584 = vpop.f32.mrb[0].mxu0
    %v3585 = vpop.f32.mrb[0].mxu0
    %v3586 = vadd.f32 %v3161, %v3585
    %v3587 = vpop.f32.mrb[0].mxu0
    %3588 = vdwg.mxu0
    %3589 = vmatprep.subr.bf16.mxu0 0
    %3590 = vmatpush1.bf16.msra.mxu0 %v2525
    %3591 = vmatprep.subr.bf16.mxu0 0
    %3592 = vmatpush1.bf16.msra.mxu0 %v2526
    %3593 = vmatprep.subr.bf16.mxu0 0
    %3594 = vmatpush1.bf16.msra.mxu0 %v2527
    %3595 = vmatprep.subr.bf16.mxu0 0
    %3596 = vmatpush1.bf16.msra.mxu0 %v2528
    %3597 = vmatprep.subr.bf16.mxu0 0
    %3598 = vmatpush1.bf16.msra.mxu0 %v2529
    %3599 = vmatprep.subr.bf16.mxu0 0
    %3600 = vmatpush1.bf16.msra.mxu0 %v2530
    %3601 = vmatprep.subr.bf16.mxu0 0
    %3602 = vmatpush1.bf16.msra.mxu0 %v2531
    %3603 = vmatprep.subr.bf16.mxu0 0
    %3604 = vmatpush1.bf16.msra.mxu0 %v2532
    %3605 = vmatprep.subr.bf16.mxu0 0
    %3606 = vmatpush1.bf16.msra.mxu0 %v2533
    %3607 = vmatprep.subr.bf16.mxu0 0
    %3608 = vmatpush1.bf16.msra.mxu0 %v2534
    %3609 = vmatprep.subr.bf16.mxu0 0
    %3610 = vmatpush1.bf16.msra.mxu0 %v2535
    %3611 = vmatprep.subr.bf16.mxu0 0
    %3612 = vmatpush1.bf16.msra.mxu0 %v2536
    %3613 = vmatprep.subr.bf16.mxu0 0
    %3614 = vmatpush1.bf16.msra.mxu0 %v2537
    %3615 = vmatprep.subr.bf16.mxu0 0
    %3616 = vmatpush1.bf16.msra.mxu0 %v2538
    %3617 = vmatprep.subr.bf16.mxu0 0
    %3618 = vmatpush1.bf16.msra.mxu0 %v2539
    %3619 = vmatprep.subr.bf16.mxu0 0
    %3620 = vmatpush1.bf16.msra.mxu0 %v2540
    %3621 = vmatprep.mubr.bf16.mxu0 %v1665
    %3622 = vmatmul.mubr.bf16.gmra.mrb[0].mxu0 %v1664
    %v3623 = vpop.f32.mrb[0].mxu0
    %v3624 = vadd.f32 %v3199, %v3623
    %v3625 = vpop.f32.mrb[0].mxu0
    %v3626 = vpop.f32.mrb[0].mxu0
    %v3627 = vadd.f32 %v3202, %v3626
    %v3628 = vpop.f32.mrb[0].mxu0
    %3629 = vmatprep.mubr.bf16.mxu0 %v1672
    %3630 = vmatmul.mubr.bf16.gmra.mrb[0].mxu0 %v1671
    %v3631 = vpop.f32.mrb[0].mxu0
    %v3632 = vadd.f32 %v3207, %v3631
    %v3633 = vpop.f32.mrb[0].mxu0
    %v3634 = vpop.f32.mrb[0].mxu0
    %v3635 = vadd.f32 %v3210, %v3634
    %v3636 = vpop.f32.mrb[0].mxu0
    %3637 = vmatprep.mubr.bf16.mxu0 %v1679
    %3638 = vmatmul.mubr.bf16.gmra.mrb[0].mxu0 %v1678
    %v3639 = vpop.f32.mrb[0].mxu0
    %v3640 = vadd.f32 %v3215, %v3639
    %v3641 = vpop.f32.mrb[0].mxu0
    %v3642 = vpop.f32.mrb[0].mxu0
    %v3643 = vadd.f32 %v3218, %v3642
    %v3644 = vpop.f32.mrb[0].mxu0
    %3645 = vmatprep.mubr.bf16.mxu0 %v1686
    %3646 = vmatmul.mubr.bf16.gmra.mrb[0].mxu0 %v1685
    %v3647 = vpop.f32.mrb[0].mxu0
    %v3648 = vadd.f32 %v3223, %v3647
    %v3649 = vpop.f32.mrb[0].mxu0
    %v3650 = vpop.f32.mrb[0].mxu0
    %v3651 = vadd.f32 %v3226, %v3650
    %v3652 = vpop.f32.mrb[0].mxu0
    %3653 = vmatprep.mubr.bf16.mxu0 %v1693
    %3654 = vmatmul.mubr.bf16.gmra.mrb[0].mxu0 %v1692
    %v3655 = vpop.f32.mrb[0].mxu0
    %v3656 = vadd.f32 %v3231, %v3655
    %v3657 = vpop.f32.mrb[0].mxu0
    %v3658 = vpop.f32.mrb[0].mxu0
    %v3659 = vadd.f32 %v3234, %v3658
    %v3660 = vpop.f32.mrb[0].mxu0
    %3661 = vmatprep.mubr.bf16.mxu0 %v1700
    %3662 = vmatmul.mubr.bf16.gmra.mrb[0].mxu0 %v1699
    %v3663 = vpop.f32.mrb[0].mxu0
    %v3664 = vadd.f32 %v3239, %v3663
    %v3665 = vpop.f32.mrb[0].mxu0
    %v3666 = vpop.f32.mrb[0].mxu0
    %v3667 = vadd.f32 %v3242, %v3666
    %v3668 = vpop.f32.mrb[0].mxu0
    %3669 = vmatprep.mubr.bf16.mxu0 %v1707
    %3670 = vmatmul.mubr.bf16.gmra.mrb[0].mxu0 %v1706
    %v3671 = vpop.f32.mrb[0].mxu0
    %v3672 = vadd.f32 %v3247, %v3671
    %v3673 = vpop.f32.mrb[0].mxu0
    %v3674 = vpop.f32.mrb[0].mxu0
    %v3675 = vadd.f32 %v3250, %v3674
    %v3676 = vpop.f32.mrb[0].mxu0
    %3677 = vmatprep.mubr.bf16.mxu0 %v1714
    %3678 = vmatmul.mubr.bf16.gmra.mrb[0].mxu0 %v1713
    %v3679 = vpop.f32.mrb[0].mxu0
    %v3680 = vadd.f32 %v3255, %v3679
    %v3681 = vpop.f32.mrb[0].mxu0
    %v3682 = vpop.f32.mrb[0].mxu0
    %v3683 = vadd.f32 %v3258, %v3682
    %v3684 = vpop.f32.mrb[0].mxu0
    %3685 = vmatprep.mubr.bf16.mxu0 %v1721
    %3686 = vmatmul.mubr.bf16.gmra.mrb[0].mxu0 %v1720
    %v3687 = vpop.f32.mrb[0].mxu0
    %v3688 = vadd.f32 %v3263, %v3687
    %v3689 = vpop.f32.mrb[0].mxu0
    %v3690 = vpop.f32.mrb[0].mxu0
    %v3691 = vadd.f32 %v3266, %v3690
    %v3692 = vpop.f32.mrb[0].mxu0
    %3693 = vmatprep.mubr.bf16.mxu0 %v1728
    %3694 = vmatmul.mubr.bf16.gmra.mrb[0].mxu0 %v1727
    %v3695 = vpop.f32.mrb[0].mxu0
    %v3696 = vadd.f32 %v3271, %v3695
    %v3697 = vpop.f32.mrb[0].mxu0
    %v3698 = vpop.f32.mrb[0].mxu0
    %v3699 = vadd.f32 %v3274, %v3698
    %v3700 = vpop.f32.mrb[0].mxu0
    %3701 = vmatprep.mubr.bf16.mxu0 %v1735
    %3702 = vmatmul.mubr.bf16.gmra.mrb[0].mxu0 %v1734
    %v3703 = vpop.f32.mrb[0].mxu0
    %v3704 = vadd.f32 %v3279, %v3703
    %v3705 = vpop.f32.mrb[0].mxu0
    %v3706 = vpop.f32.mrb[0].mxu0
    %v3707 = vadd.f32 %v3282, %v3706
    %v3708 = vpop.f32.mrb[0].mxu0
    %3709 = vmatprep.mubr.bf16.mxu0 %v1742
    %3710 = vmatmul.mubr.bf16.gmra.mrb[0].mxu0 %v1741
    %v3711 = vpop.f32.mrb[0].mxu0
    %v3712 = vadd.f32 %v3287, %v3711
    %v3713 = vpop.f32.mrb[0].mxu0
    %v3714 = vpop.f32.mrb[0].mxu0
    %v3715 = vadd.f32 %v3290, %v3714
    %v3716 = vpop.f32.mrb[0].mxu0
    %3717 = vmatprep.mubr.bf16.mxu0 %v1749
    %3718 = vmatmul.mubr.bf16.gmra.mrb[0].mxu0 %v1748
    %v3719 = vpop.f32.mrb[0].mxu0
    %v3720 = vadd.f32 %v3295, %v3719
    %v3721 = vpop.f32.mrb[0].mxu0
    %v3722 = vpop.f32.mrb[0].mxu0
    %v3723 = vadd.f32 %v3298, %v3722
    %v3724 = vpop.f32.mrb[0].mxu0
    %3725 = vmatprep.mubr.bf16.mxu0 %v1756
    %3726 = vmatmul.mubr.bf16.gmra.mrb[0].mxu0 %v1755
    %v3727 = vpop.f32.mrb[0].mxu0
    %v3728 = vadd.f32 %v3303, %v3727
    %v3729 = vpop.f32.mrb[0].mxu0
    %v3730 = vpop.f32.mrb[0].mxu0
    %v3731 = vadd.f32 %v3306, %v3730
    %v3732 = vpop.f32.mrb[0].mxu0
    %3733 = vmatprep.mubr.bf16.mxu0 %v1763
    %3734 = vmatmul.mubr.bf16.gmra.mrb[0].mxu0 %v1762
    %v3735 = vpop.f32.mrb[0].mxu0
    %v3736 = vadd.f32 %v3311, %v3735
    %v3737 = vpop.f32.mrb[0].mxu0
    %v3738 = vpop.f32.mrb[0].mxu0
    %v3739 = vadd.f32 %v3314, %v3738
    %v3740 = vpop.f32.mrb[0].mxu0
    %3741 = vmatprep.mubr.bf16.mxu0 %v1770
    %3742 = vmatmul.mubr.bf16.gmra.mrb[0].mxu0 %v1769
    %v3743 = vpop.f32.mrb[0].mxu0
    %v3744 = vadd.f32 %v3319, %v3743
    %v3745 = vpop.f32.mrb[0].mxu0
    %v3746 = vpop.f32.mrb[0].mxu0
    %v3747 = vadd.f32 %v3322, %v3746
    %v3748 = vpop.f32.mrb[0].mxu0
    %3749 = vmatprep.mubr.bf16.mxu0 %v1777
    %3750 = vmatmul.mubr.bf16.gmra.mrb[0].mxu0 %v1776
    %v3751 = vpop.f32.mrb[0].mxu0
    %v3752 = vadd.f32 %v3327, %v3751
    %v3753 = vpop.f32.mrb[0].mxu0
    %v3754 = vpop.f32.mrb[0].mxu0
    %v3755 = vadd.f32 %v3330, %v3754
    %v3756 = vpop.f32.mrb[0].mxu0
    %3757 = vmatprep.mubr.bf16.mxu0 %v1784
    %3758 = vmatmul.mubr.bf16.gmra.mrb[0].mxu0 %v1783
    %v3759 = vpop.f32.mrb[0].mxu0
    %v3760 = vadd.f32 %v3335, %v3759
    %v3761 = vpop.f32.mrb[0].mxu0
    %v3762 = vpop.f32.mrb[0].mxu0
    %v3763 = vadd.f32 %v3338, %v3762
    %v3764 = vpop.f32.mrb[0].mxu0
    %3765 = vmatprep.mubr.bf16.mxu0 %v1791
    %3766 = vmatmul.mubr.bf16.gmra.mrb[0].mxu0 %v1790
    %v3767 = vpop.f32.mrb[0].mxu0
    %v3768 = vadd.f32 %v3343, %v3767
    %v3769 = vpop.f32.mrb[0].mxu0
    %v3770 = vpop.f32.mrb[0].mxu0
    %v3771 = vadd.f32 %v3346, %v3770
    %v3772 = vpop.f32.mrb[0].mxu0
    %3773 = vmatprep.mubr.bf16.mxu0 %v1798
    %3774 = vmatmul.mubr.bf16.gmra.mrb[0].mxu0 %v1797
    %v3775 = vpop.f32.mrb[0].mxu0
    %v3776 = vadd.f32 %v3351, %v3775
    %v3777 = vpop.f32.mrb[0].mxu0
    %v3778 = vpop.f32.mrb[0].mxu0
    %v3779 = vadd.f32 %v3354, %v3778
    %v3780 = vpop.f32.mrb[0].mxu0
    %3781 = vmatprep.mubr.bf16.mxu0 %v1805
    %3782 = vmatmul.mubr.bf16.gmra.mrb[0].mxu0 %v1804
    %v3783 = vpop.f32.mrb[0].mxu0
    %v3784 = vadd.f32 %v3359, %v3783
    %v3785 = vpop.f32.mrb[0].mxu0
    %v3786 = vpop.f32.mrb[0].mxu0
    %v3787 = vadd.f32 %v3362, %v3786
    %v3788 = vpop.f32.mrb[0].mxu0
    %3789 = vmatprep.mubr.bf16.mxu0 %v1812
    %3790 = vmatmul.mubr.bf16.gmra.mrb[0].mxu0 %v1811
    %v3791 = vpop.f32.mrb[0].mxu0
    %v3792 = vadd.f32 %v3367, %v3791
    %v3793 = vpop.f32.mrb[0].mxu0
    %v3794 = vpop.f32.mrb[0].mxu0
    %v3795 = vadd.f32 %v3370, %v3794
    %v3796 = vpop.f32.mrb[0].mxu0
    %3797 = vmatprep.mubr.bf16.mxu0 %v1819
    %3798 = vmatmul.mubr.bf16.gmra.mrb[0].mxu0 %v1818
    %v3799 = vpop.f32.mrb[0].mxu0
    %v3800 = vadd.f32 %v3375, %v3799
    %v3801 = vpop.f32.mrb[0].mxu0
    %v3802 = vpop.f32.mrb[0].mxu0
    %v3803 = vadd.f32 %v3378, %v3802
    %v3804 = vpop.f32.mrb[0].mxu0
    %3805 = vmatprep.mubr.bf16.mxu0 %v1826
    %3806 = vmatmul.mubr.bf16.gmra.mrb[0].mxu0 %v1825
    %v3807 = vpop.f32.mrb[0].mxu0
    %v3808 = vadd.f32 %v3383, %v3807
    %v3809 = vpop.f32.mrb[0].mxu0
    %v3810 = vpop.f32.mrb[0].mxu0
    %v3811 = vadd.f32 %v3386, %v3810
    %v3812 = vpop.f32.mrb[0].mxu0
    %3813 = vmatprep.mubr.bf16.mxu0 %v1833
    %3814 = vmatmul.mubr.bf16.gmra.mrb[0].mxu0 %v1832
    %v3815 = vpop.f32.mrb[0].mxu0
    %v3816 = vadd.f32 %v3391, %v3815
    %v3817 = vpop.f32.mrb[0].mxu0
    %v3818 = vpop.f32.mrb[0].mxu0
    %v3819 = vadd.f32 %v3394, %v3818
    %v3820 = vpop.f32.mrb[0].mxu0
    %3821 = vmatprep.mubr.bf16.mxu0 %v1840
    %3822 = vmatmul.mubr.bf16.gmra.mrb[0].mxu0 %v1839
    %v3823 = vpop.f32.mrb[0].mxu0
    %v3824 = vadd.f32 %v3399, %v3823
    %v3825 = vpop.f32.mrb[0].mxu0
    %v3826 = vpop.f32.mrb[0].mxu0
    %v3827 = vadd.f32 %v3402, %v3826
    %v3828 = vpop.f32.mrb[0].mxu0
    %3829 = vmatprep.mubr.bf16.mxu0 %v1847
    %3830 = vmatmul.mubr.bf16.gmra.mrb[0].mxu0 %v1846
    %v3831 = vpop.f32.mrb[0].mxu0
    %v3832 = vadd.f32 %v3407, %v3831
    %v3833 = vpop.f32.mrb[0].mxu0
    %v3834 = vpop.f32.mrb[0].mxu0
    %v3835 = vadd.f32 %v3410, %v3834
    %v3836 = vpop.f32.mrb[0].mxu0
    %3837 = vmatprep.mubr.bf16.mxu0 %v1854
    %3838 = vmatmul.mubr.bf16.gmra.mrb[0].mxu0 %v1853
    %v3839 = vpop.f32.mrb[0].mxu0
    %v3840 = vadd.f32 %v3415, %v3839
    %v3841 = vpop.f32.mrb[0].mxu0
    %v3842 = vpop.f32.mrb[0].mxu0
    %v3843 = vadd.f32 %v3418, %v3842
    %v3844 = vpop.f32.mrb[0].mxu0
    %3845 = vmatprep.mubr.bf16.mxu0 %v1861
    %3846 = vmatmul.mubr.bf16.gmra.mrb[0].mxu0 %v1860
    %v3847 = vpop.f32.mrb[0].mxu0
    %v3848 = vadd.f32 %v3423, %v3847
    %v3849 = vpop.f32.mrb[0].mxu0
    %v3850 = vpop.f32.mrb[0].mxu0
    %v3851 = vadd.f32 %v3426, %v3850
    %v3852 = vpop.f32.mrb[0].mxu0
    %3853 = vmatprep.mubr.bf16.mxu0 %v1868
    %3854 = vmatmul.mubr.bf16.gmra.mrb[0].mxu0 %v1867
    %v3855 = vpop.f32.mrb[0].mxu0
    %v3856 = vadd.f32 %v3431, %v3855
    %v3857 = vpop.f32.mrb[0].mxu0
    %v3858 = vpop.f32.mrb[0].mxu0
    %v3859 = vadd.f32 %v3434, %v3858
    %v3860 = vpop.f32.mrb[0].mxu0
    %3861 = vmatprep.mubr.bf16.mxu0 %v1875
    %3862 = vmatmul.mubr.bf16.gmra.mrb[0].mxu0 %v1874
    %v3863 = vpop.f32.mrb[0].mxu0
    %v3864 = vadd.f32 %v3439, %v3863
    %v3865 = vpop.f32.mrb[0].mxu0
    %v3866 = vpop.f32.mrb[0].mxu0
    %v3867 = vadd.f32 %v3442, %v3866
    %v3868 = vpop.f32.mrb[0].mxu0
    %3869 = vmatprep.mubr.bf16.mxu0 %v1882
    %3870 = vmatmul.mubr.bf16.gmra.mrb[0].mxu0 %v1881
    %v3871 = vpop.f32.mrb[0].mxu0
    %v3872 = vadd.f32 %v3447, %v3871
    %v3873 = vpop.f32.mrb[0].mxu0
    %v3874 = vpop.f32.mrb[0].mxu0
    %v3875 = vadd.f32 %v3450, %v3874
    %v3876 = vpop.f32.mrb[0].mxu0
    %3877 = vmatprep.mubr.bf16.mxu0 %v1889
    %3878 = vmatmul.mubr.bf16.gmra.mrb[0].mxu0 %v1888
    %v3879 = vpop.f32.mrb[0].mxu0
    %v3880 = vadd.f32 %v3455, %v3879
    %v3881 = vpop.f32.mrb[0].mxu0
    %v3882 = vpop.f32.mrb[0].mxu0
    %v3883 = vadd.f32 %v3458, %v3882
    %v3884 = vpop.f32.mrb[0].mxu0
    %3885 = vmatprep.mubr.bf16.mxu0 %v1896
    %3886 = vmatmul.mubr.bf16.gmra.mrb[0].mxu0 %v1895
    %v3887 = vpop.f32.mrb[0].mxu0
    %v3888 = vadd.f32 %v3463, %v3887
    %v3889 = vpop.f32.mrb[0].mxu0
    %v3890 = vpop.f32.mrb[0].mxu0
    %v3891 = vadd.f32 %v3466, %v3890
    %v3892 = vpop.f32.mrb[0].mxu0
    %3893 = vmatprep.mubr.bf16.mxu0 %v1903
    %3894 = vmatmul.mubr.bf16.gmra.mrb[0].mxu0 %v1902
    %v3895 = vpop.f32.mrb[0].mxu0
    %v3896 = vadd.f32 %v3471, %v3895
    %v3897 = vpop.f32.mrb[0].mxu0
    %v3898 = vpop.f32.mrb[0].mxu0
    %v3899 = vadd.f32 %v3474, %v3898
    %v3900 = vpop.f32.mrb[0].mxu0
    %3901 = vmatprep.mubr.bf16.mxu0 %v1910
    %3902 = vmatmul.mubr.bf16.gmra.mrb[0].mxu0 %v1909
    %v3903 = vpop.f32.mrb[0].mxu0
    %v3904 = vadd.f32 %v3479, %v3903
    %v3905 = vpop.f32.mrb[0].mxu0
    %v3906 = vpop.f32.mrb[0].mxu0
    %v3907 = vadd.f32 %v3482, %v3906
    %v3908 = vpop.f32.mrb[0].mxu0
    %3909 = vmatprep.mubr.bf16.mxu0 %v1917
    %3910 = vmatmul.mubr.bf16.gmra.mrb[0].mxu0 %v1916
    %v3911 = vpop.f32.mrb[0].mxu0
    %v3912 = vadd.f32 %v3487, %v3911
    %v3913 = vpop.f32.mrb[0].mxu0
    %v3914 = vpop.f32.mrb[0].mxu0
    %v3915 = vadd.f32 %v3490, %v3914
    %v3916 = vpop.f32.mrb[0].mxu0
    %3917 = vmatprep.mubr.bf16.mxu0 %v1924
    %3918 = vmatmul.mubr.bf16.gmra.mrb[0].mxu0 %v1923
    %v3919 = vpop.f32.mrb[0].mxu0
    %v3920 = vadd.f32 %v3495, %v3919
    %v3921 = vpop.f32.mrb[0].mxu0
    %v3922 = vpop.f32.mrb[0].mxu0
    %v3923 = vadd.f32 %v3498, %v3922
    %v3924 = vpop.f32.mrb[0].mxu0
    %3925 = vmatprep.mubr.bf16.mxu0 %v1931
    %3926 = vmatmul.mubr.bf16.gmra.mrb[0].mxu0 %v1930
    %v3927 = vpop.f32.mrb[0].mxu0
    %v3928 = vadd.f32 %v3503, %v3927
    %v3929 = vpop.f32.mrb[0].mxu0
    %v3930 = vpop.f32.mrb[0].mxu0
    %v3931 = vadd.f32 %v3506, %v3930
    %v3932 = vpop.f32.mrb[0].mxu0
    %3933 = vmatprep.mubr.bf16.mxu0 %v1938
    %3934 = vmatmul.mubr.bf16.gmra.mrb[0].mxu0 %v1937
    %v3935 = vpop.f32.mrb[0].mxu0
    %v3936 = vadd.f32 %v3511, %v3935
    %v3937 = vpop.f32.mrb[0].mxu0
    %v3938 = vpop.f32.mrb[0].mxu0
    %v3939 = vadd.f32 %v3514, %v3938
    %v3940 = vpop.f32.mrb[0].mxu0
    %3941 = vmatprep.mubr.bf16.mxu0 %v1945
    %3942 = vmatmul.mubr.bf16.gmra.mrb[0].mxu0 %v1944
    %v3943 = vpop.f32.mrb[0].mxu0
    %v3944 = vadd.f32 %v3519, %v3943
    %v3945 = vpop.f32.mrb[0].mxu0
    %v3946 = vpop.f32.mrb[0].mxu0
    %v3947 = vadd.f32 %v3522, %v3946
    %v3948 = vpop.f32.mrb[0].mxu0
    %3949 = vmatprep.mubr.bf16.mxu0 %v1952
    %3950 = vmatmul.mubr.bf16.gmra.mrb[0].mxu0 %v1951
    %v3951 = vpop.f32.mrb[0].mxu0
    %v3952 = vadd.f32 %v3527, %v3951
    %v3953 = vpop.f32.mrb[0].mxu0
    %v3954 = vpop.f32.mrb[0].mxu0
    %v3955 = vadd.f32 %v3530, %v3954
    %v3956 = vpop.f32.mrb[0].mxu0
    %3957 = vmatprep.mubr.bf16.mxu0 %v1959
    %3958 = vmatmul.mubr.bf16.gmra.mrb[0].mxu0 %v1958
    %v3959 = vpop.f32.mrb[0].mxu0
    %v3960 = vadd.f32 %v3535, %v3959
    %v3961 = vpop.f32.mrb[0].mxu0
    %v3962 = vpop.f32.mrb[0].mxu0
    %v3963 = vadd.f32 %v3538, %v3962
    %v3964 = vpop.f32.mrb[0].mxu0
    %3965 = vmatprep.mubr.bf16.mxu0 %v1966
    %3966 = vmatmul.mubr.bf16.gmra.mrb[0].mxu0 %v1965
    %v3967 = vpop.f32.mrb[0].mxu0
    %v3968 = vadd.f32 %v3543, %v3967
    %v3969 = vpop.f32.mrb[0].mxu0
    %v3970 = vpop.f32.mrb[0].mxu0
    %v3971 = vadd.f32 %v3546, %v3970
    %v3972 = vpop.f32.mrb[0].mxu0
    %3973 = vmatprep.mubr.bf16.mxu0 %v1973
    %3974 = vmatmul.mubr.bf16.gmra.mrb[0].mxu0 %v1972
    %v3975 = vpop.f32.mrb[0].mxu0
    %v3976 = vadd.f32 %v3551, %v3975
    %v3977 = vpop.f32.mrb[0].mxu0
    %v3978 = vpop.f32.mrb[0].mxu0
    %v3979 = vadd.f32 %v3554, %v3978
    %v3980 = vpop.f32.mrb[0].mxu0
    %3981 = vmatprep.mubr.bf16.mxu0 %v1980
    %3982 = vmatmul.mubr.bf16.gmra.mrb[0].mxu0 %v1979
    %v3983 = vpop.f32.mrb[0].mxu0
    %v3984 = vadd.f32 %v3559, %v3983
    %v3985 = vpop.f32.mrb[0].mxu0
    %v3986 = vpop.f32.mrb[0].mxu0
    %v3987 = vadd.f32 %v3562, %v3986
    %v3988 = vpop.f32.mrb[0].mxu0
    %3989 = vmatprep.mubr.bf16.mxu0 %v1987
    %3990 = vmatmul.mubr.bf16.gmra.mrb[0].mxu0 %v1986
    %v3991 = vpop.f32.mrb[0].mxu0
    %v3992 = vadd.f32 %v3567, %v3991
    %v3993 = vpop.f32.mrb[0].mxu0
    %v3994 = vpop.f32.mrb[0].mxu0
    %v3995 = vadd.f32 %v3570, %v3994
    %v3996 = vpop.f32.mrb[0].mxu0
    %3997 = vmatprep.mubr.bf16.mxu0 %v1994
    %3998 = vmatmul.mubr.bf16.gmra.mrb[0].mxu0 %v1993
    %v3999 = vpop.f32.mrb[0].mxu0
    %v4000 = vadd.f32 %v3575, %v3999
    %v4001 = vpop.f32.mrb[0].mxu0
    %v4002 = vpop.f32.mrb[0].mxu0
    %v4003 = vadd.f32 %v3578, %v4002
    %v4004 = vpop.f32.mrb[0].mxu0
    %4005 = vmatprep.mubr.bf16.mxu0 %v2001
    %4006 = vmatmul.mubr.bf16.gmra.mrb[0].mxu0 %v2000
    %v4007 = vpop.f32.mrb[0].mxu0
    %v4008 = vadd.f32 %v3583, %v4007
    %v4009 = vpop.f32.mrb[0].mxu0
    %v4010 = vpop.f32.mrb[0].mxu0
    %v4011 = vadd.f32 %v3586, %v4010
    %v4012 = vpop.f32.mrb[0].mxu0
    %4013 = vdwg.mxu0
    %4014 = vmatprep.subr.bf16.mxu0 0
    %4015 = vmatpush1.bf16.msra.mxu0 %v2541
    %4016 = vmatprep.subr.bf16.mxu0 0
    %4017 = vmatpush1.bf16.msra.mxu0 0
    %4018 = vmatprep.subr.bf16.mxu0 0
    %4019 = vmatpush1.bf16.msra.mxu0 0
    %4020 = vmatprep.subr.bf16.mxu0 0
    %4021 = vmatpush1.bf16.msra.mxu0 0
    %4022 = vmatprep.subr.bf16.mxu0 0
    %4023 = vmatpush1.bf16.msra.mxu0 0
    %4024 = vmatprep.subr.bf16.mxu0 0
    %4025 = vmatpush1.bf16.msra.mxu0 0
    %4026 = vmatprep.subr.bf16.mxu0 0
    %4027 = vmatpush1.bf16.msra.mxu0 0
    %4028 = vmatprep.subr.bf16.mxu0 0
    %4029 = vmatpush1.bf16.msra.mxu0 0
    %4030 = vmatprep.subr.bf16.mxu0 0
    %4031 = vmatpush1.bf16.msra.mxu0 0
    %4032 = vmatprep.subr.bf16.mxu0 0
    %4033 = vmatpush1.bf16.msra.mxu0 0
    %4034 = vmatprep.subr.bf16.mxu0 0
    %4035 = vmatpush1.bf16.msra.mxu0 0
    %4036 = vmatprep.subr.bf16.mxu0 0
    %4037 = vmatpush1.bf16.msra.mxu0 0
    %4038 = vmatprep.subr.bf16.mxu0 0
    %4039 = vmatpush1.bf16.msra.mxu0 0
    %4040 = vmatprep.subr.bf16.mxu0 0
    %4041 = vmatpush1.bf16.msra.mxu0 0
    %4042 = vmatprep.subr.bf16.mxu0 0
    %4043 = vmatpush1.bf16.msra.mxu0 0
    %4044 = vmatprep.subr.bf16.mxu0 0
    %4045 = vmatpush1.bf16.msra.mxu0 0
    %4046 = vmatprep.mubr.bf16.mxu0 0
    %4047 = vmatmul.mubr.bf16.gmra.mrb[0].mxu0 %v2593
    %v4048 = vpop.f32.mrb[0].mxu0
    %v4049 = vadd.f32 %v3624, %v4048
    %v4050 = vpop.f32.mrb[0].mxu0
    %v4051 = vpop.f32.mrb[0].mxu0
    %v4052 = vadd.f32 %v3627, %v4051
    %v4053 = vpop.f32.mrb[0].mxu0
    %4054 = vmatprep.mubr.bf16.mxu0 0
    %4055 = vmatmul.mubr.bf16.gmra.mrb[0].mxu0 %v2596
    %v4056 = vpop.f32.mrb[0].mxu0
    %v4057 = vadd.f32 %v3632, %v4056
    %v4058 = vpop.f32.mrb[0].mxu0
    %v4059 = vpop.f32.mrb[0].mxu0
    %v4060 = vadd.f32 %v3635, %v4059
    %v4061 = vpop.f32.mrb[0].mxu0
    %4062 = vmatprep.mubr.bf16.mxu0 0
    %4063 = vmatmul.mubr.bf16.gmra.mrb[0].mxu0 %v2599
    %v4064 = vpop.f32.mrb[0].mxu0
    %v4065 = vadd.f32 %v3640, %v4064
    %v4066 = vpop.f32.mrb[0].mxu0
    %v4067 = vpop.f32.mrb[0].mxu0
    %v4068 = vadd.f32 %v3643, %v4067
    %v4069 = vpop.f32.mrb[0].mxu0
    %4070 = vmatprep.mubr.bf16.mxu0 0
    %4071 = vmatmul.mubr.bf16.gmra.mrb[0].mxu0 %v2602
    %v4072 = vpop.f32.mrb[0].mxu0
    %v4073 = vadd.f32 %v3648, %v4072
    %v4074 = vpop.f32.mrb[0].mxu0
    %v4075 = vpop.f32.mrb[0].mxu0
    %v4076 = vadd.f32 %v3651, %v4075
    %v4077 = vpop.f32.mrb[0].mxu0
    %4078 = vmatprep.mubr.bf16.mxu0 0
    %4079 = vmatmul.mubr.bf16.gmra.mrb[0].mxu0 %v2605
    %v4080 = vpop.f32.mrb[0].mxu0
    %v4081 = vadd.f32 %v3656, %v4080
    %v4082 = vpop.f32.mrb[0].mxu0
    %v4083 = vpop.f32.mrb[0].mxu0
    %v4084 = vadd.f32 %v3659, %v4083
    %v4085 = vpop.f32.mrb[0].mxu0
    %4086 = vmatprep.mubr.bf16.mxu0 0
    %4087 = vmatmul.mubr.bf16.gmra.mrb[0].mxu0 %v2608
    %v4088 = vpop.f32.mrb[0].mxu0
    %v4089 = vadd.f32 %v3664, %v4088
    %v4090 = vpop.f32.mrb[0].mxu0
    %v4091 = vpop.f32.mrb[0].mxu0
    %v4092 = vadd.f32 %v3667, %v4091
    %v4093 = vpop.f32.mrb[0].mxu0
    %4094 = vmatprep.mubr.bf16.mxu0 0
    %4095 = vmatmul.mubr.bf16.gmra.mrb[0].mxu0 %v2611
    %v4096 = vpop.f32.mrb[0].mxu0
    %v4097 = vadd.f32 %v3672, %v4096
    %v4098 = vpop.f32.mrb[0].mxu0
    %v4099 = vpop.f32.mrb[0].mxu0
    %v4100 = vadd.f32 %v3675, %v4099
    %v4101 = vpop.f32.mrb[0].mxu0
    %4102 = vmatprep.mubr.bf16.mxu0 0
    %4103 = vmatmul.mubr.bf16.gmra.mrb[0].mxu0 %v2614
    %v4104 = vpop.f32.mrb[0].mxu0
    %v4105 = vadd.f32 %v3680, %v4104
    %v4106 = vpop.f32.mrb[0].mxu0
    %v4107 = vpop.f32.mrb[0].mxu0
    %v4108 = vadd.f32 %v3683, %v4107
    %v4109 = vpop.f32.mrb[0].mxu0
    %4110 = vmatprep.mubr.bf16.mxu0 0
    %4111 = vmatmul.mubr.bf16.gmra.mrb[0].mxu0 %v2617
    %v4112 = vpop.f32.mrb[0].mxu0
    %v4113 = vadd.f32 %v3688, %v4112
    %v4114 = vpop.f32.mrb[0].mxu0
    %v4115 = vpop.f32.mrb[0].mxu0
    %v4116 = vadd.f32 %v3691, %v4115
    %v4117 = vpop.f32.mrb[0].mxu0
    %4118 = vmatprep.mubr.bf16.mxu0 0
    %4119 = vmatmul.mubr.bf16.gmra.mrb[0].mxu0 %v2620
    %v4120 = vpop.f32.mrb[0].mxu0
    %v4121 = vadd.f32 %v3696, %v4120
    %v4122 = vpop.f32.mrb[0].mxu0
    %v4123 = vpop.f32.mrb[0].mxu0
    %v4124 = vadd.f32 %v3699, %v4123
    %v4125 = vpop.f32.mrb[0].mxu0
    %4126 = vmatprep.mubr.bf16.mxu0 0
    %4127 = vmatmul.mubr.bf16.gmra.mrb[0].mxu0 %v2623
    %v4128 = vpop.f32.mrb[0].mxu0
    %v4129 = vadd.f32 %v3704, %v4128
    %v4130 = vpop.f32.mrb[0].mxu0
    %v4131 = vpop.f32.mrb[0].mxu0
    %v4132 = vadd.f32 %v3707, %v4131
    %v4133 = vpop.f32.mrb[0].mxu0
    %4134 = vmatprep.mubr.bf16.mxu0 0
    %4135 = vmatmul.mubr.bf16.gmra.mrb[0].mxu0 %v2626
    %v4136 = vpop.f32.mrb[0].mxu0
    %v4137 = vadd.f32 %v3712, %v4136
    %v4138 = vpop.f32.mrb[0].mxu0
    %v4139 = vpop.f32.mrb[0].mxu0
    %v4140 = vadd.f32 %v3715, %v4139
    %v4141 = vpop.f32.mrb[0].mxu0
    %4142 = vmatprep.mubr.bf16.mxu0 0
    %4143 = vmatmul.mubr.bf16.gmra.mrb[0].mxu0 %v2629
    %v4144 = vpop.f32.mrb[0].mxu0
    %v4145 = vadd.f32 %v3720, %v4144
    %v4146 = vpop.f32.mrb[0].mxu0
    %v4147 = vpop.f32.mrb[0].mxu0
    %v4148 = vadd.f32 %v3723, %v4147
    %v4149 = vpop.f32.mrb[0].mxu0
    %4150 = vmatprep.mubr.bf16.mxu0 0
    %4151 = vmatmul.mubr.bf16.gmra.mrb[0].mxu0 %v2632
    %v4152 = vpop.f32.mrb[0].mxu0
    %v4153 = vadd.f32 %v3728, %v4152
    %v4154 = vpop.f32.mrb[0].mxu0
    %v4155 = vpop.f32.mrb[0].mxu0
    %v4156 = vadd.f32 %v3731, %v4155
    %v4157 = vpop.f32.mrb[0].mxu0
    %4158 = vmatprep.mubr.bf16.mxu0 0
    %4159 = vmatmul.mubr.bf16.gmra.mrb[0].mxu0 %v2635
    %v4160 = vpop.f32.mrb[0].mxu0
    %v4161 = vadd.f32 %v3736, %v4160
    %v4162 = vpop.f32.mrb[0].mxu0
    %v4163 = vpop.f32.mrb[0].mxu0
    %v4164 = vadd.f32 %v3739, %v4163
    %v4165 = vpop.f32.mrb[0].mxu0
    %4166 = vmatprep.mubr.bf16.mxu0 0
    %4167 = vmatmul.mubr.bf16.gmra.mrb[0].mxu0 %v2638
    %v4168 = vpop.f32.mrb[0].mxu0
    %v4169 = vadd.f32 %v3744, %v4168
    %v4170 = vpop.f32.mrb[0].mxu0
    %v4171 = vpop.f32.mrb[0].mxu0
    %v4172 = vadd.f32 %v3747, %v4171
    %v4173 = vpop.f32.mrb[0].mxu0
    %4174 = vmatprep.mubr.bf16.mxu0 0
    %4175 = vmatmul.mubr.bf16.gmra.mrb[0].mxu0 %v2641
    %v4176 = vpop.f32.mrb[0].mxu0
    %v4177 = vadd.f32 %v3752, %v4176
    %v4178 = vpop.f32.mrb[0].mxu0
    %v4179 = vpop.f32.mrb[0].mxu0
    %v4180 = vadd.f32 %v3755, %v4179
    %v4181 = vpop.f32.mrb[0].mxu0
    %4182 = vmatprep.mubr.bf16.mxu0 0
    %4183 = vmatmul.mubr.bf16.gmra.mrb[0].mxu0 %v2644
    %v4184 = vpop.f32.mrb[0].mxu0
    %v4185 = vadd.f32 %v3760, %v4184
    %v4186 = vpop.f32.mrb[0].mxu0
    %v4187 = vpop.f32.mrb[0].mxu0
    %v4188 = vadd.f32 %v3763, %v4187
    %v4189 = vpop.f32.mrb[0].mxu0
    %4190 = vmatprep.mubr.bf16.mxu0 0
    %4191 = vmatmul.mubr.bf16.gmra.mrb[0].mxu0 %v2647
    %v4192 = vpop.f32.mrb[0].mxu0
    %v4193 = vadd.f32 %v3768, %v4192
    %v4194 = vpop.f32.mrb[0].mxu0
    %v4195 = vpop.f32.mrb[0].mxu0
    %v4196 = vadd.f32 %v3771, %v4195
    %v4197 = vpop.f32.mrb[0].mxu0
    %4198 = vmatprep.mubr.bf16.mxu0 0
    %4199 = vmatmul.mubr.bf16.gmra.mrb[0].mxu0 %v2650
    %v4200 = vpop.f32.mrb[0].mxu0
    %v4201 = vadd.f32 %v3776, %v4200
    %v4202 = vpop.f32.mrb[0].mxu0
    %v4203 = vpop.f32.mrb[0].mxu0
    %v4204 = vadd.f32 %v3779, %v4203
    %v4205 = vpop.f32.mrb[0].mxu0
    %4206 = vmatprep.mubr.bf16.mxu0 0
    %4207 = vmatmul.mubr.bf16.gmra.mrb[0].mxu0 %v2653
    %v4208 = vpop.f32.mrb[0].mxu0
    %v4209 = vadd.f32 %v3784, %v4208
    %v4210 = vpop.f32.mrb[0].mxu0
    %v4211 = vpop.f32.mrb[0].mxu0
    %v4212 = vadd.f32 %v3787, %v4211
    %v4213 = vpop.f32.mrb[0].mxu0
    %4214 = vmatprep.mubr.bf16.mxu0 0
    %4215 = vmatmul.mubr.bf16.gmra.mrb[0].mxu0 %v2656
    %v4216 = vpop.f32.mrb[0].mxu0
    %v4217 = vadd.f32 %v3792, %v4216
    %v4218 = vpop.f32.mrb[0].mxu0
    %v4219 = vpop.f32.mrb[0].mxu0
    %v4220 = vadd.f32 %v3795, %v4219
    %v4221 = vpop.f32.mrb[0].mxu0
    %4222 = vmatprep.mubr.bf16.mxu0 0
    %4223 = vmatmul.mubr.bf16.gmra.mrb[0].mxu0 %v2659
    %v4224 = vpop.f32.mrb[0].mxu0
    %v4225 = vadd.f32 %v3800, %v4224
    %v4226 = vpop.f32.mrb[0].mxu0
    %v4227 = vpop.f32.mrb[0].mxu0
    %v4228 = vadd.f32 %v3803, %v4227
    %v4229 = vpop.f32.mrb[0].mxu0
    %4230 = vmatprep.mubr.bf16.mxu0 0
    %4231 = vmatmul.mubr.bf16.gmra.mrb[0].mxu0 %v2662
    %v4232 = vpop.f32.mrb[0].mxu0
    %v4233 = vadd.f32 %v3808, %v4232
    %v4234 = vpop.f32.mrb[0].mxu0
    %v4235 = vpop.f32.mrb[0].mxu0
    %v4236 = vadd.f32 %v3811, %v4235
    %v4237 = vpop.f32.mrb[0].mxu0
    %4238 = vmatprep.mubr.bf16.mxu0 0
    %4239 = vmatmul.mubr.bf16.gmra.mrb[0].mxu0 %v2665
    %v4240 = vpop.f32.mrb[0].mxu0
    %v4241 = vadd.f32 %v3816, %v4240
    %v4242 = vpop.f32.mrb[0].mxu0
    %v4243 = vpop.f32.mrb[0].mxu0
    %v4244 = vadd.f32 %v3819, %v4243
    %v4245 = vpop.f32.mrb[0].mxu0
    %4246 = vmatprep.mubr.bf16.mxu0 0
    %4247 = vmatmul.mubr.bf16.gmra.mrb[0].mxu0 %v2668
    %v4248 = vpop.f32.mrb[0].mxu0
    %v4249 = vadd.f32 %v3824, %v4248
    %v4250 = vpop.f32.mrb[0].mxu0
    %v4251 = vpop.f32.mrb[0].mxu0
    %v4252 = vadd.f32 %v3827, %v4251
    %v4253 = vpop.f32.mrb[0].mxu0
    %4254 = vmatprep.mubr.bf16.mxu0 0
    %4255 = vmatmul.mubr.bf16.gmra.mrb[0].mxu0 %v2671
    %v4256 = vpop.f32.mrb[0].mxu0
    %v4257 = vadd.f32 %v3832, %v4256
    %v4258 = vpop.f32.mrb[0].mxu0
    %v4259 = vpop.f32.mrb[0].mxu0
    %v4260 = vadd.f32 %v3835, %v4259
    %v4261 = vpop.f32.mrb[0].mxu0
    %4262 = vmatprep.mubr.bf16.mxu0 0
    %4263 = vmatmul.mubr.bf16.gmra.mrb[0].mxu0 %v2674
    %v4264 = vpop.f32.mrb[0].mxu0
    %v4265 = vadd.f32 %v3840, %v4264
    %v4266 = vpop.f32.mrb[0].mxu0
    %v4267 = vpop.f32.mrb[0].mxu0
    %v4268 = vadd.f32 %v3843, %v4267
    %v4269 = vpop.f32.mrb[0].mxu0
    %4270 = vmatprep.mubr.bf16.mxu0 0
    %4271 = vmatmul.mubr.bf16.gmra.mrb[0].mxu0 %v2677
    %v4272 = vpop.f32.mrb[0].mxu0
    %v4273 = vadd.f32 %v3848, %v4272
    %v4274 = vpop.f32.mrb[0].mxu0
    %v4275 = vpop.f32.mrb[0].mxu0
    %v4276 = vadd.f32 %v3851, %v4275
    %v4277 = vpop.f32.mrb[0].mxu0
    %4278 = vmatprep.mubr.bf16.mxu0 0
    %4279 = vmatmul.mubr.bf16.gmra.mrb[0].mxu0 %v2680
    %v4280 = vpop.f32.mrb[0].mxu0
    %v4281 = vadd.f32 %v3856, %v4280
    %v4282 = vpop.f32.mrb[0].mxu0
    %v4283 = vpop.f32.mrb[0].mxu0
    %v4284 = vadd.f32 %v3859, %v4283
    %v4285 = vpop.f32.mrb[0].mxu0
    %4286 = vmatprep.mubr.bf16.mxu0 0
    %4287 = vmatmul.mubr.bf16.gmra.mrb[0].mxu0 %v2683
    %v4288 = vpop.f32.mrb[0].mxu0
    %v4289 = vadd.f32 %v3864, %v4288
    %v4290 = vpop.f32.mrb[0].mxu0
    %v4291 = vpop.f32.mrb[0].mxu0
    %v4292 = vadd.f32 %v3867, %v4291
    %v4293 = vpop.f32.mrb[0].mxu0
    %4294 = vmatprep.mubr.bf16.mxu0 0
    %4295 = vmatmul.mubr.bf16.gmra.mrb[0].mxu0 %v2686
    %v4296 = vpop.f32.mrb[0].mxu0
    %v4297 = vadd.f32 %v3872, %v4296
    %v4298 = vpop.f32.mrb[0].mxu0
    %v4299 = vpop.f32.mrb[0].mxu0
    %v4300 = vadd.f32 %v3875, %v4299
    %v4301 = vpop.f32.mrb[0].mxu0
    %4302 = vmatprep.mubr.bf16.mxu0 0
    %4303 = vmatmul.mubr.bf16.gmra.mrb[0].mxu0 %v2689
    %v4304 = vpop.f32.mrb[0].mxu0
    %v4305 = vadd.f32 %v3880, %v4304
    %v4306 = vpop.f32.mrb[0].mxu0
    %v4307 = vpop.f32.mrb[0].mxu0
    %v4308 = vadd.f32 %v3883, %v4307
    %v4309 = vpop.f32.mrb[0].mxu0
    %4310 = vmatprep.mubr.bf16.mxu0 0
    %4311 = vmatmul.mubr.bf16.gmra.mrb[0].mxu0 %v2692
    %v4312 = vpop.f32.mrb[0].mxu0
    %v4313 = vadd.f32 %v3888, %v4312
    %v4314 = vpop.f32.mrb[0].mxu0
    %v4315 = vpop.f32.mrb[0].mxu0
    %v4316 = vadd.f32 %v3891, %v4315
    %v4317 = vpop.f32.mrb[0].mxu0
    %4318 = vmatprep.mubr.bf16.mxu0 0
    %4319 = vmatmul.mubr.bf16.gmra.mrb[0].mxu0 %v2695
    %v4320 = vpop.f32.mrb[0].mxu0
    %v4321 = vadd.f32 %v3896, %v4320
    %v4322 = vpop.f32.mrb[0].mxu0
    %v4323 = vpop.f32.mrb[0].mxu0
    %v4324 = vadd.f32 %v3899, %v4323
    %v4325 = vpop.f32.mrb[0].mxu0
    %4326 = vmatprep.mubr.bf16.mxu0 0
    %4327 = vmatmul.mubr.bf16.gmra.mrb[0].mxu0 %v2698
    %v4328 = vpop.f32.mrb[0].mxu0
    %v4329 = vadd.f32 %v3904, %v4328
    %v4330 = vpop.f32.mrb[0].mxu0
    %v4331 = vpop.f32.mrb[0].mxu0
    %v4332 = vadd.f32 %v3907, %v4331
    %v4333 = vpop.f32.mrb[0].mxu0
    %4334 = vmatprep.mubr.bf16.mxu0 0
    %4335 = vmatmul.mubr.bf16.gmra.mrb[0].mxu0 %v2701
    %v4336 = vpop.f32.mrb[0].mxu0
    %v4337 = vadd.f32 %v3912, %v4336
    %v4338 = vpop.f32.mrb[0].mxu0
    %v4339 = vpop.f32.mrb[0].mxu0
    %v4340 = vadd.f32 %v3915, %v4339
    %v4341 = vpop.f32.mrb[0].mxu0
    %4342 = vmatprep.mubr.bf16.mxu0 0
    %4343 = vmatmul.mubr.bf16.gmra.mrb[0].mxu0 %v2704
    %v4344 = vpop.f32.mrb[0].mxu0
    %v4345 = vadd.f32 %v3920, %v4344
    %v4346 = vpop.f32.mrb[0].mxu0
    %v4347 = vpop.f32.mrb[0].mxu0
    %v4348 = vadd.f32 %v3923, %v4347
    %v4349 = vpop.f32.mrb[0].mxu0
    %4350 = vmatprep.mubr.bf16.mxu0 0
    %4351 = vmatmul.mubr.bf16.gmra.mrb[0].mxu0 %v2707
    %v4352 = vpop.f32.mrb[0].mxu0
    %v4353 = vadd.f32 %v3928, %v4352
    %v4354 = vpop.f32.mrb[0].mxu0
    %v4355 = vpop.f32.mrb[0].mxu0
    %v4356 = vadd.f32 %v3931, %v4355
    %v4357 = vpop.f32.mrb[0].mxu0
    %4358 = vmatprep.mubr.bf16.mxu0 0
    %4359 = vmatmul.mubr.bf16.gmra.mrb[0].mxu0 %v2710
    %v4360 = vpop.f32.mrb[0].mxu0
    %v4361 = vadd.f32 %v3936, %v4360
    %v4362 = vpop.f32.mrb[0].mxu0
    %v4363 = vpop.f32.mrb[0].mxu0
    %v4364 = vadd.f32 %v3939, %v4363
    %v4365 = vpop.f32.mrb[0].mxu0
    %4366 = vmatprep.mubr.bf16.mxu0 0
    %4367 = vmatmul.mubr.bf16.gmra.mrb[0].mxu0 %v2713
    %v4368 = vpop.f32.mrb[0].mxu0
    %v4369 = vadd.f32 %v3944, %v4368
    %v4370 = vpop.f32.mrb[0].mxu0
    %v4371 = vpop.f32.mrb[0].mxu0
    %v4372 = vadd.f32 %v3947, %v4371
    %v4373 = vpop.f32.mrb[0].mxu0
    %4374 = vmatprep.mubr.bf16.mxu0 0
    %4375 = vmatmul.mubr.bf16.gmra.mrb[0].mxu0 %v2716
    %v4376 = vpop.f32.mrb[0].mxu0
    %v4377 = vadd.f32 %v3952, %v4376
    %v4378 = vpop.f32.mrb[0].mxu0
    %v4379 = vpop.f32.mrb[0].mxu0
    %v4380 = vadd.f32 %v3955, %v4379
    %v4381 = vpop.f32.mrb[0].mxu0
    %4382 = vmatprep.mubr.bf16.mxu0 0
    %4383 = vmatmul.mubr.bf16.gmra.mrb[0].mxu0 %v2719
    %v4384 = vpop.f32.mrb[0].mxu0
    %v4385 = vadd.f32 %v3960, %v4384
    %v4386 = vpop.f32.mrb[0].mxu0
    %v4387 = vpop.f32.mrb[0].mxu0
    %v4388 = vadd.f32 %v3963, %v4387
    %v4389 = vpop.f32.mrb[0].mxu0
    %4390 = vmatprep.mubr.bf16.mxu0 0
    %4391 = vmatmul.mubr.bf16.gmra.mrb[0].mxu0 %v2722
    %v4392 = vpop.f32.mrb[0].mxu0
    %v4393 = vadd.f32 %v3968, %v4392
    %v4394 = vpop.f32.mrb[0].mxu0
    %v4395 = vpop.f32.mrb[0].mxu0
    %v4396 = vadd.f32 %v3971, %v4395
    %v4397 = vpop.f32.mrb[0].mxu0
    %4398 = vmatprep.mubr.bf16.mxu0 0
    %4399 = vmatmul.mubr.bf16.gmra.mrb[0].mxu0 %v2725
    %v4400 = vpop.f32.mrb[0].mxu0
    %v4401 = vadd.f32 %v3976, %v4400
    %v4402 = vpop.f32.mrb[0].mxu0
    %v4403 = vpop.f32.mrb[0].mxu0
    %v4404 = vadd.f32 %v3979, %v4403
    %v4405 = vpop.f32.mrb[0].mxu0
    %4406 = vmatprep.mubr.bf16.mxu0 0
    %4407 = vmatmul.mubr.bf16.gmra.mrb[0].mxu0 %v2728
    %v4408 = vpop.f32.mrb[0].mxu0
    %v4409 = vadd.f32 %v3984, %v4408
    %v4410 = vpop.f32.mrb[0].mxu0
    %v4411 = vpop.f32.mrb[0].mxu0
    %v4412 = vadd.f32 %v3987, %v4411
    %v4413 = vpop.f32.mrb[0].mxu0
    %4414 = vmatprep.mubr.bf16.mxu0 0
    %4415 = vmatmul.mubr.bf16.gmra.mrb[0].mxu0 %v2731
    %v4416 = vpop.f32.mrb[0].mxu0
    %v4417 = vadd.f32 %v3992, %v4416
    %v4418 = vpop.f32.mrb[0].mxu0
    %v4419 = vpop.f32.mrb[0].mxu0
    %v4420 = vadd.f32 %v3995, %v4419
    %v4421 = vpop.f32.mrb[0].mxu0
    %4422 = vmatprep.mubr.bf16.mxu0 0
    %4423 = vmatmul.mubr.bf16.gmra.mrb[0].mxu0 %v2734
    %v4424 = vpop.f32.mrb[0].mxu0
    %v4425 = vadd.f32 %v4000, %v4424
    %v4426 = vpop.f32.mrb[0].mxu0
    %v4427 = vpop.f32.mrb[0].mxu0
    %v4428 = vadd.f32 %v4003, %v4427
    %v4429 = vpop.f32.mrb[0].mxu0
    %4430 = vmatprep.mubr.bf16.mxu0 0
    %4431 = vmatmul.mubr.bf16.gmra.mrb[0].mxu0 %v2737
    %v4432 = vpop.f32.mrb[0].mxu0
    %v4433 = vadd.f32 %v4008, %v4432
    %v4434 = vpop.f32.mrb[0].mxu0
    %v4435 = vpop.f32.mrb[0].mxu0
    %v4436 = vadd.f32 %v4011, %v4435
    %v4437 = vpop.f32.mrb[0].mxu0
    %4438 = vdwg.mxu0
    %vm4439 = vcmp.gt.f32.partialorder %v4049, 0.0
    %vm4440 = vcmp.gt.f32.partialorder %v4052, 0.0
    %vm4441 = vcmp.gt.f32.partialorder %v4057, 0.0
    %vm4442 = vcmp.gt.f32.partialorder %v4060, 0.0
    %vm4443 = vcmp.gt.f32.partialorder %v4065, 0.0
    %vm4444 = vcmp.gt.f32.partialorder %v4068, 0.0
    %vm4445 = vcmp.gt.f32.partialorder %v4073, 0.0
    %vm4446 = vcmp.gt.f32.partialorder %v4076, 0.0
    %vm4447 = vcmp.gt.f32.partialorder %v4081, 0.0
    %vm4448 = vcmp.gt.f32.partialorder %v4084, 0.0
    %vm4449 = vcmp.gt.f32.partialorder %v4089, 0.0
    %vm4450 = vcmp.gt.f32.partialorder %v4092, 0.0
    %vm4451 = vcmp.gt.f32.partialorder %v4097, 0.0
    %vm4452 = vcmp.gt.f32.partialorder %v4100, 0.0
    %vm4453 = vcmp.gt.f32.partialorder %v4105, 0.0
    %vm4454 = vcmp.gt.f32.partialorder %v4108, 0.0
    %vm4455 = vcmp.gt.f32.partialorder %v4113, 0.0
    %vm4456 = vcmp.gt.f32.partialorder %v4116, 0.0
    %vm4457 = vcmp.gt.f32.partialorder %v4121, 0.0
    %vm4458 = vcmp.gt.f32.partialorder %v4124, 0.0
    %vm4459 = vcmp.gt.f32.partialorder %v4129, 0.0
    %vm4460 = vcmp.gt.f32.partialorder %v4132, 0.0
    %vm4461 = vcmp.gt.f32.partialorder %v4137, 0.0
    %vm4462 = vcmp.gt.f32.partialorder %v4140, 0.0
    %vm4463 = vcmp.gt.f32.partialorder %v4145, 0.0
    %vm4464 = vcmp.gt.f32.partialorder %v4148, 0.0
    %vm4465 = vcmp.gt.f32.partialorder %v4153, 0.0
    %vm4466 = vcmp.gt.f32.partialorder %v4156, 0.0
    %vm4467 = vcmp.gt.f32.partialorder %v4161, 0.0
    %vm4468 = vcmp.gt.f32.partialorder %v4164, 0.0
    %vm4469 = vcmp.gt.f32.partialorder %v4169, 0.0
    %vm4470 = vcmp.gt.f32.partialorder %v4172, 0.0
    %vm4471 = vcmp.gt.f32.partialorder %v4177, 0.0
    %vm4472 = vcmp.gt.f32.partialorder %v4180, 0.0
    %vm4473 = vcmp.gt.f32.partialorder %v4185, 0.0
    %vm4474 = vcmp.gt.f32.partialorder %v4188, 0.0
    %vm4475 = vcmp.gt.f32.partialorder %v4193, 0.0
    %vm4476 = vcmp.gt.f32.partialorder %v4196, 0.0
    %vm4477 = vcmp.gt.f32.partialorder %v4201, 0.0
    %vm4478 = vcmp.gt.f32.partialorder %v4204, 0.0
    %vm4479 = vcmp.gt.f32.partialorder %v4209, 0.0
    %vm4480 = vcmp.gt.f32.partialorder %v4212, 0.0
    %vm4481 = vcmp.gt.f32.partialorder %v4217, 0.0
    %vm4482 = vcmp.gt.f32.partialorder %v4220, 0.0
    %vm4483 = vcmp.gt.f32.partialorder %v4225, 0.0
    %vm4484 = vcmp.gt.f32.partialorder %v4228, 0.0
    %vm4485 = vcmp.gt.f32.partialorder %v4233, 0.0
    %vm4486 = vcmp.gt.f32.partialorder %v4236, 0.0
    %vm4487 = vcmp.gt.f32.partialorder %v4241, 0.0
    %vm4488 = vcmp.gt.f32.partialorder %v4244, 0.0
    %vm4489 = vcmp.gt.f32.partialorder %v4249, 0.0
    %vm4490 = vcmp.gt.f32.partialorder %v4252, 0.0
    %vm4491 = vcmp.gt.f32.partialorder %v4257, 0.0
    %vm4492 = vcmp.gt.f32.partialorder %v4260, 0.0
    %vm4493 = vcmp.gt.f32.partialorder %v4265, 0.0
    %vm4494 = vcmp.gt.f32.partialorder %v4268, 0.0
    %vm4495 = vcmp.gt.f32.partialorder %v4273, 0.0
    %vm4496 = vcmp.gt.f32.partialorder %v4276, 0.0
    %vm4497 = vcmp.gt.f32.partialorder %v4281, 0.0
    %vm4498 = vcmp.gt.f32.partialorder %v4284, 0.0
    %vm4499 = vcmp.gt.f32.partialorder %v4289, 0.0
    %vm4500 = vcmp.gt.f32.partialorder %v4292, 0.0
    %vm4501 = vcmp.gt.f32.partialorder %v4297, 0.0
    %vm4502 = vcmp.gt.f32.partialorder %v4300, 0.0
    %vm4503 = vcmp.gt.f32.partialorder %v4305, 0.0
    %vm4504 = vcmp.gt.f32.partialorder %v4308, 0.0
    %vm4505 = vcmp.gt.f32.partialorder %v4313, 0.0
    %vm4506 = vcmp.gt.f32.partialorder %v4316, 0.0
    %vm4507 = vcmp.gt.f32.partialorder %v4321, 0.0
    %vm4508 = vcmp.gt.f32.partialorder %v4324, 0.0
    %vm4509 = vcmp.gt.f32.partialorder %v4329, 0.0
    %vm4510 = vcmp.gt.f32.partialorder %v4332, 0.0
    %vm4511 = vcmp.gt.f32.partialorder %v4337, 0.0
    %vm4512 = vcmp.gt.f32.partialorder %v4340, 0.0
    %vm4513 = vcmp.gt.f32.partialorder %v4345, 0.0
    %vm4514 = vcmp.gt.f32.partialorder %v4348, 0.0
    %vm4515 = vcmp.gt.f32.partialorder %v4353, 0.0
    %vm4516 = vcmp.gt.f32.partialorder %v4356, 0.0
    %vm4517 = vcmp.gt.f32.partialorder %v4361, 0.0
    %vm4518 = vcmp.gt.f32.partialorder %v4364, 0.0
    %vm4519 = vcmp.gt.f32.partialorder %v4369, 0.0
    %vm4520 = vcmp.gt.f32.partialorder %v4372, 0.0
    %vm4521 = vcmp.gt.f32.partialorder %v4377, 0.0
    %vm4522 = vcmp.gt.f32.partialorder %v4380, 0.0
    %vm4523 = vcmp.gt.f32.partialorder %v4385, 0.0
    %vm4524 = vcmp.gt.f32.partialorder %v4388, 0.0
    %vm4525 = vcmp.gt.f32.partialorder %v4393, 0.0
    %vm4526 = vcmp.gt.f32.partialorder %v4396, 0.0
    %vm4527 = vcmp.gt.f32.partialorder %v4401, 0.0
    %vm4528 = vcmp.gt.f32.partialorder %v4404, 0.0
    %vm4529 = vcmp.gt.f32.partialorder %v4409, 0.0
    %vm4530 = vcmp.gt.f32.partialorder %v4412, 0.0
    %vm4531 = vcmp.gt.f32.partialorder %v4417, 0.0
    %vm4532 = vcmp.gt.f32.partialorder %v4420, 0.0
    %vm4533 = vcmp.gt.f32.partialorder %v4425, 0.0
    %vm4534 = vcmp.gt.f32.partialorder %v4428, 0.0
    %vm4535 = vcmp.gt.f32.partialorder %v4433, 0.0
    %vm4536 = vcmp.gt.f32.partialorder %v4436, 0.0
    %v4537 = vmul.f32 %v4049, 0.2
    %v4538 = vmul.f32 %v4052, 0.2
    %v4539 = vmul.f32 %v4057, 0.2
    %v4540 = vmul.f32 %v4060, 0.2
    %v4541 = vmul.f32 %v4065, 0.2
    %v4542 = vmul.f32 %v4068, 0.2
    %v4543 = vmul.f32 %v4073, 0.2
    %v4544 = vmul.f32 %v4076, 0.2
    %v4545 = vmul.f32 %v4081, 0.2
    %v4546 = vmul.f32 %v4084, 0.2
    %v4547 = vmul.f32 %v4089, 0.2
    %v4548 = vmul.f32 %v4092, 0.2
    %v4549 = vmul.f32 %v4097, 0.2
    %v4550 = vmul.f32 %v4100, 0.2
    %v4551 = vmul.f32 %v4105, 0.2
    %v4552 = vmul.f32 %v4108, 0.2
    %v4553 = vmul.f32 %v4113, 0.2
    %v4554 = vmul.f32 %v4116, 0.2
    %v4555 = vmul.f32 %v4121, 0.2
    %v4556 = vmul.f32 %v4124, 0.2
    %v4557 = vmul.f32 %v4129, 0.2
    %v4558 = vmul.f32 %v4132, 0.2
    %v4559 = vmul.f32 %v4137, 0.2
    %v4560 = vmul.f32 %v4140, 0.2
    %v4561 = vmul.f32 %v4145, 0.2
    %v4562 = vmul.f32 %v4148, 0.2
    %v4563 = vmul.f32 %v4153, 0.2
    %v4564 = vmul.f32 %v4156, 0.2
    %v4565 = vmul.f32 %v4161, 0.2
    %v4566 = vmul.f32 %v4164, 0.2
    %v4567 = vmul.f32 %v4169, 0.2
    %v4568 = vmul.f32 %v4172, 0.2
    %v4569 = vmul.f32 %v4177, 0.2
    %v4570 = vmul.f32 %v4180, 0.2
    %v4571 = vmul.f32 %v4185, 0.2
    %v4572 = vmul.f32 %v4188, 0.2
    %v4573 = vmul.f32 %v4193, 0.2
    %v4574 = vmul.f32 %v4196, 0.2
    %v4575 = vmul.f32 %v4201, 0.2
    %v4576 = vmul.f32 %v4204, 0.2
    %v4577 = vmul.f32 %v4209, 0.2
    %v4578 = vmul.f32 %v4212, 0.2
    %v4579 = vmul.f32 %v4217, 0.2
    %v4580 = vmul.f32 %v4220, 0.2
    %v4581 = vmul.f32 %v4225, 0.2
    %v4582 = vmul.f32 %v4228, 0.2
    %v4583 = vmul.f32 %v4233, 0.2
    %v4584 = vmul.f32 %v4236, 0.2
    %v4585 = vmul.f32 %v4241, 0.2
    %v4586 = vmul.f32 %v4244, 0.2
    %v4587 = vmul.f32 %v4249, 0.2
    %v4588 = vmul.f32 %v4252, 0.2
    %v4589 = vmul.f32 %v4257, 0.2
    %v4590 = vmul.f32 %v4260, 0.2
    %v4591 = vmul.f32 %v4265, 0.2
    %v4592 = vmul.f32 %v4268, 0.2
    %v4593 = vmul.f32 %v4273, 0.2
    %v4594 = vmul.f32 %v4276, 0.2
    %v4595 = vmul.f32 %v4281, 0.2
    %v4596 = vmul.f32 %v4284, 0.2
    %v4597 = vmul.f32 %v4289, 0.2
    %v4598 = vmul.f32 %v4292, 0.2
    %v4599 = vmul.f32 %v4297, 0.2
    %v4600 = vmul.f32 %v4300, 0.2
    %v4601 = vmul.f32 %v4305, 0.2
    %v4602 = vmul.f32 %v4308, 0.2
    %v4603 = vmul.f32 %v4313, 0.2
    %v4604 = vmul.f32 %v4316, 0.2
    %v4605 = vmul.f32 %v4321, 0.2
    %v4606 = vmul.f32 %v4324, 0.2
    %v4607 = vmul.f32 %v4329, 0.2
    %v4608 = vmul.f32 %v4332, 0.2
    %v4609 = vmul.f32 %v4337, 0.2
    %v4610 = vmul.f32 %v4340, 0.2
    %v4611 = vmul.f32 %v4345, 0.2
    %v4612 = vmul.f32 %v4348, 0.2
    %v4613 = vmul.f32 %v4353, 0.2
    %v4614 = vmul.f32 %v4356, 0.2
    %v4615 = vmul.f32 %v4361, 0.2
    %v4616 = vmul.f32 %v4364, 0.2
    %v4617 = vmul.f32 %v4369, 0.2
    %v4618 = vmul.f32 %v4372, 0.2
    %v4619 = vmul.f32 %v4377, 0.2
    %v4620 = vmul.f32 %v4380, 0.2
    %v4621 = vmul.f32 %v4385, 0.2
    %v4622 = vmul.f32 %v4388, 0.2
    %v4623 = vmul.f32 %v4393, 0.2
    %v4624 = vmul.f32 %v4396, 0.2
    %v4625 = vmul.f32 %v4401, 0.2
    %v4626 = vmul.f32 %v4404, 0.2
    %v4627 = vmul.f32 %v4409, 0.2
    %v4628 = vmul.f32 %v4412, 0.2
    %v4629 = vmul.f32 %v4417, 0.2
    %v4630 = vmul.f32 %v4420, 0.2
    %v4631 = vmul.f32 %v4425, 0.2
    %v4632 = vmul.f32 %v4428, 0.2
    %v4633 = vmul.f32 %v4433, 0.2
    %v4634 = vmul.f32 %v4436, 0.2
    %v4635 = vsel %vm4439, %v4049, %v4537
    %v4636 = vsel %vm4440, %v4052, %v4538
    %v4637 = vsel %vm4441, %v4057, %v4539
    %v4638 = vsel %vm4442, %v4060, %v4540
    %v4639 = vsel %vm4443, %v4065, %v4541
    %v4640 = vsel %vm4444, %v4068, %v4542
    %v4641 = vsel %vm4445, %v4073, %v4543
    %v4642 = vsel %vm4446, %v4076, %v4544
    %v4643 = vsel %vm4447, %v4081, %v4545
    %v4644 = vsel %vm4448, %v4084, %v4546
    %v4645 = vsel %vm4449, %v4089, %v4547
    %v4646 = vsel %vm4450, %v4092, %v4548
    %v4647 = vsel %vm4451, %v4097, %v4549
    %v4648 = vsel %vm4452, %v4100, %v4550
    %v4649 = vsel %vm4453, %v4105, %v4551
    %v4650 = vsel %vm4454, %v4108, %v4552
    %v4651 = vsel %vm4455, %v4113, %v4553
    %v4652 = vsel %vm4456, %v4116, %v4554
    %v4653 = vsel %vm4457, %v4121, %v4555
    %v4654 = vsel %vm4458, %v4124, %v4556
    %v4655 = vsel %vm4459, %v4129, %v4557
    %v4656 = vsel %vm4460, %v4132, %v4558
    %v4657 = vsel %vm4461, %v4137, %v4559
    %v4658 = vsel %vm4462, %v4140, %v4560
    %v4659 = vsel %vm4463, %v4145, %v4561
    %v4660 = vsel %vm4464, %v4148, %v4562
    %v4661 = vsel %vm4465, %v4153, %v4563
    %v4662 = vsel %vm4466, %v4156, %v4564
    %v4663 = vsel %vm4467, %v4161, %v4565
    %v4664 = vsel %vm4468, %v4164, %v4566
    %v4665 = vsel %vm4469, %v4169, %v4567
    %v4666 = vsel %vm4470, %v4172, %v4568
    %v4667 = vsel %vm4471, %v4177, %v4569
    %v4668 = vsel %vm4472, %v4180, %v4570
    %v4669 = vsel %vm4473, %v4185, %v4571
    %v4670 = vsel %vm4474, %v4188, %v4572
    %v4671 = vsel %vm4475, %v4193, %v4573
    %v4672 = vsel %vm4476, %v4196, %v4574
    %v4673 = vsel %vm4477, %v4201, %v4575
    %v4674 = vsel %vm4478, %v4204, %v4576
    %v4675 = vsel %vm4479, %v4209, %v4577
    %v4676 = vsel %vm4480, %v4212, %v4578
    %v4677 = vsel %vm4481, %v4217, %v4579
    %v4678 = vsel %vm4482, %v4220, %v4580
    %v4679 = vsel %vm4483, %v4225, %v4581
    %v4680 = vsel %vm4484, %v4228, %v4582
    %v4681 = vsel %vm4485, %v4233, %v4583
    %v4682 = vsel %vm4486, %v4236, %v4584
    %v4683 = vsel %vm4487, %v4241, %v4585
    %v4684 = vsel %vm4488, %v4244, %v4586
    %v4685 = vsel %vm4489, %v4249, %v4587
    %v4686 = vsel %vm4490, %v4252, %v4588
    %v4687 = vsel %vm4491, %v4257, %v4589
    %v4688 = vsel %vm4492, %v4260, %v4590
    %v4689 = vsel %vm4493, %v4265, %v4591
    %v4690 = vsel %vm4494, %v4268, %v4592
    %v4691 = vsel %vm4495, %v4273, %v4593
    %v4692 = vsel %vm4496, %v4276, %v4594
    %v4693 = vsel %vm4497, %v4281, %v4595
    %v4694 = vsel %vm4498, %v4284, %v4596
    %v4695 = vsel %vm4499, %v4289, %v4597
    %v4696 = vsel %vm4500, %v4292, %v4598
    %v4697 = vsel %vm4501, %v4297, %v4599
    %v4698 = vsel %vm4502, %v4300, %v4600
    %v4699 = vsel %vm4503, %v4305, %v4601
    %v4700 = vsel %vm4504, %v4308, %v4602
    %v4701 = vsel %vm4505, %v4313, %v4603
    %v4702 = vsel %vm4506, %v4316, %v4604
    %v4703 = vsel %vm4507, %v4321, %v4605
    %v4704 = vsel %vm4508, %v4324, %v4606
    %v4705 = vsel %vm4509, %v4329, %v4607
    %v4706 = vsel %vm4510, %v4332, %v4608
    %v4707 = vsel %vm4511, %v4337, %v4609
    %v4708 = vsel %vm4512, %v4340, %v4610
    %v4709 = vsel %vm4513, %v4345, %v4611
    %v4710 = vsel %vm4514, %v4348, %v4612
    %v4711 = vsel %vm4515, %v4353, %v4613
    %v4712 = vsel %vm4516, %v4356, %v4614
    %v4713 = vsel %vm4517, %v4361, %v4615
    %v4714 = vsel %vm4518, %v4364, %v4616
    %v4715 = vsel %vm4519, %v4369, %v4617
    %v4716 = vsel %vm4520, %v4372, %v4618
    %v4717 = vsel %vm4521, %v4377, %v4619
    %v4718 = vsel %vm4522, %v4380, %v4620
    %v4719 = vsel %vm4523, %v4385, %v4621
    %v4720 = vsel %vm4524, %v4388, %v4622
    %v4721 = vsel %vm4525, %v4393, %v4623
    %v4722 = vsel %vm4526, %v4396, %v4624
    %v4723 = vsel %vm4527, %v4401, %v4625
    %v4724 = vsel %vm4528, %v4404, %v4626
    %v4725 = vsel %vm4529, %v4409, %v4627
    %v4726 = vsel %vm4530, %v4412, %v4628
    %v4727 = vsel %vm4531, %v4417, %v4629
    %v4728 = vsel %vm4532, %v4420, %v4630
    %v4729 = vsel %vm4533, %v4425, %v4631
    %v4730 = vsel %vm4534, %v4428, %v4632
    %v4731 = vsel %vm4535, %v4433, %v4633
    %v4732 = vsel %vm4536, %v4436, %v4634
    %v4733 = vld [vmem:[%s2] sm:$0xff]
    %v4734 = vld [vmem:[%s2 + $0x8] sm:$0xff]
    %v4735 = vld [vmem:[%s2 + $0x10] sm:$0xff]
    %v4736 = vld [vmem:[%s2 + $0x18] sm:$0xf]
    %v4737 = vld [vmem:[%s2 + $0x1c] sm:$0xff]
    %v4738 = vld [vmem:[%s2 + $0x24] sm:$0xff]
    %v4739 = vld [vmem:[%s2 + $0x2c] sm:$0xff]
    %v4740 = vld [vmem:[%s2 + $0x34] sm:$0xf]
    %v4741 = vld [vmem:[%s2 + $0x38] sm:$0xff]
    %v4742 = vld [vmem:[%s2 + $0x40] sm:$0xff]
    %v4743 = vld [vmem:[%s2 + $0x48] sm:$0xff]
    %v4744 = vld [vmem:[%s2 + $0x50] sm:$0xf]
    %v4745 = vld [vmem:[%s2 + $0x54] sm:$0xff]
    %v4746 = vld [vmem:[%s2 + $0x5c] sm:$0xff]
    %v4747 = vld [vmem:[%s2 + $0x64] sm:$0xff]
    %v4748 = vld [vmem:[%s2 + $0x6c] sm:$0xf]
    %v4749 = vld [vmem:[%s2 + $0x70] sm:$0xff]
    %v4750 = vld [vmem:[%s2 + $0x78] sm:$0xff]
    %v4751 = vld [vmem:[%s2 + $0x80] sm:$0xff]
    %v4752 = vld [vmem:[%s2 + $0x88] sm:$0xf]
    %v4753 = vld [vmem:[%s2 + $0x8c] sm:$0xff]
    %v4754 = vld [vmem:[%s2 + $0x94] sm:$0xff]
    %v4755 = vld [vmem:[%s2 + $0x9c] sm:$0xff]
    %v4756 = vld [vmem:[%s2 + $0xa4] sm:$0xf]
    %v4757 = vld [vmem:[%s2 + $0xa8] sm:$0xff]
    %v4758 = vld [vmem:[%s2 + $0xb0] sm:$0xff]
    %v4759 = vld [vmem:[%s2 + $0xb8] sm:$0xff]
    %v4760 = vld [vmem:[%s2 + $0xc0] sm:$0xf]
    %v4761 = vld [vmem:[%s2 + $0xc4] sm:$0xff]
    %v4762 = vld [vmem:[%s2 + $0xcc] sm:$0xff]
    %v4763 = vld [vmem:[%s2 + $0xd4] sm:$0xff]
    %v4764 = vld [vmem:[%s2 + $0xdc] sm:$0xf]
    %v4765 = vld [vmem:[%s2 + $0xe0] sm:$0xff]
    %v4766 = vld [vmem:[%s2 + $0xe8] sm:$0xff]
    %v4767 = vld [vmem:[%s2 + $0xf0] sm:$0xff]
    %v4768 = vld [vmem:[%s2 + $0xf8] sm:$0xf]
    %v4769 = vld [vmem:[%s2 + $0xfc] sm:$0xff]
    %v4770 = vld [vmem:[%s2 + $0x104] sm:$0xff]
    %v4771 = vld [vmem:[%s2 + $0x10c] sm:$0xff]
    %v4772 = vld [vmem:[%s2 + $0x114] sm:$0xf]
    %v4773 = vld [vmem:[%s2 + $0x118] sm:$0xff]
    %v4774 = vld [vmem:[%s2 + $0x120] sm:$0xff]
    %v4775 = vld [vmem:[%s2 + $0x128] sm:$0xff]
    %v4776 = vld [vmem:[%s2 + $0x130] sm:$0xf]
    %v4777 = vld [vmem:[%s2 + $0x134] sm:$0xff]
    %v4778 = vld [vmem:[%s2 + $0x13c] sm:$0xff]
    %v4779 = vld [vmem:[%s2 + $0x144] sm:$0xff]
    %v4780 = vld [vmem:[%s2 + $0x14c] sm:$0xf]
    %v4781 = vld [vmem:[%s2 + $0x150] sm:$0xff]
    %v4782 = vld [vmem:[%s2 + $0x158] sm:$0xff]
    %v4783 = vld [vmem:[%s2 + $0x160] sm:$0xff]
    %v4784 = vld [vmem:[%s2 + $0x168] sm:$0xf]
    %v4785 = vld [vmem:[%s2 + $0x16c] sm:$0xff]
    %v4786 = vld [vmem:[%s2 + $0x174] sm:$0xff]
    %v4787 = vld [vmem:[%s2 + $0x17c] sm:$0xff]
    %v4788 = vld [vmem:[%s2 + $0x184] sm:$0xf]
    %v4789 = vld [vmem:[%s2 + $0x188] sm:$0xff]
    %v4790 = vld [vmem:[%s2 + $0x190] sm:$0xff]
    %v4791 = vld [vmem:[%s2 + $0x198] sm:$0xff]
    %v4792 = vld [vmem:[%s2 + $0x1a0] sm:$0xf]
    %v4793 = vld [vmem:[%s2 + $0x1a4] sm:$0xff]
    %v4794 = vld [vmem:[%s2 + $0x1ac] sm:$0xff]
    %v4795 = vld [vmem:[%s2 + $0x1b4] sm:$0xff]
    %v4796 = vld [vmem:[%s2 + $0x1bc] sm:$0xf]
    %v4797 = vld [vmem:[%s2 + $0x1c0] sm:$0xff]
    %v4798 = vld [vmem:[%s2 + $0x1c8] sm:$0xff]
    %v4799 = vld [vmem:[%s2 + $0x1d0] sm:$0xff]
    %v4800 = vld [vmem:[%s2 + $0x1d8] sm:$0xf]
    %v4801 = vld [vmem:[%s2 + $0x1dc] sm:$0xff]
    %v4802 = vld [vmem:[%s2 + $0x1e4] sm:$0xff]
    %v4803 = vld [vmem:[%s2 + $0x1ec] sm:$0xff]
    %v4804 = vld [vmem:[%s2 + $0x1f4] sm:$0xf]
    %v4805 = vld [vmem:[%s2 + $0x1f8] sm:$0xff]
    %v4806 = vld [vmem:[%s2 + $0x200] sm:$0xff]
    %v4807 = vld [vmem:[%s2 + $0x208] sm:$0xff]
    %v4808 = vld [vmem:[%s2 + $0x210] sm:$0xf]
    %v4809 = vld [vmem:[%s2 + $0x214] sm:$0xff]
    %v4810 = vld [vmem:[%s2 + $0x21c] sm:$0xff]
    %v4811 = vld [vmem:[%s2 + $0x224] sm:$0xff]
    %v4812 = vld [vmem:[%s2 + $0x22c] sm:$0xf]
    %v4813 = vld [vmem:[%s2 + $0x230] sm:$0xff]
    %v4814 = vld [vmem:[%s2 + $0x238] sm:$0xff]
    %v4815 = vld [vmem:[%s2 + $0x240] sm:$0xff]
    %v4816 = vld [vmem:[%s2 + $0x248] sm:$0xf]
    %v4817 = vld [vmem:[%s2 + $0x24c] sm:$0xff]
    %v4818 = vld [vmem:[%s2 + $0x254] sm:$0xff]
    %v4819 = vld [vmem:[%s2 + $0x25c] sm:$0xff]
    %v4820 = vld [vmem:[%s2 + $0x264] sm:$0xf]
    %v4821 = vld [vmem:[%s2 + $0x268] sm:$0xff]
    %v4822 = vld [vmem:[%s2 + $0x270] sm:$0xff]
    %v4823 = vld [vmem:[%s2 + $0x278] sm:$0xff]
    %v4824 = vld [vmem:[%s2 + $0x280] sm:$0xf]
    %v4825 = vld [vmem:[%s2 + $0x284] sm:$0xff]
    %v4826 = vld [vmem:[%s2 + $0x28c] sm:$0xff]
    %v4827 = vld [vmem:[%s2 + $0x294] sm:$0xff]
    %v4828 = vld [vmem:[%s2 + $0x29c] sm:$0xf]
    %v4829 = vld [vmem:[%s2 + $0x2a0] sm:$0xff]
    %v4830 = vld [vmem:[%s2 + $0x2a8] sm:$0xff]
    %v4831 = vld [vmem:[%s2 + $0x2b0] sm:$0xff]
    %v4832 = vld [vmem:[%s2 + $0x2b8] sm:$0xf]
    %v4833 = vld [vmem:[%s2 + $0x2bc] sm:$0xff]
    %v4834 = vld [vmem:[%s2 + $0x2c4] sm:$0xff]
    %v4835 = vld [vmem:[%s2 + $0x2cc] sm:$0xff]
    %v4836 = vld [vmem:[%s2 + $0x2d4] sm:$0xf]
    %v4837 = vld [vmem:[%s2 + $0x2d8] sm:$0xff]
    %v4838 = vld [vmem:[%s2 + $0x2e0] sm:$0xff]
    %v4839 = vld [vmem:[%s2 + $0x2e8] sm:$0xff]
    %v4840 = vld [vmem:[%s2 + $0x2f0] sm:$0xf]
    %v4841 = vld [vmem:[%s2 + $0x2f4] sm:$0xff]
    %v4842 = vld [vmem:[%s2 + $0x2fc] sm:$0xff]
    %v4843 = vld [vmem:[%s2 + $0x304] sm:$0xff]
    %v4844 = vld [vmem:[%s2 + $0x30c] sm:$0xf]
    %v4845 = vld [vmem:[%s2 + $0x310] sm:$0xff]
    %v4846 = vld [vmem:[%s2 + $0x318] sm:$0xff]
    %v4847 = vld [vmem:[%s2 + $0x320] sm:$0xff]
    %v4848 = vld [vmem:[%s2 + $0x328] sm:$0xf]
    %v4849 = vld [vmem:[%s2 + $0x32c] sm:$0xff]
    %v4850 = vld [vmem:[%s2 + $0x334] sm:$0xff]
    %v4851 = vld [vmem:[%s2 + $0x33c] sm:$0xff]
    %v4852 = vld [vmem:[%s2 + $0x344] sm:$0xf]
    %v4853 = vld [vmem:[%s2 + $0x348] sm:$0xff]
    %v4854 = vld [vmem:[%s2 + $0x350] sm:$0xff]
    %v4855 = vld [vmem:[%s2 + $0x358] sm:$0xff]
    %v4856 = vld [vmem:[%s2 + $0x360] sm:$0xf]
    %v4857 = vld [vmem:[%s2 + $0x364] sm:$0xff]
    %v4858 = vld [vmem:[%s2 + $0x36c] sm:$0xff]
    %v4859 = vld [vmem:[%s2 + $0x374] sm:$0xff]
    %v4860 = vld [vmem:[%s2 + $0x37c] sm:$0xf]
    %v4861 = vld [vmem:[%s2 + $0x380] sm:$0xff]
    %v4862 = vld [vmem:[%s2 + $0x388] sm:$0xff]
    %v4863 = vld [vmem:[%s2 + $0x390] sm:$0xff]
    %v4864 = vld [vmem:[%s2 + $0x398] sm:$0xf]
    %v4865 = vld [vmem:[%s2 + $0x39c] sm:$0xff]
    %v4866 = vld [vmem:[%s2 + $0x3a4] sm:$0xff]
    %v4867 = vld [vmem:[%s2 + $0x3ac] sm:$0xff]
    %v4868 = vld [vmem:[%s2 + $0x3b4] sm:$0xf]
    %v4869 = vld [vmem:[%s2 + $0x3b8] sm:$0xff]
    %v4870 = vld [vmem:[%s2 + $0x3c0] sm:$0xff]
    %v4871 = vld [vmem:[%s2 + $0x3c8] sm:$0xff]
    %v4872 = vld [vmem:[%s2 + $0x3d0] sm:$0xf]
    %v4873 = vld [vmem:[%s2 + $0x3d4] sm:$0xff]
    %v4874 = vld [vmem:[%s2 + $0x3dc] sm:$0xff]
    %v4875 = vld [vmem:[%s2 + $0x3e4] sm:$0xff]
    %v4876 = vld [vmem:[%s2 + $0x3ec] sm:$0xf]
    %v4877 = vld [vmem:[%s2 + $0x3f0] sm:$0xff]
    %v4878 = vld [vmem:[%s2 + $0x3f8] sm:$0xff]
    %v4879 = vld [vmem:[%s2 + $0x400] sm:$0xff]
    %v4880 = vld [vmem:[%s2 + $0x408] sm:$0xf]
    %v4881 = vld [vmem:[%s2 + $0x40c] sm:$0xff]
    %v4882 = vld [vmem:[%s2 + $0x414] sm:$0xff]
    %v4883 = vld [vmem:[%s2 + $0x41c] sm:$0xff]
    %v4884 = vld [vmem:[%s2 + $0x424] sm:$0xf]
    %v4885 = vld [vmem:[%s2 + $0x428] sm:$0xff]
    %v4886 = vld [vmem:[%s2 + $0x430] sm:$0xff]
    %v4887 = vld [vmem:[%s2 + $0x438] sm:$0xff]
    %v4888 = vld [vmem:[%s2 + $0x440] sm:$0xf]
    %v4889 = vld [vmem:[%s2 + $0x444] sm:$0xff]
    %v4890 = vld [vmem:[%s2 + $0x44c] sm:$0xff]
    %v4891 = vld [vmem:[%s2 + $0x454] sm:$0xff]
    %v4892 = vld [vmem:[%s2 + $0x45c] sm:$0xf]
    %v4893 = vld [vmem:[%s2 + $0x460] sm:$0xff]
    %v4894 = vld [vmem:[%s2 + $0x468] sm:$0xff]
    %v4895 = vld [vmem:[%s2 + $0x470] sm:$0xff]
    %v4896 = vld [vmem:[%s2 + $0x478] sm:$0xf]
    %v4897 = vld [vmem:[%s2 + $0x47c] sm:$0xff]
    %v4898 = vld [vmem:[%s2 + $0x484] sm:$0xff]
    %v4899 = vld [vmem:[%s2 + $0x48c] sm:$0xff]
    %v4900 = vld [vmem:[%s2 + $0x494] sm:$0xf]
    %v4901 = vld [vmem:[%s2 + $0x498] sm:$0xff]
    %v4902 = vld [vmem:[%s2 + $0x4a0] sm:$0xff]
    %v4903 = vld [vmem:[%s2 + $0x4a8] sm:$0xff]
    %v4904 = vld [vmem:[%s2 + $0x4b0] sm:$0xf]
    %v4905 = vld [vmem:[%s2 + $0x4b4] sm:$0xff]
    %v4906 = vld [vmem:[%s2 + $0x4bc] sm:$0xff]
    %v4907 = vld [vmem:[%s2 + $0x4c4] sm:$0xff]
    %v4908 = vld [vmem:[%s2 + $0x4cc] sm:$0xf]
    %v4909 = vld [vmem:[%s2 + $0x4d0] sm:$0xff]
    %v4910 = vld [vmem:[%s2 + $0x4d8] sm:$0xff]
    %v4911 = vld [vmem:[%s2 + $0x4e0] sm:$0xff]
    %v4912 = vld [vmem:[%s2 + $0x4e8] sm:$0xf]
    %v4913 = vld [vmem:[%s2 + $0x4ec] sm:$0xff]
    %v4914 = vld [vmem:[%s2 + $0x4f4] sm:$0xff]
    %v4915 = vld [vmem:[%s2 + $0x4fc] sm:$0xff]
    %v4916 = vld [vmem:[%s2 + $0x504] sm:$0xf]
    %v4917 = vld [vmem:[%s2 + $0x508] sm:$0xff]
    %v4918 = vld [vmem:[%s2 + $0x510] sm:$0xff]
    %v4919 = vld [vmem:[%s2 + $0x518] sm:$0xff]
    %v4920 = vld [vmem:[%s2 + $0x520] sm:$0xf]
    %v4921 = vld [vmem:[%s2 + $0x524] sm:$0xff]
    %v4922 = vld [vmem:[%s2 + $0x52c] sm:$0xff]
    %v4923 = vld [vmem:[%s2 + $0x534] sm:$0xff]
    %v4924 = vld [vmem:[%s2 + $0x53c] sm:$0xf]
    %v4925 = vld [vmem:[%s2 + $0x540] sm:$0xff]
    %v4926 = vld [vmem:[%s2 + $0x548] sm:$0xff]
    %v4927 = vld [vmem:[%s2 + $0x550] sm:$0xff]
    %v4928 = vld [vmem:[%s2 + $0x558] sm:$0xf]
    %v4929 = vpack.c.bf16 %v4636, %v4635
    %v4930 = vpack.c.bf16 %v4638, %v4637
    %v4931 = vpack.c.bf16 %v4640, %v4639
    %v4932 = vpack.c.bf16 %v4642, %v4641
    %v4933 = vpack.c.bf16 %v4644, %v4643
    %v4934 = vpack.c.bf16 %v4646, %v4645
    %v4935 = vpack.c.bf16 %v4648, %v4647
    %v4936 = vpack.c.bf16 %v4650, %v4649
    %v4937 = vpack.c.bf16 %v4652, %v4651
    %v4938 = vpack.c.bf16 %v4654, %v4653
    %v4939 = vpack.c.bf16 %v4656, %v4655
    %v4940 = vpack.c.bf16 %v4658, %v4657
    %v4941 = vpack.c.bf16 %v4660, %v4659
    %v4942 = vpack.c.bf16 %v4662, %v4661
    %v4943 = vpack.c.bf16 %v4664, %v4663
    %v4944 = vpack.c.bf16 %v4666, %v4665
    %v4945 = vpack.c.bf16 %v4668, %v4667
    %v4946 = vpack.c.bf16 %v4670, %v4669
    %v4947 = vpack.c.bf16 %v4672, %v4671
    %v4948 = vpack.c.bf16 %v4674, %v4673
    %v4949 = vpack.c.bf16 %v4676, %v4675
    %v4950 = vpack.c.bf16 %v4678, %v4677
    %v4951 = vpack.c.bf16 %v4680, %v4679
    %v4952 = vpack.c.bf16 %v4682, %v4681
    %v4953 = vpack.c.bf16 %v4684, %v4683
    %v4954 = vpack.c.bf16 %v4686, %v4685
    %v4955 = vpack.c.bf16 %v4688, %v4687
    %v4956 = vpack.c.bf16 %v4690, %v4689
    %v4957 = vpack.c.bf16 %v4692, %v4691
    %v4958 = vpack.c.bf16 %v4694, %v4693
    %v4959 = vpack.c.bf16 %v4696, %v4695
    %v4960 = vpack.c.bf16 %v4698, %v4697
    %v4961 = vpack.c.bf16 %v4700, %v4699
    %v4962 = vpack.c.bf16 %v4702, %v4701
    %v4963 = vpack.c.bf16 %v4704, %v4703
    %v4964 = vpack.c.bf16 %v4706, %v4705
    %v4965 = vpack.c.bf16 %v4708, %v4707
    %v4966 = vpack.c.bf16 %v4710, %v4709
    %v4967 = vpack.c.bf16 %v4712, %v4711
    %v4968 = vpack.c.bf16 %v4714, %v4713
    %v4969 = vpack.c.bf16 %v4716, %v4715
    %v4970 = vpack.c.bf16 %v4718, %v4717
    %v4971 = vpack.c.bf16 %v4720, %v4719
    %v4972 = vpack.c.bf16 %v4722, %v4721
    %v4973 = vpack.c.bf16 %v4724, %v4723
    %v4974 = vpack.c.bf16 %v4726, %v4725
    %v4975 = vpack.c.bf16 %v4728, %v4727
    %v4976 = vpack.c.bf16 %v4730, %v4729
    %v4977 = vpack.c.bf16 %v4732, %v4731
    %v5174 = vunpack.c.l.b16 %v4733
    %v5175 = vunpack.c.h.b16 %v4733
    %v5176 = vunpack.c.l.b16 %v4734
    %v5177 = vunpack.c.h.b16 %v4734
    %v5178 = vunpack.c.l.b16 %v4735
    %v5179 = vunpack.c.h.b16 %v4735
    %v5180 = vunpack.c.l.b16 %v4736
    %v5181 = vunpack.c.l.b16 %v4737
    %v5182 = vunpack.c.h.b16 %v4737
    %v5183 = vunpack.c.l.b16 %v4738
    %v5184 = vunpack.c.h.b16 %v4738
    %v5185 = vunpack.c.l.b16 %v4739
    %v5186 = vunpack.c.h.b16 %v4739
    %v5187 = vunpack.c.l.b16 %v4740
    %v5188 = vunpack.c.l.b16 %v4741
    %v5189 = vunpack.c.h.b16 %v4741
    %v5190 = vunpack.c.l.b16 %v4742
    %v5191 = vunpack.c.h.b16 %v4742
    %v5192 = vunpack.c.l.b16 %v4743
    %v5193 = vunpack.c.h.b16 %v4743
    %v5194 = vunpack.c.l.b16 %v4744
    %v5195 = vunpack.c.l.b16 %v4745
    %v5196 = vunpack.c.h.b16 %v4745
    %v5197 = vunpack.c.l.b16 %v4746
    %v5198 = vunpack.c.h.b16 %v4746
    %v5199 = vunpack.c.l.b16 %v4747
    %v5200 = vunpack.c.h.b16 %v4747
    %v5201 = vunpack.c.l.b16 %v4748
    %v5202 = vunpack.c.l.b16 %v4749
    %v5203 = vunpack.c.h.b16 %v4749
    %v5204 = vunpack.c.l.b16 %v4750
    %v5205 = vunpack.c.h.b16 %v4750
    %v5206 = vunpack.c.l.b16 %v4751
    %v5207 = vunpack.c.h.b16 %v4751
    %v5208 = vunpack.c.l.b16 %v4752
    %v5209 = vunpack.c.l.b16 %v4753
    %v5210 = vunpack.c.h.b16 %v4753
    %v5211 = vunpack.c.l.b16 %v4754
    %v5212 = vunpack.c.h.b16 %v4754
    %v5213 = vunpack.c.l.b16 %v4755
    %v5214 = vunpack.c.h.b16 %v4755
    %v5215 = vunpack.c.l.b16 %v4756
    %v5216 = vunpack.c.l.b16 %v4757
    %v5217 = vunpack.c.h.b16 %v4757
    %v5218 = vunpack.c.l.b16 %v4758
    %v5219 = vunpack.c.h.b16 %v4758
    %v5220 = vunpack.c.l.b16 %v4759
    %v5221 = vunpack.c.h.b16 %v4759
    %v5222 = vunpack.c.l.b16 %v4760
    %v5223 = vunpack.c.l.b16 %v4761
    %v5224 = vunpack.c.h.b16 %v4761
    %v5225 = vunpack.c.l.b16 %v4762
    %v5226 = vunpack.c.h.b16 %v4762
    %v5227 = vunpack.c.l.b16 %v4763
    %v5228 = vunpack.c.h.b16 %v4763
    %v5229 = vunpack.c.l.b16 %v4764
    %v5230 = vunpack.c.l.b16 %v4765
    %v5231 = vunpack.c.h.b16 %v4765
    %v5232 = vunpack.c.l.b16 %v4766
    %v5233 = vunpack.c.h.b16 %v4766
    %v5234 = vunpack.c.l.b16 %v4767
    %v5235 = vunpack.c.h.b16 %v4767
    %v5236 = vunpack.c.l.b16 %v4768
    %v5237 = vunpack.c.l.b16 %v4769
    %v5238 = vunpack.c.h.b16 %v4769
    %v5239 = vunpack.c.l.b16 %v4770
    %v5240 = vunpack.c.h.b16 %v4770
    %v5241 = vunpack.c.l.b16 %v4771
    %v5242 = vunpack.c.h.b16 %v4771
    %v5243 = vunpack.c.l.b16 %v4772
    %v5244 = vunpack.c.l.b16 %v4773
    %v5245 = vunpack.c.h.b16 %v4773
    %v5246 = vunpack.c.l.b16 %v4774
    %v5247 = vunpack.c.h.b16 %v4774
    %v5248 = vunpack.c.l.b16 %v4775
    %v5249 = vunpack.c.h.b16 %v4775
    %v5250 = vunpack.c.l.b16 %v4776
    %v5251 = vunpack.c.l.b16 %v4777
    %v5252 = vunpack.c.h.b16 %v4777
    %v5253 = vunpack.c.l.b16 %v4778
    %v5254 = vunpack.c.h.b16 %v4778
    %v5255 = vunpack.c.l.b16 %v4779
    %v5256 = vunpack.c.h.b16 %v4779
    %v5257 = vunpack.c.l.b16 %v4780
    %v5258 = vunpack.c.l.b16 %v4781
    %v5259 = vunpack.c.h.b16 %v4781
    %v5260 = vunpack.c.l.b16 %v4782
    %v5261 = vunpack.c.h.b16 %v4782
    %v5262 = vunpack.c.l.b16 %v4783
    %v5263 = vunpack.c.h.b16 %v4783
    %v5264 = vunpack.c.l.b16 %v4784
    %v5265 = vunpack.c.l.b16 %v4785
    %v5266 = vunpack.c.h.b16 %v4785
    %v5267 = vunpack.c.l.b16 %v4786
    %v5268 = vunpack.c.h.b16 %v4786
    %v5269 = vunpack.c.l.b16 %v4787
    %v5270 = vunpack.c.h.b16 %v4787
    %v5271 = vunpack.c.l.b16 %v4788
    %v5272 = vunpack.c.l.b16 %v4789
    %v5273 = vunpack.c.h.b16 %v4789
    %v5274 = vunpack.c.l.b16 %v4790
    %v5275 = vunpack.c.h.b16 %v4790
    %v5276 = vunpack.c.l.b16 %v4791
    %v5277 = vunpack.c.h.b16 %v4791
    %v5278 = vunpack.c.l.b16 %v4792
    %v5279 = vunpack.c.l.b16 %v4793
    %v5280 = vunpack.c.h.b16 %v4793
    %v5281 = vunpack.c.l.b16 %v4794
    %v5282 = vunpack.c.h.b16 %v4794
    %v5283 = vunpack.c.l.b16 %v4795
    %v5284 = vunpack.c.h.b16 %v4795
    %v5285 = vunpack.c.l.b16 %v4796
    %v5286 = vunpack.c.l.b16 %v4797
    %v5287 = vunpack.c.h.b16 %v4797
    %v5288 = vunpack.c.l.b16 %v4798
    %v5289 = vunpack.c.h.b16 %v4798
    %v5290 = vunpack.c.l.b16 %v4799
    %v5291 = vunpack.c.h.b16 %v4799
    %v5292 = vunpack.c.l.b16 %v4800
    %v5293 = vunpack.c.l.b16 %v4801
    %v5294 = vunpack.c.h.b16 %v4801
    %v5295 = vunpack.c.l.b16 %v4802
    %v5296 = vunpack.c.h.b16 %v4802
    %v5297 = vunpack.c.l.b16 %v4803
    %v5298 = vunpack.c.h.b16 %v4803
    %v5299 = vunpack.c.l.b16 %v4804
    %v5300 = vunpack.c.l.b16 %v4805
    %v5301 = vunpack.c.h.b16 %v4805
    %v5302 = vunpack.c.l.b16 %v4806
    %v5303 = vunpack.c.h.b16 %v4806
    %v5304 = vunpack.c.l.b16 %v4807
    %v5305 = vunpack.c.h.b16 %v4807
    %v5306 = vunpack.c.l.b16 %v4808
    %v5307 = vunpack.c.l.b16 %v4809
    %v5308 = vunpack.c.h.b16 %v4809
    %v5309 = vunpack.c.l.b16 %v4810
    %v5310 = vunpack.c.h.b16 %v4810
    %v5311 = vunpack.c.l.b16 %v4811
    %v5312 = vunpack.c.h.b16 %v4811
    %v5313 = vunpack.c.l.b16 %v4812
    %v5314 = vunpack.c.l.b16 %v4813
    %v5315 = vunpack.c.h.b16 %v4813
    %v5316 = vunpack.c.l.b16 %v4814
    %v5317 = vunpack.c.h.b16 %v4814
    %v5318 = vunpack.c.l.b16 %v4815
    %v5319 = vunpack.c.h.b16 %v4815
    %v5320 = vunpack.c.l.b16 %v4816
    %v5321 = vunpack.c.l.b16 %v4817
    %v5322 = vunpack.c.h.b16 %v4817
    %v5323 = vunpack.c.l.b16 %v4818
    %v5324 = vunpack.c.h.b16 %v4818
    %v5325 = vunpack.c.l.b16 %v4819
    %v5326 = vunpack.c.h.b16 %v4819
    %v5327 = vunpack.c.l.b16 %v4820
    %v5328 = vunpack.c.l.b16 %v4821
    %v5329 = vunpack.c.h.b16 %v4821
    %v5330 = vunpack.c.l.b16 %v4822
    %v5331 = vunpack.c.h.b16 %v4822
    %v5332 = vunpack.c.l.b16 %v4823
    %v5333 = vunpack.c.h.b16 %v4823
    %v5334 = vunpack.c.l.b16 %v4824
    %v5335 = vunpack.c.l.b16 %v4825
    %v5336 = vunpack.c.h.b16 %v4825
    %v5337 = vunpack.c.l.b16 %v4826
    %v5338 = vunpack.c.h.b16 %v4826
    %v5339 = vunpack.c.l.b16 %v4827
    %v5340 = vunpack.c.h.b16 %v4827
    %v5341 = vunpack.c.l.b16 %v4828
    %v5342 = vunpack.c.l.b16 %v4829
    %v5343 = vunpack.c.h.b16 %v4829
    %v5344 = vunpack.c.l.b16 %v4830
    %v5345 = vunpack.c.h.b16 %v4830
    %v5346 = vunpack.c.l.b16 %v4831
    %v5347 = vunpack.c.h.b16 %v4831
    %v5348 = vunpack.c.l.b16 %v4832
    %v5349 = vunpack.c.l.b16 %v4833
    %v5350 = vunpack.c.h.b16 %v4833
    %v5351 = vunpack.c.l.b16 %v4834
    %v5352 = vunpack.c.h.b16 %v4834
    %v5353 = vunpack.c.l.b16 %v4835
    %v5354 = vunpack.c.h.b16 %v4835
    %v5355 = vunpack.c.l.b16 %v4836
    %v5356 = vunpack.c.l.b16 %v4837
    %v5357 = vunpack.c.h.b16 %v4837
    %v5358 = vunpack.c.l.b16 %v4838
    %v5359 = vunpack.c.h.b16 %v4838
    %v5360 = vunpack.c.l.b16 %v4839
    %v5361 = vunpack.c.h.b16 %v4839
    %v5362 = vunpack.c.l.b16 %v4840
    %v5363 = vunpack.c.l.b16 %v4841
    %v5364 = vunpack.c.h.b16 %v4841
    %v5365 = vunpack.c.l.b16 %v4842
    %v5366 = vunpack.c.h.b16 %v4842
    %v5367 = vunpack.c.l.b16 %v4843
    %v5368 = vunpack.c.h.b16 %v4843
    %v5369 = vunpack.c.l.b16 %v4844
    %v5370 = vunpack.c.l.b16 %v4845
    %v5371 = vunpack.c.h.b16 %v4845
    %v5372 = vunpack.c.l.b16 %v4846
    %v5373 = vunpack.c.h.b16 %v4846
    %v5374 = vunpack.c.l.b16 %v4847
    %v5375 = vunpack.c.h.b16 %v4847
    %v5376 = vunpack.c.l.b16 %v4848
    %v5377 = vunpack.c.l.b16 %v4849
    %v5378 = vunpack.c.h.b16 %v4849
    %v5379 = vunpack.c.l.b16 %v4850
    %v5380 = vunpack.c.h.b16 %v4850
    %v5381 = vunpack.c.l.b16 %v4851
    %v5382 = vunpack.c.h.b16 %v4851
    %v5383 = vunpack.c.l.b16 %v4852
    %v5384 = vunpack.c.l.b16 %v4853
    %v5385 = vunpack.c.h.b16 %v4853
    %v5386 = vunpack.c.l.b16 %v4854
    %v5387 = vunpack.c.h.b16 %v4854
    %v5388 = vunpack.c.l.b16 %v4855
    %v5389 = vunpack.c.h.b16 %v4855
    %v5390 = vunpack.c.l.b16 %v4856
    %v5391 = vunpack.c.l.b16 %v4857
    %v5392 = vunpack.c.h.b16 %v4857
    %v5393 = vunpack.c.l.b16 %v4858
    %v5394 = vunpack.c.h.b16 %v4858
    %v5395 = vunpack.c.l.b16 %v4859
    %v5396 = vunpack.c.h.b16 %v4859
    %v5397 = vunpack.c.l.b16 %v4860
    %v5398 = vunpack.c.l.b16 %v4861
    %v5399 = vunpack.c.h.b16 %v4861
    %v5400 = vunpack.c.l.b16 %v4862
    %v5401 = vunpack.c.h.b16 %v4862
    %v5402 = vunpack.c.l.b16 %v4863
    %v5403 = vunpack.c.h.b16 %v4863
    %v5404 = vunpack.c.l.b16 %v4864
    %v5405 = vunpack.c.l.b16 %v4865
    %v5406 = vunpack.c.h.b16 %v4865
    %v5407 = vunpack.c.l.b16 %v4866
    %v5408 = vunpack.c.h.b16 %v4866
    %v5409 = vunpack.c.l.b16 %v4867
    %v5410 = vunpack.c.h.b16 %v4867
    %v5411 = vunpack.c.l.b16 %v4868
    %v5412 = vunpack.c.l.b16 %v4869
    %v5413 = vunpack.c.h.b16 %v4869
    %v5414 = vunpack.c.l.b16 %v4870
    %v5415 = vunpack.c.h.b16 %v4870
    %v5416 = vunpack.c.l.b16 %v4871
    %v5417 = vunpack.c.h.b16 %v4871
    %v5418 = vunpack.c.l.b16 %v4872
    %v5419 = vunpack.c.l.b16 %v4873
    %v5420 = vunpack.c.h.b16 %v4873
    %v5421 = vunpack.c.l.b16 %v4874
    %v5422 = vunpack.c.h.b16 %v4874
    %v5423 = vunpack.c.l.b16 %v4875
    %v5424 = vunpack.c.h.b16 %v4875
    %v5425 = vunpack.c.l.b16 %v4876
    %v5426 = vunpack.c.l.b16 %v4877
    %v5427 = vunpack.c.h.b16 %v4877
    %v5428 = vunpack.c.l.b16 %v4878
    %v5429 = vunpack.c.h.b16 %v4878
    %v5430 = vunpack.c.l.b16 %v4879
    %v5431 = vunpack.c.h.b16 %v4879
    %v5432 = vunpack.c.l.b16 %v4880
    %v5433 = vunpack.c.l.b16 %v4881
    %v5434 = vunpack.c.h.b16 %v4881
    %v5435 = vunpack.c.l.b16 %v4882
    %v5436 = vunpack.c.h.b16 %v4882
    %v5437 = vunpack.c.l.b16 %v4883
    %v5438 = vunpack.c.h.b16 %v4883
    %v5439 = vunpack.c.l.b16 %v4884
    %v5440 = vunpack.c.l.b16 %v4885
    %v5441 = vunpack.c.h.b16 %v4885
    %v5442 = vunpack.c.l.b16 %v4886
    %v5443 = vunpack.c.h.b16 %v4886
    %v5444 = vunpack.c.l.b16 %v4887
    %v5445 = vunpack.c.h.b16 %v4887
    %v5446 = vunpack.c.l.b16 %v4888
    %v5447 = vunpack.c.l.b16 %v4889
    %v5448 = vunpack.c.h.b16 %v4889
    %v5449 = vunpack.c.l.b16 %v4890
    %v5450 = vunpack.c.h.b16 %v4890
    %v5451 = vunpack.c.l.b16 %v4891
    %v5452 = vunpack.c.h.b16 %v4891
    %v5453 = vunpack.c.l.b16 %v4892
    %v5454 = vunpack.c.l.b16 %v4893
    %v5455 = vunpack.c.h.b16 %v4893
    %v5456 = vunpack.c.l.b16 %v4894
    %v5457 = vunpack.c.h.b16 %v4894
    %v5458 = vunpack.c.l.b16 %v4895
    %v5459 = vunpack.c.h.b16 %v4895
    %v5460 = vunpack.c.l.b16 %v4896
    %v5461 = vunpack.c.l.b16 %v4897
    %v5462 = vunpack.c.h.b16 %v4897
    %v5463 = vunpack.c.l.b16 %v4898
    %v5464 = vunpack.c.h.b16 %v4898
    %v5465 = vunpack.c.l.b16 %v4899
    %v5466 = vunpack.c.h.b16 %v4899
    %v5467 = vunpack.c.l.b16 %v4900
    %v5468 = vunpack.c.l.b16 %v4901
    %v5469 = vunpack.c.h.b16 %v4901
    %v5470 = vunpack.c.l.b16 %v4902
    %v5471 = vunpack.c.h.b16 %v4902
    %v5472 = vunpack.c.l.b16 %v4903
    %v5473 = vunpack.c.h.b16 %v4903
    %v5474 = vunpack.c.l.b16 %v4904
    %v5475 = vunpack.c.l.b16 %v4905
    %v5476 = vunpack.c.h.b16 %v4905
    %v5477 = vunpack.c.l.b16 %v4906
    %v5478 = vunpack.c.h.b16 %v4906
    %v5479 = vunpack.c.l.b16 %v4907
    %v5480 = vunpack.c.h.b16 %v4907
    %v5481 = vunpack.c.l.b16 %v4908
    %v5482 = vunpack.c.l.b16 %v4909
    %v5483 = vunpack.c.h.b16 %v4909
    %v5484 = vunpack.c.l.b16 %v4910
    %v5485 = vunpack.c.h.b16 %v4910
    %v5486 = vunpack.c.l.b16 %v4911
    %v5487 = vunpack.c.h.b16 %v4911
    %v5488 = vunpack.c.l.b16 %v4912
    %v5489 = vunpack.c.l.b16 %v4913
    %v5490 = vunpack.c.h.b16 %v4913
    %v5491 = vunpack.c.l.b16 %v4914
    %v5492 = vunpack.c.h.b16 %v4914
    %v5493 = vunpack.c.l.b16 %v4915
    %v5494 = vunpack.c.h.b16 %v4915
    %v5495 = vunpack.c.l.b16 %v4916
    %v5496 = vunpack.c.l.b16 %v4917
    %v5497 = vunpack.c.h.b16 %v4917
    %v5498 = vunpack.c.l.b16 %v4918
    %v5499 = vunpack.c.h.b16 %v4918
    %v5500 = vunpack.c.l.b16 %v4919
    %v5501 = vunpack.c.h.b16 %v4919
    %v5502 = vunpack.c.l.b16 %v4920
    %v5503 = vunpack.c.l.b16 %v4921
    %v5504 = vunpack.c.h.b16 %v4921
    %v5505 = vunpack.c.l.b16 %v4922
    %v5506 = vunpack.c.h.b16 %v4922
    %v5507 = vunpack.c.l.b16 %v4923
    %v5508 = vunpack.c.h.b16 %v4923
    %v5509 = vunpack.c.l.b16 %v4924
    %v5510 = vunpack.c.l.b16 %v4925
    %v5511 = vunpack.c.h.b16 %v4925
    %v5512 = vunpack.c.l.b16 %v4926
    %v5513 = vunpack.c.h.b16 %v4926
    %v5514 = vunpack.c.l.b16 %v4927
    %v5515 = vunpack.c.h.b16 %v4927
    %v5516 = vunpack.c.l.b16 %v4928
    %v5517 = vpack.c.b16 %v5181, %v5174
    %v5518 = vpack.c.b16 %v5182, %v5175
    %v5519 = vpack.c.b16 %v5183, %v5176
    %v5520 = vpack.c.b16 %v5184, %v5177
    %v5521 = vpack.c.b16 %v5185, %v5178
    %v5522 = vpack.c.b16 %v5186, %v5179
    %v5523 = vpack.c.b16 %v5187, %v5180
    %v5524 = vpack.c.b16 %v5195, %v5188
    %v5525 = vpack.c.b16 %v5196, %v5189
    %v5526 = vpack.c.b16 %v5197, %v5190
    %v5527 = vpack.c.b16 %v5198, %v5191
    %v5528 = vpack.c.b16 %v5199, %v5192
    %v5529 = vpack.c.b16 %v5200, %v5193
    %v5530 = vpack.c.b16 %v5201, %v5194
    %v5531 = vpack.c.b16 %v5209, %v5202
    %v5532 = vpack.c.b16 %v5210, %v5203
    %v5533 = vpack.c.b16 %v5211, %v5204
    %v5534 = vpack.c.b16 %v5212, %v5205
    %v5535 = vpack.c.b16 %v5213, %v5206
    %v5536 = vpack.c.b16 %v5214, %v5207
    %v5537 = vpack.c.b16 %v5215, %v5208
    %v5538 = vpack.c.b16 %v5223, %v5216
    %v5539 = vpack.c.b16 %v5224, %v5217
    %v5540 = vpack.c.b16 %v5225, %v5218
    %v5541 = vpack.c.b16 %v5226, %v5219
    %v5542 = vpack.c.b16 %v5227, %v5220
    %v5543 = vpack.c.b16 %v5228, %v5221
    %v5544 = vpack.c.b16 %v5229, %v5222
    %v5545 = vpack.c.b16 %v5237, %v5230
    %v5546 = vpack.c.b16 %v5238, %v5231
    %v5547 = vpack.c.b16 %v5239, %v5232
    %v5548 = vpack.c.b16 %v5240, %v5233
    %v5549 = vpack.c.b16 %v5241, %v5234
    %v5550 = vpack.c.b16 %v5242, %v5235
    %v5551 = vpack.c.b16 %v5243, %v5236
    %v5552 = vpack.c.b16 %v5251, %v5244
    %v5553 = vpack.c.b16 %v5252, %v5245
    %v5554 = vpack.c.b16 %v5253, %v5246
    %v5555 = vpack.c.b16 %v5254, %v5247
    %v5556 = vpack.c.b16 %v5255, %v5248
    %v5557 = vpack.c.b16 %v5256, %v5249
    %v5558 = vpack.c.b16 %v5257, %v5250
    %v5559 = vpack.c.b16 %v5265, %v5258
    %v5560 = vpack.c.b16 %v5266, %v5259
    %v5561 = vpack.c.b16 %v5267, %v5260
    %v5562 = vpack.c.b16 %v5268, %v5261
    %v5563 = vpack.c.b16 %v5269, %v5262
    %v5564 = vpack.c.b16 %v5270, %v5263
    %v5565 = vpack.c.b16 %v5271, %v5264
    %v5566 = vpack.c.b16 %v5279, %v5272
    %v5567 = vpack.c.b16 %v5280, %v5273
    %v5568 = vpack.c.b16 %v5281, %v5274
    %v5569 = vpack.c.b16 %v5282, %v5275
    %v5570 = vpack.c.b16 %v5283, %v5276
    %v5571 = vpack.c.b16 %v5284, %v5277
    %v5572 = vpack.c.b16 %v5285, %v5278
    %v5573 = vpack.c.b16 %v5293, %v5286
    %v5574 = vpack.c.b16 %v5294, %v5287
    %v5575 = vpack.c.b16 %v5295, %v5288
    %v5576 = vpack.c.b16 %v5296, %v5289
    %v5577 = vpack.c.b16 %v5297, %v5290
    %v5578 = vpack.c.b16 %v5298, %v5291
    %v5579 = vpack.c.b16 %v5299, %v5292
    %v5580 = vpack.c.b16 %v5307, %v5300
    %v5581 = vpack.c.b16 %v5308, %v5301
    %v5582 = vpack.c.b16 %v5309, %v5302
    %v5583 = vpack.c.b16 %v5310, %v5303
    %v5584 = vpack.c.b16 %v5311, %v5304
    %v5585 = vpack.c.b16 %v5312, %v5305
    %v5586 = vpack.c.b16 %v5313, %v5306
    %v5587 = vpack.c.b16 %v5321, %v5314
    %v5588 = vpack.c.b16 %v5322, %v5315
    %v5589 = vpack.c.b16 %v5323, %v5316
    %v5590 = vpack.c.b16 %v5324, %v5317
    %v5591 = vpack.c.b16 %v5325, %v5318
    %v5592 = vpack.c.b16 %v5326, %v5319
    %v5593 = vpack.c.b16 %v5327, %v5320
    %v5594 = vpack.c.b16 %v5335, %v5328
    %v5595 = vpack.c.b16 %v5336, %v5329
    %v5596 = vpack.c.b16 %v5337, %v5330
    %v5597 = vpack.c.b16 %v5338, %v5331
    %v5598 = vpack.c.b16 %v5339, %v5332
    %v5599 = vpack.c.b16 %v5340, %v5333
    %v5600 = vpack.c.b16 %v5341, %v5334
    %v5601 = vpack.c.b16 %v5349, %v5342
    %v5602 = vpack.c.b16 %v5350, %v5343
    %v5603 = vpack.c.b16 %v5351, %v5344
    %v5604 = vpack.c.b16 %v5352, %v5345
    %v5605 = vpack.c.b16 %v5353, %v5346
    %v5606 = vpack.c.b16 %v5354, %v5347
    %v5607 = vpack.c.b16 %v5355, %v5348
    %v5608 = vpack.c.b16 %v5363, %v5356
    %v5609 = vpack.c.b16 %v5364, %v5357
    %v5610 = vpack.c.b16 %v5365, %v5358
    %v5611 = vpack.c.b16 %v5366, %v5359
    %v5612 = vpack.c.b16 %v5367, %v5360
    %v5613 = vpack.c.b16 %v5368, %v5361
    %v5614 = vpack.c.b16 %v5369, %v5362
    %v5615 = vpack.c.b16 %v5377, %v5370
    %v5616 = vpack.c.b16 %v5378, %v5371
    %v5617 = vpack.c.b16 %v5379, %v5372
    %v5618 = vpack.c.b16 %v5380, %v5373
    %v5619 = vpack.c.b16 %v5381, %v5374
    %v5620 = vpack.c.b16 %v5382, %v5375
    %v5621 = vpack.c.b16 %v5383, %v5376
    %v5622 = vpack.c.b16 %v5391, %v5384
    %v5623 = vpack.c.b16 %v5392, %v5385
    %v5624 = vpack.c.b16 %v5393, %v5386
    %v5625 = vpack.c.b16 %v5394, %v5387
    %v5626 = vpack.c.b16 %v5395, %v5388
    %v5627 = vpack.c.b16 %v5396, %v5389
    %v5628 = vpack.c.b16 %v5397, %v5390
    %v5629 = vpack.c.b16 %v5405, %v5398
    %v5630 = vpack.c.b16 %v5406, %v5399
    %v5631 = vpack.c.b16 %v5407, %v5400
    %v5632 = vpack.c.b16 %v5408, %v5401
    %v5633 = vpack.c.b16 %v5409, %v5402
    %v5634 = vpack.c.b16 %v5410, %v5403
    %v5635 = vpack.c.b16 %v5411, %v5404
    %v5636 = vpack.c.b16 %v5419, %v5412
    %v5637 = vpack.c.b16 %v5420, %v5413
    %v5638 = vpack.c.b16 %v5421, %v5414
    %v5639 = vpack.c.b16 %v5422, %v5415
    %v5640 = vpack.c.b16 %v5423, %v5416
    %v5641 = vpack.c.b16 %v5424, %v5417
    %v5642 = vpack.c.b16 %v5425, %v5418
    %v5643 = vpack.c.b16 %v5433, %v5426
    %v5644 = vpack.c.b16 %v5434, %v5427
    %v5645 = vpack.c.b16 %v5435, %v5428
    %v5646 = vpack.c.b16 %v5436, %v5429
    %v5647 = vpack.c.b16 %v5437, %v5430
    %v5648 = vpack.c.b16 %v5438, %v5431
    %v5649 = vpack.c.b16 %v5439, %v5432
    %v5650 = vpack.c.b16 %v5447, %v5440
    %v5651 = vpack.c.b16 %v5448, %v5441
    %v5652 = vpack.c.b16 %v5449, %v5442
    %v5653 = vpack.c.b16 %v5450, %v5443
    %v5654 = vpack.c.b16 %v5451, %v5444
    %v5655 = vpack.c.b16 %v5452, %v5445
    %v5656 = vpack.c.b16 %v5453, %v5446
    %v5657 = vpack.c.b16 %v5461, %v5454
    %v5658 = vpack.c.b16 %v5462, %v5455
    %v5659 = vpack.c.b16 %v5463, %v5456
    %v5660 = vpack.c.b16 %v5464, %v5457
    %v5661 = vpack.c.b16 %v5465, %v5458
    %v5662 = vpack.c.b16 %v5466, %v5459
    %v5663 = vpack.c.b16 %v5467, %v5460
    %v5664 = vpack.c.b16 %v5475, %v5468
    %v5665 = vpack.c.b16 %v5476, %v5469
    %v5666 = vpack.c.b16 %v5477, %v5470
    %v5667 = vpack.c.b16 %v5478, %v5471
    %v5668 = vpack.c.b16 %v5479, %v5472
    %v5669 = vpack.c.b16 %v5480, %v5473
    %v5670 = vpack.c.b16 %v5481, %v5474
    %v5671 = vpack.c.b16 %v5489, %v5482
    %v5672 = vpack.c.b16 %v5490, %v5483
    %v5673 = vpack.c.b16 %v5491, %v5484
    %v5674 = vpack.c.b16 %v5492, %v5485
    %v5675 = vpack.c.b16 %v5493, %v5486
    %v5676 = vpack.c.b16 %v5494, %v5487
    %v5677 = vpack.c.b16 %v5495, %v5488
    %v5678 = vpack.c.b16 %v5503, %v5496
    %v5679 = vpack.c.b16 %v5504, %v5497
    %v5680 = vpack.c.b16 %v5505, %v5498
    %v5681 = vpack.c.b16 %v5506, %v5499
    %v5682 = vpack.c.b16 %v5507, %v5500
    %v5683 = vpack.c.b16 %v5508, %v5501
    %v5684 = vpack.c.b16 %v5509, %v5502
    %v5685 = vpack.c.b16 %v5510, %v5510
    %v5686 = vpack.c.b16 %v5511, %v5511
    %v5687 = vpack.c.b16 %v5512, %v5512
    %v5688 = vpack.c.b16 %v5513, %v5513
    %v5689 = vpack.c.b16 %v5514, %v5514
    %v5690 = vpack.c.b16 %v5515, %v5515
    %v5691 = vpack.c.b16 %v5516, %v5516
    %v5843 = vsel %vm2591, %v5523, 0
    %v5846 = vsel %vm2591, %v5530, 0
    %v5849 = vsel %vm2591, %v5537, 0
    %v5852 = vsel %vm2591, %v5544, 0
    %v5855 = vsel %vm2591, %v5551, 0
    %v5858 = vsel %vm2591, %v5558, 0
    %v5861 = vsel %vm2591, %v5565, 0
    %v5864 = vsel %vm2591, %v5572, 0
    %v5867 = vsel %vm2591, %v5579, 0
    %v5870 = vsel %vm2591, %v5586, 0
    %v5873 = vsel %vm2591, %v5593, 0
    %v5876 = vsel %vm2591, %v5600, 0
    %v5879 = vsel %vm2591, %v5607, 0
    %v5882 = vsel %vm2591, %v5614, 0
    %v5885 = vsel %vm2591, %v5621, 0
    %v5888 = vsel %vm2591, %v5628, 0
    %v5891 = vsel %vm2591, %v5635, 0
    %v5894 = vsel %vm2591, %v5642, 0
    %v5897 = vsel %vm2591, %v5649, 0
    %v5900 = vsel %vm2591, %v5656, 0
    %v5903 = vsel %vm2591, %v5663, 0
    %v5906 = vsel %vm2591, %v5670, 0
    %v5909 = vsel %vm2591, %v5677, 0
    %v5912 = vsel %vm2591, %v5684, 0
    %v5915 = vsel %vm2591, %v5691, 0
    %5917 = vmatprep.subr.bf16.mxu0 0
    %5918 = vmatpush1.bf16.msra.mxu0 %v4929
    %5919 = vmatprep.subr.bf16.mxu0 0
    %5920 = vmatpush1.bf16.msra.mxu0 %v4930
    %5921 = vmatprep.subr.bf16.mxu0 0
    %5922 = vmatpush1.bf16.msra.mxu0 %v4931
    %5923 = vmatprep.subr.bf16.mxu0 0
    %5924 = vmatpush1.bf16.msra.mxu0 %v4932
    %5925 = vmatprep.subr.bf16.mxu0 0
    %5926 = vmatpush1.bf16.msra.mxu0 %v4933
    %5927 = vmatprep.subr.bf16.mxu0 0
    %5928 = vmatpush1.bf16.msra.mxu0 %v4934
    %5929 = vmatprep.subr.bf16.mxu0 0
    %5930 = vmatpush1.bf16.msra.mxu0 %v4935
    %5931 = vmatprep.subr.bf16.mxu0 0
    %5932 = vmatpush1.bf16.msra.mxu0 %v4936
    %5933 = vmatprep.subr.bf16.mxu0 0
    %5934 = vmatpush1.bf16.msra.mxu0 %v4937
    %5935 = vmatprep.subr.bf16.mxu0 0
    %5936 = vmatpush1.bf16.msra.mxu0 %v4938
    %5937 = vmatprep.subr.bf16.mxu0 0
    %5938 = vmatpush1.bf16.msra.mxu0 %v4939
    %5939 = vmatprep.subr.bf16.mxu0 0
    %5940 = vmatpush1.bf16.msra.mxu0 %v4940
    %5941 = vmatprep.subr.bf16.mxu0 0
    %5942 = vmatpush1.bf16.msra.mxu0 %v4941
    %5943 = vmatprep.subr.bf16.mxu0 0
    %5944 = vmatpush1.bf16.msra.mxu0 %v4942
    %5945 = vmatprep.subr.bf16.mxu0 0
    %5946 = vmatpush1.bf16.msra.mxu0 %v4943
    %5947 = vmatprep.subr.bf16.mxu0 0
    %5948 = vmatpush1.bf16.msra.mxu0 %v4944
    %5949 = vmatprep.mubr.bf16.mxu0 %v5518
    %5950 = vmatmul.mubr.bf16.gmra.mrb[0].mxu0 %v5517
    %v5951 = vpop.f32.mrb[0].mxu0
    %v5952 = vadd.f32 0.0, %v5951
    %v5953 = vpop.f32.mrb[0].mxu0
    %v5954 = vpop.f32.mrb[0].mxu0
    %v5955 = vadd.f32 0.0, %v5954
    %v5956 = vpop.f32.mrb[0].mxu0
    %5957 = vmatprep.mubr.bf16.mxu0 %v5525
    %5958 = vmatmul.mubr.bf16.gmra.mrb[0].mxu0 %v5524
    %v5959 = vpop.f32.mrb[0].mxu0
    %v5960 = vadd.f32 0.0, %v5959
    %v5961 = vpop.f32.mrb[0].mxu0
    %v5962 = vpop.f32.mrb[0].mxu0
    %v5963 = vadd.f32 0.0, %v5962
    %v5964 = vpop.f32.mrb[0].mxu0
    %5965 = vmatprep.mubr.bf16.mxu0 %v5532
    %5966 = vmatmul.mubr.bf16.gmra.mrb[0].mxu0 %v5531
    %v5967 = vpop.f32.mrb[0].mxu0
    %v5968 = vadd.f32 0.0, %v5967
    %v5969 = vpop.f32.mrb[0].mxu0
    %v5970 = vpop.f32.mrb[0].mxu0
    %v5971 = vadd.f32 0.0, %v5970
    %v5972 = vpop.f32.mrb[0].mxu0
    %5973 = vmatprep.mubr.bf16.mxu0 %v5539
    %5974 = vmatmul.mubr.bf16.gmra.mrb[0].mxu0 %v5538
    %v5975 = vpop.f32.mrb[0].mxu0
    %v5976 = vadd.f32 0.0, %v5975
    %v5977 = vpop.f32.mrb[0].mxu0
    %v5978 = vpop.f32.mrb[0].mxu0
    %v5979 = vadd.f32 0.0, %v5978
    %v5980 = vpop.f32.mrb[0].mxu0
    %5981 = vmatprep.mubr.bf16.mxu0 %v5546
    %5982 = vmatmul.mubr.bf16.gmra.mrb[0].mxu0 %v5545
    %v5983 = vpop.f32.mrb[0].mxu0
    %v5984 = vadd.f32 0.0, %v5983
    %v5985 = vpop.f32.mrb[0].mxu0
    %v5986 = vpop.f32.mrb[0].mxu0
    %v5987 = vadd.f32 0.0, %v5986
    %v5988 = vpop.f32.mrb[0].mxu0
    %5989 = vmatprep.mubr.bf16.mxu0 %v5553
    %5990 = vmatmul.mubr.bf16.gmra.mrb[0].mxu0 %v5552
    %v5991 = vpop.f32.mrb[0].mxu0
    %v5992 = vadd.f32 0.0, %v5991
    %v5993 = vpop.f32.mrb[0].mxu0
    %v5994 = vpop.f32.mrb[0].mxu0
    %v5995 = vadd.f32 0.0, %v5994
    %v5996 = vpop.f32.mrb[0].mxu0
    %5997 = vmatprep.mubr.bf16.mxu0 %v5560
    %5998 = vmatmul.mubr.bf16.gmra.mrb[0].mxu0 %v5559
    %v5999 = vpop.f32.mrb[0].mxu0
    %v6000 = vadd.f32 0.0, %v5999
    %v6001 = vpop.f32.mrb[0].mxu0
    %v6002 = vpop.f32.mrb[0].mxu0
    %v6003 = vadd.f32 0.0, %v6002
    %v6004 = vpop.f32.mrb[0].mxu0
    %6005 = vmatprep.mubr.bf16.mxu0 %v5567
    %6006 = vmatmul.mubr.bf16.gmra.mrb[0].mxu0 %v5566
    %v6007 = vpop.f32.mrb[0].mxu0
    %v6008 = vadd.f32 0.0, %v6007
    %v6009 = vpop.f32.mrb[0].mxu0
    %v6010 = vpop.f32.mrb[0].mxu0
    %v6011 = vadd.f32 0.0, %v6010
    %v6012 = vpop.f32.mrb[0].mxu0
    %6013 = vmatprep.mubr.bf16.mxu0 %v5574
    %6014 = vmatmul.mubr.bf16.gmra.mrb[0].mxu0 %v5573
    %v6015 = vpop.f32.mrb[0].mxu0
    %v6016 = vadd.f32 0.0, %v6015
    %v6017 = vpop.f32.mrb[0].mxu0
    %v6018 = vpop.f32.mrb[0].mxu0
    %v6019 = vadd.f32 0.0, %v6018
    %v6020 = vpop.f32.mrb[0].mxu0
    %6021 = vmatprep.mubr.bf16.mxu0 %v5581
    %6022 = vmatmul.mubr.bf16.gmra.mrb[0].mxu0 %v5580
    %v6023 = vpop.f32.mrb[0].mxu0
    %v6024 = vadd.f32 0.0, %v6023
    %v6025 = vpop.f32.mrb[0].mxu0
    %v6026 = vpop.f32.mrb[0].mxu0
    %v6027 = vadd.f32 0.0, %v6026
    %v6028 = vpop.f32.mrb[0].mxu0
    %6029 = vmatprep.mubr.bf16.mxu0 %v5588
    %6030 = vmatmul.mubr.bf16.gmra.mrb[0].mxu0 %v5587
    %v6031 = vpop.f32.mrb[0].mxu0
    %v6032 = vadd.f32 0.0, %v6031
    %v6033 = vpop.f32.mrb[0].mxu0
    %v6034 = vpop.f32.mrb[0].mxu0
    %v6035 = vadd.f32 0.0, %v6034
    %v6036 = vpop.f32.mrb[0].mxu0
    %6037 = vmatprep.mubr.bf16.mxu0 %v5595
    %6038 = vmatmul.mubr.bf16.gmra.mrb[0].mxu0 %v5594
    %v6039 = vpop.f32.mrb[0].mxu0
    %v6040 = vadd.f32 0.0, %v6039
    %v6041 = vpop.f32.mrb[0].mxu0
    %v6042 = vpop.f32.mrb[0].mxu0
    %v6043 = vadd.f32 0.0, %v6042
    %v6044 = vpop.f32.mrb[0].mxu0
    %6045 = vmatprep.mubr.bf16.mxu0 %v5602
    %6046 = vmatmul.mubr.bf16.gmra.mrb[0].mxu0 %v5601
    %v6047 = vpop.f32.mrb[0].mxu0
    %v6048 = vadd.f32 0.0, %v6047
    %v6049 = vpop.f32.mrb[0].mxu0
    %v6050 = vpop.f32.mrb[0].mxu0
    %v6051 = vadd.f32 0.0, %v6050
    %v6052 = vpop.f32.mrb[0].mxu0
    %6053 = vmatprep.mubr.bf16.mxu0 %v5609
    %6054 = vmatmul.mubr.bf16.gmra.mrb[0].mxu0 %v5608
    %v6055 = vpop.f32.mrb[0].mxu0
    %v6056 = vadd.f32 0.0, %v6055
    %v6057 = vpop.f32.mrb[0].mxu0
    %v6058 = vpop.f32.mrb[0].mxu0
    %v6059 = vadd.f32 0.0, %v6058
    %v6060 = vpop.f32.mrb[0].mxu0
    %6061 = vmatprep.mubr.bf16.mxu0 %v5616
    %6062 = vmatmul.mubr.bf16.gmra.mrb[0].mxu0 %v5615
    %v6063 = vpop.f32.mrb[0].mxu0
    %v6064 = vadd.f32 0.0, %v6063
    %v6065 = vpop.f32.mrb[0].mxu0
    %v6066 = vpop.f32.mrb[0].mxu0
    %v6067 = vadd.f32 0.0, %v6066
    %v6068 = vpop.f32.mrb[0].mxu0
    %6069 = vmatprep.mubr.bf16.mxu0 %v5623
    %6070 = vmatmul.mubr.bf16.gmra.mrb[0].mxu0 %v5622
    %v6071 = vpop.f32.mrb[0].mxu0
    %v6072 = vadd.f32 0.0, %v6071
    %v6073 = vpop.f32.mrb[0].mxu0
    %v6074 = vpop.f32.mrb[0].mxu0
    %v6075 = vadd.f32 0.0, %v6074
    %v6076 = vpop.f32.mrb[0].mxu0
    %6077 = vmatprep.mubr.bf16.mxu0 %v5630
    %6078 = vmatmul.mubr.bf16.gmra.mrb[0].mxu0 %v5629
    %v6079 = vpop.f32.mrb[0].mxu0
    %v6080 = vadd.f32 0.0, %v6079
    %v6081 = vpop.f32.mrb[0].mxu0
    %v6082 = vpop.f32.mrb[0].mxu0
    %v6083 = vadd.f32 0.0, %v6082
    %v6084 = vpop.f32.mrb[0].mxu0
    %6085 = vmatprep.mubr.bf16.mxu0 %v5637
    %6086 = vmatmul.mubr.bf16.gmra.mrb[0].mxu0 %v5636
    %v6087 = vpop.f32.mrb[0].mxu0
    %v6088 = vadd.f32 0.0, %v6087
    %v6089 = vpop.f32.mrb[0].mxu0
    %v6090 = vpop.f32.mrb[0].mxu0
    %v6091 = vadd.f32 0.0, %v6090
    %v6092 = vpop.f32.mrb[0].mxu0
    %6093 = vmatprep.mubr.bf16.mxu0 %v5644
    %6094 = vmatmul.mubr.bf16.gmra.mrb[0].mxu0 %v5643
    %v6095 = vpop.f32.mrb[0].mxu0
    %v6096 = vadd.f32 0.0, %v6095
    %v6097 = vpop.f32.mrb[0].mxu0
    %v6098 = vpop.f32.mrb[0].mxu0
    %v6099 = vadd.f32 0.0, %v6098
    %v6100 = vpop.f32.mrb[0].mxu0
    %6101 = vmatprep.mubr.bf16.mxu0 %v5651
    %6102 = vmatmul.mubr.bf16.gmra.mrb[0].mxu0 %v5650
    %v6103 = vpop.f32.mrb[0].mxu0
    %v6104 = vadd.f32 0.0, %v6103
    %v6105 = vpop.f32.mrb[0].mxu0
    %v6106 = vpop.f32.mrb[0].mxu0
    %v6107 = vadd.f32 0.0, %v6106
    %v6108 = vpop.f32.mrb[0].mxu0
    %6109 = vmatprep.mubr.bf16.mxu0 %v5658
    %6110 = vmatmul.mubr.bf16.gmra.mrb[0].mxu0 %v5657
    %v6111 = vpop.f32.mrb[0].mxu0
    %v6112 = vadd.f32 0.0, %v6111
    %v6113 = vpop.f32.mrb[0].mxu0
    %v6114 = vpop.f32.mrb[0].mxu0
    %v6115 = vadd.f32 0.0, %v6114
    %v6116 = vpop.f32.mrb[0].mxu0
    %6117 = vmatprep.mubr.bf16.mxu0 %v5665
    %6118 = vmatmul.mubr.bf16.gmra.mrb[0].mxu0 %v5664
    %v6119 = vpop.f32.mrb[0].mxu0
    %v6120 = vadd.f32 0.0, %v6119
    %v6121 = vpop.f32.mrb[0].mxu0
    %v6122 = vpop.f32.mrb[0].mxu0
    %v6123 = vadd.f32 0.0, %v6122
    %v6124 = vpop.f32.mrb[0].mxu0
    %6125 = vmatprep.mubr.bf16.mxu0 %v5672
    %6126 = vmatmul.mubr.bf16.gmra.mrb[0].mxu0 %v5671
    %v6127 = vpop.f32.mrb[0].mxu0
    %v6128 = vadd.f32 0.0, %v6127
    %v6129 = vpop.f32.mrb[0].mxu0
    %v6130 = vpop.f32.mrb[0].mxu0
    %v6131 = vadd.f32 0.0, %v6130
    %v6132 = vpop.f32.mrb[0].mxu0
    %6133 = vmatprep.mubr.bf16.mxu0 %v5679
    %6134 = vmatmul.mubr.bf16.gmra.mrb[0].mxu0 %v5678
    %v6135 = vpop.f32.mrb[0].mxu0
    %v6136 = vadd.f32 0.0, %v6135
    %v6137 = vpop.f32.mrb[0].mxu0
    %v6138 = vpop.f32.mrb[0].mxu0
    %v6139 = vadd.f32 0.0, %v6138
    %v6140 = vpop.f32.mrb[0].mxu0
    %6141 = vmatprep.mubr.bf16.mxu0 %v5686
    %6142 = vmatmul.mubr.bf16.gmra.mrb[0].mxu0 %v5685
    %v6143 = vpop.f32.mrb[0].mxu0
    %v6144 = vadd.f32 0.0, %v6143
    %v6145 = vpop.f32.mrb[0].mxu0
    %v6146 = vpop.f32.mrb[0].mxu0
    %v6147 = vpop.f32.mrb[0].mxu0
    %6148 = vdwg.mxu0
    %6149 = vmatprep.subr.bf16.mxu0 0
    %6150 = vmatpush1.bf16.msra.mxu0 %v4945
    %6151 = vmatprep.subr.bf16.mxu0 0
    %6152 = vmatpush1.bf16.msra.mxu0 %v4946
    %6153 = vmatprep.subr.bf16.mxu0 0
    %6154 = vmatpush1.bf16.msra.mxu0 %v4947
    %6155 = vmatprep.subr.bf16.mxu0 0
    %6156 = vmatpush1.bf16.msra.mxu0 %v4948
    %6157 = vmatprep.subr.bf16.mxu0 0
    %6158 = vmatpush1.bf16.msra.mxu0 %v4949
    %6159 = vmatprep.subr.bf16.mxu0 0
    %6160 = vmatpush1.bf16.msra.mxu0 %v4950
    %6161 = vmatprep.subr.bf16.mxu0 0
    %6162 = vmatpush1.bf16.msra.mxu0 %v4951
    %6163 = vmatprep.subr.bf16.mxu0 0
    %6164 = vmatpush1.bf16.msra.mxu0 %v4952
    %6165 = vmatprep.subr.bf16.mxu0 0
    %6166 = vmatpush1.bf16.msra.mxu0 %v4953
    %6167 = vmatprep.subr.bf16.mxu0 0
    %6168 = vmatpush1.bf16.msra.mxu0 %v4954
    %6169 = vmatprep.subr.bf16.mxu0 0
    %6170 = vmatpush1.bf16.msra.mxu0 %v4955
    %6171 = vmatprep.subr.bf16.mxu0 0
    %6172 = vmatpush1.bf16.msra.mxu0 %v4956
    %6173 = vmatprep.subr.bf16.mxu0 0
    %6174 = vmatpush1.bf16.msra.mxu0 %v4957
    %6175 = vmatprep.subr.bf16.mxu0 0
    %6176 = vmatpush1.bf16.msra.mxu0 %v4958
    %6177 = vmatprep.subr.bf16.mxu0 0
    %6178 = vmatpush1.bf16.msra.mxu0 %v4959
    %6179 = vmatprep.subr.bf16.mxu0 0
    %6180 = vmatpush1.bf16.msra.mxu0 %v4960
    %6181 = vmatprep.mubr.bf16.mxu0 %v5520
    %6182 = vmatmul.mubr.bf16.gmra.mrb[0].mxu0 %v5519
    %v6183 = vpop.f32.mrb[0].mxu0
    %v6184 = vadd.f32 %v5952, %v6183
    %v6185 = vpop.f32.mrb[0].mxu0
    %v6186 = vpop.f32.mrb[0].mxu0
    %v6187 = vadd.f32 %v5955, %v6186
    %v6188 = vpop.f32.mrb[0].mxu0
    %6189 = vmatprep.mubr.bf16.mxu0 %v5527
    %6190 = vmatmul.mubr.bf16.gmra.mrb[0].mxu0 %v5526
    %v6191 = vpop.f32.mrb[0].mxu0
    %v6192 = vadd.f32 %v5960, %v6191
    %v6193 = vpop.f32.mrb[0].mxu0
    %v6194 = vpop.f32.mrb[0].mxu0
    %v6195 = vadd.f32 %v5963, %v6194
    %v6196 = vpop.f32.mrb[0].mxu0
    %6197 = vmatprep.mubr.bf16.mxu0 %v5534
    %6198 = vmatmul.mubr.bf16.gmra.mrb[0].mxu0 %v5533
    %v6199 = vpop.f32.mrb[0].mxu0
    %v6200 = vadd.f32 %v5968, %v6199
    %v6201 = vpop.f32.mrb[0].mxu0
    %v6202 = vpop.f32.mrb[0].mxu0
    %v6203 = vadd.f32 %v5971, %v6202
    %v6204 = vpop.f32.mrb[0].mxu0
    %6205 = vmatprep.mubr.bf16.mxu0 %v5541
    %6206 = vmatmul.mubr.bf16.gmra.mrb[0].mxu0 %v5540
    %v6207 = vpop.f32.mrb[0].mxu0
    %v6208 = vadd.f32 %v5976, %v6207
    %v6209 = vpop.f32.mrb[0].mxu0
    %v6210 = vpop.f32.mrb[0].mxu0
    %v6211 = vadd.f32 %v5979, %v6210
    %v6212 = vpop.f32.mrb[0].mxu0
    %6213 = vmatprep.mubr.bf16.mxu0 %v5548
    %6214 = vmatmul.mubr.bf16.gmra.mrb[0].mxu0 %v5547
    %v6215 = vpop.f32.mrb[0].mxu0
    %v6216 = vadd.f32 %v5984, %v6215
    %v6217 = vpop.f32.mrb[0].mxu0
    %v6218 = vpop.f32.mrb[0].mxu0
    %v6219 = vadd.f32 %v5987, %v6218
    %v6220 = vpop.f32.mrb[0].mxu0
    %6221 = vmatprep.mubr.bf16.mxu0 %v5555
    %6222 = vmatmul.mubr.bf16.gmra.mrb[0].mxu0 %v5554
    %v6223 = vpop.f32.mrb[0].mxu0
    %v6224 = vadd.f32 %v5992, %v6223
    %v6225 = vpop.f32.mrb[0].mxu0
    %v6226 = vpop.f32.mrb[0].mxu0
    %v6227 = vadd.f32 %v5995, %v6226
    %v6228 = vpop.f32.mrb[0].mxu0
    %6229 = vmatprep.mubr.bf16.mxu0 %v5562
    %6230 = vmatmul.mubr.bf16.gmra.mrb[0].mxu0 %v5561
    %v6231 = vpop.f32.mrb[0].mxu0
    %v6232 = vadd.f32 %v6000, %v6231
    %v6233 = vpop.f32.mrb[0].mxu0
    %v6234 = vpop.f32.mrb[0].mxu0
    %v6235 = vadd.f32 %v6003, %v6234
    %v6236 = vpop.f32.mrb[0].mxu0
    %6237 = vmatprep.mubr.bf16.mxu0 %v5569
    %6238 = vmatmul.mubr.bf16.gmra.mrb[0].mxu0 %v5568
    %v6239 = vpop.f32.mrb[0].mxu0
    %v6240 = vadd.f32 %v6008, %v6239
    %v6241 = vpop.f32.mrb[0].mxu0
    %v6242 = vpop.f32.mrb[0].mxu0
    %v6243 = vadd.f32 %v6011, %v6242
    %v6244 = vpop.f32.mrb[0].mxu0
    %6245 = vmatprep.mubr.bf16.mxu0 %v5576
    %6246 = vmatmul.mubr.bf16.gmra.mrb[0].mxu0 %v5575
    %v6247 = vpop.f32.mrb[0].mxu0
    %v6248 = vadd.f32 %v6016, %v6247
    %v6249 = vpop.f32.mrb[0].mxu0
    %v6250 = vpop.f32.mrb[0].mxu0
    %v6251 = vadd.f32 %v6019, %v6250
    %v6252 = vpop.f32.mrb[0].mxu0
    %6253 = vmatprep.mubr.bf16.mxu0 %v5583
    %6254 = vmatmul.mubr.bf16.gmra.mrb[0].mxu0 %v5582
    %v6255 = vpop.f32.mrb[0].mxu0
    %v6256 = vadd.f32 %v6024, %v6255
    %v6257 = vpop.f32.mrb[0].mxu0
    %v6258 = vpop.f32.mrb[0].mxu0
    %v6259 = vadd.f32 %v6027, %v6258
    %v6260 = vpop.f32.mrb[0].mxu0
    %6261 = vmatprep.mubr.bf16.mxu0 %v5590
    %6262 = vmatmul.mubr.bf16.gmra.mrb[0].mxu0 %v5589
    %v6263 = vpop.f32.mrb[0].mxu0
    %v6264 = vadd.f32 %v6032, %v6263
    %v6265 = vpop.f32.mrb[0].mxu0
    %v6266 = vpop.f32.mrb[0].mxu0
    %v6267 = vadd.f32 %v6035, %v6266
    %v6268 = vpop.f32.mrb[0].mxu0
    %6269 = vmatprep.mubr.bf16.mxu0 %v5597
    %6270 = vmatmul.mubr.bf16.gmra.mrb[0].mxu0 %v5596
    %v6271 = vpop.f32.mrb[0].mxu0
    %v6272 = vadd.f32 %v6040, %v6271
    %v6273 = vpop.f32.mrb[0].mxu0
    %v6274 = vpop.f32.mrb[0].mxu0
    %v6275 = vadd.f32 %v6043, %v6274
    %v6276 = vpop.f32.mrb[0].mxu0
    %6277 = vmatprep.mubr.bf16.mxu0 %v5604
    %6278 = vmatmul.mubr.bf16.gmra.mrb[0].mxu0 %v5603
    %v6279 = vpop.f32.mrb[0].mxu0
    %v6280 = vadd.f32 %v6048, %v6279
    %v6281 = vpop.f32.mrb[0].mxu0
    %v6282 = vpop.f32.mrb[0].mxu0
    %v6283 = vadd.f32 %v6051, %v6282
    %v6284 = vpop.f32.mrb[0].mxu0
    %6285 = vmatprep.mubr.bf16.mxu0 %v5611
    %6286 = vmatmul.mubr.bf16.gmra.mrb[0].mxu0 %v5610
    %v6287 = vpop.f32.mrb[0].mxu0
    %v6288 = vadd.f32 %v6056, %v6287
    %v6289 = vpop.f32.mrb[0].mxu0
    %v6290 = vpop.f32.mrb[0].mxu0
    %v6291 = vadd.f32 %v6059, %v6290
    %v6292 = vpop.f32.mrb[0].mxu0
    %6293 = vmatprep.mubr.bf16.mxu0 %v5618
    %6294 = vmatmul.mubr.bf16.gmra.mrb[0].mxu0 %v5617
    %v6295 = vpop.f32.mrb[0].mxu0
    %v6296 = vadd.f32 %v6064, %v6295
    %v6297 = vpop.f32.mrb[0].mxu0
    %v6298 = vpop.f32.mrb[0].mxu0
    %v6299 = vadd.f32 %v6067, %v6298
    %v6300 = vpop.f32.mrb[0].mxu0
    %6301 = vmatprep.mubr.bf16.mxu0 %v5625
    %6302 = vmatmul.mubr.bf16.gmra.mrb[0].mxu0 %v5624
    %v6303 = vpop.f32.mrb[0].mxu0
    %v6304 = vadd.f32 %v6072, %v6303
    %v6305 = vpop.f32.mrb[0].mxu0
    %v6306 = vpop.f32.mrb[0].mxu0
    %v6307 = vadd.f32 %v6075, %v6306
    %v6308 = vpop.f32.mrb[0].mxu0
    %6309 = vmatprep.mubr.bf16.mxu0 %v5632
    %6310 = vmatmul.mubr.bf16.gmra.mrb[0].mxu0 %v5631
    %v6311 = vpop.f32.mrb[0].mxu0
    %v6312 = vadd.f32 %v6080, %v6311
    %v6313 = vpop.f32.mrb[0].mxu0
    %v6314 = vpop.f32.mrb[0].mxu0
    %v6315 = vadd.f32 %v6083, %v6314
    %v6316 = vpop.f32.mrb[0].mxu0
    %6317 = vmatprep.mubr.bf16.mxu0 %v5639
    %6318 = vmatmul.mubr.bf16.gmra.mrb[0].mxu0 %v5638
    %v6319 = vpop.f32.mrb[0].mxu0
    %v6320 = vadd.f32 %v6088, %v6319
    %v6321 = vpop.f32.mrb[0].mxu0
    %v6322 = vpop.f32.mrb[0].mxu0
    %v6323 = vadd.f32 %v6091, %v6322
    %v6324 = vpop.f32.mrb[0].mxu0
    %6325 = vmatprep.mubr.bf16.mxu0 %v5646
    %6326 = vmatmul.mubr.bf16.gmra.mrb[0].mxu0 %v5645
    %v6327 = vpop.f32.mrb[0].mxu0
    %v6328 = vadd.f32 %v6096, %v6327
    %v6329 = vpop.f32.mrb[0].mxu0
    %v6330 = vpop.f32.mrb[0].mxu0
    %v6331 = vadd.f32 %v6099, %v6330
    %v6332 = vpop.f32.mrb[0].mxu0
    %6333 = vmatprep.mubr.bf16.mxu0 %v5653
    %6334 = vmatmul.mubr.bf16.gmra.mrb[0].mxu0 %v5652
    %v6335 = vpop.f32.mrb[0].mxu0
    %v6336 = vadd.f32 %v6104, %v6335
    %v6337 = vpop.f32.mrb[0].mxu0
    %v6338 = vpop.f32.mrb[0].mxu0
    %v6339 = vadd.f32 %v6107, %v6338
    %v6340 = vpop.f32.mrb[0].mxu0
    %6341 = vmatprep.mubr.bf16.mxu0 %v5660
    %6342 = vmatmul.mubr.bf16.gmra.mrb[0].mxu0 %v5659
    %v6343 = vpop.f32.mrb[0].mxu0
    %v6344 = vadd.f32 %v6112, %v6343
    %v6345 = vpop.f32.mrb[0].mxu0
    %v6346 = vpop.f32.mrb[0].mxu0
    %v6347 = vadd.f32 %v6115, %v6346
    %v6348 = vpop.f32.mrb[0].mxu0
    %6349 = vmatprep.mubr.bf16.mxu0 %v5667
    %6350 = vmatmul.mubr.bf16.gmra.mrb[0].mxu0 %v5666
    %v6351 = vpop.f32.mrb[0].mxu0
    %v6352 = vadd.f32 %v6120, %v6351
    %v6353 = vpop.f32.mrb[0].mxu0
    %v6354 = vpop.f32.mrb[0].mxu0
    %v6355 = vadd.f32 %v6123, %v6354
    %v6356 = vpop.f32.mrb[0].mxu0
    %6357 = vmatprep.mubr.bf16.mxu0 %v5674
    %6358 = vmatmul.mubr.bf16.gmra.mrb[0].mxu0 %v5673
    %v6359 = vpop.f32.mrb[0].mxu0
    %v6360 = vadd.f32 %v6128, %v6359
    %v6361 = vpop.f32.mrb[0].mxu0
    %v6362 = vpop.f32.mrb[0].mxu0
    %v6363 = vadd.f32 %v6131, %v6362
    %v6364 = vpop.f32.mrb[0].mxu0
    %6365 = vmatprep.mubr.bf16.mxu0 %v5681
    %6366 = vmatmul.mubr.bf16.gmra.mrb[0].mxu0 %v5680
    %v6367 = vpop.f32.mrb[0].mxu0
    %v6368 = vadd.f32 %v6136, %v6367
    %v6369 = vpop.f32.mrb[0].mxu0
    %v6370 = vpop.f32.mrb[0].mxu0
    %v6371 = vadd.f32 %v6139, %v6370
    %v6372 = vpop.f32.mrb[0].mxu0
    %6373 = vmatprep.mubr.bf16.mxu0 %v5688
    %6374 = vmatmul.mubr.bf16.gmra.mrb[0].mxu0 %v5687
    %v6375 = vpop.f32.mrb[0].mxu0
    %v6376 = vadd.f32 %v6144, %v6375
    %v6377 = vpop.f32.mrb[0].mxu0
    %v6378 = vpop.f32.mrb[0].mxu0
    %v6379 = vpop.f32.mrb[0].mxu0
    %6380 = vdwg.mxu0
    %6381 = vmatprep.subr.bf16.mxu0 0
    %6382 = vmatpush1.bf16.msra.mxu0 %v4961
    %6383 = vmatprep.subr.bf16.mxu0 0
    %6384 = vmatpush1.bf16.msra.mxu0 %v4962
    %6385 = vmatprep.subr.bf16.mxu0 0
    %6386 = vmatpush1.bf16.msra.mxu0 %v4963
    %6387 = vmatprep.subr.bf16.mxu0 0
    %6388 = vmatpush1.bf16.msra.mxu0 %v4964
    %6389 = vmatprep.subr.bf16.mxu0 0
    %6390 = vmatpush1.bf16.msra.mxu0 %v4965
    %6391 = vmatprep.subr.bf16.mxu0 0
    %6392 = vmatpush1.bf16.msra.mxu0 %v4966
    %6393 = vmatprep.subr.bf16.mxu0 0
    %6394 = vmatpush1.bf16.msra.mxu0 %v4967
    %6395 = vmatprep.subr.bf16.mxu0 0
    %6396 = vmatpush1.bf16.msra.mxu0 %v4968
    %6397 = vmatprep.subr.bf16.mxu0 0
    %6398 = vmatpush1.bf16.msra.mxu0 %v4969
    %6399 = vmatprep.subr.bf16.mxu0 0
    %6400 = vmatpush1.bf16.msra.mxu0 %v4970
    %6401 = vmatprep.subr.bf16.mxu0 0
    %6402 = vmatpush1.bf16.msra.mxu0 %v4971
    %6403 = vmatprep.subr.bf16.mxu0 0
    %6404 = vmatpush1.bf16.msra.mxu0 %v4972
    %6405 = vmatprep.subr.bf16.mxu0 0
    %6406 = vmatpush1.bf16.msra.mxu0 %v4973
    %6407 = vmatprep.subr.bf16.mxu0 0
    %6408 = vmatpush1.bf16.msra.mxu0 %v4974
    %6409 = vmatprep.subr.bf16.mxu0 0
    %6410 = vmatpush1.bf16.msra.mxu0 %v4975
    %6411 = vmatprep.subr.bf16.mxu0 0
    %6412 = vmatpush1.bf16.msra.mxu0 %v4976
    %6413 = vmatprep.mubr.bf16.mxu0 %v5522
    %6414 = vmatmul.mubr.bf16.gmra.mrb[0].mxu0 %v5521
    %v6415 = vpop.f32.mrb[0].mxu0
    %v6416 = vadd.f32 %v6184, %v6415
    %v6417 = vpop.f32.mrb[0].mxu0
    %v6418 = vpop.f32.mrb[0].mxu0
    %v6419 = vadd.f32 %v6187, %v6418
    %v6420 = vpop.f32.mrb[0].mxu0
    %6421 = vmatprep.mubr.bf16.mxu0 %v5529
    %6422 = vmatmul.mubr.bf16.gmra.mrb[0].mxu0 %v5528
    %v6423 = vpop.f32.mrb[0].mxu0
    %v6424 = vadd.f32 %v6192, %v6423
    %v6425 = vpop.f32.mrb[0].mxu0
    %v6426 = vpop.f32.mrb[0].mxu0
    %v6427 = vadd.f32 %v6195, %v6426
    %v6428 = vpop.f32.mrb[0].mxu0
    %6429 = vmatprep.mubr.bf16.mxu0 %v5536
    %6430 = vmatmul.mubr.bf16.gmra.mrb[0].mxu0 %v5535
    %v6431 = vpop.f32.mrb[0].mxu0
    %v6432 = vadd.f32 %v6200, %v6431
    %v6433 = vpop.f32.mrb[0].mxu0
    %v6434 = vpop.f32.mrb[0].mxu0
    %v6435 = vadd.f32 %v6203, %v6434
    %v6436 = vpop.f32.mrb[0].mxu0
    %6437 = vmatprep.mubr.bf16.mxu0 %v5543
    %6438 = vmatmul.mubr.bf16.gmra.mrb[0].mxu0 %v5542
    %v6439 = vpop.f32.mrb[0].mxu0
    %v6440 = vadd.f32 %v6208, %v6439
    %v6441 = vpop.f32.mrb[0].mxu0
    %v6442 = vpop.f32.mrb[0].mxu0
    %v6443 = vadd.f32 %v6211, %v6442
    %v6444 = vpop.f32.mrb[0].mxu0
    %6445 = vmatprep.mubr.bf16.mxu0 %v5550
    %6446 = vmatmul.mubr.bf16.gmra.mrb[0].mxu0 %v5549
    %v6447 = vpop.f32.mrb[0].mxu0
    %v6448 = vadd.f32 %v6216, %v6447
    %v6449 = vpop.f32.mrb[0].mxu0
    %v6450 = vpop.f32.mrb[0].mxu0
    %v6451 = vadd.f32 %v6219, %v6450
    %v6452 = vpop.f32.mrb[0].mxu0
    %6453 = vmatprep.mubr.bf16.mxu0 %v5557
    %6454 = vmatmul.mubr.bf16.gmra.mrb[0].mxu0 %v5556
    %v6455 = vpop.f32.mrb[0].mxu0
    %v6456 = vadd.f32 %v6224, %v6455
    %v6457 = vpop.f32.mrb[0].mxu0
    %v6458 = vpop.f32.mrb[0].mxu0
    %v6459 = vadd.f32 %v6227, %v6458
    %v6460 = vpop.f32.mrb[0].mxu0
    %6461 = vmatprep.mubr.bf16.mxu0 %v5564
    %6462 = vmatmul.mubr.bf16.gmra.mrb[0].mxu0 %v5563
    %v6463 = vpop.f32.mrb[0].mxu0
    %v6464 = vadd.f32 %v6232, %v6463
    %v6465 = vpop.f32.mrb[0].mxu0
    %v6466 = vpop.f32.mrb[0].mxu0
    %v6467 = vadd.f32 %v6235, %v6466
    %v6468 = vpop.f32.mrb[0].mxu0
    %6469 = vmatprep.mubr.bf16.mxu0 %v5571
    %6470 = vmatmul.mubr.bf16.gmra.mrb[0].mxu0 %v5570
    %v6471 = vpop.f32.mrb[0].mxu0
    %v6472 = vadd.f32 %v6240, %v6471
    %v6473 = vpop.f32.mrb[0].mxu0
    %v6474 = vpop.f32.mrb[0].mxu0
    %v6475 = vadd.f32 %v6243, %v6474
    %v6476 = vpop.f32.mrb[0].mxu0
    %6477 = vmatprep.mubr.bf16.mxu0 %v5578
    %6478 = vmatmul.mubr.bf16.gmra.mrb[0].mxu0 %v5577
    %v6479 = vpop.f32.mrb[0].mxu0
    %v6480 = vadd.f32 %v6248, %v6479
    %v6481 = vpop.f32.mrb[0].mxu0
    %v6482 = vpop.f32.mrb[0].mxu0
    %v6483 = vadd.f32 %v6251, %v6482
    %v6484 = vpop.f32.mrb[0].mxu0
    %6485 = vmatprep.mubr.bf16.mxu0 %v5585
    %6486 = vmatmul.mubr.bf16.gmra.mrb[0].mxu0 %v5584
    %v6487 = vpop.f32.mrb[0].mxu0
    %v6488 = vadd.f32 %v6256, %v6487
    %v6489 = vpop.f32.mrb[0].mxu0
    %v6490 = vpop.f32.mrb[0].mxu0
    %v6491 = vadd.f32 %v6259, %v6490
    %v6492 = vpop.f32.mrb[0].mxu0
    %6493 = vmatprep.mubr.bf16.mxu0 %v5592
    %6494 = vmatmul.mubr.bf16.gmra.mrb[0].mxu0 %v5591
    %v6495 = vpop.f32.mrb[0].mxu0
    %v6496 = vadd.f32 %v6264, %v6495
    %v6497 = vpop.f32.mrb[0].mxu0
    %v6498 = vpop.f32.mrb[0].mxu0
    %v6499 = vadd.f32 %v6267, %v6498
    %v6500 = vpop.f32.mrb[0].mxu0
    %6501 = vmatprep.mubr.bf16.mxu0 %v5599
    %6502 = vmatmul.mubr.bf16.gmra.mrb[0].mxu0 %v5598
    %v6503 = vpop.f32.mrb[0].mxu0
    %v6504 = vadd.f32 %v6272, %v6503
    %v6505 = vpop.f32.mrb[0].mxu0
    %v6506 = vpop.f32.mrb[0].mxu0
    %v6507 = vadd.f32 %v6275, %v6506
    %v6508 = vpop.f32.mrb[0].mxu0
    %6509 = vmatprep.mubr.bf16.mxu0 %v5606
    %6510 = vmatmul.mubr.bf16.gmra.mrb[0].mxu0 %v5605
    %v6511 = vpop.f32.mrb[0].mxu0
    %v6512 = vadd.f32 %v6280, %v6511
    %v6513 = vpop.f32.mrb[0].mxu0
    %v6514 = vpop.f32.mrb[0].mxu0
    %v6515 = vadd.f32 %v6283, %v6514
    %v6516 = vpop.f32.mrb[0].mxu0
    %6517 = vmatprep.mubr.bf16.mxu0 %v5613
    %6518 = vmatmul.mubr.bf16.gmra.mrb[0].mxu0 %v5612
    %v6519 = vpop.f32.mrb[0].mxu0
    %v6520 = vadd.f32 %v6288, %v6519
    %v6521 = vpop.f32.mrb[0].mxu0
    %v6522 = vpop.f32.mrb[0].mxu0
    %v6523 = vadd.f32 %v6291, %v6522
    %v6524 = vpop.f32.mrb[0].mxu0
    %6525 = vmatprep.mubr.bf16.mxu0 %v5620
    %6526 = vmatmul.mubr.bf16.gmra.mrb[0].mxu0 %v5619
    %v6527 = vpop.f32.mrb[0].mxu0
    %v6528 = vadd.f32 %v6296, %v6527
    %v6529 = vpop.f32.mrb[0].mxu0
    %v6530 = vpop.f32.mrb[0].mxu0
    %v6531 = vadd.f32 %v6299, %v6530
    %v6532 = vpop.f32.mrb[0].mxu0
    %6533 = vmatprep.mubr.bf16.mxu0 %v5627
    %6534 = vmatmul.mubr.bf16.gmra.mrb[0].mxu0 %v5626
    %v6535 = vpop.f32.mrb[0].mxu0
    %v6536 = vadd.f32 %v6304, %v6535
    %v6537 = vpop.f32.mrb[0].mxu0
    %v6538 = vpop.f32.mrb[0].mxu0
    %v6539 = vadd.f32 %v6307, %v6538
    %v6540 = vpop.f32.mrb[0].mxu0
    %6541 = vmatprep.mubr.bf16.mxu0 %v5634
    %6542 = vmatmul.mubr.bf16.gmra.mrb[0].mxu0 %v5633
    %v6543 = vpop.f32.mrb[0].mxu0
    %v6544 = vadd.f32 %v6312, %v6543
    %v6545 = vpop.f32.mrb[0].mxu0
    %v6546 = vpop.f32.mrb[0].mxu0
    %v6547 = vadd.f32 %v6315, %v6546
    %v6548 = vpop.f32.mrb[0].mxu0
    %6549 = vmatprep.mubr.bf16.mxu0 %v5641
    %6550 = vmatmul.mubr.bf16.gmra.mrb[0].mxu0 %v5640
    %v6551 = vpop.f32.mrb[0].mxu0
    %v6552 = vadd.f32 %v6320, %v6551
    %v6553 = vpop.f32.mrb[0].mxu0
    %v6554 = vpop.f32.mrb[0].mxu0
    %v6555 = vadd.f32 %v6323, %v6554
    %v6556 = vpop.f32.mrb[0].mxu0
    %6557 = vmatprep.mubr.bf16.mxu0 %v5648
    %6558 = vmatmul.mubr.bf16.gmra.mrb[0].mxu0 %v5647
    %v6559 = vpop.f32.mrb[0].mxu0
    %v6560 = vadd.f32 %v6328, %v6559
    %v6561 = vpop.f32.mrb[0].mxu0
    %v6562 = vpop.f32.mrb[0].mxu0
    %v6563 = vadd.f32 %v6331, %v6562
    %v6564 = vpop.f32.mrb[0].mxu0
    %6565 = vmatprep.mubr.bf16.mxu0 %v5655
    %6566 = vmatmul.mubr.bf16.gmra.mrb[0].mxu0 %v5654
    %v6567 = vpop.f32.mrb[0].mxu0
    %v6568 = vadd.f32 %v6336, %v6567
    %v6569 = vpop.f32.mrb[0].mxu0
    %v6570 = vpop.f32.mrb[0].mxu0
    %v6571 = vadd.f32 %v6339, %v6570
    %v6572 = vpop.f32.mrb[0].mxu0
    %6573 = vmatprep.mubr.bf16.mxu0 %v5662
    %6574 = vmatmul.mubr.bf16.gmra.mrb[0].mxu0 %v5661
    %v6575 = vpop.f32.mrb[0].mxu0
    %v6576 = vadd.f32 %v6344, %v6575
    %v6577 = vpop.f32.mrb[0].mxu0
    %v6578 = vpop.f32.mrb[0].mxu0
    %v6579 = vadd.f32 %v6347, %v6578
    %v6580 = vpop.f32.mrb[0].mxu0
    %6581 = vmatprep.mubr.bf16.mxu0 %v5669
    %6582 = vmatmul.mubr.bf16.gmra.mrb[0].mxu0 %v5668
    %v6583 = vpop.f32.mrb[0].mxu0
    %v6584 = vadd.f32 %v6352, %v6583
    %v6585 = vpop.f32.mrb[0].mxu0
    %v6586 = vpop.f32.mrb[0].mxu0
    %v6587 = vadd.f32 %v6355, %v6586
    %v6588 = vpop.f32.mrb[0].mxu0
    %6589 = vmatprep.mubr.bf16.mxu0 %v5676
    %6590 = vmatmul.mubr.bf16.gmra.mrb[0].mxu0 %v5675
    %v6591 = vpop.f32.mrb[0].mxu0
    %v6592 = vadd.f32 %v6360, %v6591
    %v6593 = vpop.f32.mrb[0].mxu0
    %v6594 = vpop.f32.mrb[0].mxu0
    %v6595 = vadd.f32 %v6363, %v6594
    %v6596 = vpop.f32.mrb[0].mxu0
    %6597 = vmatprep.mubr.bf16.mxu0 %v5683
    %6598 = vmatmul.mubr.bf16.gmra.mrb[0].mxu0 %v5682
    %v6599 = vpop.f32.mrb[0].mxu0
    %v6600 = vadd.f32 %v6368, %v6599
    %v6601 = vpop.f32.mrb[0].mxu0
    %v6602 = vpop.f32.mrb[0].mxu0
    %v6603 = vadd.f32 %v6371, %v6602
    %v6604 = vpop.f32.mrb[0].mxu0
    %6605 = vmatprep.mubr.bf16.mxu0 %v5690
    %6606 = vmatmul.mubr.bf16.gmra.mrb[0].mxu0 %v5689
    %v6607 = vpop.f32.mrb[0].mxu0
    %v6608 = vadd.f32 %v6376, %v6607
    %v6609 = vpop.f32.mrb[0].mxu0
    %v6610 = vpop.f32.mrb[0].mxu0
    %v6611 = vpop.f32.mrb[0].mxu0
    %6612 = vdwg.mxu0
    %6613 = vmatprep.subr.bf16.mxu0 0
    %6614 = vmatpush1.bf16.msra.mxu0 %v4977
    %6615 = vmatprep.subr.bf16.mxu0 0
    %6616 = vmatpush1.bf16.msra.mxu0 0
    %6617 = vmatprep.subr.bf16.mxu0 0
    %6618 = vmatpush1.bf16.msra.mxu0 0
    %6619 = vmatprep.subr.bf16.mxu0 0
    %6620 = vmatpush1.bf16.msra.mxu0 0
    %6621 = vmatprep.subr.bf16.mxu0 0
    %6622 = vmatpush1.bf16.msra.mxu0 0
    %6623 = vmatprep.subr.bf16.mxu0 0
    %6624 = vmatpush1.bf16.msra.mxu0 0
    %6625 = vmatprep.subr.bf16.mxu0 0
    %6626 = vmatpush1.bf16.msra.mxu0 0
    %6627 = vmatprep.subr.bf16.mxu0 0
    %6628 = vmatpush1.bf16.msra.mxu0 0
    %6629 = vmatprep.subr.bf16.mxu0 0
    %6630 = vmatpush1.bf16.msra.mxu0 0
    %6631 = vmatprep.subr.bf16.mxu0 0
    %6632 = vmatpush1.bf16.msra.mxu0 0
    %6633 = vmatprep.subr.bf16.mxu0 0
    %6634 = vmatpush1.bf16.msra.mxu0 0
    %6635 = vmatprep.subr.bf16.mxu0 0
    %6636 = vmatpush1.bf16.msra.mxu0 0
    %6637 = vmatprep.subr.bf16.mxu0 0
    %6638 = vmatpush1.bf16.msra.mxu0 0
    %6639 = vmatprep.subr.bf16.mxu0 0
    %6640 = vmatpush1.bf16.msra.mxu0 0
    %6641 = vmatprep.subr.bf16.mxu0 0
    %6642 = vmatpush1.bf16.msra.mxu0 0
    %6643 = vmatprep.subr.bf16.mxu0 0
    %6644 = vmatpush1.bf16.msra.mxu0 0
    %6645 = vmatprep.mubr.bf16.mxu0 0
    %6646 = vmatmul.mubr.bf16.gmra.mrb[0].mxu0 %v5843
    %v6647 = vpop.f32.mrb[0].mxu0
    %v6648 = vadd.f32 %v6416, %v6647
    %v6649 = vpop.f32.mrb[0].mxu0
    %v6650 = vpop.f32.mrb[0].mxu0
    %v6651 = vadd.f32 %v6419, %v6650
    %v6652 = vpop.f32.mrb[0].mxu0
    %6653 = vmatprep.mubr.bf16.mxu0 0
    %6654 = vmatmul.mubr.bf16.gmra.mrb[0].mxu0 %v5846
    %v6655 = vpop.f32.mrb[0].mxu0
    %v6656 = vadd.f32 %v6424, %v6655
    %v6657 = vpop.f32.mrb[0].mxu0
    %v6658 = vpop.f32.mrb[0].mxu0
    %v6659 = vadd.f32 %v6427, %v6658
    %v6660 = vpop.f32.mrb[0].mxu0
    %6661 = vmatprep.mubr.bf16.mxu0 0
    %6662 = vmatmul.mubr.bf16.gmra.mrb[0].mxu0 %v5849
    %v6663 = vpop.f32.mrb[0].mxu0
    %v6664 = vadd.f32 %v6432, %v6663
    %v6665 = vpop.f32.mrb[0].mxu0
    %v6666 = vpop.f32.mrb[0].mxu0
    %v6667 = vadd.f32 %v6435, %v6666
    %v6668 = vpop.f32.mrb[0].mxu0
    %6669 = vmatprep.mubr.bf16.mxu0 0
    %6670 = vmatmul.mubr.bf16.gmra.mrb[0].mxu0 %v5852
    %v6671 = vpop.f32.mrb[0].mxu0
    %v6672 = vadd.f32 %v6440, %v6671
    %v6673 = vpop.f32.mrb[0].mxu0
    %v6674 = vpop.f32.mrb[0].mxu0
    %v6675 = vadd.f32 %v6443, %v6674
    %v6676 = vpop.f32.mrb[0].mxu0
    %6677 = vmatprep.mubr.bf16.mxu0 0
    %6678 = vmatmul.mubr.bf16.gmra.mrb[0].mxu0 %v5855
    %v6679 = vpop.f32.mrb[0].mxu0
    %v6680 = vadd.f32 %v6448, %v6679
    %v6681 = vpop.f32.mrb[0].mxu0
    %v6682 = vpop.f32.mrb[0].mxu0
    %v6683 = vadd.f32 %v6451, %v6682
    %v6684 = vpop.f32.mrb[0].mxu0
    %6685 = vmatprep.mubr.bf16.mxu0 0
    %6686 = vmatmul.mubr.bf16.gmra.mrb[0].mxu0 %v5858
    %v6687 = vpop.f32.mrb[0].mxu0
    %v6688 = vadd.f32 %v6456, %v6687
    %v6689 = vpop.f32.mrb[0].mxu0
    %v6690 = vpop.f32.mrb[0].mxu0
    %v6691 = vadd.f32 %v6459, %v6690
    %v6692 = vpop.f32.mrb[0].mxu0
    %6693 = vmatprep.mubr.bf16.mxu0 0
    %6694 = vmatmul.mubr.bf16.gmra.mrb[0].mxu0 %v5861
    %v6695 = vpop.f32.mrb[0].mxu0
    %v6696 = vadd.f32 %v6464, %v6695
    %v6697 = vpop.f32.mrb[0].mxu0
    %v6698 = vpop.f32.mrb[0].mxu0
    %v6699 = vadd.f32 %v6467, %v6698
    %v6700 = vpop.f32.mrb[0].mxu0
    %6701 = vmatprep.mubr.bf16.mxu0 0
    %6702 = vmatmul.mubr.bf16.gmra.mrb[0].mxu0 %v5864
    %v6703 = vpop.f32.mrb[0].mxu0
    %v6704 = vadd.f32 %v6472, %v6703
    %v6705 = vpop.f32.mrb[0].mxu0
    %v6706 = vpop.f32.mrb[0].mxu0
    %v6707 = vadd.f32 %v6475, %v6706
    %v6708 = vpop.f32.mrb[0].mxu0
    %6709 = vmatprep.mubr.bf16.mxu0 0
    %6710 = vmatmul.mubr.bf16.gmra.mrb[0].mxu0 %v5867
    %v6711 = vpop.f32.mrb[0].mxu0
    %v6712 = vadd.f32 %v6480, %v6711
    %v6713 = vpop.f32.mrb[0].mxu0
    %v6714 = vpop.f32.mrb[0].mxu0
    %v6715 = vadd.f32 %v6483, %v6714
    %v6716 = vpop.f32.mrb[0].mxu0
    %6717 = vmatprep.mubr.bf16.mxu0 0
    %6718 = vmatmul.mubr.bf16.gmra.mrb[0].mxu0 %v5870
    %v6719 = vpop.f32.mrb[0].mxu0
    %v6720 = vadd.f32 %v6488, %v6719
    %v6721 = vpop.f32.mrb[0].mxu0
    %v6722 = vpop.f32.mrb[0].mxu0
    %v6723 = vadd.f32 %v6491, %v6722
    %v6724 = vpop.f32.mrb[0].mxu0
    %6725 = vmatprep.mubr.bf16.mxu0 0
    %6726 = vmatmul.mubr.bf16.gmra.mrb[0].mxu0 %v5873
    %v6727 = vpop.f32.mrb[0].mxu0
    %v6728 = vadd.f32 %v6496, %v6727
    %v6729 = vpop.f32.mrb[0].mxu0
    %v6730 = vpop.f32.mrb[0].mxu0
    %v6731 = vadd.f32 %v6499, %v6730
    %v6732 = vpop.f32.mrb[0].mxu0
    %6733 = vmatprep.mubr.bf16.mxu0 0
    %6734 = vmatmul.mubr.bf16.gmra.mrb[0].mxu0 %v5876
    %v6735 = vpop.f32.mrb[0].mxu0
    %v6736 = vadd.f32 %v6504, %v6735
    %v6737 = vpop.f32.mrb[0].mxu0
    %v6738 = vpop.f32.mrb[0].mxu0
    %v6739 = vadd.f32 %v6507, %v6738
    %v6740 = vpop.f32.mrb[0].mxu0
    %6741 = vmatprep.mubr.bf16.mxu0 0
    %6742 = vmatmul.mubr.bf16.gmra.mrb[0].mxu0 %v5879
    %v6743 = vpop.f32.mrb[0].mxu0
    %v6744 = vadd.f32 %v6512, %v6743
    %v6745 = vpop.f32.mrb[0].mxu0
    %v6746 = vpop.f32.mrb[0].mxu0
    %v6747 = vadd.f32 %v6515, %v6746
    %v6748 = vpop.f32.mrb[0].mxu0
    %6749 = vmatprep.mubr.bf16.mxu0 0
    %6750 = vmatmul.mubr.bf16.gmra.mrb[0].mxu0 %v5882
    %v6751 = vpop.f32.mrb[0].mxu0
    %v6752 = vadd.f32 %v6520, %v6751
    %v6753 = vpop.f32.mrb[0].mxu0
    %v6754 = vpop.f32.mrb[0].mxu0
    %v6755 = vadd.f32 %v6523, %v6754
    %v6756 = vpop.f32.mrb[0].mxu0
    %6757 = vmatprep.mubr.bf16.mxu0 0
    %6758 = vmatmul.mubr.bf16.gmra.mrb[0].mxu0 %v5885
    %v6759 = vpop.f32.mrb[0].mxu0
    %v6760 = vadd.f32 %v6528, %v6759
    %v6761 = vpop.f32.mrb[0].mxu0
    %v6762 = vpop.f32.mrb[0].mxu0
    %v6763 = vadd.f32 %v6531, %v6762
    %v6764 = vpop.f32.mrb[0].mxu0
    %6765 = vmatprep.mubr.bf16.mxu0 0
    %6766 = vmatmul.mubr.bf16.gmra.mrb[0].mxu0 %v5888
    %v6767 = vpop.f32.mrb[0].mxu0
    %v6768 = vadd.f32 %v6536, %v6767
    %v6769 = vpop.f32.mrb[0].mxu0
    %v6770 = vpop.f32.mrb[0].mxu0
    %v6771 = vadd.f32 %v6539, %v6770
    %v6772 = vpop.f32.mrb[0].mxu0
    %6773 = vmatprep.mubr.bf16.mxu0 0
    %6774 = vmatmul.mubr.bf16.gmra.mrb[0].mxu0 %v5891
    %v6775 = vpop.f32.mrb[0].mxu0
    %v6776 = vadd.f32 %v6544, %v6775
    %v6777 = vpop.f32.mrb[0].mxu0
    %v6778 = vpop.f32.mrb[0].mxu0
    %v6779 = vadd.f32 %v6547, %v6778
    %v6780 = vpop.f32.mrb[0].mxu0
    %6781 = vmatprep.mubr.bf16.mxu0 0
    %6782 = vmatmul.mubr.bf16.gmra.mrb[0].mxu0 %v5894
    %v6783 = vpop.f32.mrb[0].mxu0
    %v6784 = vadd.f32 %v6552, %v6783
    %v6785 = vpop.f32.mrb[0].mxu0
    %v6786 = vpop.f32.mrb[0].mxu0
    %v6787 = vadd.f32 %v6555, %v6786
    %v6788 = vpop.f32.mrb[0].mxu0
    %6789 = vmatprep.mubr.bf16.mxu0 0
    %6790 = vmatmul.mubr.bf16.gmra.mrb[0].mxu0 %v5897
    %v6791 = vpop.f32.mrb[0].mxu0
    %v6792 = vadd.f32 %v6560, %v6791
    %v6793 = vpop.f32.mrb[0].mxu0
    %v6794 = vpop.f32.mrb[0].mxu0
    %v6795 = vadd.f32 %v6563, %v6794
    %v6796 = vpop.f32.mrb[0].mxu0
    %6797 = vmatprep.mubr.bf16.mxu0 0
    %6798 = vmatmul.mubr.bf16.gmra.mrb[0].mxu0 %v5900
    %v6799 = vpop.f32.mrb[0].mxu0
    %v6800 = vadd.f32 %v6568, %v6799
    %v6801 = vpop.f32.mrb[0].mxu0
    %v6802 = vpop.f32.mrb[0].mxu0
    %v6803 = vadd.f32 %v6571, %v6802
    %v6804 = vpop.f32.mrb[0].mxu0
    %6805 = vmatprep.mubr.bf16.mxu0 0
    %6806 = vmatmul.mubr.bf16.gmra.mrb[0].mxu0 %v5903
    %v6807 = vpop.f32.mrb[0].mxu0
    %v6808 = vadd.f32 %v6576, %v6807
    %v6809 = vpop.f32.mrb[0].mxu0
    %v6810 = vpop.f32.mrb[0].mxu0
    %v6811 = vadd.f32 %v6579, %v6810
    %v6812 = vpop.f32.mrb[0].mxu0
    %6813 = vmatprep.mubr.bf16.mxu0 0
    %6814 = vmatmul.mubr.bf16.gmra.mrb[0].mxu0 %v5906
    %v6815 = vpop.f32.mrb[0].mxu0
    %v6816 = vadd.f32 %v6584, %v6815
    %v6817 = vpop.f32.mrb[0].mxu0
    %v6818 = vpop.f32.mrb[0].mxu0
    %v6819 = vadd.f32 %v6587, %v6818
    %v6820 = vpop.f32.mrb[0].mxu0
    %6821 = vmatprep.mubr.bf16.mxu0 0
    %6822 = vmatmul.mubr.bf16.gmra.mrb[0].mxu0 %v5909
    %v6823 = vpop.f32.mrb[0].mxu0
    %v6824 = vadd.f32 %v6592, %v6823
    %v6825 = vpop.f32.mrb[0].mxu0
    %v6826 = vpop.f32.mrb[0].mxu0
    %v6827 = vadd.f32 %v6595, %v6826
    %v6828 = vpop.f32.mrb[0].mxu0
    %6829 = vmatprep.mubr.bf16.mxu0 0
    %6830 = vmatmul.mubr.bf16.gmra.mrb[0].mxu0 %v5912
    %v6831 = vpop.f32.mrb[0].mxu0
    %v6832 = vadd.f32 %v6600, %v6831
    %v6833 = vpop.f32.mrb[0].mxu0
    %v6834 = vpop.f32.mrb[0].mxu0
    %v6835 = vadd.f32 %v6603, %v6834
    %v6836 = vpop.f32.mrb[0].mxu0
    %6837 = vmatprep.mubr.bf16.mxu0 0
    %6838 = vmatmul.mubr.bf16.gmra.mrb[0].mxu0 %v5915
    %v6839 = vpop.f32.mrb[0].mxu0
    %v6840 = vadd.f32 %v6608, %v6839
    %v6841 = vpop.f32.mrb[0].mxu0
    %v6842 = vpop.f32.mrb[0].mxu0
    %v6843 = vpop.f32.mrb[0].mxu0
    %6844 = vdwg.mxu0
    %v6845 = vld [vmem:[#allocation4] sm:$0xff]
    %v6846 = vld [vmem:[#allocation4 + $0x8] sm:$0xff]
    %v6847 = vld [vmem:[#allocation4 + $0x10] sm:$0xff]
    %v6848 = vld [vmem:[#allocation4 + $0x18] sm:$0xff]
    %v6849 = vld [vmem:[%s5] sm:$0xff]
    %v6850 = vld [vmem:[%s5 + $0x8] sm:$0xff]
    %v6851 = vld [vmem:[%s5 + $0x10] sm:$0xff]
    %v6852 = vld [vmem:[%s5 + $0x18] sm:$0xff]
    %v6853 = vld [vmem:[%s5 + $0x20] sm:$0xff]
    %v6854 = vld [vmem:[%s5 + $0x28] sm:$0xff]
    %v6855 = vld [vmem:[%s5 + $0x30] sm:$0xff]
    %v6856 = vld [vmem:[%s5 + $0x38] sm:$0xff]
    %v6857 = vld [vmem:[%s5 + $0x40] sm:$0xff]
    %v6858 = vld [vmem:[%s5 + $0x48] sm:$0xff]
    %v6859 = vld [vmem:[%s5 + $0x50] sm:$0xff]
    %v6860 = vld [vmem:[%s5 + $0x58] sm:$0xff]
    %v6861 = vld [vmem:[%s5 + $0x60] sm:$0xff]
    %v6862 = vld [vmem:[%s5 + $0x68] sm:$0xff]
    %v6863 = vld [vmem:[%s5 + $0x70] sm:$0xff]
    %v6864 = vld [vmem:[%s5 + $0x78] sm:$0xff]
    %v6865 = vld [vmem:[%s5 + $0x80] sm:$0xff]
    %v6866 = vld [vmem:[%s5 + $0x88] sm:$0xff]
    %v6867 = vld [vmem:[%s5 + $0x90] sm:$0xff]
    %v6868 = vld [vmem:[%s5 + $0x98] sm:$0xff]
    %v6869 = vld [vmem:[%s5 + $0xa0] sm:$0xff]
    %v6870 = vld [vmem:[%s5 + $0xa8] sm:$0xff]
    %v6871 = vld [vmem:[%s5 + $0xb0] sm:$0xff]
    %v6872 = vld [vmem:[%s5 + $0xb8] sm:$0xff]
    %v6873 = vld [vmem:[%s5 + $0xc0] sm:$0xff]
    %v6874 = vld [vmem:[%s5 + $0xc8] sm:$0xff]
    %v6875 = vld [vmem:[%s5 + $0xd0] sm:$0xff]
    %v6876 = vld [vmem:[%s5 + $0xd8] sm:$0xff]
    %v6877 = vld [vmem:[%s5 + $0xe0] sm:$0xff]
    %v6878 = vld [vmem:[%s5 + $0xe8] sm:$0xff]
    %v6879 = vld [vmem:[%s5 + $0xf0] sm:$0xff]
    %v6880 = vld [vmem:[%s5 + $0xf8] sm:$0xff]
    %v6881 = vld [vmem:[%s5 + $0x100] sm:$0xff]
    %v6882 = vld [vmem:[%s5 + $0x108] sm:$0xff]
    %v6883 = vld [vmem:[%s5 + $0x110] sm:$0xff]
    %v6884 = vld [vmem:[%s5 + $0x118] sm:$0xff]
    %v6885 = vld [vmem:[%s5 + $0x120] sm:$0xff]
    %v6886 = vld [vmem:[%s5 + $0x128] sm:$0xff]
    %v6887 = vld [vmem:[%s5 + $0x130] sm:$0xff]
    %v6888 = vld [vmem:[%s5 + $0x138] sm:$0xff]
    %v6889 = vld [vmem:[%s5 + $0x140] sm:$0xff]
    %v6890 = vld [vmem:[%s5 + $0x148] sm:$0xff]
    %v6891 = vld [vmem:[%s5 + $0x150] sm:$0xff]
    %v6892 = vld [vmem:[%s5 + $0x158] sm:$0xff]
    %v6893 = vld [vmem:[%s5 + $0x160] sm:$0xff]
    %v6894 = vld [vmem:[%s5 + $0x168] sm:$0xff]
    %v6895 = vld [vmem:[%s5 + $0x170] sm:$0xff]
    %v6896 = vld [vmem:[%s5 + $0x178] sm:$0xff]
    %v6897 = vld [vmem:[%s5 + $0x180] sm:$0xff]
    %vm6898 = vcmask 64512
    %v6900 = vsel %vm6898, %v6848, 0
    %6902 = vmatprep.subr.mxu0 0.0
    %6903 = vmatpush1.msra.mxu0 %v6648
    %6904 = vmatprep.subr.mxu0 0.0
    %6905 = vmatpush1.msra.mxu0 %v6651
    %6906 = vmatprep.subr.mxu0 0.0
    %6907 = vmatpush1.msra.mxu0 %v6656
    %6908 = vmatprep.subr.mxu0 0.0
    %6909 = vmatpush1.msra.mxu0 %v6659
    %6910 = vmatprep.subr.mxu0 0.0
    %6911 = vmatpush1.msra.mxu0 %v6664
    %6912 = vmatprep.subr.mxu0 0.0
    %6913 = vmatpush1.msra.mxu0 %v6667
    %6914 = vmatprep.subr.mxu0 0.0
    %6915 = vmatpush1.msra.mxu0 %v6672
    %6916 = vmatprep.subr.mxu0 0.0
    %6917 = vmatpush1.msra.mxu0 %v6675
    %6918 = vmatprep.subr.mxu0 0.0
    %6919 = vmatpush1.msra.mxu0 %v6680
    %6920 = vmatprep.subr.mxu0 0.0
    %6921 = vmatpush1.msra.mxu0 %v6683
    %6922 = vmatprep.subr.mxu0 0.0
    %6923 = vmatpush1.msra.mxu0 %v6688
    %6924 = vmatprep.subr.mxu0 0.0
    %6925 = vmatpush1.msra.mxu0 %v6691
    %6926 = vmatprep.subr.mxu0 0.0
    %6927 = vmatpush1.msra.mxu0 %v6696
    %6928 = vmatprep.subr.mxu0 0.0
    %6929 = vmatpush1.msra.mxu0 %v6699
    %6930 = vmatprep.subr.mxu0 0.0
    %6931 = vmatpush1.msra.mxu0 %v6704
    %6932 = vmatprep.subr.mxu0 0.0
    %6933 = vmatpush1.msra.mxu0 %v6707
    %6934 = vmatprep.subr.mxu0 0.0
    %6935 = vmatpush1.msra.mxu0 %v6712
    %6936 = vmatprep.subr.mxu0 0.0
    %6937 = vmatpush1.msra.mxu0 %v6715
    %6938 = vmatprep.subr.mxu0 0.0
    %6939 = vmatpush1.msra.mxu0 %v6720
    %6940 = vmatprep.subr.mxu0 0.0
    %6941 = vmatpush1.msra.mxu0 %v6723
    %6942 = vmatprep.subr.mxu0 0.0
    %6943 = vmatpush1.msra.mxu0 %v6728
    %6944 = vmatprep.subr.mxu0 0.0
    %6945 = vmatpush1.msra.mxu0 %v6731
    %6946 = vmatprep.subr.mxu0 0.0
    %6947 = vmatpush1.msra.mxu0 %v6736
    %6948 = vmatprep.subr.mxu0 0.0
    %6949 = vmatpush1.msra.mxu0 %v6739
    %6950 = vmatprep.subr.mxu0 0.0
    %6951 = vmatpush1.msra.mxu0 %v6744
    %6952 = vmatprep.subr.mxu0 0.0
    %6953 = vmatpush1.msra.mxu0 %v6747
    %6954 = vmatprep.subr.mxu0 0.0
    %6955 = vmatpush1.msra.mxu0 %v6752
    %6956 = vmatprep.subr.mxu0 0.0
    %6957 = vmatpush1.msra.mxu0 %v6755
    %6958 = vmatprep.subr.mxu0 0.0
    %6959 = vmatpush1.msra.mxu0 %v6760
    %6960 = vmatprep.subr.mxu0 0.0
    %6961 = vmatpush1.msra.mxu0 %v6763
    %6962 = vmatprep.subr.mxu0 0.0
    %6963 = vmatpush1.msra.mxu0 %v6768
    %6964 = vmatprep.subr.mxu0 0.0
    %6965 = vmatpush1.msra.mxu0 %v6771
    %6966 = vmatprep.mubr.f32.mxu0 %v6846
    %6967 = vmatmul.mubr.f32.gmra.mrb[0].mxu0 %v6845
    %v6968 = vpop.f32.mrb[0].mxu0
    %v6969 = vadd.f32 0.0, %v6968
    %v6970 = vpop.f32.mrb[0].mxu0
    %6971 = vdwg.mxu0
    %6972 = vmatprep.subr.mxu0 0.0
    %6973 = vmatpush1.msra.mxu0 %v6776
    %6974 = vmatprep.subr.mxu0 0.0
    %6975 = vmatpush1.msra.mxu0 %v6779
    %6976 = vmatprep.subr.mxu0 0.0
    %6977 = vmatpush1.msra.mxu0 %v6784
    %6978 = vmatprep.subr.mxu0 0.0
    %6979 = vmatpush1.msra.mxu0 %v6787
    %6980 = vmatprep.subr.mxu0 0.0
    %6981 = vmatpush1.msra.mxu0 %v6792
    %6982 = vmatprep.subr.mxu0 0.0
    %6983 = vmatpush1.msra.mxu0 %v6795
    %6984 = vmatprep.subr.mxu0 0.0
    %6985 = vmatpush1.msra.mxu0 %v6800
    %6986 = vmatprep.subr.mxu0 0.0
    %6987 = vmatpush1.msra.mxu0 %v6803
    %6988 = vmatprep.subr.mxu0 0.0
    %6989 = vmatpush1.msra.mxu0 %v6808
    %6990 = vmatprep.subr.mxu0 0.0
    %6991 = vmatpush1.msra.mxu0 %v6811
    %6992 = vmatprep.subr.mxu0 0.0
    %6993 = vmatpush1.msra.mxu0 %v6816
    %6994 = vmatprep.subr.mxu0 0.0
    %6995 = vmatpush1.msra.mxu0 %v6819
    %6996 = vmatprep.subr.mxu0 0.0
    %6997 = vmatpush1.msra.mxu0 %v6824
    %6998 = vmatprep.subr.mxu0 0.0
    %6999 = vmatpush1.msra.mxu0 %v6827
    %7000 = vmatprep.subr.mxu0 0.0
    %7001 = vmatpush1.msra.mxu0 %v6832
    %7002 = vmatprep.subr.mxu0 0.0
    %7003 = vmatpush1.msra.mxu0 %v6835
    %7004 = vmatprep.subr.mxu0 0.0
    %7005 = vmatpush1.msra.mxu0 %v6840
    %7006 = vmatprep.subr.mxu0 0.0
    %7007 = vmatpush1.msra.mxu0 0.0
    %7008 = vmatprep.subr.mxu0 0.0
    %7009 = vmatpush1.msra.mxu0 0.0
    %7010 = vmatprep.subr.mxu0 0.0
    %7011 = vmatpush1.msra.mxu0 0.0
    %7012 = vmatprep.subr.mxu0 0.0
    %7013 = vmatpush1.msra.mxu0 0.0
    %7014 = vmatprep.subr.mxu0 0.0
    %7015 = vmatpush1.msra.mxu0 0.0
    %7016 = vmatprep.subr.mxu0 0.0
    %7017 = vmatpush1.msra.mxu0 0.0
    %7018 = vmatprep.subr.mxu0 0.0
    %7019 = vmatpush1.msra.mxu0 0.0
    %7020 = vmatprep.subr.mxu0 0.0
    %7021 = vmatpush1.msra.mxu0 0.0
    %7022 = vmatprep.subr.mxu0 0.0
    %7023 = vmatpush1.msra.mxu0 0.0
    %7024 = vmatprep.subr.mxu0 0.0
    %7025 = vmatpush1.msra.mxu0 0.0
    %7026 = vmatprep.subr.mxu0 0.0
    %7027 = vmatpush1.msra.mxu0 0.0
    %7028 = vmatprep.subr.mxu0 0.0
    %7029 = vmatpush1.msra.mxu0 0.0
    %7030 = vmatprep.subr.mxu0 0.0
    %7031 = vmatpush1.msra.mxu0 0.0
    %7032 = vmatprep.subr.mxu0 0.0
    %7033 = vmatpush1.msra.mxu0 0.0
    %7034 = vmatprep.subr.mxu0 0.0
    %7035 = vmatpush1.msra.mxu0 0.0
    %7036 = vmatprep.mubr.f32.mxu0 %v6900
    %7037 = vmatmul.mubr.f32.gmra.mrb[0].mxu0 %v6847
    %v7038 = vpop.f32.mrb[0].mxu0
    %v7039 = vadd.f32 %v6969, %v7038
    %v7040 = vpop.f32.mrb[0].mxu0
    %7041 = vdwg.mxu0
    %vm7042 = vcmask 15360
    %v7043 = vsel %vm7042, %v7039, 0.0
    %7044 = vadd.xlane.f32.xlu0 %v7043
    %v7045 = vpop.xlane.xlu0 %7044
    %v7046 = vmul.f32 %v7045, 0.010204081
    %v7048 = vsel %vm6898, %v6849, 0
    %v7051 = vsel %vm6898, %v6850, 0
    %v7054 = vsel %vm6898, %v6851, 0
    %v7057 = vsel %vm6898, %v6852, 0
    %v7060 = vsel %vm6898, %v6853, 0
    %v7063 = vsel %vm6898, %v6854, 0
    %v7066 = vsel %vm6898, %v6855, 0
    %v7069 = vsel %vm6898, %v6856, 0
    %v7072 = vsel %vm6898, %v6857, 0
    %v7075 = vsel %vm6898, %v6858, 0
    %v7078 = vsel %vm6898, %v6859, 0
    %v7081 = vsel %vm6898, %v6860, 0
    %v7084 = vsel %vm6898, %v6861, 0
    %v7087 = vsel %vm6898, %v6862, 0
    %v7090 = vsel %vm6898, %v6863, 0
    %v7093 = vsel %vm6898, %v6864, 0
    %v7096 = vsel %vm6898, %v6865, 0
    %v7099 = vsel %vm6898, %v6866, 0
    %v7102 = vsel %vm6898, %v6867, 0
    %v7105 = vsel %vm6898, %v6868, 0
    %v7108 = vsel %vm6898, %v6869, 0
    %v7111 = vsel %vm6898, %v6870, 0
    %v7114 = vsel %vm6898, %v6871, 0
    %v7117 = vsel %vm6898, %v6872, 0
    %v7120 = vsel %vm6898, %v6873, 0
    %v7123 = vsel %vm6898, %v6874, 0
    %v7126 = vsel %vm6898, %v6875, 0
    %v7129 = vsel %vm6898, %v6876, 0
    %v7132 = vsel %vm6898, %v6877, 0
    %v7135 = vsel %vm6898, %v6878, 0
    %v7138 = vsel %vm6898, %v6879, 0
    %v7141 = vsel %vm6898, %v6880, 0
    %v7144 = vsel %vm6898, %v6881, 0
    %v7147 = vsel %vm6898, %v6882, 0
    %v7150 = vsel %vm6898, %v6883, 0
    %v7153 = vsel %vm6898, %v6884, 0
    %v7156 = vsel %vm6898, %v6885, 0
    %v7159 = vsel %vm6898, %v6886, 0
    %v7162 = vsel %vm6898, %v6887, 0
    %v7165 = vsel %vm6898, %v6888, 0
    %v7168 = vsel %vm6898, %v6889, 0
    %v7171 = vsel %vm6898, %v6890, 0
    %v7174 = vsel %vm6898, %v6891, 0
    %v7177 = vsel %vm6898, %v6892, 0
    %v7180 = vsel %vm6898, %v6893, 0
    %v7183 = vsel %vm6898, %v6894, 0
    %v7186 = vsel %vm6898, %v6895, 0
    %v7189 = vsel %vm6898, %v6896, 0
    %v7192 = vsel %vm6898, %v6897, 0
    %7194 = vmatprep.subr.mxu0 0.0
    %7195 = vmatpush1.msra.mxu0 %v7046
    %7196 = vmatprep.subr.mxu0 0.0
    %7197 = vmatpush1.msra.mxu0 0.0
    %7198 = vmatprep.subr.mxu0 0.0
    %7199 = vmatpush1.msra.mxu0 0.0
    %7200 = vmatprep.subr.mxu0 0.0
    %7201 = vmatpush1.msra.mxu0 0.0
    %7202 = vmatprep.subr.mxu0 0.0
    %7203 = vmatpush1.msra.mxu0 0.0
    %7204 = vmatprep.subr.mxu0 0.0
    %7205 = vmatpush1.msra.mxu0 0.0
    %7206 = vmatprep.subr.mxu0 0.0
    %7207 = vmatpush1.msra.mxu0 0.0
    %7208 = vmatprep.subr.mxu0 0.0
    %7209 = vmatpush1.msra.mxu0 0.0
    %7210 = vmatprep.subr.mxu0 0.0
    %7211 = vmatpush1.msra.mxu0 0.0
    %7212 = vmatprep.subr.mxu0 0.0
    %7213 = vmatpush1.msra.mxu0 0.0
    %7214 = vmatprep.subr.mxu0 0.0
    %7215 = vmatpush1.msra.mxu0 0.0
    %7216 = vmatprep.subr.mxu0 0.0
    %7217 = vmatpush1.msra.mxu0 0.0
    %7218 = vmatprep.subr.mxu0 0.0
    %7219 = vmatpush1.msra.mxu0 0.0
    %7220 = vmatprep.subr.mxu0 0.0
    %7221 = vmatpush1.msra.mxu0 0.0
    %7222 = vmatprep.subr.mxu0 0.0
    %7223 = vmatpush1.msra.mxu0 0.0
    %7224 = vmatprep.subr.mxu0 0.0
    %7225 = vmatpush1.msra.mxu0 0.0
    %7226 = vmatprep.subr.mxu0 0.0
    %7227 = vmatpush1.msra.mxu0 0.0
    %7228 = vmatprep.subr.mxu0 0.0
    %7229 = vmatpush1.msra.mxu0 0.0
    %7230 = vmatprep.subr.mxu0 0.0
    %7231 = vmatpush1.msra.mxu0 0.0
    %7232 = vmatprep.subr.mxu0 0.0
    %7233 = vmatpush1.msra.mxu0 0.0
    %7234 = vmatprep.subr.mxu0 0.0
    %7235 = vmatpush1.msra.mxu0 0.0
    %7236 = vmatprep.subr.mxu0 0.0
    %7237 = vmatpush1.msra.mxu0 0.0
    %7238 = vmatprep.subr.mxu0 0.0
    %7239 = vmatpush1.msra.mxu0 0.0
    %7240 = vmatprep.subr.mxu0 0.0
    %7241 = vmatpush1.msra.mxu0 0.0
    %7242 = vmatprep.subr.mxu0 0.0
    %7243 = vmatpush1.msra.mxu0 0.0
    %7244 = vmatprep.subr.mxu0 0.0
    %7245 = vmatpush1.msra.mxu0 0.0
    %7246 = vmatprep.subr.mxu0 0.0
    %7247 = vmatpush1.msra.mxu0 0.0
    %7248 = vmatprep.subr.mxu0 0.0
    %7249 = vmatpush1.msra.mxu0 0.0
    %7250 = vmatprep.subr.mxu0 0.0
    %7251 = vmatpush1.msra.mxu0 0.0
    %7252 = vmatprep.subr.mxu0 0.0
    %7253 = vmatpush1.msra.mxu0 0.0
    %7254 = vmatprep.subr.mxu0 0.0
    %7255 = vmatpush1.msra.mxu0 0.0
    %7256 = vmatprep.subr.mxu0 0.0
    %7257 = vmatpush1.msra.mxu0 0.0
    %7258 = vmatprep.mubr.f32.mxu0 0.0
    %7259 = vmatmul.mubr.f32.gmra.mrb[0].mxu0 %v7048
    %v7260 = vpop.f32.mrb[0].mxu0
    %v7261 = vadd.f32 0.0, %v7260
    %v7262 = vpop.f32.mrb[0].mxu0
    %7263 = vmatprep.mubr.f32.mxu0 0.0
    %7264 = vmatmul.mubr.f32.gmra.mrb[0].mxu0 %v7051
    %v7265 = vpop.f32.mrb[0].mxu0
    %v7266 = vadd.f32 0.0, %v7265
    %v7267 = vpop.f32.mrb[0].mxu0
    %7268 = vmatprep.mubr.f32.mxu0 0.0
    %7269 = vmatmul.mubr.f32.gmra.mrb[0].mxu0 %v7054
    %v7270 = vpop.f32.mrb[0].mxu0
    %v7271 = vadd.f32 0.0, %v7270
    %v7272 = vpop.f32.mrb[0].mxu0
    %7273 = vmatprep.mubr.f32.mxu0 0.0
    %7274 = vmatmul.mubr.f32.gmra.mrb[0].mxu0 %v7057
    %v7275 = vpop.f32.mrb[0].mxu0
    %v7276 = vadd.f32 0.0, %v7275
    %v7277 = vpop.f32.mrb[0].mxu0
    %7278 = vmatprep.mubr.f32.mxu0 0.0
    %7279 = vmatmul.mubr.f32.gmra.mrb[0].mxu0 %v7060
    %v7280 = vpop.f32.mrb[0].mxu0
    %v7281 = vadd.f32 0.0, %v7280
    %v7282 = vpop.f32.mrb[0].mxu0
    %7283 = vmatprep.mubr.f32.mxu0 0.0
    %7284 = vmatmul.mubr.f32.gmra.mrb[0].mxu0 %v7063
    %v7285 = vpop.f32.mrb[0].mxu0
    %v7286 = vadd.f32 0.0, %v7285
    %v7287 = vpop.f32.mrb[0].mxu0
    %7288 = vmatprep.mubr.f32.mxu0 0.0
    %7289 = vmatmul.mubr.f32.gmra.mrb[0].mxu0 %v7066
    %v7290 = vpop.f32.mrb[0].mxu0
    %v7291 = vadd.f32 0.0, %v7290
    %v7292 = vpop.f32.mrb[0].mxu0
    %7293 = vmatprep.mubr.f32.mxu0 0.0
    %7294 = vmatmul.mubr.f32.gmra.mrb[0].mxu0 %v7069
    %v7295 = vpop.f32.mrb[0].mxu0
    %v7296 = vadd.f32 0.0, %v7295
    %v7297 = vpop.f32.mrb[0].mxu0
    %7298 = vmatprep.mubr.f32.mxu0 0.0
    %7299 = vmatmul.mubr.f32.gmra.mrb[0].mxu0 %v7072
    %v7300 = vpop.f32.mrb[0].mxu0
    %v7301 = vadd.f32 0.0, %v7300
    %v7302 = vpop.f32.mrb[0].mxu0
    %7303 = vmatprep.mubr.f32.mxu0 0.0
    %7304 = vmatmul.mubr.f32.gmra.mrb[0].mxu0 %v7075
    %v7305 = vpop.f32.mrb[0].mxu0
    %v7306 = vadd.f32 0.0, %v7305
    %v7307 = vpop.f32.mrb[0].mxu0
    %7308 = vmatprep.mubr.f32.mxu0 0.0
    %7309 = vmatmul.mubr.f32.gmra.mrb[0].mxu0 %v7078
    %v7310 = vpop.f32.mrb[0].mxu0
    %v7311 = vadd.f32 0.0, %v7310
    %v7312 = vpop.f32.mrb[0].mxu0
    %7313 = vmatprep.mubr.f32.mxu0 0.0
    %7314 = vmatmul.mubr.f32.gmra.mrb[0].mxu0 %v7081
    %v7315 = vpop.f32.mrb[0].mxu0
    %v7316 = vadd.f32 0.0, %v7315
    %v7317 = vpop.f32.mrb[0].mxu0
    %7318 = vmatprep.mubr.f32.mxu0 0.0
    %7319 = vmatmul.mubr.f32.gmra.mrb[0].mxu0 %v7084
    %v7320 = vpop.f32.mrb[0].mxu0
    %v7321 = vadd.f32 0.0, %v7320
    %v7322 = vpop.f32.mrb[0].mxu0
    %7323 = vmatprep.mubr.f32.mxu0 0.0
    %7324 = vmatmul.mubr.f32.gmra.mrb[0].mxu0 %v7087
    %v7325 = vpop.f32.mrb[0].mxu0
    %v7326 = vadd.f32 0.0, %v7325
    %v7327 = vpop.f32.mrb[0].mxu0
    %7328 = vmatprep.mubr.f32.mxu0 0.0
    %7329 = vmatmul.mubr.f32.gmra.mrb[0].mxu0 %v7090
    %v7330 = vpop.f32.mrb[0].mxu0
    %v7331 = vadd.f32 0.0, %v7330
    %v7332 = vpop.f32.mrb[0].mxu0
    %7333 = vmatprep.mubr.f32.mxu0 0.0
    %7334 = vmatmul.mubr.f32.gmra.mrb[0].mxu0 %v7093
    %v7335 = vpop.f32.mrb[0].mxu0
    %v7336 = vadd.f32 0.0, %v7335
    %v7337 = vpop.f32.mrb[0].mxu0
    %7338 = vmatprep.mubr.f32.mxu0 0.0
    %7339 = vmatmul.mubr.f32.gmra.mrb[0].mxu0 %v7096
    %v7340 = vpop.f32.mrb[0].mxu0
    %v7341 = vadd.f32 0.0, %v7340
    %v7342 = vpop.f32.mrb[0].mxu0
    %7343 = vmatprep.mubr.f32.mxu0 0.0
    %7344 = vmatmul.mubr.f32.gmra.mrb[0].mxu0 %v7099
    %v7345 = vpop.f32.mrb[0].mxu0
    %v7346 = vadd.f32 0.0, %v7345
    %v7347 = vpop.f32.mrb[0].mxu0
    %7348 = vmatprep.mubr.f32.mxu0 0.0
    %7349 = vmatmul.mubr.f32.gmra.mrb[0].mxu0 %v7102
    %v7350 = vpop.f32.mrb[0].mxu0
    %v7351 = vadd.f32 0.0, %v7350
    %v7352 = vpop.f32.mrb[0].mxu0
    %7353 = vmatprep.mubr.f32.mxu0 0.0
    %7354 = vmatmul.mubr.f32.gmra.mrb[0].mxu0 %v7105
    %v7355 = vpop.f32.mrb[0].mxu0
    %v7356 = vadd.f32 0.0, %v7355
    %v7357 = vpop.f32.mrb[0].mxu0
    %7358 = vmatprep.mubr.f32.mxu0 0.0
    %7359 = vmatmul.mubr.f32.gmra.mrb[0].mxu0 %v7108
    %v7360 = vpop.f32.mrb[0].mxu0
    %v7361 = vadd.f32 0.0, %v7360
    %v7362 = vpop.f32.mrb[0].mxu0
    %7363 = vmatprep.mubr.f32.mxu0 0.0
    %7364 = vmatmul.mubr.f32.gmra.mrb[0].mxu0 %v7111
    %v7365 = vpop.f32.mrb[0].mxu0
    %v7366 = vadd.f32 0.0, %v7365
    %v7367 = vpop.f32.mrb[0].mxu0
    %7368 = vmatprep.mubr.f32.mxu0 0.0
    %7369 = vmatmul.mubr.f32.gmra.mrb[0].mxu0 %v7114
    %v7370 = vpop.f32.mrb[0].mxu0
    %v7371 = vadd.f32 0.0, %v7370
    %v7372 = vpop.f32.mrb[0].mxu0
    %7373 = vmatprep.mubr.f32.mxu0 0.0
    %7374 = vmatmul.mubr.f32.gmra.mrb[0].mxu0 %v7117
    %v7375 = vpop.f32.mrb[0].mxu0
    %v7376 = vadd.f32 0.0, %v7375
    %v7377 = vpop.f32.mrb[0].mxu0
    %7378 = vmatprep.mubr.f32.mxu0 0.0
    %7379 = vmatmul.mubr.f32.gmra.mrb[0].mxu0 %v7120
    %v7380 = vpop.f32.mrb[0].mxu0
    %v7381 = vadd.f32 0.0, %v7380
    %v7382 = vpop.f32.mrb[0].mxu0
    %7383 = vmatprep.mubr.f32.mxu0 0.0
    %7384 = vmatmul.mubr.f32.gmra.mrb[0].mxu0 %v7123
    %v7385 = vpop.f32.mrb[0].mxu0
    %v7386 = vadd.f32 0.0, %v7385
    %v7387 = vpop.f32.mrb[0].mxu0
    %7388 = vmatprep.mubr.f32.mxu0 0.0
    %7389 = vmatmul.mubr.f32.gmra.mrb[0].mxu0 %v7126
    %v7390 = vpop.f32.mrb[0].mxu0
    %v7391 = vadd.f32 0.0, %v7390
    %v7392 = vpop.f32.mrb[0].mxu0
    %7393 = vmatprep.mubr.f32.mxu0 0.0
    %7394 = vmatmul.mubr.f32.gmra.mrb[0].mxu0 %v7129
    %v7395 = vpop.f32.mrb[0].mxu0
    %v7396 = vadd.f32 0.0, %v7395
    %v7397 = vpop.f32.mrb[0].mxu0
    %7398 = vmatprep.mubr.f32.mxu0 0.0
    %7399 = vmatmul.mubr.f32.gmra.mrb[0].mxu0 %v7132
    %v7400 = vpop.f32.mrb[0].mxu0
    %v7401 = vadd.f32 0.0, %v7400
    %v7402 = vpop.f32.mrb[0].mxu0
    %7403 = vmatprep.mubr.f32.mxu0 0.0
    %7404 = vmatmul.mubr.f32.gmra.mrb[0].mxu0 %v7135
    %v7405 = vpop.f32.mrb[0].mxu0
    %v7406 = vadd.f32 0.0, %v7405
    %v7407 = vpop.f32.mrb[0].mxu0
    %7408 = vmatprep.mubr.f32.mxu0 0.0
    %7409 = vmatmul.mubr.f32.gmra.mrb[0].mxu0 %v7138
    %v7410 = vpop.f32.mrb[0].mxu0
    %v7411 = vadd.f32 0.0, %v7410
    %v7412 = vpop.f32.mrb[0].mxu0
    %7413 = vmatprep.mubr.f32.mxu0 0.0
    %7414 = vmatmul.mubr.f32.gmra.mrb[0].mxu0 %v7141
    %v7415 = vpop.f32.mrb[0].mxu0
    %v7416 = vadd.f32 0.0, %v7415
    %v7417 = vpop.f32.mrb[0].mxu0
    %7418 = vmatprep.mubr.f32.mxu0 0.0
    %7419 = vmatmul.mubr.f32.gmra.mrb[0].mxu0 %v7144
    %v7420 = vpop.f32.mrb[0].mxu0
    %v7421 = vadd.f32 0.0, %v7420
    %v7422 = vpop.f32.mrb[0].mxu0
    %7423 = vmatprep.mubr.f32.mxu0 0.0
    %7424 = vmatmul.mubr.f32.gmra.mrb[0].mxu0 %v7147
    %v7425 = vpop.f32.mrb[0].mxu0
    %v7426 = vadd.f32 0.0, %v7425
    %v7427 = vpop.f32.mrb[0].mxu0
    %7428 = vmatprep.mubr.f32.mxu0 0.0
    %7429 = vmatmul.mubr.f32.gmra.mrb[0].mxu0 %v7150
    %v7430 = vpop.f32.mrb[0].mxu0
    %v7431 = vadd.f32 0.0, %v7430
    %v7432 = vpop.f32.mrb[0].mxu0
    %7433 = vmatprep.mubr.f32.mxu0 0.0
    %7434 = vmatmul.mubr.f32.gmra.mrb[0].mxu0 %v7153
    %v7435 = vpop.f32.mrb[0].mxu0
    %v7436 = vadd.f32 0.0, %v7435
    %v7437 = vpop.f32.mrb[0].mxu0
    %7438 = vmatprep.mubr.f32.mxu0 0.0
    %7439 = vmatmul.mubr.f32.gmra.mrb[0].mxu0 %v7156
    %v7440 = vpop.f32.mrb[0].mxu0
    %v7441 = vadd.f32 0.0, %v7440
    %v7442 = vpop.f32.mrb[0].mxu0
    %7443 = vmatprep.mubr.f32.mxu0 0.0
    %7444 = vmatmul.mubr.f32.gmra.mrb[0].mxu0 %v7159
    %v7445 = vpop.f32.mrb[0].mxu0
    %v7446 = vadd.f32 0.0, %v7445
    %v7447 = vpop.f32.mrb[0].mxu0
    %7448 = vmatprep.mubr.f32.mxu0 0.0
    %7449 = vmatmul.mubr.f32.gmra.mrb[0].mxu0 %v7162
    %v7450 = vpop.f32.mrb[0].mxu0
    %v7451 = vadd.f32 0.0, %v7450
    %v7452 = vpop.f32.mrb[0].mxu0
    %7453 = vmatprep.mubr.f32.mxu0 0.0
    %7454 = vmatmul.mubr.f32.gmra.mrb[0].mxu0 %v7165
    %v7455 = vpop.f32.mrb[0].mxu0
    %v7456 = vadd.f32 0.0, %v7455
    %v7457 = vpop.f32.mrb[0].mxu0
    %7458 = vmatprep.mubr.f32.mxu0 0.0
    %7459 = vmatmul.mubr.f32.gmra.mrb[0].mxu0 %v7168
    %v7460 = vpop.f32.mrb[0].mxu0
    %v7461 = vadd.f32 0.0, %v7460
    %v7462 = vpop.f32.mrb[0].mxu0
    %7463 = vmatprep.mubr.f32.mxu0 0.0
    %7464 = vmatmul.mubr.f32.gmra.mrb[0].mxu0 %v7171
    %v7465 = vpop.f32.mrb[0].mxu0
    %v7466 = vadd.f32 0.0, %v7465
    %v7467 = vpop.f32.mrb[0].mxu0
    %7468 = vmatprep.mubr.f32.mxu0 0.0
    %7469 = vmatmul.mubr.f32.gmra.mrb[0].mxu0 %v7174
    %v7470 = vpop.f32.mrb[0].mxu0
    %v7471 = vadd.f32 0.0, %v7470
    %v7472 = vpop.f32.mrb[0].mxu0
    %7473 = vmatprep.mubr.f32.mxu0 0.0
    %7474 = vmatmul.mubr.f32.gmra.mrb[0].mxu0 %v7177
    %v7475 = vpop.f32.mrb[0].mxu0
    %v7476 = vadd.f32 0.0, %v7475
    %v7477 = vpop.f32.mrb[0].mxu0
    %7478 = vmatprep.mubr.f32.mxu0 0.0
    %7479 = vmatmul.mubr.f32.gmra.mrb[0].mxu0 %v7180
    %v7480 = vpop.f32.mrb[0].mxu0
    %v7481 = vadd.f32 0.0, %v7480
    %v7482 = vpop.f32.mrb[0].mxu0
    %7483 = vmatprep.mubr.f32.mxu0 0.0
    %7484 = vmatmul.mubr.f32.gmra.mrb[0].mxu0 %v7183
    %v7485 = vpop.f32.mrb[0].mxu0
    %v7486 = vadd.f32 0.0, %v7485
    %v7487 = vpop.f32.mrb[0].mxu0
    %7488 = vmatprep.mubr.f32.mxu0 0.0
    %7489 = vmatmul.mubr.f32.gmra.mrb[0].mxu0 %v7186
    %v7490 = vpop.f32.mrb[0].mxu0
    %v7491 = vadd.f32 0.0, %v7490
    %v7492 = vpop.f32.mrb[0].mxu0
    %7493 = vmatprep.mubr.f32.mxu0 0.0
    %7494 = vmatmul.mubr.f32.gmra.mrb[0].mxu0 %v7189
    %v7495 = vpop.f32.mrb[0].mxu0
    %v7496 = vadd.f32 0.0, %v7495
    %v7497 = vpop.f32.mrb[0].mxu0
    %7498 = vmatprep.mubr.f32.mxu0 0.0
    %7499 = vmatmul.mubr.f32.gmra.mrb[0].mxu0 %v7192
    %v7500 = vpop.f32.mrb[0].mxu0
    %v7501 = vadd.f32 0.0, %v7500
    %v7502 = vpop.f32.mrb[0].mxu0
    %7503 = vdwg.mxu0
    %7505 = vset.pattern.permute.xlu0 0
    %7506 = vperm.xlu0 %7505, %v7261
    %v7507 = vpop.permute.xlu0 %7506
    %7510 = vset.pattern.permute.xlu0 0
    %7511 = vperm.xlu0 %7510, %v7266
    %v7512 = vpop.permute.xlu0 %7511
    %7515 = vset.pattern.permute.xlu0 0
    %7516 = vperm.xlu0 %7515, %v7271
    %v7517 = vpop.permute.xlu0 %7516
    %7520 = vset.pattern.permute.xlu0 0
    %7521 = vperm.xlu0 %7520, %v7276
    %v7522 = vpop.permute.xlu0 %7521
    %7525 = vset.pattern.permute.xlu0 0
    %7526 = vperm.xlu0 %7525, %v7281
    %v7527 = vpop.permute.xlu0 %7526
    %7530 = vset.pattern.permute.xlu0 0
    %7531 = vperm.xlu0 %7530, %v7286
    %v7532 = vpop.permute.xlu0 %7531
    %7535 = vset.pattern.permute.xlu0 0
    %7536 = vperm.xlu0 %7535, %v7291
    %v7537 = vpop.permute.xlu0 %7536
    %7540 = vset.pattern.permute.xlu0 0
    %7541 = vperm.xlu0 %7540, %v7296
    %v7542 = vpop.permute.xlu0 %7541
    %7545 = vset.pattern.permute.xlu0 0
    %7546 = vperm.xlu0 %7545, %v7301
    %v7547 = vpop.permute.xlu0 %7546
    %7550 = vset.pattern.permute.xlu0 0
    %7551 = vperm.xlu0 %7550, %v7306
    %v7552 = vpop.permute.xlu0 %7551
    %7555 = vset.pattern.permute.xlu0 0
    %7556 = vperm.xlu0 %7555, %v7311
    %v7557 = vpop.permute.xlu0 %7556
    %7560 = vset.pattern.permute.xlu0 0
    %7561 = vperm.xlu0 %7560, %v7316
    %v7562 = vpop.permute.xlu0 %7561
    %7565 = vset.pattern.permute.xlu0 0
    %7566 = vperm.xlu0 %7565, %v7321
    %v7567 = vpop.permute.xlu0 %7566
    %7570 = vset.pattern.permute.xlu0 0
    %7571 = vperm.xlu0 %7570, %v7326
    %v7572 = vpop.permute.xlu0 %7571
    %7575 = vset.pattern.permute.xlu0 0
    %7576 = vperm.xlu0 %7575, %v7331
    %v7577 = vpop.permute.xlu0 %7576
    %7580 = vset.pattern.permute.xlu0 0
    %7581 = vperm.xlu0 %7580, %v7336
    %v7582 = vpop.permute.xlu0 %7581
    %7585 = vset.pattern.permute.xlu0 0
    %7586 = vperm.xlu0 %7585, %v7341
    %v7587 = vpop.permute.xlu0 %7586
    %7590 = vset.pattern.permute.xlu0 0
    %7591 = vperm.xlu0 %7590, %v7346
    %v7592 = vpop.permute.xlu0 %7591
    %7595 = vset.pattern.permute.xlu0 0
    %7596 = vperm.xlu0 %7595, %v7351
    %v7597 = vpop.permute.xlu0 %7596
    %7600 = vset.pattern.permute.xlu0 0
    %7601 = vperm.xlu0 %7600, %v7356
    %v7602 = vpop.permute.xlu0 %7601
    %7605 = vset.pattern.permute.xlu0 0
    %7606 = vperm.xlu0 %7605, %v7361
    %v7607 = vpop.permute.xlu0 %7606
    %7610 = vset.pattern.permute.xlu0 0
    %7611 = vperm.xlu0 %7610, %v7366
    %v7612 = vpop.permute.xlu0 %7611
    %7615 = vset.pattern.permute.xlu0 0
    %7616 = vperm.xlu0 %7615, %v7371
    %v7617 = vpop.permute.xlu0 %7616
    %7620 = vset.pattern.permute.xlu0 0
    %7621 = vperm.xlu0 %7620, %v7376
    %v7622 = vpop.permute.xlu0 %7621
    %7625 = vset.pattern.permute.xlu0 0
    %7626 = vperm.xlu0 %7625, %v7381
    %v7627 = vpop.permute.xlu0 %7626
    %7630 = vset.pattern.permute.xlu0 0
    %7631 = vperm.xlu0 %7630, %v7386
    %v7632 = vpop.permute.xlu0 %7631
    %7635 = vset.pattern.permute.xlu0 0
    %7636 = vperm.xlu0 %7635, %v7391
    %v7637 = vpop.permute.xlu0 %7636
    %7640 = vset.pattern.permute.xlu0 0
    %7641 = vperm.xlu0 %7640, %v7396
    %v7642 = vpop.permute.xlu0 %7641
    %7645 = vset.pattern.permute.xlu0 0
    %7646 = vperm.xlu0 %7645, %v7401
    %v7647 = vpop.permute.xlu0 %7646
    %7650 = vset.pattern.permute.xlu0 0
    %7651 = vperm.xlu0 %7650, %v7406
    %v7652 = vpop.permute.xlu0 %7651
    %7655 = vset.pattern.permute.xlu0 0
    %7656 = vperm.xlu0 %7655, %v7411
    %v7657 = vpop.permute.xlu0 %7656
    %7660 = vset.pattern.permute.xlu0 0
    %7661 = vperm.xlu0 %7660, %v7416
    %v7662 = vpop.permute.xlu0 %7661
    %7665 = vset.pattern.permute.xlu0 0
    %7666 = vperm.xlu0 %7665, %v7421
    %v7667 = vpop.permute.xlu0 %7666
    %7670 = vset.pattern.permute.xlu0 0
    %7671 = vperm.xlu0 %7670, %v7426
    %v7672 = vpop.permute.xlu0 %7671
    %7675 = vset.pattern.permute.xlu0 0
    %7676 = vperm.xlu0 %7675, %v7431
    %v7677 = vpop.permute.xlu0 %7676
    %7680 = vset.pattern.permute.xlu0 0
    %7681 = vperm.xlu0 %7680, %v7436
    %v7682 = vpop.permute.xlu0 %7681
    %7685 = vset.pattern.permute.xlu0 0
    %7686 = vperm.xlu0 %7685, %v7441
    %v7687 = vpop.permute.xlu0 %7686
    %7690 = vset.pattern.permute.xlu0 0
    %7691 = vperm.xlu0 %7690, %v7446
    %v7692 = vpop.permute.xlu0 %7691
    %7695 = vset.pattern.permute.xlu0 0
    %7696 = vperm.xlu0 %7695, %v7451
    %v7697 = vpop.permute.xlu0 %7696
    %7700 = vset.pattern.permute.xlu0 0
    %7701 = vperm.xlu0 %7700, %v7456
    %v7702 = vpop.permute.xlu0 %7701
    %7705 = vset.pattern.permute.xlu0 0
    %7706 = vperm.xlu0 %7705, %v7461
    %v7707 = vpop.permute.xlu0 %7706
    %7710 = vset.pattern.permute.xlu0 0
    %7711 = vperm.xlu0 %7710, %v7466
    %v7712 = vpop.permute.xlu0 %7711
    %7715 = vset.pattern.permute.xlu0 0
    %7716 = vperm.xlu0 %7715, %v7471
    %v7717 = vpop.permute.xlu0 %7716
    %7720 = vset.pattern.permute.xlu0 0
    %7721 = vperm.xlu0 %7720, %v7476
    %v7722 = vpop.permute.xlu0 %7721
    %7725 = vset.pattern.permute.xlu0 0
    %7726 = vperm.xlu0 %7725, %v7481
    %v7727 = vpop.permute.xlu0 %7726
    %7730 = vset.pattern.permute.xlu0 0
    %7731 = vperm.xlu0 %7730, %v7486
    %v7732 = vpop.permute.xlu0 %7731
    %7735 = vset.pattern.permute.xlu0 0
    %7736 = vperm.xlu0 %7735, %v7491
    %v7737 = vpop.permute.xlu0 %7736
    %7740 = vset.pattern.permute.xlu0 0
    %7741 = vperm.xlu0 %7740, %v7496
    %v7742 = vpop.permute.xlu0 %7741
    %7745 = vset.pattern.permute.xlu0 0
    %7746 = vperm.xlu0 %7745, %v7501
    %v7747 = vpop.permute.xlu0 %7746
    %v7749 = vsub.f32 %v6648, %v7507
    %v7750 = vsub.f32 %v6651, %v7512
    %v7751 = vsub.f32 %v6656, %v7517
    %v7752 = vsub.f32 %v6659, %v7522
    %v7753 = vsub.f32 %v6664, %v7527
    %v7754 = vsub.f32 %v6667, %v7532
    %v7755 = vsub.f32 %v6672, %v7537
    %v7756 = vsub.f32 %v6675, %v7542
    %v7757 = vsub.f32 %v6680, %v7547
    %v7758 = vsub.f32 %v6683, %v7552
    %v7759 = vsub.f32 %v6688, %v7557
    %v7760 = vsub.f32 %v6691, %v7562
    %v7761 = vsub.f32 %v6696, %v7567
    %v7762 = vsub.f32 %v6699, %v7572
    %v7763 = vsub.f32 %v6704, %v7577
    %v7764 = vsub.f32 %v6707, %v7582
    %v7765 = vsub.f32 %v6712, %v7587
    %v7766 = vsub.f32 %v6715, %v7592
    %v7767 = vsub.f32 %v6720, %v7597
    %v7768 = vsub.f32 %v6723, %v7602
    %v7769 = vsub.f32 %v6728, %v7607
    %v7770 = vsub.f32 %v6731, %v7612
    %v7771 = vsub.f32 %v6736, %v7617
    %v7772 = vsub.f32 %v6739, %v7622
    %v7773 = vsub.f32 %v6744, %v7627
    %v7774 = vsub.f32 %v6747, %v7632
    %v7775 = vsub.f32 %v6752, %v7637
    %v7776 = vsub.f32 %v6755, %v7642
    %v7777 = vsub.f32 %v6760, %v7647
    %v7778 = vsub.f32 %v6763, %v7652
    %v7779 = vsub.f32 %v6768, %v7657
    %v7780 = vsub.f32 %v6771, %v7662
    %v7781 = vsub.f32 %v6776, %v7667
    %v7782 = vsub.f32 %v6779, %v7672
    %v7783 = vsub.f32 %v6784, %v7677
    %v7784 = vsub.f32 %v6787, %v7682
    %v7785 = vsub.f32 %v6792, %v7687
    %v7786 = vsub.f32 %v6795, %v7692
    %v7787 = vsub.f32 %v6800, %v7697
    %v7788 = vsub.f32 %v6803, %v7702
    %v7789 = vsub.f32 %v6808, %v7707
    %v7790 = vsub.f32 %v6811, %v7712
    %v7791 = vsub.f32 %v6816, %v7717
    %v7792 = vsub.f32 %v6819, %v7722
    %v7793 = vsub.f32 %v6824, %v7727
    %v7794 = vsub.f32 %v6827, %v7732
    %v7795 = vsub.f32 %v6832, %v7737
    %v7796 = vsub.f32 %v6835, %v7742
    %v7797 = vsub.f32 %v6840, %v7747
    %v7798 = vmul.f32 %v7749, %v7749
    %v7799 = vmul.f32 %v7750, %v7750
    %v7800 = vmul.f32 %v7751, %v7751
    %v7801 = vmul.f32 %v7752, %v7752
    %v7802 = vmul.f32 %v7753, %v7753
    %v7803 = vmul.f32 %v7754, %v7754
    %v7804 = vmul.f32 %v7755, %v7755
    %v7805 = vmul.f32 %v7756, %v7756
    %v7806 = vmul.f32 %v7757, %v7757
    %v7807 = vmul.f32 %v7758, %v7758
    %v7808 = vmul.f32 %v7759, %v7759
    %v7809 = vmul.f32 %v7760, %v7760
    %v7810 = vmul.f32 %v7761, %v7761
    %v7811 = vmul.f32 %v7762, %v7762
    %v7812 = vmul.f32 %v7763, %v7763
    %v7813 = vmul.f32 %v7764, %v7764
    %v7814 = vmul.f32 %v7765, %v7765
    %v7815 = vmul.f32 %v7766, %v7766
    %v7816 = vmul.f32 %v7767, %v7767
    %v7817 = vmul.f32 %v7768, %v7768
    %v7818 = vmul.f32 %v7769, %v7769
    %v7819 = vmul.f32 %v7770, %v7770
    %v7820 = vmul.f32 %v7771, %v7771
    %v7821 = vmul.f32 %v7772, %v7772
    %v7822 = vmul.f32 %v7773, %v7773
    %v7823 = vmul.f32 %v7774, %v7774
    %v7824 = vmul.f32 %v7775, %v7775
    %v7825 = vmul.f32 %v7776, %v7776
    %v7826 = vmul.f32 %v7777, %v7777
    %v7827 = vmul.f32 %v7778, %v7778
    %v7828 = vmul.f32 %v7779, %v7779
    %v7829 = vmul.f32 %v7780, %v7780
    %v7830 = vmul.f32 %v7781, %v7781
    %v7831 = vmul.f32 %v7782, %v7782
    %v7832 = vmul.f32 %v7783, %v7783
    %v7833 = vmul.f32 %v7784, %v7784
    %v7834 = vmul.f32 %v7785, %v7785
    %v7835 = vmul.f32 %v7786, %v7786
    %v7836 = vmul.f32 %v7787, %v7787
    %v7837 = vmul.f32 %v7788, %v7788
    %v7838 = vmul.f32 %v7789, %v7789
    %v7839 = vmul.f32 %v7790, %v7790
    %v7840 = vmul.f32 %v7791, %v7791
    %v7841 = vmul.f32 %v7792, %v7792
    %v7842 = vmul.f32 %v7793, %v7793
    %v7843 = vmul.f32 %v7794, %v7794
    %v7844 = vmul.f32 %v7795, %v7795
    %v7845 = vmul.f32 %v7796, %v7796
    %v7846 = vmul.f32 %v7797, %v7797
    %7847 = vmatprep.subr.mxu0 0.0
    %7848 = vmatpush1.msra.mxu0 %v7798
    %7849 = vmatprep.subr.mxu0 0.0
    %7850 = vmatpush1.msra.mxu0 %v7799
    %7851 = vmatprep.subr.mxu0 0.0
    %7852 = vmatpush1.msra.mxu0 %v7800
    %7853 = vmatprep.subr.mxu0 0.0
    %7854 = vmatpush1.msra.mxu0 %v7801
    %7855 = vmatprep.subr.mxu0 0.0
    %7856 = vmatpush1.msra.mxu0 %v7802
    %7857 = vmatprep.subr.mxu0 0.0
    %7858 = vmatpush1.msra.mxu0 %v7803
    %7859 = vmatprep.subr.mxu0 0.0
    %7860 = vmatpush1.msra.mxu0 %v7804
    %7861 = vmatprep.subr.mxu0 0.0
    %7862 = vmatpush1.msra.mxu0 %v7805
    %7863 = vmatprep.subr.mxu0 0.0
    %7864 = vmatpush1.msra.mxu0 %v7806
    %7865 = vmatprep.subr.mxu0 0.0
    %7866 = vmatpush1.msra.mxu0 %v7807
    %7867 = vmatprep.subr.mxu0 0.0
    %7868 = vmatpush1.msra.mxu0 %v7808
    %7869 = vmatprep.subr.mxu0 0.0
    %7870 = vmatpush1.msra.mxu0 %v7809
    %7871 = vmatprep.subr.mxu0 0.0
    %7872 = vmatpush1.msra.mxu0 %v7810
    %7873 = vmatprep.subr.mxu0 0.0
    %7874 = vmatpush1.msra.mxu0 %v7811
    %7875 = vmatprep.subr.mxu0 0.0
    %7876 = vmatpush1.msra.mxu0 %v7812
    %7877 = vmatprep.subr.mxu0 0.0
    %7878 = vmatpush1.msra.mxu0 %v7813
    %7879 = vmatprep.subr.mxu0 0.0
    %7880 = vmatpush1.msra.mxu0 %v7814
    %7881 = vmatprep.subr.mxu0 0.0
    %7882 = vmatpush1.msra.mxu0 %v7815
    %7883 = vmatprep.subr.mxu0 0.0
    %7884 = vmatpush1.msra.mxu0 %v7816
    %7885 = vmatprep.subr.mxu0 0.0
    %7886 = vmatpush1.msra.mxu0 %v7817
    %7887 = vmatprep.subr.mxu0 0.0
    %7888 = vmatpush1.msra.mxu0 %v7818
    %7889 = vmatprep.subr.mxu0 0.0
    %7890 = vmatpush1.msra.mxu0 %v7819
    %7891 = vmatprep.subr.mxu0 0.0
    %7892 = vmatpush1.msra.mxu0 %v7820
    %7893 = vmatprep.subr.mxu0 0.0
    %7894 = vmatpush1.msra.mxu0 %v7821
    %7895 = vmatprep.subr.mxu0 0.0
    %7896 = vmatpush1.msra.mxu0 %v7822
    %7897 = vmatprep.subr.mxu0 0.0
    %7898 = vmatpush1.msra.mxu0 %v7823
    %7899 = vmatprep.subr.mxu0 0.0
    %7900 = vmatpush1.msra.mxu0 %v7824
    %7901 = vmatprep.subr.mxu0 0.0
    %7902 = vmatpush1.msra.mxu0 %v7825
    %7903 = vmatprep.subr.mxu0 0.0
    %7904 = vmatpush1.msra.mxu0 %v7826
    %7905 = vmatprep.subr.mxu0 0.0
    %7906 = vmatpush1.msra.mxu0 %v7827
    %7907 = vmatprep.subr.mxu0 0.0
    %7908 = vmatpush1.msra.mxu0 %v7828
    %7909 = vmatprep.subr.mxu0 0.0
    %7910 = vmatpush1.msra.mxu0 %v7829
    %7911 = vmatprep.mubr.f32.mxu0 %v6846
    %7912 = vmatmul.mubr.f32.gmra.mrb[0].mxu0 %v6845
    %v7913 = vpop.f32.mrb[0].mxu0
    %v7914 = vadd.f32 0.0, %v7913
    %v7915 = vpop.f32.mrb[0].mxu0
    %7916 = vdwg.mxu0
    %7917 = vmatprep.subr.mxu0 0.0
    %7918 = vmatpush1.msra.mxu0 %v7830
    %7919 = vmatprep.subr.mxu0 0.0
    %7920 = vmatpush1.msra.mxu0 %v7831
    %7921 = vmatprep.subr.mxu0 0.0
    %7922 = vmatpush1.msra.mxu0 %v7832
    %7923 = vmatprep.subr.mxu0 0.0
    %7924 = vmatpush1.msra.mxu0 %v7833
    %7925 = vmatprep.subr.mxu0 0.0
    %7926 = vmatpush1.msra.mxu0 %v7834
    %7927 = vmatprep.subr.mxu0 0.0
    %7928 = vmatpush1.msra.mxu0 %v7835
    %7929 = vmatprep.subr.mxu0 0.0
    %7930 = vmatpush1.msra.mxu0 %v7836
    %7931 = vmatprep.subr.mxu0 0.0
    %7932 = vmatpush1.msra.mxu0 %v7837
    %7933 = vmatprep.subr.mxu0 0.0
    %7934 = vmatpush1.msra.mxu0 %v7838
    %7935 = vmatprep.subr.mxu0 0.0
    %7936 = vmatpush1.msra.mxu0 %v7839
    %7937 = vmatprep.subr.mxu0 0.0
    %7938 = vmatpush1.msra.mxu0 %v7840
    %7939 = vmatprep.subr.mxu0 0.0
    %7940 = vmatpush1.msra.mxu0 %v7841
    %7941 = vmatprep.subr.mxu0 0.0
    %7942 = vmatpush1.msra.mxu0 %v7842
    %7943 = vmatprep.subr.mxu0 0.0
    %7944 = vmatpush1.msra.mxu0 %v7843
    %7945 = vmatprep.subr.mxu0 0.0
    %7946 = vmatpush1.msra.mxu0 %v7844
    %7947 = vmatprep.subr.mxu0 0.0
    %7948 = vmatpush1.msra.mxu0 %v7845
    %7949 = vmatprep.subr.mxu0 0.0
    %7950 = vmatpush1.msra.mxu0 %v7846
    %7951 = vmatprep.subr.mxu0 0.0
    %7952 = vmatpush1.msra.mxu0 0.0
    %7953 = vmatprep.subr.mxu0 0.0
    %7954 = vmatpush1.msra.mxu0 0.0
    %7955 = vmatprep.subr.mxu0 0.0
    %7956 = vmatpush1.msra.mxu0 0.0
    %7957 = vmatprep.subr.mxu0 0.0
    %7958 = vmatpush1.msra.mxu0 0.0
    %7959 = vmatprep.subr.mxu0 0.0
    %7960 = vmatpush1.msra.mxu0 0.0
    %7961 = vmatprep.subr.mxu0 0.0
    %7962 = vmatpush1.msra.mxu0 0.0
    %7963 = vmatprep.subr.mxu0 0.0
    %7964 = vmatpush1.msra.mxu0 0.0
    %7965 = vmatprep.subr.mxu0 0.0
    %7966 = vmatpush1.msra.mxu0 0.0
    %7967 = vmatprep.subr.mxu0 0.0
    %7968 = vmatpush1.msra.mxu0 0.0
    %7969 = vmatprep.subr.mxu0 0.0
    %7970 = vmatpush1.msra.mxu0 0.0
    %7971 = vmatprep.subr.mxu0 0.0
    %7972 = vmatpush1.msra.mxu0 0.0
    %7973 = vmatprep.subr.mxu0 0.0
    %7974 = vmatpush1.msra.mxu0 0.0
    %7975 = vmatprep.subr.mxu0 0.0
    %7976 = vmatpush1.msra.mxu0 0.0
    %7977 = vmatprep.subr.mxu0 0.0
    %7978 = vmatpush1.msra.mxu0 0.0
    %7979 = vmatprep.subr.mxu0 0.0
    %7980 = vmatpush1.msra.mxu0 0.0
    %7981 = vmatprep.mubr.f32.mxu0 %v6900
    %7982 = vmatmul.mubr.f32.gmra.mrb[0].mxu0 %v6847
    %v7983 = vpop.f32.mrb[0].mxu0
    %v7984 = vadd.f32 %v7914, %v7983
    %v7985 = vpop.f32.mrb[0].mxu0
    %7986 = vdwg.mxu0
    %v7987 = vsel %vm7042, %v7984, 0.0
    %7988 = vadd.xlane.f32.xlu0 %v7987
    %v7989 = vpop.xlane.xlu0 %7988
    %v7990 = vmul.f32 %v7989, 0.010204081
    %v7991 = vadd.f32 %v7990, 1e-05
    %v7992 = vrsqrt.pop %v7991
    %7993 = vmatprep.subr.mxu0 0.0
    %7994 = vmatpush1.msra.mxu0 %v7992
    %7995 = vmatprep.subr.mxu0 0.0
    %7996 = vmatpush1.msra.mxu0 0.0
    %7997 = vmatprep.subr.mxu0 0.0
    %7998 = vmatpush1.msra.mxu0 0.0
    %7999 = vmatprep.subr.mxu0 0.0
    %8000 = vmatpush1.msra.mxu0 0.0
    %8001 = vmatprep.subr.mxu0 0.0
    %8002 = vmatpush1.msra.mxu0 0.0
    %8003 = vmatprep.subr.mxu0 0.0
    %8004 = vmatpush1.msra.mxu0 0.0
    %8005 = vmatprep.subr.mxu0 0.0
    %8006 = vmatpush1.msra.mxu0 0.0
    %8007 = vmatprep.subr.mxu0 0.0
    %8008 = vmatpush1.msra.mxu0 0.0
    %8009 = vmatprep.subr.mxu0 0.0
    %8010 = vmatpush1.msra.mxu0 0.0
    %8011 = vmatprep.subr.mxu0 0.0
    %8012 = vmatpush1.msra.mxu0 0.0
    %8013 = vmatprep.subr.mxu0 0.0
    %8014 = vmatpush1.msra.mxu0 0.0
    %8015 = vmatprep.subr.mxu0 0.0
    %8016 = vmatpush1.msra.mxu0 0.0
    %8017 = vmatprep.subr.mxu0 0.0
    %8018 = vmatpush1.msra.mxu0 0.0
    %8019 = vmatprep.subr.mxu0 0.0
    %8020 = vmatpush1.msra.mxu0 0.0
    %8021 = vmatprep.subr.mxu0 0.0
    %8022 = vmatpush1.msra.mxu0 0.0
    %8023 = vmatprep.subr.mxu0 0.0
    %8024 = vmatpush1.msra.mxu0 0.0
    %8025 = vmatprep.subr.mxu0 0.0
    %8026 = vmatpush1.msra.mxu0 0.0
    %8027 = vmatprep.subr.mxu0 0.0
    %8028 = vmatpush1.msra.mxu0 0.0
    %8029 = vmatprep.subr.mxu0 0.0
    %8030 = vmatpush1.msra.mxu0 0.0
    %8031 = vmatprep.subr.mxu0 0.0
    %8032 = vmatpush1.msra.mxu0 0.0
    %8033 = vmatprep.subr.mxu0 0.0
    %8034 = vmatpush1.msra.mxu0 0.0
    %8035 = vmatprep.subr.mxu0 0.0
    %8036 = vmatpush1.msra.mxu0 0.0
    %8037 = vmatprep.subr.mxu0 0.0
    %8038 = vmatpush1.msra.mxu0 0.0
    %8039 = vmatprep.subr.mxu0 0.0
    %8040 = vmatpush1.msra.mxu0 0.0
    %8041 = vmatprep.subr.mxu0 0.0
    %8042 = vmatpush1.msra.mxu0 0.0
    %8043 = vmatprep.subr.mxu0 0.0
    %8044 = vmatpush1.msra.mxu0 0.0
    %8045 = vmatprep.subr.mxu0 0.0
    %8046 = vmatpush1.msra.mxu0 0.0
    %8047 = vmatprep.subr.mxu0 0.0
    %8048 = vmatpush1.msra.mxu0 0.0
    %8049 = vmatprep.subr.mxu0 0.0
    %8050 = vmatpush1.msra.mxu0 0.0
    %8051 = vmatprep.subr.mxu0 0.0
    %8052 = vmatpush1.msra.mxu0 0.0
    %8053 = vmatprep.subr.mxu0 0.0
    %8054 = vmatpush1.msra.mxu0 0.0
    %8055 = vmatprep.subr.mxu0 0.0
    %8056 = vmatpush1.msra.mxu0 0.0
    %8057 = vmatprep.mubr.f32.mxu0 0.0
    %8058 = vmatmul.mubr.f32.gmra.mrb[0].mxu0 %v7048
    %v8059 = vpop.f32.mrb[0].mxu0
    %v8060 = vadd.f32 0.0, %v8059
    %v8061 = vpop.f32.mrb[0].mxu0
    %8062 = vmatprep.mubr.f32.mxu0 0.0
    %8063 = vmatmul.mubr.f32.gmra.mrb[0].mxu0 %v7051
    %v8064 = vpop.f32.mrb[0].mxu0
    %v8065 = vadd.f32 0.0, %v8064
    %v8066 = vpop.f32.mrb[0].mxu0
    %8067 = vmatprep.mubr.f32.mxu0 0.0
    %8068 = vmatmul.mubr.f32.gmra.mrb[0].mxu0 %v7054
    %v8069 = vpop.f32.mrb[0].mxu0
    %v8070 = vadd.f32 0.0, %v8069
    %v8071 = vpop.f32.mrb[0].mxu0
    %8072 = vmatprep.mubr.f32.mxu0 0.0
    %8073 = vmatmul.mubr.f32.gmra.mrb[0].mxu0 %v7057
    %v8074 = vpop.f32.mrb[0].mxu0
    %v8075 = vadd.f32 0.0, %v8074
    %v8076 = vpop.f32.mrb[0].mxu0
    %8077 = vmatprep.mubr.f32.mxu0 0.0
    %8078 = vmatmul.mubr.f32.gmra.mrb[0].mxu0 %v7060
    %v8079 = vpop.f32.mrb[0].mxu0
    %v8080 = vadd.f32 0.0, %v8079
    %v8081 = vpop.f32.mrb[0].mxu0
    %8082 = vmatprep.mubr.f32.mxu0 0.0
    %8083 = vmatmul.mubr.f32.gmra.mrb[0].mxu0 %v7063
    %v8084 = vpop.f32.mrb[0].mxu0
    %v8085 = vadd.f32 0.0, %v8084
    %v8086 = vpop.f32.mrb[0].mxu0
    %8087 = vmatprep.mubr.f32.mxu0 0.0
    %8088 = vmatmul.mubr.f32.gmra.mrb[0].mxu0 %v7066
    %v8089 = vpop.f32.mrb[0].mxu0
    %v8090 = vadd.f32 0.0, %v8089
    %v8091 = vpop.f32.mrb[0].mxu0
    %8092 = vmatprep.mubr.f32.mxu0 0.0
    %8093 = vmatmul.mubr.f32.gmra.mrb[0].mxu0 %v7069
    %v8094 = vpop.f32.mrb[0].mxu0
    %v8095 = vadd.f32 0.0, %v8094
    %v8096 = vpop.f32.mrb[0].mxu0
    %8097 = vmatprep.mubr.f32.mxu0 0.0
    %8098 = vmatmul.mubr.f32.gmra.mrb[0].mxu0 %v7072
    %v8099 = vpop.f32.mrb[0].mxu0
    %v8100 = vadd.f32 0.0, %v8099
    %v8101 = vpop.f32.mrb[0].mxu0
    %8102 = vmatprep.mubr.f32.mxu0 0.0
    %8103 = vmatmul.mubr.f32.gmra.mrb[0].mxu0 %v7075
    %v8104 = vpop.f32.mrb[0].mxu0
    %v8105 = vadd.f32 0.0, %v8104
    %v8106 = vpop.f32.mrb[0].mxu0
    %8107 = vmatprep.mubr.f32.mxu0 0.0
    %8108 = vmatmul.mubr.f32.gmra.mrb[0].mxu0 %v7078
    %v8109 = vpop.f32.mrb[0].mxu0
    %v8110 = vadd.f32 0.0, %v8109
    %v8111 = vpop.f32.mrb[0].mxu0
    %8112 = vmatprep.mubr.f32.mxu0 0.0
    %8113 = vmatmul.mubr.f32.gmra.mrb[0].mxu0 %v7081
    %v8114 = vpop.f32.mrb[0].mxu0
    %v8115 = vadd.f32 0.0, %v8114
    %v8116 = vpop.f32.mrb[0].mxu0
    %8117 = vmatprep.mubr.f32.mxu0 0.0
    %8118 = vmatmul.mubr.f32.gmra.mrb[0].mxu0 %v7084
    %v8119 = vpop.f32.mrb[0].mxu0
    %v8120 = vadd.f32 0.0, %v8119
    %v8121 = vpop.f32.mrb[0].mxu0
    %8122 = vmatprep.mubr.f32.mxu0 0.0
    %8123 = vmatmul.mubr.f32.gmra.mrb[0].mxu0 %v7087
    %v8124 = vpop.f32.mrb[0].mxu0
    %v8125 = vadd.f32 0.0, %v8124
    %v8126 = vpop.f32.mrb[0].mxu0
    %8127 = vmatprep.mubr.f32.mxu0 0.0
    %8128 = vmatmul.mubr.f32.gmra.mrb[0].mxu0 %v7090
    %v8129 = vpop.f32.mrb[0].mxu0
    %v8130 = vadd.f32 0.0, %v8129
    %v8131 = vpop.f32.mrb[0].mxu0
    %8132 = vmatprep.mubr.f32.mxu0 0.0
    %8133 = vmatmul.mubr.f32.gmra.mrb[0].mxu0 %v7093
    %v8134 = vpop.f32.mrb[0].mxu0
    %v8135 = vadd.f32 0.0, %v8134
    %v8136 = vpop.f32.mrb[0].mxu0
    %8137 = vmatprep.mubr.f32.mxu0 0.0
    %8138 = vmatmul.mubr.f32.gmra.mrb[0].mxu0 %v7096
    %v8139 = vpop.f32.mrb[0].mxu0
    %v8140 = vadd.f32 0.0, %v8139
    %v8141 = vpop.f32.mrb[0].mxu0
    %8142 = vmatprep.mubr.f32.mxu0 0.0
    %8143 = vmatmul.mubr.f32.gmra.mrb[0].mxu0 %v7099
    %v8144 = vpop.f32.mrb[0].mxu0
    %v8145 = vadd.f32 0.0, %v8144
    %v8146 = vpop.f32.mrb[0].mxu0
    %8147 = vmatprep.mubr.f32.mxu0 0.0
    %8148 = vmatmul.mubr.f32.gmra.mrb[0].mxu0 %v7102
    %v8149 = vpop.f32.mrb[0].mxu0
    %v8150 = vadd.f32 0.0, %v8149
    %v8151 = vpop.f32.mrb[0].mxu0
    %8152 = vmatprep.mubr.f32.mxu0 0.0
    %8153 = vmatmul.mubr.f32.gmra.mrb[0].mxu0 %v7105
    %v8154 = vpop.f32.mrb[0].mxu0
    %v8155 = vadd.f32 0.0, %v8154
    %v8156 = vpop.f32.mrb[0].mxu0
    %8157 = vmatprep.mubr.f32.mxu0 0.0
    %8158 = vmatmul.mubr.f32.gmra.mrb[0].mxu0 %v7108
    %v8159 = vpop.f32.mrb[0].mxu0
    %v8160 = vadd.f32 0.0, %v8159
    %v8161 = vpop.f32.mrb[0].mxu0
    %8162 = vmatprep.mubr.f32.mxu0 0.0
    %8163 = vmatmul.mubr.f32.gmra.mrb[0].mxu0 %v7111
    %v8164 = vpop.f32.mrb[0].mxu0
    %v8165 = vadd.f32 0.0, %v8164
    %v8166 = vpop.f32.mrb[0].mxu0
    %8167 = vmatprep.mubr.f32.mxu0 0.0
    %8168 = vmatmul.mubr.f32.gmra.mrb[0].mxu0 %v7114
    %v8169 = vpop.f32.mrb[0].mxu0
    %v8170 = vadd.f32 0.0, %v8169
    %v8171 = vpop.f32.mrb[0].mxu0
    %8172 = vmatprep.mubr.f32.mxu0 0.0
    %8173 = vmatmul.mubr.f32.gmra.mrb[0].mxu0 %v7117
    %v8174 = vpop.f32.mrb[0].mxu0
    %v8175 = vadd.f32 0.0, %v8174
    %v8176 = vpop.f32.mrb[0].mxu0
    %8177 = vmatprep.mubr.f32.mxu0 0.0
    %8178 = vmatmul.mubr.f32.gmra.mrb[0].mxu0 %v7120
    %v8179 = vpop.f32.mrb[0].mxu0
    %v8180 = vadd.f32 0.0, %v8179
    %v8181 = vpop.f32.mrb[0].mxu0
    %8182 = vmatprep.mubr.f32.mxu0 0.0
    %8183 = vmatmul.mubr.f32.gmra.mrb[0].mxu0 %v7123
    %v8184 = vpop.f32.mrb[0].mxu0
    %v8185 = vadd.f32 0.0, %v8184
    %v8186 = vpop.f32.mrb[0].mxu0
    %8187 = vmatprep.mubr.f32.mxu0 0.0
    %8188 = vmatmul.mubr.f32.gmra.mrb[0].mxu0 %v7126
    %v8189 = vpop.f32.mrb[0].mxu0
    %v8190 = vadd.f32 0.0, %v8189
    %v8191 = vpop.f32.mrb[0].mxu0
    %8192 = vmatprep.mubr.f32.mxu0 0.0
    %8193 = vmatmul.mubr.f32.gmra.mrb[0].mxu0 %v7129
    %v8194 = vpop.f32.mrb[0].mxu0
    %v8195 = vadd.f32 0.0, %v8194
    %v8196 = vpop.f32.mrb[0].mxu0
    %8197 = vmatprep.mubr.f32.mxu0 0.0
    %8198 = vmatmul.mubr.f32.gmra.mrb[0].mxu0 %v7132
    %v8199 = vpop.f32.mrb[0].mxu0
    %v8200 = vadd.f32 0.0, %v8199
    %v8201 = vpop.f32.mrb[0].mxu0
    %8202 = vmatprep.mubr.f32.mxu0 0.0
    %8203 = vmatmul.mubr.f32.gmra.mrb[0].mxu0 %v7135
    %v8204 = vpop.f32.mrb[0].mxu0
    %v8205 = vadd.f32 0.0, %v8204
    %v8206 = vpop.f32.mrb[0].mxu0
    %8207 = vmatprep.mubr.f32.mxu0 0.0
    %8208 = vmatmul.mubr.f32.gmra.mrb[0].mxu0 %v7138
    %v8209 = vpop.f32.mrb[0].mxu0
    %v8210 = vadd.f32 0.0, %v8209
    %v8211 = vpop.f32.mrb[0].mxu0
    %8212 = vmatprep.mubr.f32.mxu0 0.0
    %8213 = vmatmul.mubr.f32.gmra.mrb[0].mxu0 %v7141
    %v8214 = vpop.f32.mrb[0].mxu0
    %v8215 = vadd.f32 0.0, %v8214
    %v8216 = vpop.f32.mrb[0].mxu0
    %8217 = vmatprep.mubr.f32.mxu0 0.0
    %8218 = vmatmul.mubr.f32.gmra.mrb[0].mxu0 %v7144
    %v8219 = vpop.f32.mrb[0].mxu0
    %v8220 = vadd.f32 0.0, %v8219
    %v8221 = vpop.f32.mrb[0].mxu0
    %8222 = vmatprep.mubr.f32.mxu0 0.0
    %8223 = vmatmul.mubr.f32.gmra.mrb[0].mxu0 %v7147
    %v8224 = vpop.f32.mrb[0].mxu0
    %v8225 = vadd.f32 0.0, %v8224
    %v8226 = vpop.f32.mrb[0].mxu0
    %8227 = vmatprep.mubr.f32.mxu0 0.0
    %8228 = vmatmul.mubr.f32.gmra.mrb[0].mxu0 %v7150
    %v8229 = vpop.f32.mrb[0].mxu0
    %v8230 = vadd.f32 0.0, %v8229
    %v8231 = vpop.f32.mrb[0].mxu0
    %8232 = vmatprep.mubr.f32.mxu0 0.0
    %8233 = vmatmul.mubr.f32.gmra.mrb[0].mxu0 %v7153
    %v8234 = vpop.f32.mrb[0].mxu0
    %v8235 = vadd.f32 0.0, %v8234
    %v8236 = vpop.f32.mrb[0].mxu0
    %8237 = vmatprep.mubr.f32.mxu0 0.0
    %8238 = vmatmul.mubr.f32.gmra.mrb[0].mxu0 %v7156
    %v8239 = vpop.f32.mrb[0].mxu0
    %v8240 = vadd.f32 0.0, %v8239
    %v8241 = vpop.f32.mrb[0].mxu0
    %8242 = vmatprep.mubr.f32.mxu0 0.0
    %8243 = vmatmul.mubr.f32.gmra.mrb[0].mxu0 %v7159
    %v8244 = vpop.f32.mrb[0].mxu0
    %v8245 = vadd.f32 0.0, %v8244
    %v8246 = vpop.f32.mrb[0].mxu0
    %8247 = vmatprep.mubr.f32.mxu0 0.0
    %8248 = vmatmul.mubr.f32.gmra.mrb[0].mxu0 %v7162
    %v8249 = vpop.f32.mrb[0].mxu0
    %v8250 = vadd.f32 0.0, %v8249
    %v8251 = vpop.f32.mrb[0].mxu0
    %8252 = vmatprep.mubr.f32.mxu0 0.0
    %8253 = vmatmul.mubr.f32.gmra.mrb[0].mxu0 %v7165
    %v8254 = vpop.f32.mrb[0].mxu0
    %v8255 = vadd.f32 0.0, %v8254
    %v8256 = vpop.f32.mrb[0].mxu0
    %8257 = vmatprep.mubr.f32.mxu0 0.0
    %8258 = vmatmul.mubr.f32.gmra.mrb[0].mxu0 %v7168
    %v8259 = vpop.f32.mrb[0].mxu0
    %v8260 = vadd.f32 0.0, %v8259
    %v8261 = vpop.f32.mrb[0].mxu0
    %8262 = vmatprep.mubr.f32.mxu0 0.0
    %8263 = vmatmul.mubr.f32.gmra.mrb[0].mxu0 %v7171
    %v8264 = vpop.f32.mrb[0].mxu0
    %v8265 = vadd.f32 0.0, %v8264
    %v8266 = vpop.f32.mrb[0].mxu0
    %8267 = vmatprep.mubr.f32.mxu0 0.0
    %8268 = vmatmul.mubr.f32.gmra.mrb[0].mxu0 %v7174
    %v8269 = vpop.f32.mrb[0].mxu0
    %v8270 = vadd.f32 0.0, %v8269
    %v8271 = vpop.f32.mrb[0].mxu0
    %8272 = vmatprep.mubr.f32.mxu0 0.0
    %8273 = vmatmul.mubr.f32.gmra.mrb[0].mxu0 %v7177
    %v8274 = vpop.f32.mrb[0].mxu0
    %v8275 = vadd.f32 0.0, %v8274
    %v8276 = vpop.f32.mrb[0].mxu0
    %8277 = vmatprep.mubr.f32.mxu0 0.0
    %8278 = vmatmul.mubr.f32.gmra.mrb[0].mxu0 %v7180
    %v8279 = vpop.f32.mrb[0].mxu0
    %v8280 = vadd.f32 0.0, %v8279
    %v8281 = vpop.f32.mrb[0].mxu0
    %8282 = vmatprep.mubr.f32.mxu0 0.0
    %8283 = vmatmul.mubr.f32.gmra.mrb[0].mxu0 %v7183
    %v8284 = vpop.f32.mrb[0].mxu0
    %v8285 = vadd.f32 0.0, %v8284
    %v8286 = vpop.f32.mrb[0].mxu0
    %8287 = vmatprep.mubr.f32.mxu0 0.0
    %8288 = vmatmul.mubr.f32.gmra.mrb[0].mxu0 %v7186
    %v8289 = vpop.f32.mrb[0].mxu0
    %v8290 = vadd.f32 0.0, %v8289
    %v8291 = vpop.f32.mrb[0].mxu0
    %8292 = vmatprep.mubr.f32.mxu0 0.0
    %8293 = vmatmul.mubr.f32.gmra.mrb[0].mxu0 %v7189
    %v8294 = vpop.f32.mrb[0].mxu0
    %v8295 = vadd.f32 0.0, %v8294
    %v8296 = vpop.f32.mrb[0].mxu0
    %8297 = vmatprep.mubr.f32.mxu0 0.0
    %8298 = vmatmul.mubr.f32.gmra.mrb[0].mxu0 %v7192
    %v8299 = vpop.f32.mrb[0].mxu0
    %v8300 = vadd.f32 0.0, %v8299
    %v8301 = vpop.f32.mrb[0].mxu0
    %8302 = vdwg.mxu0
    %8304 = vset.pattern.permute.xlu0 0
    %8305 = vperm.xlu0 %8304, %v8060
    %v8306 = vpop.permute.xlu0 %8305
    %8309 = vset.pattern.permute.xlu0 0
    %8310 = vperm.xlu0 %8309, %v8065
    %v8311 = vpop.permute.xlu0 %8310
    %8314 = vset.pattern.permute.xlu0 0
    %8315 = vperm.xlu0 %8314, %v8070
    %v8316 = vpop.permute.xlu0 %8315
    %8319 = vset.pattern.permute.xlu0 0
    %8320 = vperm.xlu0 %8319, %v8075
    %v8321 = vpop.permute.xlu0 %8320
    %8324 = vset.pattern.permute.xlu0 0
    %8325 = vperm.xlu0 %8324, %v8080
    %v8326 = vpop.permute.xlu0 %8325
    %8329 = vset.pattern.permute.xlu0 0
    %8330 = vperm.xlu0 %8329, %v8085
    %v8331 = vpop.permute.xlu0 %8330
    %8334 = vset.pattern.permute.xlu0 0
    %8335 = vperm.xlu0 %8334, %v8090
    %v8336 = vpop.permute.xlu0 %8335
    %8339 = vset.pattern.permute.xlu0 0
    %8340 = vperm.xlu0 %8339, %v8095
    %v8341 = vpop.permute.xlu0 %8340
    %8344 = vset.pattern.permute.xlu0 0
    %8345 = vperm.xlu0 %8344, %v8100
    %v8346 = vpop.permute.xlu0 %8345
    %8349 = vset.pattern.permute.xlu0 0
    %8350 = vperm.xlu0 %8349, %v8105
    %v8351 = vpop.permute.xlu0 %8350
    %8354 = vset.pattern.permute.xlu0 0
    %8355 = vperm.xlu0 %8354, %v8110
    %v8356 = vpop.permute.xlu0 %8355
    %8359 = vset.pattern.permute.xlu0 0
    %8360 = vperm.xlu0 %8359, %v8115
    %v8361 = vpop.permute.xlu0 %8360
    %8364 = vset.pattern.permute.xlu0 0
    %8365 = vperm.xlu0 %8364, %v8120
    %v8366 = vpop.permute.xlu0 %8365
    %8369 = vset.pattern.permute.xlu0 0
    %8370 = vperm.xlu0 %8369, %v8125
    %v8371 = vpop.permute.xlu0 %8370
    %8374 = vset.pattern.permute.xlu0 0
    %8375 = vperm.xlu0 %8374, %v8130
    %v8376 = vpop.permute.xlu0 %8375
    %8379 = vset.pattern.permute.xlu0 0
    %8380 = vperm.xlu0 %8379, %v8135
    %v8381 = vpop.permute.xlu0 %8380
    %8384 = vset.pattern.permute.xlu0 0
    %8385 = vperm.xlu0 %8384, %v8140
    %v8386 = vpop.permute.xlu0 %8385
    %8389 = vset.pattern.permute.xlu0 0
    %8390 = vperm.xlu0 %8389, %v8145
    %v8391 = vpop.permute.xlu0 %8390
    %8394 = vset.pattern.permute.xlu0 0
    %8395 = vperm.xlu0 %8394, %v8150
    %v8396 = vpop.permute.xlu0 %8395
    %8399 = vset.pattern.permute.xlu0 0
    %8400 = vperm.xlu0 %8399, %v8155
    %v8401 = vpop.permute.xlu0 %8400
    %8404 = vset.pattern.permute.xlu0 0
    %8405 = vperm.xlu0 %8404, %v8160
    %v8406 = vpop.permute.xlu0 %8405
    %8409 = vset.pattern.permute.xlu0 0
    %8410 = vperm.xlu0 %8409, %v8165
    %v8411 = vpop.permute.xlu0 %8410
    %8414 = vset.pattern.permute.xlu0 0
    %8415 = vperm.xlu0 %8414, %v8170
    %v8416 = vpop.permute.xlu0 %8415
    %8419 = vset.pattern.permute.xlu0 0
    %8420 = vperm.xlu0 %8419, %v8175
    %v8421 = vpop.permute.xlu0 %8420
    %8424 = vset.pattern.permute.xlu0 0
    %8425 = vperm.xlu0 %8424, %v8180
    %v8426 = vpop.permute.xlu0 %8425
    %8429 = vset.pattern.permute.xlu0 0
    %8430 = vperm.xlu0 %8429, %v8185
    %v8431 = vpop.permute.xlu0 %8430
    %8434 = vset.pattern.permute.xlu0 0
    %8435 = vperm.xlu0 %8434, %v8190
    %v8436 = vpop.permute.xlu0 %8435
    %8439 = vset.pattern.permute.xlu0 0
    %8440 = vperm.xlu0 %8439, %v8195
    %v8441 = vpop.permute.xlu0 %8440
    %8444 = vset.pattern.permute.xlu0 0
    %8445 = vperm.xlu0 %8444, %v8200
    %v8446 = vpop.permute.xlu0 %8445
    %8449 = vset.pattern.permute.xlu0 0
    %8450 = vperm.xlu0 %8449, %v8205
    %v8451 = vpop.permute.xlu0 %8450
    %8454 = vset.pattern.permute.xlu0 0
    %8455 = vperm.xlu0 %8454, %v8210
    %v8456 = vpop.permute.xlu0 %8455
    %8459 = vset.pattern.permute.xlu0 0
    %8460 = vperm.xlu0 %8459, %v8215
    %v8461 = vpop.permute.xlu0 %8460
    %8464 = vset.pattern.permute.xlu0 0
    %8465 = vperm.xlu0 %8464, %v8220
    %v8466 = vpop.permute.xlu0 %8465
    %8469 = vset.pattern.permute.xlu0 0
    %8470 = vperm.xlu0 %8469, %v8225
    %v8471 = vpop.permute.xlu0 %8470
    %8474 = vset.pattern.permute.xlu0 0
    %8475 = vperm.xlu0 %8474, %v8230
    %v8476 = vpop.permute.xlu0 %8475
    %8479 = vset.pattern.permute.xlu0 0
    %8480 = vperm.xlu0 %8479, %v8235
    %v8481 = vpop.permute.xlu0 %8480
    %8484 = vset.pattern.permute.xlu0 0
    %8485 = vperm.xlu0 %8484, %v8240
    %v8486 = vpop.permute.xlu0 %8485
    %8489 = vset.pattern.permute.xlu0 0
    %8490 = vperm.xlu0 %8489, %v8245
    %v8491 = vpop.permute.xlu0 %8490
    %8494 = vset.pattern.permute.xlu0 0
    %8495 = vperm.xlu0 %8494, %v8250
    %v8496 = vpop.permute.xlu0 %8495
    %8499 = vset.pattern.permute.xlu0 0
    %8500 = vperm.xlu0 %8499, %v8255
    %v8501 = vpop.permute.xlu0 %8500
    %8504 = vset.pattern.permute.xlu0 0
    %8505 = vperm.xlu0 %8504, %v8260
    %v8506 = vpop.permute.xlu0 %8505
    %8509 = vset.pattern.permute.xlu0 0
    %8510 = vperm.xlu0 %8509, %v8265
    %v8511 = vpop.permute.xlu0 %8510
    %8514 = vset.pattern.permute.xlu0 0
    %8515 = vperm.xlu0 %8514, %v8270
    %v8516 = vpop.permute.xlu0 %8515
    %8519 = vset.pattern.permute.xlu0 0
    %8520 = vperm.xlu0 %8519, %v8275
    %v8521 = vpop.permute.xlu0 %8520
    %8524 = vset.pattern.permute.xlu0 0
    %8525 = vperm.xlu0 %8524, %v8280
    %v8526 = vpop.permute.xlu0 %8525
    %8529 = vset.pattern.permute.xlu0 0
    %8530 = vperm.xlu0 %8529, %v8285
    %v8531 = vpop.permute.xlu0 %8530
    %8534 = vset.pattern.permute.xlu0 0
    %8535 = vperm.xlu0 %8534, %v8290
    %v8536 = vpop.permute.xlu0 %8535
    %8539 = vset.pattern.permute.xlu0 0
    %8540 = vperm.xlu0 %8539, %v8295
    %v8541 = vpop.permute.xlu0 %8540
    %8544 = vset.pattern.permute.xlu0 0
    %8545 = vperm.xlu0 %8544, %v8300
    %v8546 = vpop.permute.xlu0 %8545
    %v8548 = vmul.f32 %v7749, %v8306
    %v8549 = vmul.f32 %v7750, %v8311
    %v8550 = vmul.f32 %v7751, %v8316
    %v8551 = vmul.f32 %v7752, %v8321
    %v8552 = vmul.f32 %v7753, %v8326
    %v8553 = vmul.f32 %v7754, %v8331
    %v8554 = vmul.f32 %v7755, %v8336
    %v8555 = vmul.f32 %v7756, %v8341
    %v8556 = vmul.f32 %v7757, %v8346
    %v8557 = vmul.f32 %v7758, %v8351
    %v8558 = vmul.f32 %v7759, %v8356
    %v8559 = vmul.f32 %v7760, %v8361
    %v8560 = vmul.f32 %v7761, %v8366
    %v8561 = vmul.f32 %v7762, %v8371
    %v8562 = vmul.f32 %v7763, %v8376
    %v8563 = vmul.f32 %v7764, %v8381
    %v8564 = vmul.f32 %v7765, %v8386
    %v8565 = vmul.f32 %v7766, %v8391
    %v8566 = vmul.f32 %v7767, %v8396
    %v8567 = vmul.f32 %v7768, %v8401
    %v8568 = vmul.f32 %v7769, %v8406
    %v8569 = vmul.f32 %v7770, %v8411
    %v8570 = vmul.f32 %v7771, %v8416
    %v8571 = vmul.f32 %v7772, %v8421
    %v8572 = vmul.f32 %v7773, %v8426
    %v8573 = vmul.f32 %v7774, %v8431
    %v8574 = vmul.f32 %v7775, %v8436
    %v8575 = vmul.f32 %v7776, %v8441
    %v8576 = vmul.f32 %v7777, %v8446
    %v8577 = vmul.f32 %v7778, %v8451
    %v8578 = vmul.f32 %v7779, %v8456
    %v8579 = vmul.f32 %v7780, %v8461
    %v8580 = vmul.f32 %v7781, %v8466
    %v8581 = vmul.f32 %v7782, %v8471
    %v8582 = vmul.f32 %v7783, %v8476
    %v8583 = vmul.f32 %v7784, %v8481
    %v8584 = vmul.f32 %v7785, %v8486
    %v8585 = vmul.f32 %v7786, %v8491
    %v8586 = vmul.f32 %v7787, %v8496
    %v8587 = vmul.f32 %v7788, %v8501
    %v8588 = vmul.f32 %v7789, %v8506
    %v8589 = vmul.f32 %v7790, %v8511
    %v8590 = vmul.f32 %v7791, %v8516
    %v8591 = vmul.f32 %v7792, %v8521
    %v8592 = vmul.f32 %v7793, %v8526
    %v8593 = vmul.f32 %v7794, %v8531
    %v8594 = vmul.f32 %v7795, %v8536
    %v8595 = vmul.f32 %v7796, %v8541
    %v8596 = vmul.f32 %v7797, %v8546
    %vm8597 = vcmp.gt.f32.partialorder %v8548, 0.0
    %vm8598 = vcmp.gt.f32.partialorder %v8549, 0.0
    %vm8599 = vcmp.gt.f32.partialorder %v8550, 0.0
    %vm8600 = vcmp.gt.f32.partialorder %v8551, 0.0
    %vm8601 = vcmp.gt.f32.partialorder %v8552, 0.0
    %vm8602 = vcmp.gt.f32.partialorder %v8553, 0.0
    %vm8603 = vcmp.gt.f32.partialorder %v8554, 0.0
    %vm8604 = vcmp.gt.f32.partialorder %v8555, 0.0
    %vm8605 = vcmp.gt.f32.partialorder %v8556, 0.0
    %vm8606 = vcmp.gt.f32.partialorder %v8557, 0.0
    %vm8607 = vcmp.gt.f32.partialorder %v8558, 0.0
    %vm8608 = vcmp.gt.f32.partialorder %v8559, 0.0
    %vm8609 = vcmp.gt.f32.partialorder %v8560, 0.0
    %vm8610 = vcmp.gt.f32.partialorder %v8561, 0.0
    %vm8611 = vcmp.gt.f32.partialorder %v8562, 0.0
    %vm8612 = vcmp.gt.f32.partialorder %v8563, 0.0
    %vm8613 = vcmp.gt.f32.partialorder %v8564, 0.0
    %vm8614 = vcmp.gt.f32.partialorder %v8565, 0.0
    %vm8615 = vcmp.gt.f32.partialorder %v8566, 0.0
    %vm8616 = vcmp.gt.f32.partialorder %v8567, 0.0
    %vm8617 = vcmp.gt.f32.partialorder %v8568, 0.0
    %vm8618 = vcmp.gt.f32.partialorder %v8569, 0.0
    %vm8619 = vcmp.gt.f32.partialorder %v8570, 0.0
    %vm8620 = vcmp.gt.f32.partialorder %v8571, 0.0
    %vm8621 = vcmp.gt.f32.partialorder %v8572, 0.0
    %vm8622 = vcmp.gt.f32.partialorder %v8573, 0.0
    %vm8623 = vcmp.gt.f32.partialorder %v8574, 0.0
    %vm8624 = vcmp.gt.f32.partialorder %v8575, 0.0
    %vm8625 = vcmp.gt.f32.partialorder %v8576, 0.0
    %vm8626 = vcmp.gt.f32.partialorder %v8577, 0.0
    %vm8627 = vcmp.gt.f32.partialorder %v8578, 0.0
    %vm8628 = vcmp.gt.f32.partialorder %v8579, 0.0
    %vm8629 = vcmp.gt.f32.partialorder %v8580, 0.0
    %vm8630 = vcmp.gt.f32.partialorder %v8581, 0.0
    %vm8631 = vcmp.gt.f32.partialorder %v8582, 0.0
    %vm8632 = vcmp.gt.f32.partialorder %v8583, 0.0
    %vm8633 = vcmp.gt.f32.partialorder %v8584, 0.0
    %vm8634 = vcmp.gt.f32.partialorder %v8585, 0.0
    %vm8635 = vcmp.gt.f32.partialorder %v8586, 0.0
    %vm8636 = vcmp.gt.f32.partialorder %v8587, 0.0
    %vm8637 = vcmp.gt.f32.partialorder %v8588, 0.0
    %vm8638 = vcmp.gt.f32.partialorder %v8589, 0.0
    %vm8639 = vcmp.gt.f32.partialorder %v8590, 0.0
    %vm8640 = vcmp.gt.f32.partialorder %v8591, 0.0
    %vm8641 = vcmp.gt.f32.partialorder %v8592, 0.0
    %vm8642 = vcmp.gt.f32.partialorder %v8593, 0.0
    %vm8643 = vcmp.gt.f32.partialorder %v8594, 0.0
    %vm8644 = vcmp.gt.f32.partialorder %v8595, 0.0
    %vm8645 = vcmp.gt.f32.partialorder %v8596, 0.0
    %v8646 = vmul.f32 %v8548, 0.2
    %v8647 = vmul.f32 %v8549, 0.2
    %v8648 = vmul.f32 %v8550, 0.2
    %v8649 = vmul.f32 %v8551, 0.2
    %v8650 = vmul.f32 %v8552, 0.2
    %v8651 = vmul.f32 %v8553, 0.2
    %v8652 = vmul.f32 %v8554, 0.2
    %v8653 = vmul.f32 %v8555, 0.2
    %v8654 = vmul.f32 %v8556, 0.2
    %v8655 = vmul.f32 %v8557, 0.2
    %v8656 = vmul.f32 %v8558, 0.2
    %v8657 = vmul.f32 %v8559, 0.2
    %v8658 = vmul.f32 %v8560, 0.2
    %v8659 = vmul.f32 %v8561, 0.2
    %v8660 = vmul.f32 %v8562, 0.2
    %v8661 = vmul.f32 %v8563, 0.2
    %v8662 = vmul.f32 %v8564, 0.2
    %v8663 = vmul.f32 %v8565, 0.2
    %v8664 = vmul.f32 %v8566, 0.2
    %v8665 = vmul.f32 %v8567, 0.2
    %v8666 = vmul.f32 %v8568, 0.2
    %v8667 = vmul.f32 %v8569, 0.2
    %v8668 = vmul.f32 %v8570, 0.2
    %v8669 = vmul.f32 %v8571, 0.2
    %v8670 = vmul.f32 %v8572, 0.2
    %v8671 = vmul.f32 %v8573, 0.2
    %v8672 = vmul.f32 %v8574, 0.2
    %v8673 = vmul.f32 %v8575, 0.2
    %v8674 = vmul.f32 %v8576, 0.2
    %v8675 = vmul.f32 %v8577, 0.2
    %v8676 = vmul.f32 %v8578, 0.2
    %v8677 = vmul.f32 %v8579, 0.2
    %v8678 = vmul.f32 %v8580, 0.2
    %v8679 = vmul.f32 %v8581, 0.2
    %v8680 = vmul.f32 %v8582, 0.2
    %v8681 = vmul.f32 %v8583, 0.2
    %v8682 = vmul.f32 %v8584, 0.2
    %v8683 = vmul.f32 %v8585, 0.2
    %v8684 = vmul.f32 %v8586, 0.2
    %v8685 = vmul.f32 %v8587, 0.2
    %v8686 = vmul.f32 %v8588, 0.2
    %v8687 = vmul.f32 %v8589, 0.2
    %v8688 = vmul.f32 %v8590, 0.2
    %v8689 = vmul.f32 %v8591, 0.2
    %v8690 = vmul.f32 %v8592, 0.2
    %v8691 = vmul.f32 %v8593, 0.2
    %v8692 = vmul.f32 %v8594, 0.2
    %v8693 = vmul.f32 %v8595, 0.2
    %v8694 = vmul.f32 %v8596, 0.2
    %v8695 = vsel %vm8597, %v8548, %v8646
    %v8696 = vsel %vm8598, %v8549, %v8647
    %v8697 = vsel %vm8599, %v8550, %v8648
    %v8698 = vsel %vm8600, %v8551, %v8649
    %v8699 = vsel %vm8601, %v8552, %v8650
    %v8700 = vsel %vm8602, %v8553, %v8651
    %v8701 = vsel %vm8603, %v8554, %v8652
    %v8702 = vsel %vm8604, %v8555, %v8653
    %v8703 = vsel %vm8605, %v8556, %v8654
    %v8704 = vsel %vm8606, %v8557, %v8655
    %v8705 = vsel %vm8607, %v8558, %v8656
    %v8706 = vsel %vm8608, %v8559, %v8657
    %v8707 = vsel %vm8609, %v8560, %v8658
    %v8708 = vsel %vm8610, %v8561, %v8659
    %v8709 = vsel %vm8611, %v8562, %v8660
    %v8710 = vsel %vm8612, %v8563, %v8661
    %v8711 = vsel %vm8613, %v8564, %v8662
    %v8712 = vsel %vm8614, %v8565, %v8663
    %v8713 = vsel %vm8615, %v8566, %v8664
    %v8714 = vsel %vm8616, %v8567, %v8665
    %v8715 = vsel %vm8617, %v8568, %v8666
    %v8716 = vsel %vm8618, %v8569, %v8667
    %v8717 = vsel %vm8619, %v8570, %v8668
    %v8718 = vsel %vm8620, %v8571, %v8669
    %v8719 = vsel %vm8621, %v8572, %v8670
    %v8720 = vsel %vm8622, %v8573, %v8671
    %v8721 = vsel %vm8623, %v8574, %v8672
    %v8722 = vsel %vm8624, %v8575, %v8673
    %v8723 = vsel %vm8625, %v8576, %v8674
    %v8724 = vsel %vm8626, %v8577, %v8675
    %v8725 = vsel %vm8627, %v8578, %v8676
    %v8726 = vsel %vm8628, %v8579, %v8677
    %v8727 = vsel %vm8629, %v8580, %v8678
    %v8728 = vsel %vm8630, %v8581, %v8679
    %v8729 = vsel %vm8631, %v8582, %v8680
    %v8730 = vsel %vm8632, %v8583, %v8681
    %v8731 = vsel %vm8633, %v8584, %v8682
    %v8732 = vsel %vm8634, %v8585, %v8683
    %v8733 = vsel %vm8635, %v8586, %v8684
    %v8734 = vsel %vm8636, %v8587, %v8685
    %v8735 = vsel %vm8637, %v8588, %v8686
    %v8736 = vsel %vm8638, %v8589, %v8687
    %v8737 = vsel %vm8639, %v8590, %v8688
    %v8738 = vsel %vm8640, %v8591, %v8689
    %v8739 = vsel %vm8641, %v8592, %v8690
    %v8740 = vsel %vm8642, %v8593, %v8691
    %v8741 = vsel %vm8643, %v8594, %v8692
    %v8742 = vsel %vm8644, %v8595, %v8693
    %v8743 = vsel %vm8645, %v8596, %v8694
    %v8744 = vld [vmem:[%s3] sm:$0xff]
    %v8745 = vld [vmem:[%s3 + $0x8] sm:$0xff]
    %v8746 = vld [vmem:[%s3 + $0x10] sm:$0xff]
    %v8747 = vld [vmem:[%s3 + $0x18] sm:$0xff]
    %v8748 = vld [vmem:[%s3 + $0x20] sm:$0xff]
    %v8749 = vld [vmem:[%s3 + $0x28] sm:$0xff]
    %v8750 = vld [vmem:[%s3 + $0x30] sm:$0xff]
    %v8751 = vld [vmem:[%s3 + $0x38] sm:$0xff]
    %v8752 = vld [vmem:[%s3 + $0x40] sm:$0xff]
    %v8753 = vld [vmem:[%s3 + $0x48] sm:$0xff]
    %v8754 = vld [vmem:[%s3 + $0x50] sm:$0xff]
    %v8755 = vld [vmem:[%s3 + $0x58] sm:$0xff]
    %v8756 = vld [vmem:[%s3 + $0x60] sm:$0xff]
    %v8757 = vld [vmem:[%s3 + $0x68] sm:$0xff]
    %v8758 = vld [vmem:[%s3 + $0x70] sm:$0xff]
    %v8759 = vld [vmem:[%s3 + $0x78] sm:$0xff]
    %v8760 = vld [vmem:[%s3 + $0x80] sm:$0xff]
    %v8761 = vld [vmem:[%s3 + $0x88] sm:$0xff]
    %v8762 = vld [vmem:[%s3 + $0x90] sm:$0xff]
    %v8763 = vld [vmem:[%s3 + $0x98] sm:$0xff]
    %v8764 = vld [vmem:[%s3 + $0xa0] sm:$0xff]
    %v8765 = vld [vmem:[%s3 + $0xa8] sm:$0xff]
    %v8766 = vld [vmem:[%s3 + $0xb0] sm:$0xff]
    %v8767 = vld [vmem:[%s3 + $0xb8] sm:$0xff]
    %v8768 = vld [vmem:[%s3 + $0xc0] sm:$0xff]
    %v8769 = vld [vmem:[%s3 + $0xc8] sm:$0xff]
    %v8770 = vld [vmem:[%s3 + $0xd0] sm:$0xff]
    %v8771 = vld [vmem:[%s3 + $0xd8] sm:$0xff]
    %v8772 = vld [vmem:[%s3 + $0xe0] sm:$0xff]
    %v8773 = vld [vmem:[%s3 + $0xe8] sm:$0xff]
    %v8774 = vld [vmem:[%s3 + $0xf0] sm:$0xff]
    %v8775 = vld [vmem:[%s3 + $0xf8] sm:$0xff]
    %v8776 = vld [vmem:[%s3 + $0x100] sm:$0xff]
    %v8777 = vld [vmem:[%s3 + $0x108] sm:$0xff]
    %v8778 = vld [vmem:[%s3 + $0x110] sm:$0xff]
    %v8779 = vld [vmem:[%s3 + $0x118] sm:$0xff]
    %v8780 = vld [vmem:[%s3 + $0x120] sm:$0xff]
    %v8781 = vld [vmem:[%s3 + $0x128] sm:$0xff]
    %v8782 = vld [vmem:[%s3 + $0x130] sm:$0xff]
    %v8783 = vld [vmem:[%s3 + $0x138] sm:$0xff]
    %v8784 = vld [vmem:[%s3 + $0x140] sm:$0xff]
    %v8785 = vld [vmem:[%s3 + $0x148] sm:$0xff]
    %v8786 = vld [vmem:[%s3 + $0x150] sm:$0xff]
    %v8787 = vld [vmem:[%s3 + $0x158] sm:$0xff]
    %v8788 = vld [vmem:[%s3 + $0x160] sm:$0xff]
    %v8789 = vld [vmem:[%s3 + $0x168] sm:$0xff]
    %v8790 = vld [vmem:[%s3 + $0x170] sm:$0xff]
    %v8791 = vld [vmem:[%s3 + $0x178] sm:$0xff]
    %v8792 = vld [vmem:[%s3 + $0x180] sm:$0xff]
    %v8793 = vld [vmem:[%s3 + $0x188] sm:$0xff]
    %v8794 = vld [vmem:[%s3 + $0x190] sm:$0xff]
    %v8795 = vld [vmem:[%s3 + $0x198] sm:$0xff]
    %v8796 = vld [vmem:[%s3 + $0x1a0] sm:$0xff]
    %v8797 = vld [vmem:[%s3 + $0x1a8] sm:$0xff]
    %v8798 = vld [vmem:[%s3 + $0x1b0] sm:$0xff]
    %v8799 = vld [vmem:[%s3 + $0x1b8] sm:$0xff]
    %v8800 = vld [vmem:[%s3 + $0x1c0] sm:$0xff]
    %v8801 = vld [vmem:[%s3 + $0x1c8] sm:$0xff]
    %v8802 = vld [vmem:[%s3 + $0x1d0] sm:$0xff]
    %v8803 = vld [vmem:[%s3 + $0x1d8] sm:$0xff]
    %v8804 = vld [vmem:[%s3 + $0x1e0] sm:$0xff]
    %v8805 = vld [vmem:[%s3 + $0x1e8] sm:$0xff]
    %v8806 = vld [vmem:[%s3 + $0x1f0] sm:$0xff]
    %v8807 = vld [vmem:[%s3 + $0x1f8] sm:$0xff]
    %v8808 = vpack.c.bf16 %v8696, %v8695
    %v8809 = vpack.c.bf16 %v8698, %v8697
    %v8810 = vpack.c.bf16 %v8700, %v8699
    %v8811 = vpack.c.bf16 %v8702, %v8701
    %v8812 = vpack.c.bf16 %v8704, %v8703
    %v8813 = vpack.c.bf16 %v8706, %v8705
    %v8814 = vpack.c.bf16 %v8708, %v8707
    %v8815 = vpack.c.bf16 %v8710, %v8709
    %v8816 = vpack.c.bf16 %v8712, %v8711
    %v8817 = vpack.c.bf16 %v8714, %v8713
    %v8818 = vpack.c.bf16 %v8716, %v8715
    %v8819 = vpack.c.bf16 %v8718, %v8717
    %v8820 = vpack.c.bf16 %v8720, %v8719
    %v8821 = vpack.c.bf16 %v8722, %v8721
    %v8822 = vpack.c.bf16 %v8724, %v8723
    %v8823 = vpack.c.bf16 %v8726, %v8725
    %v8824 = vpack.c.bf16 %v8728, %v8727
    %v8825 = vpack.c.bf16 %v8730, %v8729
    %v8826 = vpack.c.bf16 %v8732, %v8731
    %v8827 = vpack.c.bf16 %v8734, %v8733
    %v8828 = vpack.c.bf16 %v8736, %v8735
    %v8829 = vpack.c.bf16 %v8738, %v8737
    %v8830 = vpack.c.bf16 %v8740, %v8739
    %v8831 = vpack.c.bf16 %v8742, %v8741
    %v8832 = vpack.c.bf16 %v8743, %v8743
    %v8897 = vunpack.c.l.b16 %v8744
    %v8898 = vunpack.c.h.b16 %v8744
    %v8899 = vunpack.c.l.b16 %v8745
    %v8900 = vunpack.c.h.b16 %v8745
    %v8901 = vunpack.c.l.b16 %v8746
    %v8902 = vunpack.c.h.b16 %v8746
    %v8903 = vunpack.c.l.b16 %v8747
    %v8904 = vunpack.c.h.b16 %v8747
    %v8905 = vunpack.c.l.b16 %v8748
    %v8906 = vunpack.c.h.b16 %v8748
    %v8907 = vunpack.c.l.b16 %v8749
    %v8908 = vunpack.c.h.b16 %v8749
    %v8909 = vunpack.c.l.b16 %v8750
    %v8910 = vunpack.c.h.b16 %v8750
    %v8911 = vunpack.c.l.b16 %v8751
    %v8912 = vunpack.c.h.b16 %v8751
    %v8913 = vunpack.c.l.b16 %v8752
    %v8914 = vunpack.c.h.b16 %v8752
    %v8915 = vunpack.c.l.b16 %v8753
    %v8916 = vunpack.c.h.b16 %v8753
    %v8917 = vunpack.c.l.b16 %v8754
    %v8918 = vunpack.c.h.b16 %v8754
    %v8919 = vunpack.c.l.b16 %v8755
    %v8920 = vunpack.c.h.b16 %v8755
    %v8921 = vunpack.c.l.b16 %v8756
    %v8922 = vunpack.c.h.b16 %v8756
    %v8923 = vunpack.c.l.b16 %v8757
    %v8924 = vunpack.c.h.b16 %v8757
    %v8925 = vunpack.c.l.b16 %v8758
    %v8926 = vunpack.c.h.b16 %v8758
    %v8927 = vunpack.c.l.b16 %v8759
    %v8928 = vunpack.c.h.b16 %v8759
    %v8929 = vunpack.c.l.b16 %v8760
    %v8930 = vunpack.c.h.b16 %v8760
    %v8931 = vunpack.c.l.b16 %v8761
    %v8932 = vunpack.c.h.b16 %v8761
    %v8933 = vunpack.c.l.b16 %v8762
    %v8934 = vunpack.c.h.b16 %v8762
    %v8935 = vunpack.c.l.b16 %v8763
    %v8936 = vunpack.c.h.b16 %v8763
    %v8937 = vunpack.c.l.b16 %v8764
    %v8938 = vunpack.c.h.b16 %v8764
    %v8939 = vunpack.c.l.b16 %v8765
    %v8940 = vunpack.c.h.b16 %v8765
    %v8941 = vunpack.c.l.b16 %v8766
    %v8942 = vunpack.c.h.b16 %v8766
    %v8943 = vunpack.c.l.b16 %v8767
    %v8944 = vunpack.c.h.b16 %v8767
    %v8945 = vunpack.c.l.b16 %v8768
    %v8946 = vunpack.c.h.b16 %v8768
    %v8947 = vunpack.c.l.b16 %v8769
    %v8948 = vunpack.c.h.b16 %v8769
    %v8949 = vunpack.c.l.b16 %v8770
    %v8950 = vunpack.c.h.b16 %v8770
    %v8951 = vunpack.c.l.b16 %v8771
    %v8952 = vunpack.c.h.b16 %v8771
    %v8953 = vunpack.c.l.b16 %v8772
    %v8954 = vunpack.c.h.b16 %v8772
    %v8955 = vunpack.c.l.b16 %v8773
    %v8956 = vunpack.c.h.b16 %v8773
    %v8957 = vunpack.c.l.b16 %v8774
    %v8958 = vunpack.c.h.b16 %v8774
    %v8959 = vunpack.c.l.b16 %v8775
    %v8960 = vunpack.c.h.b16 %v8775
    %v8961 = vunpack.c.l.b16 %v8776
    %v8962 = vunpack.c.h.b16 %v8776
    %v8963 = vunpack.c.l.b16 %v8777
    %v8964 = vunpack.c.h.b16 %v8777
    %v8965 = vunpack.c.l.b16 %v8778
    %v8966 = vunpack.c.h.b16 %v8778
    %v8967 = vunpack.c.l.b16 %v8779
    %v8968 = vunpack.c.h.b16 %v8779
    %v8969 = vunpack.c.l.b16 %v8780
    %v8970 = vunpack.c.h.b16 %v8780
    %v8971 = vunpack.c.l.b16 %v8781
    %v8972 = vunpack.c.h.b16 %v8781
    %v8973 = vunpack.c.l.b16 %v8782
    %v8974 = vunpack.c.h.b16 %v8782
    %v8975 = vunpack.c.l.b16 %v8783
    %v8976 = vunpack.c.h.b16 %v8783
    %v8977 = vunpack.c.l.b16 %v8784
    %v8978 = vunpack.c.h.b16 %v8784
    %v8979 = vunpack.c.l.b16 %v8785
    %v8980 = vunpack.c.h.b16 %v8785
    %v8981 = vunpack.c.l.b16 %v8786
    %v8982 = vunpack.c.h.b16 %v8786
    %v8983 = vunpack.c.l.b16 %v8787
    %v8984 = vunpack.c.h.b16 %v8787
    %v8985 = vunpack.c.l.b16 %v8788
    %v8986 = vunpack.c.h.b16 %v8788
    %v8987 = vunpack.c.l.b16 %v8789
    %v8988 = vunpack.c.h.b16 %v8789
    %v8989 = vunpack.c.l.b16 %v8790
    %v8990 = vunpack.c.h.b16 %v8790
    %v8991 = vunpack.c.l.b16 %v8791
    %v8992 = vunpack.c.h.b16 %v8791
    %v8993 = vunpack.c.l.b16 %v8792
    %v8994 = vunpack.c.h.b16 %v8792
    %v8995 = vunpack.c.l.b16 %v8793
    %v8996 = vunpack.c.h.b16 %v8793
    %v8997 = vunpack.c.l.b16 %v8794
    %v8998 = vunpack.c.h.b16 %v8794
    %v8999 = vunpack.c.l.b16 %v8795
    %v9000 = vunpack.c.h.b16 %v8795
    %v9001 = vunpack.c.l.b16 %v8796
    %v9002 = vunpack.c.h.b16 %v8796
    %v9003 = vunpack.c.l.b16 %v8797
    %v9004 = vunpack.c.h.b16 %v8797
    %v9005 = vunpack.c.l.b16 %v8798
    %v9006 = vunpack.c.h.b16 %v8798
    %v9007 = vunpack.c.l.b16 %v8799
    %v9008 = vunpack.c.h.b16 %v8799
    %v9009 = vunpack.c.l.b16 %v8800
    %v9010 = vunpack.c.h.b16 %v8800
    %v9011 = vunpack.c.l.b16 %v8801
    %v9012 = vunpack.c.h.b16 %v8801
    %v9013 = vunpack.c.l.b16 %v8802
    %v9014 = vunpack.c.h.b16 %v8802
    %v9015 = vunpack.c.l.b16 %v8803
    %v9016 = vunpack.c.h.b16 %v8803
    %v9017 = vunpack.c.l.b16 %v8804
    %v9018 = vunpack.c.h.b16 %v8804
    %v9019 = vunpack.c.l.b16 %v8805
    %v9020 = vunpack.c.h.b16 %v8805
    %v9021 = vunpack.c.l.b16 %v8806
    %v9022 = vunpack.c.h.b16 %v8806
    %v9023 = vunpack.c.l.b16 %v8807
    %v9024 = vunpack.c.h.b16 %v8807
    %v9025 = vpack.c.b16 %v8901, %v8897
    %v9026 = vpack.c.b16 %v8902, %v8898
    %v9027 = vpack.c.b16 %v8903, %v8899
    %v9028 = vpack.c.b16 %v8904, %v8900
    %v9029 = vpack.c.b16 %v8909, %v8905
    %v9030 = vpack.c.b16 %v8910, %v8906
    %v9031 = vpack.c.b16 %v8911, %v8907
    %v9032 = vpack.c.b16 %v8912, %v8908
    %v9033 = vpack.c.b16 %v8917, %v8913
    %v9034 = vpack.c.b16 %v8918, %v8914
    %v9035 = vpack.c.b16 %v8919, %v8915
    %v9036 = vpack.c.b16 %v8920, %v8916
    %v9037 = vpack.c.b16 %v8925, %v8921
    %v9038 = vpack.c.b16 %v8926, %v8922
    %v9039 = vpack.c.b16 %v8927, %v8923
    %v9040 = vpack.c.b16 %v8928, %v8924
    %v9041 = vpack.c.b16 %v8933, %v8929
    %v9042 = vpack.c.b16 %v8934, %v8930
    %v9043 = vpack.c.b16 %v8935, %v8931
    %v9044 = vpack.c.b16 %v8936, %v8932
    %v9045 = vpack.c.b16 %v8941, %v8937
    %v9046 = vpack.c.b16 %v8942, %v8938
    %v9047 = vpack.c.b16 %v8943, %v8939
    %v9048 = vpack.c.b16 %v8944, %v8940
    %v9049 = vpack.c.b16 %v8949, %v8945
    %v9050 = vpack.c.b16 %v8950, %v8946
    %v9051 = vpack.c.b16 %v8951, %v8947
    %v9052 = vpack.c.b16 %v8952, %v8948
    %v9053 = vpack.c.b16 %v8957, %v8953
    %v9054 = vpack.c.b16 %v8958, %v8954
    %v9055 = vpack.c.b16 %v8959, %v8955
    %v9056 = vpack.c.b16 %v8960, %v8956
    %v9057 = vpack.c.b16 %v8965, %v8961
    %v9058 = vpack.c.b16 %v8966, %v8962
    %v9059 = vpack.c.b16 %v8967, %v8963
    %v9060 = vpack.c.b16 %v8968, %v8964
    %v9061 = vpack.c.b16 %v8973, %v8969
    %v9062 = vpack.c.b16 %v8974, %v8970
    %v9063 = vpack.c.b16 %v8975, %v8971
    %v9064 = vpack.c.b16 %v8976, %v8972
    %v9065 = vpack.c.b16 %v8981, %v8977
    %v9066 = vpack.c.b16 %v8982, %v8978
    %v9067 = vpack.c.b16 %v8983, %v8979
    %v9068 = vpack.c.b16 %v8984, %v8980
    %v9069 = vpack.c.b16 %v8989, %v8985
    %v9070 = vpack.c.b16 %v8990, %v8986
    %v9071 = vpack.c.b16 %v8991, %v8987
    %v9072 = vpack.c.b16 %v8992, %v8988
    %v9073 = vpack.c.b16 %v8997, %v8993
    %v9074 = vpack.c.b16 %v8998, %v8994
    %v9075 = vpack.c.b16 %v8999, %v8995
    %v9076 = vpack.c.b16 %v9000, %v8996
    %v9077 = vpack.c.b16 %v9005, %v9001
    %v9078 = vpack.c.b16 %v9006, %v9002
    %v9079 = vpack.c.b16 %v9007, %v9003
    %v9080 = vpack.c.b16 %v9008, %v9004
    %v9081 = vpack.c.b16 %v9013, %v9009
    %v9082 = vpack.c.b16 %v9014, %v9010
    %v9083 = vpack.c.b16 %v9015, %v9011
    %v9084 = vpack.c.b16 %v9016, %v9012
    %v9085 = vpack.c.b16 %v9021, %v9017
    %v9086 = vpack.c.b16 %v9022, %v9018
    %v9087 = vpack.c.b16 %v9023, %v9019
    %v9088 = vpack.c.b16 %v9024, %v9020
    %v9138 = vsel %vm6898, %v9028, 0
    %v9141 = vsel %vm6898, %v9032, 0
    %v9144 = vsel %vm6898, %v9036, 0
    %v9147 = vsel %vm6898, %v9040, 0
    %v9150 = vsel %vm6898, %v9044, 0
    %v9153 = vsel %vm6898, %v9048, 0
    %v9156 = vsel %vm6898, %v9052, 0
    %v9159 = vsel %vm6898, %v9056, 0
    %v9162 = vsel %vm6898, %v9060, 0
    %v9165 = vsel %vm6898, %v9064, 0
    %v9168 = vsel %vm6898, %v9068, 0
    %v9171 = vsel %vm6898, %v9072, 0
    %v9174 = vsel %vm6898, %v9076, 0
    %v9177 = vsel %vm6898, %v9080, 0
    %v9180 = vsel %vm6898, %v9084, 0
    %v9183 = vsel %vm6898, %v9088, 0
    %vm9185 = vcmask 1043456
    %v9187 = vsel %vm9185, %v8832, 0
    %9189 = vmatprep.subr.bf16.mxu0 0
    %9190 = vmatpush1.bf16.msra.mxu0 %v8808
    %9191 = vmatprep.subr.bf16.mxu0 0
    %9192 = vmatpush1.bf16.msra.mxu0 %v8809
    %9193 = vmatprep.subr.bf16.mxu0 0
    %9194 = vmatpush1.bf16.msra.mxu0 %v8810
    %9195 = vmatprep.subr.bf16.mxu0 0
    %9196 = vmatpush1.bf16.msra.mxu0 %v8811
    %9197 = vmatprep.subr.bf16.mxu0 0
    %9198 = vmatpush1.bf16.msra.mxu0 %v8812
    %9199 = vmatprep.subr.bf16.mxu0 0
    %9200 = vmatpush1.bf16.msra.mxu0 %v8813
    %9201 = vmatprep.subr.bf16.mxu0 0
    %9202 = vmatpush1.bf16.msra.mxu0 %v8814
    %9203 = vmatprep.subr.bf16.mxu0 0
    %9204 = vmatpush1.bf16.msra.mxu0 %v8815
    %9205 = vmatprep.subr.bf16.mxu0 0
    %9206 = vmatpush1.bf16.msra.mxu0 %v8816
    %9207 = vmatprep.subr.bf16.mxu0 0
    %9208 = vmatpush1.bf16.msra.mxu0 %v8817
    %9209 = vmatprep.subr.bf16.mxu0 0
    %9210 = vmatpush1.bf16.msra.mxu0 %v8818
    %9211 = vmatprep.subr.bf16.mxu0 0
    %9212 = vmatpush1.bf16.msra.mxu0 %v8819
    %9213 = vmatprep.subr.bf16.mxu0 0
    %9214 = vmatpush1.bf16.msra.mxu0 %v8820
    %9215 = vmatprep.subr.bf16.mxu0 0
    %9216 = vmatpush1.bf16.msra.mxu0 %v8821
    %9217 = vmatprep.subr.bf16.mxu0 0
    %9218 = vmatpush1.bf16.msra.mxu0 %v8822
    %9219 = vmatprep.subr.bf16.mxu0 0
    %9220 = vmatpush1.bf16.msra.mxu0 %v8823
    %9221 = vmatprep.mubr.bf16.mxu0 %v9026
    %9222 = vmatmul.mubr.bf16.gmra.mrb[0].mxu0 %v9025
    %v9223 = vpop.f32.mrb[0].mxu0
    %v9224 = vadd.f32 0.0, %v9223
    %v9225 = vpop.f32.mrb[0].mxu0
    %v9226 = vpop.f32.mrb[0].mxu0
    %v9227 = vadd.f32 0.0, %v9226
    %v9228 = vpop.f32.mrb[0].mxu0
    %9229 = vmatprep.mubr.bf16.mxu0 %v9030
    %9230 = vmatmul.mubr.bf16.gmra.mrb[0].mxu0 %v9029
    %v9231 = vpop.f32.mrb[0].mxu0
    %v9232 = vadd.f32 0.0, %v9231
    %v9233 = vpop.f32.mrb[0].mxu0
    %v9234 = vpop.f32.mrb[0].mxu0
    %v9235 = vadd.f32 0.0, %v9234
    %v9236 = vpop.f32.mrb[0].mxu0
    %9237 = vmatprep.mubr.bf16.mxu0 %v9034
    %9238 = vmatmul.mubr.bf16.gmra.mrb[0].mxu0 %v9033
    %v9239 = vpop.f32.mrb[0].mxu0
    %v9240 = vadd.f32 0.0, %v9239
    %v9241 = vpop.f32.mrb[0].mxu0
    %v9242 = vpop.f32.mrb[0].mxu0
    %v9243 = vadd.f32 0.0, %v9242
    %v9244 = vpop.f32.mrb[0].mxu0
    %9245 = vmatprep.mubr.bf16.mxu0 %v9038
    %9246 = vmatmul.mubr.bf16.gmra.mrb[0].mxu0 %v9037
    %v9247 = vpop.f32.mrb[0].mxu0
    %v9248 = vadd.f32 0.0, %v9247
    %v9249 = vpop.f32.mrb[0].mxu0
    %v9250 = vpop.f32.mrb[0].mxu0
    %v9251 = vadd.f32 0.0, %v9250
    %v9252 = vpop.f32.mrb[0].mxu0
    %9253 = vmatprep.mubr.bf16.mxu0 %v9042
    %9254 = vmatmul.mubr.bf16.gmra.mrb[0].mxu0 %v9041
    %v9255 = vpop.f32.mrb[0].mxu0
    %v9256 = vadd.f32 0.0, %v9255
    %v9257 = vpop.f32.mrb[0].mxu0
    %v9258 = vpop.f32.mrb[0].mxu0
    %v9259 = vadd.f32 0.0, %v9258
    %v9260 = vpop.f32.mrb[0].mxu0
    %9261 = vmatprep.mubr.bf16.mxu0 %v9046
    %9262 = vmatmul.mubr.bf16.gmra.mrb[0].mxu0 %v9045
    %v9263 = vpop.f32.mrb[0].mxu0
    %v9264 = vadd.f32 0.0, %v9263
    %v9265 = vpop.f32.mrb[0].mxu0
    %v9266 = vpop.f32.mrb[0].mxu0
    %v9267 = vadd.f32 0.0, %v9266
    %v9268 = vpop.f32.mrb[0].mxu0
    %9269 = vmatprep.mubr.bf16.mxu0 %v9050
    %9270 = vmatmul.mubr.bf16.gmra.mrb[0].mxu0 %v9049
    %v9271 = vpop.f32.mrb[0].mxu0
    %v9272 = vadd.f32 0.0, %v9271
    %v9273 = vpop.f32.mrb[0].mxu0
    %v9274 = vpop.f32.mrb[0].mxu0
    %v9275 = vadd.f32 0.0, %v9274
    %v9276 = vpop.f32.mrb[0].mxu0
    %9277 = vmatprep.mubr.bf16.mxu0 %v9054
    %9278 = vmatmul.mubr.bf16.gmra.mrb[0].mxu0 %v9053
    %v9279 = vpop.f32.mrb[0].mxu0
    %v9280 = vadd.f32 0.0, %v9279
    %v9281 = vpop.f32.mrb[0].mxu0
    %v9282 = vpop.f32.mrb[0].mxu0
    %v9283 = vadd.f32 0.0, %v9282
    %v9284 = vpop.f32.mrb[0].mxu0
    %9285 = vmatprep.mubr.bf16.mxu0 %v9058
    %9286 = vmatmul.mubr.bf16.gmra.mrb[0].mxu0 %v9057
    %v9287 = vpop.f32.mrb[0].mxu0
    %v9288 = vadd.f32 0.0, %v9287
    %v9289 = vpop.f32.mrb[0].mxu0
    %v9290 = vpop.f32.mrb[0].mxu0
    %v9291 = vadd.f32 0.0, %v9290
    %v9292 = vpop.f32.mrb[0].mxu0
    %9293 = vmatprep.mubr.bf16.mxu0 %v9062
    %9294 = vmatmul.mubr.bf16.gmra.mrb[0].mxu0 %v9061
    %v9295 = vpop.f32.mrb[0].mxu0
    %v9296 = vadd.f32 0.0, %v9295
    %v9297 = vpop.f32.mrb[0].mxu0
    %v9298 = vpop.f32.mrb[0].mxu0
    %v9299 = vadd.f32 0.0, %v9298
    %v9300 = vpop.f32.mrb[0].mxu0
    %9301 = vmatprep.mubr.bf16.mxu0 %v9066
    %9302 = vmatmul.mubr.bf16.gmra.mrb[0].mxu0 %v9065
    %v9303 = vpop.f32.mrb[0].mxu0
    %v9304 = vadd.f32 0.0, %v9303
    %v9305 = vpop.f32.mrb[0].mxu0
    %v9306 = vpop.f32.mrb[0].mxu0
    %v9307 = vadd.f32 0.0, %v9306
    %v9308 = vpop.f32.mrb[0].mxu0
    %9309 = vmatprep.mubr.bf16.mxu0 %v9070
    %9310 = vmatmul.mubr.bf16.gmra.mrb[0].mxu0 %v9069
    %v9311 = vpop.f32.mrb[0].mxu0
    %v9312 = vadd.f32 0.0, %v9311
    %v9313 = vpop.f32.mrb[0].mxu0
    %v9314 = vpop.f32.mrb[0].mxu0
    %v9315 = vadd.f32 0.0, %v9314
    %v9316 = vpop.f32.mrb[0].mxu0
    %9317 = vmatprep.mubr.bf16.mxu0 %v9074
    %9318 = vmatmul.mubr.bf16.gmra.mrb[0].mxu0 %v9073
    %v9319 = vpop.f32.mrb[0].mxu0
    %v9320 = vadd.f32 0.0, %v9319
    %v9321 = vpop.f32.mrb[0].mxu0
    %v9322 = vpop.f32.mrb[0].mxu0
    %v9323 = vadd.f32 0.0, %v9322
    %v9324 = vpop.f32.mrb[0].mxu0
    %9325 = vmatprep.mubr.bf16.mxu0 %v9078
    %9326 = vmatmul.mubr.bf16.gmra.mrb[0].mxu0 %v9077
    %v9327 = vpop.f32.mrb[0].mxu0
    %v9328 = vadd.f32 0.0, %v9327
    %v9329 = vpop.f32.mrb[0].mxu0
    %v9330 = vpop.f32.mrb[0].mxu0
    %v9331 = vadd.f32 0.0, %v9330
    %v9332 = vpop.f32.mrb[0].mxu0
    %9333 = vmatprep.mubr.bf16.mxu0 %v9082
    %9334 = vmatmul.mubr.bf16.gmra.mrb[0].mxu0 %v9081
    %v9335 = vpop.f32.mrb[0].mxu0
    %v9336 = vadd.f32 0.0, %v9335
    %v9337 = vpop.f32.mrb[0].mxu0
    %v9338 = vpop.f32.mrb[0].mxu0
    %v9339 = vadd.f32 0.0, %v9338
    %v9340 = vpop.f32.mrb[0].mxu0
    %9341 = vmatprep.mubr.bf16.mxu0 %v9086
    %9342 = vmatmul.mubr.bf16.gmra.mrb[0].mxu0 %v9085
    %v9343 = vpop.f32.mrb[0].mxu0
    %v9344 = vadd.f32 0.0, %v9343
    %v9345 = vpop.f32.mrb[0].mxu0
    %v9346 = vpop.f32.mrb[0].mxu0
    %v9347 = vadd.f32 0.0, %v9346
    %v9348 = vpop.f32.mrb[0].mxu0
    %9349 = vdwg.mxu0
    %9350 = vmatprep.subr.bf16.mxu0 0
    %9351 = vmatpush1.bf16.msra.mxu0 %v8824
    %9352 = vmatprep.subr.bf16.mxu0 0
    %9353 = vmatpush1.bf16.msra.mxu0 %v8825
    %9354 = vmatprep.subr.bf16.mxu0 0
    %9355 = vmatpush1.bf16.msra.mxu0 %v8826
    %9356 = vmatprep.subr.bf16.mxu0 0
    %9357 = vmatpush1.bf16.msra.mxu0 %v8827
    %9358 = vmatprep.subr.bf16.mxu0 0
    %9359 = vmatpush1.bf16.msra.mxu0 %v8828
    %9360 = vmatprep.subr.bf16.mxu0 0
    %9361 = vmatpush1.bf16.msra.mxu0 %v8829
    %9362 = vmatprep.subr.bf16.mxu0 0
    %9363 = vmatpush1.bf16.msra.mxu0 %v8830
    %9364 = vmatprep.subr.bf16.mxu0 0
    %9365 = vmatpush1.bf16.msra.mxu0 %v8831
    %9366 = vmatprep.subr.bf16.mxu0 0
    %9367 = vmatpush1.bf16.msra.mxu0 %v9187
    %9368 = vmatprep.subr.bf16.mxu0 0
    %9369 = vmatpush1.bf16.msra.mxu0 0
    %9370 = vmatprep.subr.bf16.mxu0 0
    %9371 = vmatpush1.bf16.msra.mxu0 0
    %9372 = vmatprep.subr.bf16.mxu0 0
    %9373 = vmatpush1.bf16.msra.mxu0 0
    %9374 = vmatprep.subr.bf16.mxu0 0
    %9375 = vmatpush1.bf16.msra.mxu0 0
    %9376 = vmatprep.subr.bf16.mxu0 0
    %9377 = vmatpush1.bf16.msra.mxu0 0
    %9378 = vmatprep.subr.bf16.mxu0 0
    %9379 = vmatpush1.bf16.msra.mxu0 0
    %9380 = vmatprep.subr.bf16.mxu0 0
    %9381 = vmatpush1.bf16.msra.mxu0 0
    %9382 = vmatprep.mubr.bf16.mxu0 %v9138
    %9383 = vmatmul.mubr.bf16.gmra.mrb[0].mxu0 %v9027
    %v9384 = vpop.f32.mrb[0].mxu0
    %v9385 = vadd.f32 %v9224, %v9384
    %v9386 = vpop.f32.mrb[0].mxu0
    %v9387 = vpop.f32.mrb[0].mxu0
    %v9388 = vadd.f32 %v9227, %v9387
    %v9389 = vpop.f32.mrb[0].mxu0
    %9390 = vmatprep.mubr.bf16.mxu0 %v9141
    %9391 = vmatmul.mubr.bf16.gmra.mrb[0].mxu0 %v9031
    %v9392 = vpop.f32.mrb[0].mxu0
    %v9393 = vadd.f32 %v9232, %v9392
    %v9394 = vpop.f32.mrb[0].mxu0
    %v9395 = vpop.f32.mrb[0].mxu0
    %v9396 = vadd.f32 %v9235, %v9395
    %v9397 = vpop.f32.mrb[0].mxu0
    %9398 = vmatprep.mubr.bf16.mxu0 %v9144
    %9399 = vmatmul.mubr.bf16.gmra.mrb[0].mxu0 %v9035
    %v9400 = vpop.f32.mrb[0].mxu0
    %v9401 = vadd.f32 %v9240, %v9400
    %v9402 = vpop.f32.mrb[0].mxu0
    %v9403 = vpop.f32.mrb[0].mxu0
    %v9404 = vadd.f32 %v9243, %v9403
    %v9405 = vpop.f32.mrb[0].mxu0
    %9406 = vmatprep.mubr.bf16.mxu0 %v9147
    %9407 = vmatmul.mubr.bf16.gmra.mrb[0].mxu0 %v9039
    %v9408 = vpop.f32.mrb[0].mxu0
    %v9409 = vadd.f32 %v9248, %v9408
    %v9410 = vpop.f32.mrb[0].mxu0
    %v9411 = vpop.f32.mrb[0].mxu0
    %v9412 = vadd.f32 %v9251, %v9411
    %v9413 = vpop.f32.mrb[0].mxu0
    %9414 = vmatprep.mubr.bf16.mxu0 %v9150
    %9415 = vmatmul.mubr.bf16.gmra.mrb[0].mxu0 %v9043
    %v9416 = vpop.f32.mrb[0].mxu0
    %v9417 = vadd.f32 %v9256, %v9416
    %v9418 = vpop.f32.mrb[0].mxu0
    %v9419 = vpop.f32.mrb[0].mxu0
    %v9420 = vadd.f32 %v9259, %v9419
    %v9421 = vpop.f32.mrb[0].mxu0
    %9422 = vmatprep.mubr.bf16.mxu0 %v9153
    %9423 = vmatmul.mubr.bf16.gmra.mrb[0].mxu0 %v9047
    %v9424 = vpop.f32.mrb[0].mxu0
    %v9425 = vadd.f32 %v9264, %v9424
    %v9426 = vpop.f32.mrb[0].mxu0
    %v9427 = vpop.f32.mrb[0].mxu0
    %v9428 = vadd.f32 %v9267, %v9427
    %v9429 = vpop.f32.mrb[0].mxu0
    %9430 = vmatprep.mubr.bf16.mxu0 %v9156
    %9431 = vmatmul.mubr.bf16.gmra.mrb[0].mxu0 %v9051
    %v9432 = vpop.f32.mrb[0].mxu0
    %v9433 = vadd.f32 %v9272, %v9432
    %v9434 = vpop.f32.mrb[0].mxu0
    %v9435 = vpop.f32.mrb[0].mxu0
    %v9436 = vadd.f32 %v9275, %v9435
    %v9437 = vpop.f32.mrb[0].mxu0
    %9438 = vmatprep.mubr.bf16.mxu0 %v9159
    %9439 = vmatmul.mubr.bf16.gmra.mrb[0].mxu0 %v9055
    %v9440 = vpop.f32.mrb[0].mxu0
    %v9441 = vadd.f32 %v9280, %v9440
    %v9442 = vpop.f32.mrb[0].mxu0
    %v9443 = vpop.f32.mrb[0].mxu0
    %v9444 = vadd.f32 %v9283, %v9443
    %v9445 = vpop.f32.mrb[0].mxu0
    %9446 = vmatprep.mubr.bf16.mxu0 %v9162
    %9447 = vmatmul.mubr.bf16.gmra.mrb[0].mxu0 %v9059
    %v9448 = vpop.f32.mrb[0].mxu0
    %v9449 = vadd.f32 %v9288, %v9448
    %v9450 = vpop.f32.mrb[0].mxu0
    %v9451 = vpop.f32.mrb[0].mxu0
    %v9452 = vadd.f32 %v9291, %v9451
    %v9453 = vpop.f32.mrb[0].mxu0
    %9454 = vmatprep.mubr.bf16.mxu0 %v9165
    %9455 = vmatmul.mubr.bf16.gmra.mrb[0].mxu0 %v9063
    %v9456 = vpop.f32.mrb[0].mxu0
    %v9457 = vadd.f32 %v9296, %v9456
    %v9458 = vpop.f32.mrb[0].mxu0
    %v9459 = vpop.f32.mrb[0].mxu0
    %v9460 = vadd.f32 %v9299, %v9459
    %v9461 = vpop.f32.mrb[0].mxu0
    %9462 = vmatprep.mubr.bf16.mxu0 %v9168
    %9463 = vmatmul.mubr.bf16.gmra.mrb[0].mxu0 %v9067
    %v9464 = vpop.f32.mrb[0].mxu0
    %v9465 = vadd.f32 %v9304, %v9464
    %v9466 = vpop.f32.mrb[0].mxu0
    %v9467 = vpop.f32.mrb[0].mxu0
    %v9468 = vadd.f32 %v9307, %v9467
    %v9469 = vpop.f32.mrb[0].mxu0
    %9470 = vmatprep.mubr.bf16.mxu0 %v9171
    %9471 = vmatmul.mubr.bf16.gmra.mrb[0].mxu0 %v9071
    %v9472 = vpop.f32.mrb[0].mxu0
    %v9473 = vadd.f32 %v9312, %v9472
    %v9474 = vpop.f32.mrb[0].mxu0
    %v9475 = vpop.f32.mrb[0].mxu0
    %v9476 = vadd.f32 %v9315, %v9475
    %v9477 = vpop.f32.mrb[0].mxu0
    %9478 = vmatprep.mubr.bf16.mxu0 %v9174
    %9479 = vmatmul.mubr.bf16.gmra.mrb[0].mxu0 %v9075
    %v9480 = vpop.f32.mrb[0].mxu0
    %v9481 = vadd.f32 %v9320, %v9480
    %v9482 = vpop.f32.mrb[0].mxu0
    %v9483 = vpop.f32.mrb[0].mxu0
    %v9484 = vadd.f32 %v9323, %v9483
    %v9485 = vpop.f32.mrb[0].mxu0
    %9486 = vmatprep.mubr.bf16.mxu0 %v9177
    %9487 = vmatmul.mubr.bf16.gmra.mrb[0].mxu0 %v9079
    %v9488 = vpop.f32.mrb[0].mxu0
    %v9489 = vadd.f32 %v9328, %v9488
    %v9490 = vpop.f32.mrb[0].mxu0
    %v9491 = vpop.f32.mrb[0].mxu0
    %v9492 = vadd.f32 %v9331, %v9491
    %v9493 = vpop.f32.mrb[0].mxu0
    %9494 = vmatprep.mubr.bf16.mxu0 %v9180
    %9495 = vmatmul.mubr.bf16.gmra.mrb[0].mxu0 %v9083
    %v9496 = vpop.f32.mrb[0].mxu0
    %v9497 = vadd.f32 %v9336, %v9496
    %v9498 = vpop.f32.mrb[0].mxu0
    %v9499 = vpop.f32.mrb[0].mxu0
    %v9500 = vadd.f32 %v9339, %v9499
    %v9501 = vpop.f32.mrb[0].mxu0
    %9502 = vmatprep.mubr.bf16.mxu0 %v9183
    %9503 = vmatmul.mubr.bf16.gmra.mrb[0].mxu0 %v9087
    %v9504 = vpop.f32.mrb[0].mxu0
    %v9505 = vadd.f32 %v9344, %v9504
    %v9506 = vpop.f32.mrb[0].mxu0
    %v9507 = vpop.f32.mrb[0].mxu0
    %v9508 = vadd.f32 %v9347, %v9507
    %v9509 = vpop.f32.mrb[0].mxu0
    %9510 = vdwg.mxu0
    %v9511 = vld [vmem:[#allocation6] sm:$0xff]
    %v9512 = vld [vmem:[#allocation6 + $0x8] sm:$0xff]
    %v9513 = vld [vmem:[#allocation6 + $0x10] sm:$0xff]
    %v9514 = vld [vmem:[#allocation6 + $0x18] sm:$0xff]
    %v9515 = vld [vmem:[%s7] sm:$0xff]
    %v9516 = vld [vmem:[%s7 + $0x8] sm:$0xff]
    %v9517 = vld [vmem:[%s7 + $0x10] sm:$0xff]
    %v9518 = vld [vmem:[%s7 + $0x18] sm:$0xff]
    %v9519 = vld [vmem:[%s7 + $0x20] sm:$0xff]
    %v9520 = vld [vmem:[%s7 + $0x28] sm:$0xff]
    %v9521 = vld [vmem:[%s7 + $0x30] sm:$0xff]
    %v9522 = vld [vmem:[%s7 + $0x38] sm:$0xff]
    %v9523 = vld [vmem:[%s7 + $0x40] sm:$0xff]
    %v9524 = vld [vmem:[%s7 + $0x48] sm:$0xff]
    %v9525 = vld [vmem:[%s7 + $0x50] sm:$0xff]
    %v9526 = vld [vmem:[%s7 + $0x58] sm:$0xff]
    %v9527 = vld [vmem:[%s7 + $0x60] sm:$0xff]
    %v9528 = vld [vmem:[%s7 + $0x68] sm:$0xff]
    %v9529 = vld [vmem:[%s7 + $0x70] sm:$0xff]
    %v9530 = vld [vmem:[%s7 + $0x78] sm:$0xff]
    %v9531 = vld [vmem:[%s7 + $0x80] sm:$0xff]
    %v9532 = vld [vmem:[%s7 + $0x88] sm:$0xff]
    %v9533 = vld [vmem:[%s7 + $0x90] sm:$0xff]
    %v9534 = vld [vmem:[%s7 + $0x98] sm:$0xff]
    %v9535 = vld [vmem:[%s7 + $0xa0] sm:$0xff]
    %v9536 = vld [vmem:[%s7 + $0xa8] sm:$0xff]
    %v9537 = vld [vmem:[%s7 + $0xb0] sm:$0xff]
    %v9538 = vld [vmem:[%s7 + $0xb8] sm:$0xff]
    %v9539 = vld [vmem:[%s7 + $0xc0] sm:$0xff]
    %v9540 = vld [vmem:[%s7 + $0xc8] sm:$0xff]
    %v9541 = vld [vmem:[%s7 + $0xd0] sm:$0xff]
    %v9542 = vld [vmem:[%s7 + $0xd8] sm:$0xff]
    %v9543 = vld [vmem:[%s7 + $0xe0] sm:$0xff]
    %v9544 = vld [vmem:[%s7 + $0xe8] sm:$0xff]
    %v9545 = vld [vmem:[%s7 + $0xf0] sm:$0xff]
    %v9546 = vld [vmem:[%s7 + $0xf8] sm:$0xff]
    %9547 = vmatprep.subr.mxu0 0.0
    %9548 = vmatpush1.msra.mxu0 %v9385
    %9549 = vmatprep.subr.mxu0 0.0
    %9550 = vmatpush1.msra.mxu0 %v9388
    %9551 = vmatprep.subr.mxu0 0.0
    %9552 = vmatpush1.msra.mxu0 %v9393
    %9553 = vmatprep.subr.mxu0 0.0
    %9554 = vmatpush1.msra.mxu0 %v9396
    %9555 = vmatprep.subr.mxu0 0.0
    %9556 = vmatpush1.msra.mxu0 %v9401
    %9557 = vmatprep.subr.mxu0 0.0
    %9558 = vmatpush1.msra.mxu0 %v9404
    %9559 = vmatprep.subr.mxu0 0.0
    %9560 = vmatpush1.msra.mxu0 %v9409
    %9561 = vmatprep.subr.mxu0 0.0
    %9562 = vmatpush1.msra.mxu0 %v9412
    %9563 = vmatprep.subr.mxu0 0.0
    %9564 = vmatpush1.msra.mxu0 %v9417
    %9565 = vmatprep.subr.mxu0 0.0
    %9566 = vmatpush1.msra.mxu0 %v9420
    %9567 = vmatprep.subr.mxu0 0.0
    %9568 = vmatpush1.msra.mxu0 %v9425
    %9569 = vmatprep.subr.mxu0 0.0
    %9570 = vmatpush1.msra.mxu0 %v9428
    %9571 = vmatprep.subr.mxu0 0.0
    %9572 = vmatpush1.msra.mxu0 %v9433
    %9573 = vmatprep.subr.mxu0 0.0
    %9574 = vmatpush1.msra.mxu0 %v9436
    %9575 = vmatprep.subr.mxu0 0.0
    %9576 = vmatpush1.msra.mxu0 %v9441
    %9577 = vmatprep.subr.mxu0 0.0
    %9578 = vmatpush1.msra.mxu0 %v9444
    %9579 = vmatprep.subr.mxu0 0.0
    %9580 = vmatpush1.msra.mxu0 %v9449
    %9581 = vmatprep.subr.mxu0 0.0
    %9582 = vmatpush1.msra.mxu0 %v9452
    %9583 = vmatprep.subr.mxu0 0.0
    %9584 = vmatpush1.msra.mxu0 %v9457
    %9585 = vmatprep.subr.mxu0 0.0
    %9586 = vmatpush1.msra.mxu0 %v9460
    %9587 = vmatprep.subr.mxu0 0.0
    %9588 = vmatpush1.msra.mxu0 %v9465
    %9589 = vmatprep.subr.mxu0 0.0
    %9590 = vmatpush1.msra.mxu0 %v9468
    %9591 = vmatprep.subr.mxu0 0.0
    %9592 = vmatpush1.msra.mxu0 %v9473
    %9593 = vmatprep.subr.mxu0 0.0
    %9594 = vmatpush1.msra.mxu0 %v9476
    %9595 = vmatprep.subr.mxu0 0.0
    %9596 = vmatpush1.msra.mxu0 %v9481
    %9597 = vmatprep.subr.mxu0 0.0
    %9598 = vmatpush1.msra.mxu0 %v9484
    %9599 = vmatprep.subr.mxu0 0.0
    %9600 = vmatpush1.msra.mxu0 %v9489
    %9601 = vmatprep.subr.mxu0 0.0
    %9602 = vmatpush1.msra.mxu0 %v9492
    %9603 = vmatprep.subr.mxu0 0.0
    %9604 = vmatpush1.msra.mxu0 %v9497
    %9605 = vmatprep.subr.mxu0 0.0
    %9606 = vmatpush1.msra.mxu0 %v9500
    %9607 = vmatprep.subr.mxu0 0.0
    %9608 = vmatpush1.msra.mxu0 %v9505
    %9609 = vmatprep.subr.mxu0 0.0
    %9610 = vmatpush1.msra.mxu0 %v9508
    %9611 = vmatprep.mubr.f32.mxu0 %v9512
    %9612 = vmatmul.mubr.f32.gmra.mrb[0].mxu0 %v9511
    %v9613 = vpop.f32.mrb[0].mxu0
    %v9614 = vadd.f32 0.0, %v9613
    %v9615 = vpop.f32.mrb[0].mxu0
    %9616 = vmatprep.mubr.f32.mxu0 %v9514
    %9617 = vmatmul.mubr.f32.gmra.mrb[0].mxu0 %v9513
    %v9618 = vpop.f32.mrb[0].mxu0
    %v9619 = vadd.f32 0.0, %v9618
    %v9620 = vpop.f32.mrb[0].mxu0
    %9621 = vdwg.mxu0
    %v9622 = vsel %vm7042, %v9614, 0.0
    %9623 = vadd.xlane.f32.xlu0 %v9622
    %v9624 = vpop.xlane.xlu0 %9623
    %v9625 = vsel %vm7042, %v9619, 0.0
    %9626 = vadd.xlane.f32.xlu0 %v9625
    %v9627 = vpop.xlane.xlu0 %9626
    %v9628 = vmul.f32 %v9624, 0.03125
    %v9629 = vmul.f32 %v9627, 0.03125
    %v9631 = vsel %vm2591, %v9515, 0
    %v9634 = vsel %vm2591, %v9516, 0
    %v9637 = vsel %vm2591, %v9517, 0
    %v9640 = vsel %vm2591, %v9518, 0
    %v9643 = vsel %vm2591, %v9519, 0
    %v9646 = vsel %vm2591, %v9520, 0
    %v9649 = vsel %vm2591, %v9521, 0
    %v9652 = vsel %vm2591, %v9522, 0
    %v9655 = vsel %vm2591, %v9523, 0
    %v9658 = vsel %vm2591, %v9524, 0
    %v9661 = vsel %vm2591, %v9525, 0
    %v9664 = vsel %vm2591, %v9526, 0
    %v9667 = vsel %vm2591, %v9527, 0
    %v9670 = vsel %vm2591, %v9528, 0
    %v9673 = vsel %vm2591, %v9529, 0
    %v9676 = vsel %vm2591, %v9530, 0
    %v9679 = vsel %vm2591, %v9531, 0
    %v9682 = vsel %vm2591, %v9532, 0
    %v9685 = vsel %vm2591, %v9533, 0
    %v9688 = vsel %vm2591, %v9534, 0
    %v9691 = vsel %vm2591, %v9535, 0
    %v9694 = vsel %vm2591, %v9536, 0
    %v9697 = vsel %vm2591, %v9537, 0
    %v9700 = vsel %vm2591, %v9538, 0
    %v9703 = vsel %vm2591, %v9539, 0
    %v9706 = vsel %vm2591, %v9540, 0
    %v9709 = vsel %vm2591, %v9541, 0
    %v9712 = vsel %vm2591, %v9542, 0
    %v9715 = vsel %vm2591, %v9543, 0
    %v9718 = vsel %vm2591, %v9544, 0
    %v9721 = vsel %vm2591, %v9545, 0
    %v9724 = vsel %vm2591, %v9546, 0
    %9726 = vmatprep.subr.mxu0 0.0
    %9727 = vmatpush1.msra.mxu0 %v9628
    %9728 = vmatprep.subr.mxu0 0.0
    %9729 = vmatpush1.msra.mxu0 %v9629
    %9730 = vmatprep.subr.mxu0 0.0
    %9731 = vmatpush1.msra.mxu0 0.0
    %9732 = vmatprep.subr.mxu0 0.0
    %9733 = vmatpush1.msra.mxu0 0.0
    %9734 = vmatprep.subr.mxu0 0.0
    %9735 = vmatpush1.msra.mxu0 0.0
    %9736 = vmatprep.subr.mxu0 0.0
    %9737 = vmatpush1.msra.mxu0 0.0
    %9738 = vmatprep.subr.mxu0 0.0
    %9739 = vmatpush1.msra.mxu0 0.0
    %9740 = vmatprep.subr.mxu0 0.0
    %9741 = vmatpush1.msra.mxu0 0.0
    %9742 = vmatprep.subr.mxu0 0.0
    %9743 = vmatpush1.msra.mxu0 0.0
    %9744 = vmatprep.subr.mxu0 0.0
    %9745 = vmatpush1.msra.mxu0 0.0
    %9746 = vmatprep.subr.mxu0 0.0
    %9747 = vmatpush1.msra.mxu0 0.0
    %9748 = vmatprep.subr.mxu0 0.0
    %9749 = vmatpush1.msra.mxu0 0.0
    %9750 = vmatprep.subr.mxu0 0.0
    %9751 = vmatpush1.msra.mxu0 0.0
    %9752 = vmatprep.subr.mxu0 0.0
    %9753 = vmatpush1.msra.mxu0 0.0
    %9754 = vmatprep.subr.mxu0 0.0
    %9755 = vmatpush1.msra.mxu0 0.0
    %9756 = vmatprep.subr.mxu0 0.0
    %9757 = vmatpush1.msra.mxu0 0.0
    %9758 = vmatprep.subr.mxu0 0.0
    %9759 = vmatpush1.msra.mxu0 0.0
    %9760 = vmatprep.subr.mxu0 0.0
    %9761 = vmatpush1.msra.mxu0 0.0
    %9762 = vmatprep.subr.mxu0 0.0
    %9763 = vmatpush1.msra.mxu0 0.0
    %9764 = vmatprep.subr.mxu0 0.0
    %9765 = vmatpush1.msra.mxu0 0.0
    %9766 = vmatprep.subr.mxu0 0.0
    %9767 = vmatpush1.msra.mxu0 0.0
    %9768 = vmatprep.subr.mxu0 0.0
    %9769 = vmatpush1.msra.mxu0 0.0
    %9770 = vmatprep.subr.mxu0 0.0
    %9771 = vmatpush1.msra.mxu0 0.0
    %9772 = vmatprep.subr.mxu0 0.0
    %9773 = vmatpush1.msra.mxu0 0.0
    %9774 = vmatprep.subr.mxu0 0.0
    %9775 = vmatpush1.msra.mxu0 0.0
    %9776 = vmatprep.subr.mxu0 0.0
    %9777 = vmatpush1.msra.mxu0 0.0
    %9778 = vmatprep.subr.mxu0 0.0
    %9779 = vmatpush1.msra.mxu0 0.0
    %9780 = vmatprep.subr.mxu0 0.0
    %9781 = vmatpush1.msra.mxu0 0.0
    %9782 = vmatprep.subr.mxu0 0.0
    %9783 = vmatpush1.msra.mxu0 0.0
    %9784 = vmatprep.subr.mxu0 0.0
    %9785 = vmatpush1.msra.mxu0 0.0
    %9786 = vmatprep.subr.mxu0 0.0
    %9787 = vmatpush1.msra.mxu0 0.0
    %9788 = vmatprep.subr.mxu0 0.0
    %9789 = vmatpush1.msra.mxu0 0.0
    %9790 = vmatprep.mubr.f32.mxu0 0.0
    %9791 = vmatmul.mubr.f32.gmra.mrb[0].mxu0 %v9631
    %v9792 = vpop.f32.mrb[0].mxu0
    %v9793 = vadd.f32 0.0, %v9792
    %v9794 = vpop.f32.mrb[0].mxu0
    %9795 = vmatprep.mubr.f32.mxu0 0.0
    %9796 = vmatmul.mubr.f32.gmra.mrb[0].mxu0 %v9634
    %v9797 = vpop.f32.mrb[0].mxu0
    %v9798 = vadd.f32 0.0, %v9797
    %v9799 = vpop.f32.mrb[0].mxu0
    %9800 = vmatprep.mubr.f32.mxu0 0.0
    %9801 = vmatmul.mubr.f32.gmra.mrb[0].mxu0 %v9637
    %v9802 = vpop.f32.mrb[0].mxu0
    %v9803 = vadd.f32 0.0, %v9802
    %v9804 = vpop.f32.mrb[0].mxu0
    %9805 = vmatprep.mubr.f32.mxu0 0.0
    %9806 = vmatmul.mubr.f32.gmra.mrb[0].mxu0 %v9640
    %v9807 = vpop.f32.mrb[0].mxu0
    %v9808 = vadd.f32 0.0, %v9807
    %v9809 = vpop.f32.mrb[0].mxu0
    %9810 = vmatprep.mubr.f32.mxu0 0.0
    %9811 = vmatmul.mubr.f32.gmra.mrb[0].mxu0 %v9643
    %v9812 = vpop.f32.mrb[0].mxu0
    %v9813 = vadd.f32 0.0, %v9812
    %v9814 = vpop.f32.mrb[0].mxu0
    %9815 = vmatprep.mubr.f32.mxu0 0.0
    %9816 = vmatmul.mubr.f32.gmra.mrb[0].mxu0 %v9646
    %v9817 = vpop.f32.mrb[0].mxu0
    %v9818 = vadd.f32 0.0, %v9817
    %v9819 = vpop.f32.mrb[0].mxu0
    %9820 = vmatprep.mubr.f32.mxu0 0.0
    %9821 = vmatmul.mubr.f32.gmra.mrb[0].mxu0 %v9649
    %v9822 = vpop.f32.mrb[0].mxu0
    %v9823 = vadd.f32 0.0, %v9822
    %v9824 = vpop.f32.mrb[0].mxu0
    %9825 = vmatprep.mubr.f32.mxu0 0.0
    %9826 = vmatmul.mubr.f32.gmra.mrb[0].mxu0 %v9652
    %v9827 = vpop.f32.mrb[0].mxu0
    %v9828 = vadd.f32 0.0, %v9827
    %v9829 = vpop.f32.mrb[0].mxu0
    %9830 = vmatprep.mubr.f32.mxu0 0.0
    %9831 = vmatmul.mubr.f32.gmra.mrb[0].mxu0 %v9655
    %v9832 = vpop.f32.mrb[0].mxu0
    %v9833 = vadd.f32 0.0, %v9832
    %v9834 = vpop.f32.mrb[0].mxu0
    %9835 = vmatprep.mubr.f32.mxu0 0.0
    %9836 = vmatmul.mubr.f32.gmra.mrb[0].mxu0 %v9658
    %v9837 = vpop.f32.mrb[0].mxu0
    %v9838 = vadd.f32 0.0, %v9837
    %v9839 = vpop.f32.mrb[0].mxu0
    %9840 = vmatprep.mubr.f32.mxu0 0.0
    %9841 = vmatmul.mubr.f32.gmra.mrb[0].mxu0 %v9661
    %v9842 = vpop.f32.mrb[0].mxu0
    %v9843 = vadd.f32 0.0, %v9842
    %v9844 = vpop.f32.mrb[0].mxu0
    %9845 = vmatprep.mubr.f32.mxu0 0.0
    %9846 = vmatmul.mubr.f32.gmra.mrb[0].mxu0 %v9664
    %v9847 = vpop.f32.mrb[0].mxu0
    %v9848 = vadd.f32 0.0, %v9847
    %v9849 = vpop.f32.mrb[0].mxu0
    %9850 = vmatprep.mubr.f32.mxu0 0.0
    %9851 = vmatmul.mubr.f32.gmra.mrb[0].mxu0 %v9667
    %v9852 = vpop.f32.mrb[0].mxu0
    %v9853 = vadd.f32 0.0, %v9852
    %v9854 = vpop.f32.mrb[0].mxu0
    %9855 = vmatprep.mubr.f32.mxu0 0.0
    %9856 = vmatmul.mubr.f32.gmra.mrb[0].mxu0 %v9670
    %v9857 = vpop.f32.mrb[0].mxu0
    %v9858 = vadd.f32 0.0, %v9857
    %v9859 = vpop.f32.mrb[0].mxu0
    %9860 = vmatprep.mubr.f32.mxu0 0.0
    %9861 = vmatmul.mubr.f32.gmra.mrb[0].mxu0 %v9673
    %v9862 = vpop.f32.mrb[0].mxu0
    %v9863 = vadd.f32 0.0, %v9862
    %v9864 = vpop.f32.mrb[0].mxu0
    %9865 = vmatprep.mubr.f32.mxu0 0.0
    %9866 = vmatmul.mubr.f32.gmra.mrb[0].mxu0 %v9676
    %v9867 = vpop.f32.mrb[0].mxu0
    %v9868 = vadd.f32 0.0, %v9867
    %v9869 = vpop.f32.mrb[0].mxu0
    %9870 = vmatprep.mubr.f32.mxu0 0.0
    %9871 = vmatmul.mubr.f32.gmra.mrb[0].mxu0 %v9679
    %v9872 = vpop.f32.mrb[0].mxu0
    %v9873 = vadd.f32 0.0, %v9872
    %v9874 = vpop.f32.mrb[0].mxu0
    %9875 = vmatprep.mubr.f32.mxu0 0.0
    %9876 = vmatmul.mubr.f32.gmra.mrb[0].mxu0 %v9682
    %v9877 = vpop.f32.mrb[0].mxu0
    %v9878 = vadd.f32 0.0, %v9877
    %v9879 = vpop.f32.mrb[0].mxu0
    %9880 = vmatprep.mubr.f32.mxu0 0.0
    %9881 = vmatmul.mubr.f32.gmra.mrb[0].mxu0 %v9685
    %v9882 = vpop.f32.mrb[0].mxu0
    %v9883 = vadd.f32 0.0, %v9882
    %v9884 = vpop.f32.mrb[0].mxu0
    %9885 = vmatprep.mubr.f32.mxu0 0.0
    %9886 = vmatmul.mubr.f32.gmra.mrb[0].mxu0 %v9688
    %v9887 = vpop.f32.mrb[0].mxu0
    %v9888 = vadd.f32 0.0, %v9887
    %v9889 = vpop.f32.mrb[0].mxu0
    %9890 = vmatprep.mubr.f32.mxu0 0.0
    %9891 = vmatmul.mubr.f32.gmra.mrb[0].mxu0 %v9691
    %v9892 = vpop.f32.mrb[0].mxu0
    %v9893 = vadd.f32 0.0, %v9892
    %v9894 = vpop.f32.mrb[0].mxu0
    %9895 = vmatprep.mubr.f32.mxu0 0.0
    %9896 = vmatmul.mubr.f32.gmra.mrb[0].mxu0 %v9694
    %v9897 = vpop.f32.mrb[0].mxu0
    %v9898 = vadd.f32 0.0, %v9897
    %v9899 = vpop.f32.mrb[0].mxu0
    %9900 = vmatprep.mubr.f32.mxu0 0.0
    %9901 = vmatmul.mubr.f32.gmra.mrb[0].mxu0 %v9697
    %v9902 = vpop.f32.mrb[0].mxu0
    %v9903 = vadd.f32 0.0, %v9902
    %v9904 = vpop.f32.mrb[0].mxu0
    %9905 = vmatprep.mubr.f32.mxu0 0.0
    %9906 = vmatmul.mubr.f32.gmra.mrb[0].mxu0 %v9700
    %v9907 = vpop.f32.mrb[0].mxu0
    %v9908 = vadd.f32 0.0, %v9907
    %v9909 = vpop.f32.mrb[0].mxu0
    %9910 = vmatprep.mubr.f32.mxu0 0.0
    %9911 = vmatmul.mubr.f32.gmra.mrb[0].mxu0 %v9703
    %v9912 = vpop.f32.mrb[0].mxu0
    %v9913 = vadd.f32 0.0, %v9912
    %v9914 = vpop.f32.mrb[0].mxu0
    %9915 = vmatprep.mubr.f32.mxu0 0.0
    %9916 = vmatmul.mubr.f32.gmra.mrb[0].mxu0 %v9706
    %v9917 = vpop.f32.mrb[0].mxu0
    %v9918 = vadd.f32 0.0, %v9917
    %v9919 = vpop.f32.mrb[0].mxu0
    %9920 = vmatprep.mubr.f32.mxu0 0.0
    %9921 = vmatmul.mubr.f32.gmra.mrb[0].mxu0 %v9709
    %v9922 = vpop.f32.mrb[0].mxu0
    %v9923 = vadd.f32 0.0, %v9922
    %v9924 = vpop.f32.mrb[0].mxu0
    %9925 = vmatprep.mubr.f32.mxu0 0.0
    %9926 = vmatmul.mubr.f32.gmra.mrb[0].mxu0 %v9712
    %v9927 = vpop.f32.mrb[0].mxu0
    %v9928 = vadd.f32 0.0, %v9927
    %v9929 = vpop.f32.mrb[0].mxu0
    %9930 = vmatprep.mubr.f32.mxu0 0.0
    %9931 = vmatmul.mubr.f32.gmra.mrb[0].mxu0 %v9715
    %v9932 = vpop.f32.mrb[0].mxu0
    %v9933 = vadd.f32 0.0, %v9932
    %v9934 = vpop.f32.mrb[0].mxu0
    %9935 = vmatprep.mubr.f32.mxu0 0.0
    %9936 = vmatmul.mubr.f32.gmra.mrb[0].mxu0 %v9718
    %v9937 = vpop.f32.mrb[0].mxu0
    %v9938 = vadd.f32 0.0, %v9937
    %v9939 = vpop.f32.mrb[0].mxu0
    %9940 = vmatprep.mubr.f32.mxu0 0.0
    %9941 = vmatmul.mubr.f32.gmra.mrb[0].mxu0 %v9721
    %v9942 = vpop.f32.mrb[0].mxu0
    %v9943 = vadd.f32 0.0, %v9942
    %v9944 = vpop.f32.mrb[0].mxu0
    %9945 = vmatprep.mubr.f32.mxu0 0.0
    %9946 = vmatmul.mubr.f32.gmra.mrb[0].mxu0 %v9724
    %v9947 = vpop.f32.mrb[0].mxu0
    %v9948 = vadd.f32 0.0, %v9947
    %v9949 = vpop.f32.mrb[0].mxu0
    %9950 = vdwg.mxu0
    %9952 = vset.pattern.permute.xlu0 0
    %9953 = vperm.xlu0 %9952, %v9793
    %v9954 = vpop.permute.xlu0 %9953
    %9957 = vset.pattern.permute.xlu0 0
    %9958 = vperm.xlu0 %9957, %v9798
    %v9959 = vpop.permute.xlu0 %9958
    %9962 = vset.pattern.permute.xlu0 0
    %9963 = vperm.xlu0 %9962, %v9803
    %v9964 = vpop.permute.xlu0 %9963
    %9967 = vset.pattern.permute.xlu0 0
    %9968 = vperm.xlu0 %9967, %v9808
    %v9969 = vpop.permute.xlu0 %9968
    %9972 = vset.pattern.permute.xlu0 0
    %9973 = vperm.xlu0 %9972, %v9813
    %v9974 = vpop.permute.xlu0 %9973
    %9977 = vset.pattern.permute.xlu0 0
    %9978 = vperm.xlu0 %9977, %v9818
    %v9979 = vpop.permute.xlu0 %9978
    %9982 = vset.pattern.permute.xlu0 0
    %9983 = vperm.xlu0 %9982, %v9823
    %v9984 = vpop.permute.xlu0 %9983
    %9987 = vset.pattern.permute.xlu0 0
    %9988 = vperm.xlu0 %9987, %v9828
    %v9989 = vpop.permute.xlu0 %9988
    %9992 = vset.pattern.permute.xlu0 0
    %9993 = vperm.xlu0 %9992, %v9833
    %v9994 = vpop.permute.xlu0 %9993
    %9997 = vset.pattern.permute.xlu0 0
    %9998 = vperm.xlu0 %9997, %v9838
    %v9999 = vpop.permute.xlu0 %9998
    %10002 = vset.pattern.permute.xlu0 0
    %10003 = vperm.xlu0 %10002, %v9843
    %v10004 = vpop.permute.xlu0 %10003
    %10007 = vset.pattern.permute.xlu0 0
    %10008 = vperm.xlu0 %10007, %v9848
    %v10009 = vpop.permute.xlu0 %10008
    %10012 = vset.pattern.permute.xlu0 0
    %10013 = vperm.xlu0 %10012, %v9853
    %v10014 = vpop.permute.xlu0 %10013
    %10017 = vset.pattern.permute.xlu0 0
    %10018 = vperm.xlu0 %10017, %v9858
    %v10019 = vpop.permute.xlu0 %10018
    %10022 = vset.pattern.permute.xlu0 0
    %10023 = vperm.xlu0 %10022, %v9863
    %v10024 = vpop.permute.xlu0 %10023
    %10027 = vset.pattern.permute.xlu0 0
    %10028 = vperm.xlu0 %10027, %v9868
    %v10029 = vpop.permute.xlu0 %10028
    %10032 = vset.pattern.permute.xlu0 0
    %10033 = vperm.xlu0 %10032, %v9873
    %v10034 = vpop.permute.xlu0 %10033
    %10037 = vset.pattern.permute.xlu0 0
    %10038 = vperm.xlu0 %10037, %v9878
    %v10039 = vpop.permute.xlu0 %10038
    %10042 = vset.pattern.permute.xlu0 0
    %10043 = vperm.xlu0 %10042, %v9883
    %v10044 = vpop.permute.xlu0 %10043
    %10047 = vset.pattern.permute.xlu0 0
    %10048 = vperm.xlu0 %10047, %v9888
    %v10049 = vpop.permute.xlu0 %10048
    %10052 = vset.pattern.permute.xlu0 0
    %10053 = vperm.xlu0 %10052, %v9893
    %v10054 = vpop.permute.xlu0 %10053
    %10057 = vset.pattern.permute.xlu0 0
    %10058 = vperm.xlu0 %10057, %v9898
    %v10059 = vpop.permute.xlu0 %10058
    %10062 = vset.pattern.permute.xlu0 0
    %10063 = vperm.xlu0 %10062, %v9903
    %v10064 = vpop.permute.xlu0 %10063
    %10067 = vset.pattern.permute.xlu0 0
    %10068 = vperm.xlu0 %10067, %v9908
    %v10069 = vpop.permute.xlu0 %10068
    %10072 = vset.pattern.permute.xlu0 0
    %10073 = vperm.xlu0 %10072, %v9913
    %v10074 = vpop.permute.xlu0 %10073
    %10077 = vset.pattern.permute.xlu0 0
    %10078 = vperm.xlu0 %10077, %v9918
    %v10079 = vpop.permute.xlu0 %10078
    %10082 = vset.pattern.permute.xlu0 0
    %10083 = vperm.xlu0 %10082, %v9923
    %v10084 = vpop.permute.xlu0 %10083
    %10087 = vset.pattern.permute.xlu0 0
    %10088 = vperm.xlu0 %10087, %v9928
    %v10089 = vpop.permute.xlu0 %10088
    %10092 = vset.pattern.permute.xlu0 0
    %10093 = vperm.xlu0 %10092, %v9933
    %v10094 = vpop.permute.xlu0 %10093
    %10097 = vset.pattern.permute.xlu0 0
    %10098 = vperm.xlu0 %10097, %v9938
    %v10099 = vpop.permute.xlu0 %10098
    %10102 = vset.pattern.permute.xlu0 0
    %10103 = vperm.xlu0 %10102, %v9943
    %v10104 = vpop.permute.xlu0 %10103
    %10107 = vset.pattern.permute.xlu0 0
    %10108 = vperm.xlu0 %10107, %v9948
    %v10109 = vpop.permute.xlu0 %10108
    %v10111 = vsub.f32 %v9385, %v9954
    %v10112 = vsub.f32 %v9388, %v9959
    %v10113 = vsub.f32 %v9393, %v9964
    %v10114 = vsub.f32 %v9396, %v9969
    %v10115 = vsub.f32 %v9401, %v9974
    %v10116 = vsub.f32 %v9404, %v9979
    %v10117 = vsub.f32 %v9409, %v9984
    %v10118 = vsub.f32 %v9412, %v9989
    %v10119 = vsub.f32 %v9417, %v9994
    %v10120 = vsub.f32 %v9420, %v9999
    %v10121 = vsub.f32 %v9425, %v10004
    %v10122 = vsub.f32 %v9428, %v10009
    %v10123 = vsub.f32 %v9433, %v10014
    %v10124 = vsub.f32 %v9436, %v10019
    %v10125 = vsub.f32 %v9441, %v10024
    %v10126 = vsub.f32 %v9444, %v10029
    %v10127 = vsub.f32 %v9449, %v10034
    %v10128 = vsub.f32 %v9452, %v10039
    %v10129 = vsub.f32 %v9457, %v10044
    %v10130 = vsub.f32 %v9460, %v10049
    %v10131 = vsub.f32 %v9465, %v10054
    %v10132 = vsub.f32 %v9468, %v10059
    %v10133 = vsub.f32 %v9473, %v10064
    %v10134 = vsub.f32 %v9476, %v10069
    %v10135 = vsub.f32 %v9481, %v10074
    %v10136 = vsub.f32 %v9484, %v10079
    %v10137 = vsub.f32 %v9489, %v10084
    %v10138 = vsub.f32 %v9492, %v10089
    %v10139 = vsub.f32 %v9497, %v10094
    %v10140 = vsub.f32 %v9500, %v10099
    %v10141 = vsub.f32 %v9505, %v10104
    %v10142 = vsub.f32 %v9508, %v10109
    %v10143 = vmul.f32 %v10111, %v10111
    %v10144 = vmul.f32 %v10112, %v10112
    %v10145 = vmul.f32 %v10113, %v10113
    %v10146 = vmul.f32 %v10114, %v10114
    %v10147 = vmul.f32 %v10115, %v10115
    %v10148 = vmul.f32 %v10116, %v10116
    %v10149 = vmul.f32 %v10117, %v10117
    %v10150 = vmul.f32 %v10118, %v10118
    %v10151 = vmul.f32 %v10119, %v10119
    %v10152 = vmul.f32 %v10120, %v10120
    %v10153 = vmul.f32 %v10121, %v10121
    %v10154 = vmul.f32 %v10122, %v10122
    %v10155 = vmul.f32 %v10123, %v10123
    %v10156 = vmul.f32 %v10124, %v10124
    %v10157 = vmul.f32 %v10125, %v10125
    %v10158 = vmul.f32 %v10126, %v10126
    %v10159 = vmul.f32 %v10127, %v10127
    %v10160 = vmul.f32 %v10128, %v10128
    %v10161 = vmul.f32 %v10129, %v10129
    %v10162 = vmul.f32 %v10130, %v10130
    %v10163 = vmul.f32 %v10131, %v10131
    %v10164 = vmul.f32 %v10132, %v10132
    %v10165 = vmul.f32 %v10133, %v10133
    %v10166 = vmul.f32 %v10134, %v10134
    %v10167 = vmul.f32 %v10135, %v10135
    %v10168 = vmul.f32 %v10136, %v10136
    %v10169 = vmul.f32 %v10137, %v10137
    %v10170 = vmul.f32 %v10138, %v10138
    %v10171 = vmul.f32 %v10139, %v10139
    %v10172 = vmul.f32 %v10140, %v10140
    %v10173 = vmul.f32 %v10141, %v10141
    %v10174 = vmul.f32 %v10142, %v10142
    %10175 = vmatprep.subr.mxu0 0.0
    %10176 = vmatpush1.msra.mxu0 %v10143
    %10177 = vmatprep.subr.mxu0 0.0
    %10178 = vmatpush1.msra.mxu0 %v10144
    %10179 = vmatprep.subr.mxu0 0.0
    %10180 = vmatpush1.msra.mxu0 %v10145
    %10181 = vmatprep.subr.mxu0 0.0
    %10182 = vmatpush1.msra.mxu0 %v10146
    %10183 = vmatprep.subr.mxu0 0.0
    %10184 = vmatpush1.msra.mxu0 %v10147
    %10185 = vmatprep.subr.mxu0 0.0
    %10186 = vmatpush1.msra.mxu0 %v10148
    %10187 = vmatprep.subr.mxu0 0.0
    %10188 = vmatpush1.msra.mxu0 %v10149
    %10189 = vmatprep.subr.mxu0 0.0
    %10190 = vmatpush1.msra.mxu0 %v10150
    %10191 = vmatprep.subr.mxu0 0.0
    %10192 = vmatpush1.msra.mxu0 %v10151
    %10193 = vmatprep.subr.mxu0 0.0
    %10194 = vmatpush1.msra.mxu0 %v10152
    %10195 = vmatprep.subr.mxu0 0.0
    %10196 = vmatpush1.msra.mxu0 %v10153
    %10197 = vmatprep.subr.mxu0 0.0
    %10198 = vmatpush1.msra.mxu0 %v10154
    %10199 = vmatprep.subr.mxu0 0.0
    %10200 = vmatpush1.msra.mxu0 %v10155
    %10201 = vmatprep.subr.mxu0 0.0
    %10202 = vmatpush1.msra.mxu0 %v10156
    %10203 = vmatprep.subr.mxu0 0.0
    %10204 = vmatpush1.msra.mxu0 %v10157
    %10205 = vmatprep.subr.mxu0 0.0
    %10206 = vmatpush1.msra.mxu0 %v10158
    %10207 = vmatprep.subr.mxu0 0.0
    %10208 = vmatpush1.msra.mxu0 %v10159
    %10209 = vmatprep.subr.mxu0 0.0
    %10210 = vmatpush1.msra.mxu0 %v10160
    %10211 = vmatprep.subr.mxu0 0.0
    %10212 = vmatpush1.msra.mxu0 %v10161
    %10213 = vmatprep.subr.mxu0 0.0
    %10214 = vmatpush1.msra.mxu0 %v10162
    %10215 = vmatprep.subr.mxu0 0.0
    %10216 = vmatpush1.msra.mxu0 %v10163
    %10217 = vmatprep.subr.mxu0 0.0
    %10218 = vmatpush1.msra.mxu0 %v10164
    %10219 = vmatprep.subr.mxu0 0.0
    %10220 = vmatpush1.msra.mxu0 %v10165
    %10221 = vmatprep.subr.mxu0 0.0
    %10222 = vmatpush1.msra.mxu0 %v10166
    %10223 = vmatprep.subr.mxu0 0.0
    %10224 = vmatpush1.msra.mxu0 %v10167
    %10225 = vmatprep.subr.mxu0 0.0
    %10226 = vmatpush1.msra.mxu0 %v10168
    %10227 = vmatprep.subr.mxu0 0.0
    %10228 = vmatpush1.msra.mxu0 %v10169
    %10229 = vmatprep.subr.mxu0 0.0
    %10230 = vmatpush1.msra.mxu0 %v10170
    %10231 = vmatprep.subr.mxu0 0.0
    %10232 = vmatpush1.msra.mxu0 %v10171
    %10233 = vmatprep.subr.mxu0 0.0
    %10234 = vmatpush1.msra.mxu0 %v10172
    %10235 = vmatprep.subr.mxu0 0.0
    %10236 = vmatpush1.msra.mxu0 %v10173
    %10237 = vmatprep.subr.mxu0 0.0
    %10238 = vmatpush1.msra.mxu0 %v10174
    %10239 = vmatprep.mubr.f32.mxu0 %v9512
    %10240 = vmatmul.mubr.f32.gmra.mrb[0].mxu0 %v9511
    %v10241 = vpop.f32.mrb[0].mxu0
    %v10242 = vadd.f32 0.0, %v10241
    %v10243 = vpop.f32.mrb[0].mxu0
    %10244 = vmatprep.mubr.f32.mxu0 %v9514
    %10245 = vmatmul.mubr.f32.gmra.mrb[0].mxu0 %v9513
    %v10246 = vpop.f32.mrb[0].mxu0
    %v10247 = vadd.f32 0.0, %v10246
    %v10248 = vpop.f32.mrb[0].mxu0
    %10249 = vdwg.mxu0
    %v10250 = vsel %vm7042, %v10242, 0.0
    %10251 = vadd.xlane.f32.xlu0 %v10250
    %v10252 = vpop.xlane.xlu0 %10251
    %v10253 = vsel %vm7042, %v10247, 0.0
    %10254 = vadd.xlane.f32.xlu0 %v10253
    %v10255 = vpop.xlane.xlu0 %10254
    %v10256 = vmul.f32 %v10252, 0.03125
    %v10257 = vmul.f32 %v10255, 0.03125
    %v10258 = vadd.f32 %v10256, 1e-05
    %v10259 = vadd.f32 %v10257, 1e-05
    %v10260 = vrsqrt.pop %v10258
    %v10261 = vrsqrt.pop %v10259
    %10262 = vmatprep.subr.mxu0 0.0
    %10263 = vmatpush1.msra.mxu0 %v10260
    %10264 = vmatprep.subr.mxu0 0.0
    %10265 = vmatpush1.msra.mxu0 %v10261
    %10266 = vmatprep.subr.mxu0 0.0
    %10267 = vmatpush1.msra.mxu0 0.0
    %10268 = vmatprep.subr.mxu0 0.0
    %10269 = vmatpush1.msra.mxu0 0.0
    %10270 = vmatprep.subr.mxu0 0.0
    %10271 = vmatpush1.msra.mxu0 0.0
    %10272 = vmatprep.subr.mxu0 0.0
    %10273 = vmatpush1.msra.mxu0 0.0
    %10274 = vmatprep.subr.mxu0 0.0
    %10275 = vmatpush1.msra.mxu0 0.0
    %10276 = vmatprep.subr.mxu0 0.0
    %10277 = vmatpush1.msra.mxu0 0.0
    %10278 = vmatprep.subr.mxu0 0.0
    %10279 = vmatpush1.msra.mxu0 0.0
    %10280 = vmatprep.subr.mxu0 0.0
    %10281 = vmatpush1.msra.mxu0 0.0
    %10282 = vmatprep.subr.mxu0 0.0
    %10283 = vmatpush1.msra.mxu0 0.0
    %10284 = vmatprep.subr.mxu0 0.0
    %10285 = vmatpush1.msra.mxu0 0.0
    %10286 = vmatprep.subr.mxu0 0.0
    %10287 = vmatpush1.msra.mxu0 0.0
    %10288 = vmatprep.subr.mxu0 0.0
    %10289 = vmatpush1.msra.mxu0 0.0
    %10290 = vmatprep.subr.mxu0 0.0
    %10291 = vmatpush1.msra.mxu0 0.0
    %10292 = vmatprep.subr.mxu0 0.0
    %10293 = vmatpush1.msra.mxu0 0.0
    %10294 = vmatprep.subr.mxu0 0.0
    %10295 = vmatpush1.msra.mxu0 0.0
    %10296 = vmatprep.subr.mxu0 0.0
    %10297 = vmatpush1.msra.mxu0 0.0
    %10298 = vmatprep.subr.mxu0 0.0
    %10299 = vmatpush1.msra.mxu0 0.0
    %10300 = vmatprep.subr.mxu0 0.0
    %10301 = vmatpush1.msra.mxu0 0.0
    %10302 = vmatprep.subr.mxu0 0.0
    %10303 = vmatpush1.msra.mxu0 0.0
    %10304 = vmatprep.subr.mxu0 0.0
    %10305 = vmatpush1.msra.mxu0 0.0
    %10306 = vmatprep.subr.mxu0 0.0
    %10307 = vmatpush1.msra.mxu0 0.0
    %10308 = vmatprep.subr.mxu0 0.0
    %10309 = vmatpush1.msra.mxu0 0.0
    %10310 = vmatprep.subr.mxu0 0.0
    %10311 = vmatpush1.msra.mxu0 0.0
    %10312 = vmatprep.subr.mxu0 0.0
    %10313 = vmatpush1.msra.mxu0 0.0
    %10314 = vmatprep.subr.mxu0 0.0
    %10315 = vmatpush1.msra.mxu0 0.0
    %10316 = vmatprep.subr.mxu0 0.0
    %10317 = vmatpush1.msra.mxu0 0.0
    %10318 = vmatprep.subr.mxu0 0.0
    %10319 = vmatpush1.msra.mxu0 0.0
    %10320 = vmatprep.subr.mxu0 0.0
    %10321 = vmatpush1.msra.mxu0 0.0
    %10322 = vmatprep.subr.mxu0 0.0
    %10323 = vmatpush1.msra.mxu0 0.0
    %10324 = vmatprep.subr.mxu0 0.0
    %10325 = vmatpush1.msra.mxu0 0.0
    %10326 = vmatprep.mubr.f32.mxu0 0.0
    %10327 = vmatmul.mubr.f32.gmra.mrb[0].mxu0 %v9631
    %v10328 = vpop.f32.mrb[0].mxu0
    %v10329 = vadd.f32 0.0, %v10328
    %v10330 = vpop.f32.mrb[0].mxu0
    %10331 = vmatprep.mubr.f32.mxu0 0.0
    %10332 = vmatmul.mubr.f32.gmra.mrb[0].mxu0 %v9634
    %v10333 = vpop.f32.mrb[0].mxu0
    %v10334 = vadd.f32 0.0, %v10333
    %v10335 = vpop.f32.mrb[0].mxu0
    %10336 = vmatprep.mubr.f32.mxu0 0.0
    %10337 = vmatmul.mubr.f32.gmra.mrb[0].mxu0 %v9637
    %v10338 = vpop.f32.mrb[0].mxu0
    %v10339 = vadd.f32 0.0, %v10338
    %v10340 = vpop.f32.mrb[0].mxu0
    %10341 = vmatprep.mubr.f32.mxu0 0.0
    %10342 = vmatmul.mubr.f32.gmra.mrb[0].mxu0 %v9640
    %v10343 = vpop.f32.mrb[0].mxu0
    %v10344 = vadd.f32 0.0, %v10343
    %v10345 = vpop.f32.mrb[0].mxu0
    %10346 = vmatprep.mubr.f32.mxu0 0.0
    %10347 = vmatmul.mubr.f32.gmra.mrb[0].mxu0 %v9643
    %v10348 = vpop.f32.mrb[0].mxu0
    %v10349 = vadd.f32 0.0, %v10348
    %v10350 = vpop.f32.mrb[0].mxu0
    %10351 = vmatprep.mubr.f32.mxu0 0.0
    %10352 = vmatmul.mubr.f32.gmra.mrb[0].mxu0 %v9646
    %v10353 = vpop.f32.mrb[0].mxu0
    %v10354 = vadd.f32 0.0, %v10353
    %v10355 = vpop.f32.mrb[0].mxu0
    %10356 = vmatprep.mubr.f32.mxu0 0.0
    %10357 = vmatmul.mubr.f32.gmra.mrb[0].mxu0 %v9649
    %v10358 = vpop.f32.mrb[0].mxu0
    %v10359 = vadd.f32 0.0, %v10358
    %v10360 = vpop.f32.mrb[0].mxu0
    %10361 = vmatprep.mubr.f32.mxu0 0.0
    %10362 = vmatmul.mubr.f32.gmra.mrb[0].mxu0 %v9652
    %v10363 = vpop.f32.mrb[0].mxu0
    %v10364 = vadd.f32 0.0, %v10363
    %v10365 = vpop.f32.mrb[0].mxu0
    %10366 = vmatprep.mubr.f32.mxu0 0.0
    %10367 = vmatmul.mubr.f32.gmra.mrb[0].mxu0 %v9655
    %v10368 = vpop.f32.mrb[0].mxu0
    %v10369 = vadd.f32 0.0, %v10368
    %v10370 = vpop.f32.mrb[0].mxu0
    %10371 = vmatprep.mubr.f32.mxu0 0.0
    %10372 = vmatmul.mubr.f32.gmra.mrb[0].mxu0 %v9658
    %v10373 = vpop.f32.mrb[0].mxu0
    %v10374 = vadd.f32 0.0, %v10373
    %v10375 = vpop.f32.mrb[0].mxu0
    %10376 = vmatprep.mubr.f32.mxu0 0.0
    %10377 = vmatmul.mubr.f32.gmra.mrb[0].mxu0 %v9661
    %v10378 = vpop.f32.mrb[0].mxu0
    %v10379 = vadd.f32 0.0, %v10378
    %v10380 = vpop.f32.mrb[0].mxu0
    %10381 = vmatprep.mubr.f32.mxu0 0.0
    %10382 = vmatmul.mubr.f32.gmra.mrb[0].mxu0 %v9664
    %v10383 = vpop.f32.mrb[0].mxu0
    %v10384 = vadd.f32 0.0, %v10383
    %v10385 = vpop.f32.mrb[0].mxu0
    %10386 = vmatprep.mubr.f32.mxu0 0.0
    %10387 = vmatmul.mubr.f32.gmra.mrb[0].mxu0 %v9667
    %v10388 = vpop.f32.mrb[0].mxu0
    %v10389 = vadd.f32 0.0, %v10388
    %v10390 = vpop.f32.mrb[0].mxu0
    %10391 = vmatprep.mubr.f32.mxu0 0.0
    %10392 = vmatmul.mubr.f32.gmra.mrb[0].mxu0 %v9670
    %v10393 = vpop.f32.mrb[0].mxu0
    %v10394 = vadd.f32 0.0, %v10393
    %v10395 = vpop.f32.mrb[0].mxu0
    %10396 = vmatprep.mubr.f32.mxu0 0.0
    %10397 = vmatmul.mubr.f32.gmra.mrb[0].mxu0 %v9673
    %v10398 = vpop.f32.mrb[0].mxu0
    %v10399 = vadd.f32 0.0, %v10398
    %v10400 = vpop.f32.mrb[0].mxu0
    %10401 = vmatprep.mubr.f32.mxu0 0.0
    %10402 = vmatmul.mubr.f32.gmra.mrb[0].mxu0 %v9676
    %v10403 = vpop.f32.mrb[0].mxu0
    %v10404 = vadd.f32 0.0, %v10403
    %v10405 = vpop.f32.mrb[0].mxu0
    %10406 = vmatprep.mubr.f32.mxu0 0.0
    %10407 = vmatmul.mubr.f32.gmra.mrb[0].mxu0 %v9679
    %v10408 = vpop.f32.mrb[0].mxu0
    %v10409 = vadd.f32 0.0, %v10408
    %v10410 = vpop.f32.mrb[0].mxu0
    %10411 = vmatprep.mubr.f32.mxu0 0.0
    %10412 = vmatmul.mubr.f32.gmra.mrb[0].mxu0 %v9682
    %v10413 = vpop.f32.mrb[0].mxu0
    %v10414 = vadd.f32 0.0, %v10413
    %v10415 = vpop.f32.mrb[0].mxu0
    %10416 = vmatprep.mubr.f32.mxu0 0.0
    %10417 = vmatmul.mubr.f32.gmra.mrb[0].mxu0 %v9685
    %v10418 = vpop.f32.mrb[0].mxu0
    %v10419 = vadd.f32 0.0, %v10418
    %v10420 = vpop.f32.mrb[0].mxu0
    %10421 = vmatprep.mubr.f32.mxu0 0.0
    %10422 = vmatmul.mubr.f32.gmra.mrb[0].mxu0 %v9688
    %v10423 = vpop.f32.mrb[0].mxu0
    %v10424 = vadd.f32 0.0, %v10423
    %v10425 = vpop.f32.mrb[0].mxu0
    %10426 = vmatprep.mubr.f32.mxu0 0.0
    %10427 = vmatmul.mubr.f32.gmra.mrb[0].mxu0 %v9691
    %v10428 = vpop.f32.mrb[0].mxu0
    %v10429 = vadd.f32 0.0, %v10428
    %v10430 = vpop.f32.mrb[0].mxu0
    %10431 = vmatprep.mubr.f32.mxu0 0.0
    %10432 = vmatmul.mubr.f32.gmra.mrb[0].mxu0 %v9694
    %v10433 = vpop.f32.mrb[0].mxu0
    %v10434 = vadd.f32 0.0, %v10433
    %v10435 = vpop.f32.mrb[0].mxu0
    %10436 = vmatprep.mubr.f32.mxu0 0.0
    %10437 = vmatmul.mubr.f32.gmra.mrb[0].mxu0 %v9697
    %v10438 = vpop.f32.mrb[0].mxu0
    %v10439 = vadd.f32 0.0, %v10438
    %v10440 = vpop.f32.mrb[0].mxu0
    %10441 = vmatprep.mubr.f32.mxu0 0.0
    %10442 = vmatmul.mubr.f32.gmra.mrb[0].mxu0 %v9700
    %v10443 = vpop.f32.mrb[0].mxu0
    %v10444 = vadd.f32 0.0, %v10443
    %v10445 = vpop.f32.mrb[0].mxu0
    %10446 = vmatprep.mubr.f32.mxu0 0.0
    %10447 = vmatmul.mubr.f32.gmra.mrb[0].mxu0 %v9703
    %v10448 = vpop.f32.mrb[0].mxu0
    %v10449 = vadd.f32 0.0, %v10448
    %v10450 = vpop.f32.mrb[0].mxu0
    %10451 = vmatprep.mubr.f32.mxu0 0.0
    %10452 = vmatmul.mubr.f32.gmra.mrb[0].mxu0 %v9706
    %v10453 = vpop.f32.mrb[0].mxu0
    %v10454 = vadd.f32 0.0, %v10453
    %v10455 = vpop.f32.mrb[0].mxu0
    %10456 = vmatprep.mubr.f32.mxu0 0.0
    %10457 = vmatmul.mubr.f32.gmra.mrb[0].mxu0 %v9709
    %v10458 = vpop.f32.mrb[0].mxu0
    %v10459 = vadd.f32 0.0, %v10458
    %v10460 = vpop.f32.mrb[0].mxu0
    %10461 = vmatprep.mubr.f32.mxu0 0.0
    %10462 = vmatmul.mubr.f32.gmra.mrb[0].mxu0 %v9712
    %v10463 = vpop.f32.mrb[0].mxu0
    %v10464 = vadd.f32 0.0, %v10463
    %v10465 = vpop.f32.mrb[0].mxu0
    %10466 = vmatprep.mubr.f32.mxu0 0.0
    %10467 = vmatmul.mubr.f32.gmra.mrb[0].mxu0 %v9715
    %v10468 = vpop.f32.mrb[0].mxu0
    %v10469 = vadd.f32 0.0, %v10468
    %v10470 = vpop.f32.mrb[0].mxu0
    %10471 = vmatprep.mubr.f32.mxu0 0.0
    %10472 = vmatmul.mubr.f32.gmra.mrb[0].mxu0 %v9718
    %v10473 = vpop.f32.mrb[0].mxu0
    %v10474 = vadd.f32 0.0, %v10473
    %v10475 = vpop.f32.mrb[0].mxu0
    %10476 = vmatprep.mubr.f32.mxu0 0.0
    %10477 = vmatmul.mubr.f32.gmra.mrb[0].mxu0 %v9721
    %v10478 = vpop.f32.mrb[0].mxu0
    %v10479 = vadd.f32 0.0, %v10478
    %v10480 = vpop.f32.mrb[0].mxu0
    %10481 = vmatprep.mubr.f32.mxu0 0.0
    %10482 = vmatmul.mubr.f32.gmra.mrb[0].mxu0 %v9724
    %v10483 = vpop.f32.mrb[0].mxu0
    %v10484 = vadd.f32 0.0, %v10483
    %v10485 = vpop.f32.mrb[0].mxu0
    %10486 = vdwg.mxu0
    %10488 = vset.pattern.permute.xlu0 0
    %10489 = vperm.xlu0 %10488, %v10329
    %v10490 = vpop.permute.xlu0 %10489
    %10493 = vset.pattern.permute.xlu0 0
    %10494 = vperm.xlu0 %10493, %v10334
    %v10495 = vpop.permute.xlu0 %10494
    %10498 = vset.pattern.permute.xlu0 0
    %10499 = vperm.xlu0 %10498, %v10339
    %v10500 = vpop.permute.xlu0 %10499
    %10503 = vset.pattern.permute.xlu0 0
    %10504 = vperm.xlu0 %10503, %v10344
    %v10505 = vpop.permute.xlu0 %10504
    %10508 = vset.pattern.permute.xlu0 0
    %10509 = vperm.xlu0 %10508, %v10349
    %v10510 = vpop.permute.xlu0 %10509
    %10513 = vset.pattern.permute.xlu0 0
    %10514 = vperm.xlu0 %10513, %v10354
    %v10515 = vpop.permute.xlu0 %10514
    %10518 = vset.pattern.permute.xlu0 0
    %10519 = vperm.xlu0 %10518, %v10359
    %v10520 = vpop.permute.xlu0 %10519
    %10523 = vset.pattern.permute.xlu0 0
    %10524 = vperm.xlu0 %10523, %v10364
    %v10525 = vpop.permute.xlu0 %10524
    %10528 = vset.pattern.permute.xlu0 0
    %10529 = vperm.xlu0 %10528, %v10369
    %v10530 = vpop.permute.xlu0 %10529
    %10533 = vset.pattern.permute.xlu0 0
    %10534 = vperm.xlu0 %10533, %v10374
    %v10535 = vpop.permute.xlu0 %10534
    %10538 = vset.pattern.permute.xlu0 0
    %10539 = vperm.xlu0 %10538, %v10379
    %v10540 = vpop.permute.xlu0 %10539
    %10543 = vset.pattern.permute.xlu0 0
    %10544 = vperm.xlu0 %10543, %v10384
    %v10545 = vpop.permute.xlu0 %10544
    %10548 = vset.pattern.permute.xlu0 0
    %10549 = vperm.xlu0 %10548, %v10389
    %v10550 = vpop.permute.xlu0 %10549
    %10553 = vset.pattern.permute.xlu0 0
    %10554 = vperm.xlu0 %10553, %v10394
    %v10555 = vpop.permute.xlu0 %10554
    %10558 = vset.pattern.permute.xlu0 0
    %10559 = vperm.xlu0 %10558, %v10399
    %v10560 = vpop.permute.xlu0 %10559
    %10563 = vset.pattern.permute.xlu0 0
    %10564 = vperm.xlu0 %10563, %v10404
    %v10565 = vpop.permute.xlu0 %10564
    %10568 = vset.pattern.permute.xlu0 0
    %10569 = vperm.xlu0 %10568, %v10409
    %v10570 = vpop.permute.xlu0 %10569
    %10573 = vset.pattern.permute.xlu0 0
    %10574 = vperm.xlu0 %10573, %v10414
    %v10575 = vpop.permute.xlu0 %10574
    %10578 = vset.pattern.permute.xlu0 0
    %10579 = vperm.xlu0 %10578, %v10419
    %v10580 = vpop.permute.xlu0 %10579
    %10583 = vset.pattern.permute.xlu0 0
    %10584 = vperm.xlu0 %10583, %v10424
    %v10585 = vpop.permute.xlu0 %10584
    %10588 = vset.pattern.permute.xlu0 0
    %10589 = vperm.xlu0 %10588, %v10429
    %v10590 = vpop.permute.xlu0 %10589
    %10593 = vset.pattern.permute.xlu0 0
    %10594 = vperm.xlu0 %10593, %v10434
    %v10595 = vpop.permute.xlu0 %10594
    %10598 = vset.pattern.permute.xlu0 0
    %10599 = vperm.xlu0 %10598, %v10439
    %v10600 = vpop.permute.xlu0 %10599
    %10603 = vset.pattern.permute.xlu0 0
    %10604 = vperm.xlu0 %10603, %v10444
    %v10605 = vpop.permute.xlu0 %10604
    %10608 = vset.pattern.permute.xlu0 0
    %10609 = vperm.xlu0 %10608, %v10449
    %v10610 = vpop.permute.xlu0 %10609
    %10613 = vset.pattern.permute.xlu0 0
    %10614 = vperm.xlu0 %10613, %v10454
    %v10615 = vpop.permute.xlu0 %10614
    %10618 = vset.pattern.permute.xlu0 0
    %10619 = vperm.xlu0 %10618, %v10459
    %v10620 = vpop.permute.xlu0 %10619
    %10623 = vset.pattern.permute.xlu0 0
    %10624 = vperm.xlu0 %10623, %v10464
    %v10625 = vpop.permute.xlu0 %10624
    %10628 = vset.pattern.permute.xlu0 0
    %10629 = vperm.xlu0 %10628, %v10469
    %v10630 = vpop.permute.xlu0 %10629
    %10633 = vset.pattern.permute.xlu0 0
    %10634 = vperm.xlu0 %10633, %v10474
    %v10635 = vpop.permute.xlu0 %10634
    %10638 = vset.pattern.permute.xlu0 0
    %10639 = vperm.xlu0 %10638, %v10479
    %v10640 = vpop.permute.xlu0 %10639
    %10643 = vset.pattern.permute.xlu0 0
    %10644 = vperm.xlu0 %10643, %v10484
    %v10645 = vpop.permute.xlu0 %10644
    %v10647 = vmul.f32 %v10111, %v10490
    %v10648 = vmul.f32 %v10112, %v10495
    %v10649 = vmul.f32 %v10113, %v10500
    %v10650 = vmul.f32 %v10114, %v10505
    %v10651 = vmul.f32 %v10115, %v10510
    %v10652 = vmul.f32 %v10116, %v10515
    %v10653 = vmul.f32 %v10117, %v10520
    %v10654 = vmul.f32 %v10118, %v10525
    %v10655 = vmul.f32 %v10119, %v10530
    %v10656 = vmul.f32 %v10120, %v10535
    %v10657 = vmul.f32 %v10121, %v10540
    %v10658 = vmul.f32 %v10122, %v10545
    %v10659 = vmul.f32 %v10123, %v10550
    %v10660 = vmul.f32 %v10124, %v10555
    %v10661 = vmul.f32 %v10125, %v10560
    %v10662 = vmul.f32 %v10126, %v10565
    %v10663 = vmul.f32 %v10127, %v10570
    %v10664 = vmul.f32 %v10128, %v10575
    %v10665 = vmul.f32 %v10129, %v10580
    %v10666 = vmul.f32 %v10130, %v10585
    %v10667 = vmul.f32 %v10131, %v10590
    %v10668 = vmul.f32 %v10132, %v10595
    %v10669 = vmul.f32 %v10133, %v10600
    %v10670 = vmul.f32 %v10134, %v10605
    %v10671 = vmul.f32 %v10135, %v10610
    %v10672 = vmul.f32 %v10136, %v10615
    %v10673 = vmul.f32 %v10137, %v10620
    %v10674 = vmul.f32 %v10138, %v10625
    %v10675 = vmul.f32 %v10139, %v10630
    %v10676 = vmul.f32 %v10140, %v10635
    %v10677 = vmul.f32 %v10141, %v10640
    %v10678 = vmul.f32 %v10142, %v10645
    %vm10679 = vcmp.gt.f32.partialorder %v10647, 0.0
    %vm10680 = vcmp.gt.f32.partialorder %v10648, 0.0
    %vm10681 = vcmp.gt.f32.partialorder %v10649, 0.0
    %vm10682 = vcmp.gt.f32.partialorder %v10650, 0.0
    %vm10683 = vcmp.gt.f32.partialorder %v10651, 0.0
    %vm10684 = vcmp.gt.f32.partialorder %v10652, 0.0
    %vm10685 = vcmp.gt.f32.partialorder %v10653, 0.0
    %vm10686 = vcmp.gt.f32.partialorder %v10654, 0.0
    %vm10687 = vcmp.gt.f32.partialorder %v10655, 0.0
    %vm10688 = vcmp.gt.f32.partialorder %v10656, 0.0
    %vm10689 = vcmp.gt.f32.partialorder %v10657, 0.0
    %vm10690 = vcmp.gt.f32.partialorder %v10658, 0.0
    %vm10691 = vcmp.gt.f32.partialorder %v10659, 0.0
    %vm10692 = vcmp.gt.f32.partialorder %v10660, 0.0
    %vm10693 = vcmp.gt.f32.partialorder %v10661, 0.0
    %vm10694 = vcmp.gt.f32.partialorder %v10662, 0.0
    %vm10695 = vcmp.gt.f32.partialorder %v10663, 0.0
    %vm10696 = vcmp.gt.f32.partialorder %v10664, 0.0
    %vm10697 = vcmp.gt.f32.partialorder %v10665, 0.0
    %vm10698 = vcmp.gt.f32.partialorder %v10666, 0.0
    %vm10699 = vcmp.gt.f32.partialorder %v10667, 0.0
    %vm10700 = vcmp.gt.f32.partialorder %v10668, 0.0
    %vm10701 = vcmp.gt.f32.partialorder %v10669, 0.0
    %vm10702 = vcmp.gt.f32.partialorder %v10670, 0.0
    %vm10703 = vcmp.gt.f32.partialorder %v10671, 0.0
    %vm10704 = vcmp.gt.f32.partialorder %v10672, 0.0
    %vm10705 = vcmp.gt.f32.partialorder %v10673, 0.0
    %vm10706 = vcmp.gt.f32.partialorder %v10674, 0.0
    %vm10707 = vcmp.gt.f32.partialorder %v10675, 0.0
    %vm10708 = vcmp.gt.f32.partialorder %v10676, 0.0
    %vm10709 = vcmp.gt.f32.partialorder %v10677, 0.0
    %vm10710 = vcmp.gt.f32.partialorder %v10678, 0.0
    %v10711 = vmul.f32 %v10647, 0.2
    %v10712 = vmul.f32 %v10648, 0.2
    %v10713 = vmul.f32 %v10649, 0.2
    %v10714 = vmul.f32 %v10650, 0.2
    %v10715 = vmul.f32 %v10651, 0.2
    %v10716 = vmul.f32 %v10652, 0.2
    %v10717 = vmul.f32 %v10653, 0.2
    %v10718 = vmul.f32 %v10654, 0.2
    %v10719 = vmul.f32 %v10655, 0.2
    %v10720 = vmul.f32 %v10656, 0.2
    %v10721 = vmul.f32 %v10657, 0.2
    %v10722 = vmul.f32 %v10658, 0.2
    %v10723 = vmul.f32 %v10659, 0.2
    %v10724 = vmul.f32 %v10660, 0.2
    %v10725 = vmul.f32 %v10661, 0.2
    %v10726 = vmul.f32 %v10662, 0.2
    %v10727 = vmul.f32 %v10663, 0.2
    %v10728 = vmul.f32 %v10664, 0.2
    %v10729 = vmul.f32 %v10665, 0.2
    %v10730 = vmul.f32 %v10666, 0.2
    %v10731 = vmul.f32 %v10667, 0.2
    %v10732 = vmul.f32 %v10668, 0.2
    %v10733 = vmul.f32 %v10669, 0.2
    %v10734 = vmul.f32 %v10670, 0.2
    %v10735 = vmul.f32 %v10671, 0.2
    %v10736 = vmul.f32 %v10672, 0.2
    %v10737 = vmul.f32 %v10673, 0.2
    %v10738 = vmul.f32 %v10674, 0.2
    %v10739 = vmul.f32 %v10675, 0.2
    %v10740 = vmul.f32 %v10676, 0.2
    %v10741 = vmul.f32 %v10677, 0.2
    %v10742 = vmul.f32 %v10678, 0.2
    %v10743 = vsel %vm10679, %v10647, %v10711
    %v10744 = vsel %vm10680, %v10648, %v10712
    %v10745 = vsel %vm10681, %v10649, %v10713
    %v10746 = vsel %vm10682, %v10650, %v10714
    %v10747 = vsel %vm10683, %v10651, %v10715
    %v10748 = vsel %vm10684, %v10652, %v10716
    %v10749 = vsel %vm10685, %v10653, %v10717
    %v10750 = vsel %vm10686, %v10654, %v10718
    %v10751 = vsel %vm10687, %v10655, %v10719
    %v10752 = vsel %vm10688, %v10656, %v10720
    %v10753 = vsel %vm10689, %v10657, %v10721
    %v10754 = vsel %vm10690, %v10658, %v10722
    %v10755 = vsel %vm10691, %v10659, %v10723
    %v10756 = vsel %vm10692, %v10660, %v10724
    %v10757 = vsel %vm10693, %v10661, %v10725
    %v10758 = vsel %vm10694, %v10662, %v10726
    %v10759 = vsel %vm10695, %v10663, %v10727
    %v10760 = vsel %vm10696, %v10664, %v10728
    %v10761 = vsel %vm10697, %v10665, %v10729
    %v10762 = vsel %vm10698, %v10666, %v10730
    %v10763 = vsel %vm10699, %v10667, %v10731
    %v10764 = vsel %vm10700, %v10668, %v10732
    %v10765 = vsel %vm10701, %v10669, %v10733
    %v10766 = vsel %vm10702, %v10670, %v10734
    %v10767 = vsel %vm10703, %v10671, %v10735
    %v10768 = vsel %vm10704, %v10672, %v10736
    %v10769 = vsel %vm10705, %v10673, %v10737
    %v10770 = vsel %vm10706, %v10674, %v10738
    %v10771 = vsel %vm10707, %v10675, %v10739
    %v10772 = vsel %vm10708, %v10676, %v10740
    %v10773 = vsel %vm10709, %v10677, %v10741
    %v10774 = vsel %vm10710, %v10678, %v10742
    %v10775 = vld [vmem:[#allocation7] sm:$0xff]
    %v10776 = vld [vmem:[#allocation7 + $0x8] sm:$0xff]
    %v10777 = vld [vmem:[#allocation7 + $0x10] sm:$0xff]
    %v10778 = vld [vmem:[#allocation7 + $0x18] sm:$0xff]
    %v10779 = vld [vmem:[#allocation7 + $0x20] sm:$0xff]
    %v10780 = vld [vmem:[#allocation7 + $0x28] sm:$0xff]
    %v10781 = vld [vmem:[#allocation7 + $0x30] sm:$0xff]
    %v10782 = vld [vmem:[#allocation7 + $0x38] sm:$0xff]
    %v10783 = vpack.c.bf16 %v10744, %v10743
    %v10784 = vpack.c.bf16 %v10746, %v10745
    %v10785 = vpack.c.bf16 %v10748, %v10747
    %v10786 = vpack.c.bf16 %v10750, %v10749
    %v10787 = vpack.c.bf16 %v10752, %v10751
    %v10788 = vpack.c.bf16 %v10754, %v10753
    %v10789 = vpack.c.bf16 %v10756, %v10755
    %v10790 = vpack.c.bf16 %v10758, %v10757
    %v10791 = vpack.c.bf16 %v10760, %v10759
    %v10792 = vpack.c.bf16 %v10762, %v10761
    %v10793 = vpack.c.bf16 %v10764, %v10763
    %v10794 = vpack.c.bf16 %v10766, %v10765
    %v10795 = vpack.c.bf16 %v10768, %v10767
    %v10796 = vpack.c.bf16 %v10770, %v10769
    %v10797 = vpack.c.bf16 %v10772, %v10771
    %v10798 = vpack.c.bf16 %v10774, %v10773
    %v10799 = vld [vmem:[%s9] sm:$0xff]
    %v10800 = vld [vmem:[%s9 + $0x8] sm:$0xff]
    %v10801 = vld [vmem:[%s9 + $0x10] sm:$0xff]
    %v10802 = vld [vmem:[%s9 + $0x18] sm:$0xff]
    %v10803 = vld [vmem:[%s9 + $0x20] sm:$0xff]
    %v10804 = vld [vmem:[%s9 + $0x28] sm:$0xff]
    %v10805 = vld [vmem:[%s9 + $0x30] sm:$0xff]
    %v10806 = vld [vmem:[%s9 + $0x38] sm:$0xff]
    %10808 = vset.pattern.permute.xlu0 0
    %10809 = vperm.xlu0 %10808, %v10799
    %v10810 = vpop.permute.xlu0 %10809
    %10813 = vset.pattern.permute.xlu0 0
    %10814 = vperm.xlu0 %10813, %v10800
    %v10815 = vpop.permute.xlu0 %10814
    %10818 = vset.pattern.permute.xlu0 0
    %10819 = vperm.xlu0 %10818, %v10801
    %v10820 = vpop.permute.xlu0 %10819
    %10823 = vset.pattern.permute.xlu0 0
    %10824 = vperm.xlu0 %10823, %v10802
    %v10825 = vpop.permute.xlu0 %10824
    %10828 = vset.pattern.permute.xlu0 0
    %10829 = vperm.xlu0 %10828, %v10803
    %v10830 = vpop.permute.xlu0 %10829
    %10833 = vset.pattern.permute.xlu0 0
    %10834 = vperm.xlu0 %10833, %v10804
    %v10835 = vpop.permute.xlu0 %10834
    %10838 = vset.pattern.permute.xlu0 0
    %10839 = vperm.xlu0 %10838, %v10805
    %v10840 = vpop.permute.xlu0 %10839
    %10843 = vset.pattern.permute.xlu0 0
    %10844 = vperm.xlu0 %10843, %v10806
    %v10845 = vpop.permute.xlu0 %10844
    %v10855 = vunpack.c.l.b16 %v10775
    %v10856 = vunpack.c.h.b16 %v10775
    %v10857 = vunpack.c.l.b16 %v10776
    %v10858 = vunpack.c.h.b16 %v10776
    %v10859 = vunpack.c.l.b16 %v10777
    %v10860 = vunpack.c.h.b16 %v10777
    %v10861 = vunpack.c.l.b16 %v10778
    %v10862 = vunpack.c.h.b16 %v10778
    %v10863 = vunpack.c.l.b16 %v10779
    %v10864 = vunpack.c.h.b16 %v10779
    %v10865 = vunpack.c.l.b16 %v10780
    %v10866 = vunpack.c.h.b16 %v10780
    %v10867 = vunpack.c.l.b16 %v10781
    %v10868 = vunpack.c.h.b16 %v10781
    %v10869 = vunpack.c.l.b16 %v10782
    %v10870 = vunpack.c.h.b16 %v10782
    %v10871 = vpack.c.b16 %v10857, %v10855
    %v10872 = vpack.c.b16 %v10858, %v10856
    %v10873 = vpack.c.b16 %v10861, %v10859
    %v10874 = vpack.c.b16 %v10862, %v10860
    %v10875 = vpack.c.b16 %v10865, %v10863
    %v10876 = vpack.c.b16 %v10866, %v10864
    %v10877 = vpack.c.b16 %v10869, %v10867
    %v10878 = vpack.c.b16 %v10870, %v10868
    %10887 = vmatprep.subr.bf16.mxu0 0
    %10888 = vmatpush1.bf16.msra.mxu0 %v10783
    %10889 = vmatprep.subr.bf16.mxu0 0
    %10890 = vmatpush1.bf16.msra.mxu0 %v10784
    %10891 = vmatprep.subr.bf16.mxu0 0
    %10892 = vmatpush1.bf16.msra.mxu0 %v10785
    %10893 = vmatprep.subr.bf16.mxu0 0
    %10894 = vmatpush1.bf16.msra.mxu0 %v10786
    %10895 = vmatprep.subr.bf16.mxu0 0
    %10896 = vmatpush1.bf16.msra.mxu0 %v10787
    %10897 = vmatprep.subr.bf16.mxu0 0
    %10898 = vmatpush1.bf16.msra.mxu0 %v10788
    %10899 = vmatprep.subr.bf16.mxu0 0
    %10900 = vmatpush1.bf16.msra.mxu0 %v10789
    %10901 = vmatprep.subr.bf16.mxu0 0
    %10902 = vmatpush1.bf16.msra.mxu0 %v10790
    %10903 = vmatprep.subr.bf16.mxu0 0
    %10904 = vmatpush1.bf16.msra.mxu0 %v10791
    %10905 = vmatprep.subr.bf16.mxu0 0
    %10906 = vmatpush1.bf16.msra.mxu0 %v10792
    %10907 = vmatprep.subr.bf16.mxu0 0
    %10908 = vmatpush1.bf16.msra.mxu0 %v10793
    %10909 = vmatprep.subr.bf16.mxu0 0
    %10910 = vmatpush1.bf16.msra.mxu0 %v10794
    %10911 = vmatprep.subr.bf16.mxu0 0
    %10912 = vmatpush1.bf16.msra.mxu0 %v10795
    %10913 = vmatprep.subr.bf16.mxu0 0
    %10914 = vmatpush1.bf16.msra.mxu0 %v10796
    %10915 = vmatprep.subr.bf16.mxu0 0
    %10916 = vmatpush1.bf16.msra.mxu0 %v10797
    %10917 = vmatprep.subr.bf16.mxu0 0
    %10918 = vmatpush1.bf16.msra.mxu0 %v10798
    %10919 = vmatprep.mubr.bf16.mxu0 %v10872
    %10920 = vmatmul.mubr.bf16.gmra.mrb[0].mxu0 %v10871
    %v10921 = vpop.f32.mrb[0].mxu0
    %v10922 = vadd.f32 %v10810, %v10921
    %v10923 = vpop.f32.mrb[0].mxu0
    %v10924 = vpop.f32.mrb[0].mxu0
    %v10925 = vadd.f32 %v10815, %v10924
    %v10926 = vpop.f32.mrb[0].mxu0
    %10927 = vmatprep.mubr.bf16.mxu0 %v10874
    %10928 = vmatmul.mubr.bf16.gmra.mrb[0].mxu0 %v10873
    %v10929 = vpop.f32.mrb[0].mxu0
    %v10930 = vadd.f32 %v10820, %v10929
    %v10931 = vpop.f32.mrb[0].mxu0
    %v10932 = vpop.f32.mrb[0].mxu0
    %v10933 = vadd.f32 %v10825, %v10932
    %v10934 = vpop.f32.mrb[0].mxu0
    %10935 = vmatprep.mubr.bf16.mxu0 %v10876
    %10936 = vmatmul.mubr.bf16.gmra.mrb[0].mxu0 %v10875
    %v10937 = vpop.f32.mrb[0].mxu0
    %v10938 = vadd.f32 %v10830, %v10937
    %v10939 = vpop.f32.mrb[0].mxu0
    %v10940 = vpop.f32.mrb[0].mxu0
    %v10941 = vadd.f32 %v10835, %v10940
    %v10942 = vpop.f32.mrb[0].mxu0
    %10943 = vmatprep.mubr.bf16.mxu0 %v10878
    %10944 = vmatmul.mubr.bf16.gmra.mrb[0].mxu0 %v10877
    %v10945 = vpop.f32.mrb[0].mxu0
    %v10946 = vadd.f32 %v10840, %v10945
    %v10947 = vpop.f32.mrb[0].mxu0
    %v10948 = vpop.f32.mrb[0].mxu0
    %v10949 = vadd.f32 %v10845, %v10948
    %v10950 = vpop.f32.mrb[0].mxu0
    %10951 = vdwg.mxu0
    %v10952 = vld [vmem:[%s10] sm:$0xff]
    %v10953 = vld [vmem:[%s10 + $0x8] sm:$0xff]
    %v10954 = vld [vmem:[%s10 + $0x10] sm:$0xff]
    %v10955 = vld [vmem:[%s10 + $0x18] sm:$0xff]
    %v10956 = vmul.f32 %v10938, 0.5
    %v10957 = vmul.f32 %v10941, 0.5
    %v10958 = vmul.f32 %v10946, 0.5
    %v10959 = vmul.f32 %v10949, 0.5
    %v10960 = vmul.f32 %v10956, 1.442695
    %v10961 = vpow.pop %v10960
    %v10962 = vmul.f32 %v10957, 1.442695
    %v10963 = vpow.pop %v10962
    %v10964 = vmul.f32 %v10958, 1.442695
    %v10965 = vpow.pop %v10964
    %v10966 = vmul.f32 %v10959, 1.442695
    %v10967 = vpow.pop %v10966
    %v10968 = vmul.f32 %v10952, %v10961
    %v10969 = vmul.f32 %v10953, %v10963
    %v10970 = vmul.f32 %v10954, %v10965
    %v10971 = vmul.f32 %v10955, %v10967
    %v10972 = vadd.f32 %v10922, %v10968
    %v10973 = vadd.f32 %v10925, %v10969
    %v10974 = vadd.f32 %v10930, %v10970
    %v10975 = vadd.f32 %v10933, %v10971
    %10976 = vst.msk [vmem:[%s11] sm:$0xff] %vm7042, %v10972
    %10977 = vst.msk [vmem:[%s11 + $0x8] sm:$0xff] %vm7042, %v10973
    %10978 = vst.msk [vmem:[%s11 + $0x10] sm:$0xff] %vm7042, %v10974
    %10979 = vst.msk [vmem:[%s11 + $0x18] sm:$0xff] %vm7042, %v10975
    %10980 = vst.msk [vmem:[%s11 + $0x20] sm:$0xff] %vm7042, %v10922
    %10981 = vst.msk [vmem:[%s11 + $0x28] sm:$0xff] %vm7042, %v10925
    %10982 = vst.msk [vmem:[%s11 + $0x30] sm:$0xff] %vm7042, %v10930
    %10983 = vst.msk [vmem:[%s11 + $0x38] sm:$0xff] %vm7042, %v10933
    %10984 = vst.msk [vmem:[%s11 + $0x40] sm:$0xff] %vm7042, %v10938
    %10985 = vst.msk [vmem:[%s11 + $0x48] sm:$0xff] %vm7042, %v10941
    %10986 = vst.msk [vmem:[%s11 + $0x50] sm:$0xff] %vm7042, %v10946
    %10987 = vst.msk [vmem:[%s11 + $0x58] sm:$0xff] %vm7042, %v10949
    // Predicated region
    $region62: #{encoder_forward.1} parent=1 // pred_check
      _
    $region63: #{encoder_forward.1} parent=1 // pred_check_branch
      %10989 = sbr.rel (0) target = $region65
    $region64: #{encoder_forward.1} parent=1 // pred_region
      _
    $region65: #{encoder_forward.1} parent=1 // pred_fallthru
      _
    // Predicated region
    $region66: #{encoder_forward.1} parent=1 // pred_check
      _
    $region67: #{encoder_forward.1} parent=1 // pred_check_branch
      %10991 = sbr.rel (0) target = $region69
    $region68: #{encoder_forward.1} parent=1 // pred_region
      _
    $region69: #{encoder_forward.1} parent=1 // pred_fallthru
      _
    %10992 = vsyncpa [#allocation3], 1
    %10993 = vsyncpa [#allocation5], 1
    %10994 = vsyncpa [#allocation8], 1

</llo_original>
